<compile_context>
chip_gen: v6e
topology: v6e:2x2x1
jax: 0.10.0
libtpu: 0.0.40
codegen_flags: <defaults>
</compile_context>

<pallas_src>
import functools
import math

import jax
import jax.numpy as jnp
from jax import lax
from jax.experimental import pallas as pl
from jax.experimental.pallas import tpu as pltpu

F32 = jnp.float32

_N_FIXED = 7                        # fixed (non per-block) inputs of the backbone kernel
_BLOCK_KEYS = ('w_qkvr', 'bq', 'bk', 'bv', 'bres', 'wp', 'bp',
               'wr_cat', 'br', 'cen_n', 'we_all', 'be_all')
_N_BLOCK = len(_BLOCK_KEYS)         # 12 per BiDGN block


# ----------------------------------------------------------------------------
# fused backbone kernel: one grid step == one batch element (pure 2-D compute)
# ----------------------------------------------------------------------------
def backbone_kernel(*refs, num_blocks, c2):
    (x_ref, bns_ref, bnh_ref, wg_ref, bg_ref, sel_ref, colid_ref) = refs[:_N_FIXED]
    blk_refs = [refs[_N_FIXED + i * _N_BLOCK:_N_FIXED + (i + 1) * _N_BLOCK]
                for i in range(num_blocks)]
    out_ref = refs[_N_FIXED + num_blocks * _N_BLOCK]

    sel = sel_ref[...]                # (NE*E, E) one-hot column-fold matrix (shared)
    colid = colid_ref[...]            # (1, NE*E) int32 expert-id of each wide column

    # ---------------- DSHS: BN(eval) + fused Chebynet(K=2), stacked rows --------
    x = x_ref[0] * bns_ref[...] + bnh_ref[...]                       # (2*C2, T)
    x = jnp.maximum(jnp.dot(x, wg_ref[...], preferred_element_type=F32)
                    + bg_ref[...], 0.0)                              # (2*C2, E)
    E = x.shape[1]

    for (w4_ref, bq_ref, bk_ref, bv_ref, bres_ref, wp_ref, bp_ref,
         wrc_ref, br_ref, cen_ref, weall_ref, beall_ref) in blk_refs:
        # ---------------- CHA (cross-hemisphere attention) ----------------
        # single projection matmul: columns = [wq/sqrt(E) | wk | wv | wres]
        p = jnp.dot(x, w4_ref[...], preferred_element_type=F32)      # (2*C2, 4E)
        q = p[:c2, 0:E] + bq_ref[...]                                # left rows
        k = p[c2:, E:2 * E] + bk_ref[...]                            # right rows
        v = p[:c2, 2 * E:3 * E] - p[c2:, 2 * E:3 * E] + bv_ref[...]  # Linear_v(x_l - x_r)
        res = p[:, 3 * E:4 * E] + bres_ref[...]                      # stacked residual

        # scale already folded into q; softmax with EUP reciprocal
        s = lax.dot_general(q, k, (((1,), (1,)), ((), ())),
                            preferred_element_type=F32)              # (C2, C2)
        s = s - jnp.max(s, axis=-1, keepdims=True)
        pe = jnp.exp(s)
        attn = pe * pl.reciprocal(jnp.sum(pe, axis=-1, keepdims=True), approx=True)

        out_l = jnp.dot(attn, v, preferred_element_type=F32)         # attn   @ v
        out_r = lax.dot_general(attn, v, (((0,), (0,)), ((), ())),
                                preferred_element_type=F32)          # attn^T @ v (no vxpose)
        out = jnp.concatenate([out_l, out_r], axis=0)                # (2*C2, E)
        x = jnp.dot(out, wp_ref[...], preferred_element_type=F32) + bp_ref[...] + res

        # ---------------- SHMoE (cosine top-2 router, dense expert sweep) --
        # router projection on stacked rows with wr_cat = [wr_l | wr_r]:
        #   xp = x_l @ wr_l + x_r @ wr_r  (extract via static slices, no concat)
        y = jnp.dot(x, wrc_ref[...], preferred_element_type=F32)     # (2*C2, 2*ED)
        ed = y.shape[1] // 2
        xp = y[:c2, 0:ed] + y[c2:, ed:2 * ed] + br_ref[...]          # (C2, ED)
        xp = xp * lax.rsqrt(jnp.maximum(jnp.sum(xp * xp, axis=-1, keepdims=True), 1e-24))
        cos = jnp.dot(xp, cen_ref[...], preferred_element_type=F32)  # (C2, NE)
        ne = cos.shape[1]

        lane = lax.broadcasted_iota(jnp.int32, cos.shape, 1)
        v1 = jnp.max(cos, axis=-1, keepdims=True)
        i1 = jnp.min(jnp.where(cos >= v1, lane, ne), axis=-1, keepdims=True)
        cos2 = jnp.where(lane == i1, -1e30, cos)
        v2 = jnp.max(cos2, axis=-1, keepdims=True)
        i2 = jnp.min(jnp.where(cos2 >= v2, lane, ne), axis=-1, keepdims=True)

        # reference gate = sum of the softmaxed top-2 probs == exactly 1.0 per
        # selected expert, so the gate is a pure 0/1 mask shared by both hemispheres.
        i1s = jnp.concatenate([i1, i1], axis=0)                      # (2*C2, 1)
        i2s = jnp.concatenate([i2, i2], axis=0)
        gate = jnp.logical_or(colid == i1s, colid == i2s).astype(F32)  # (2*C2, NE*E)

        allo = jnp.dot(x, weall_ref[...], preferred_element_type=F32) + beall_ref[...]
        x = jnp.dot(gate * allo, sel, preferred_element_type=F32) + x   # fold + residual

    out_ref[0] = x


# ----------------------------------------------------------------------------
# classification head: Linear -> ELU -> Linear -> ELU -> Linear (dropout = id)
# ----------------------------------------------------------------------------
def head_kernel(x_ref, w1_ref, b1_ref, w2_ref, b2_ref, w3_ref, b3_ref, o_ref):
    def elu(h):
        return jnp.where(h > 0, h, jnp.exp(jnp.minimum(h, 0.0)) - 1.0)

    h = jnp.dot(x_ref[...], w1_ref[...], preferred_element_type=F32) + b1_ref[...]
    h = elu(h)
    h = jnp.dot(h, w2_ref[...], preferred_element_type=F32) + b2_ref[...]
    h = elu(h)
    o_ref[...] = jnp.dot(h, w3_ref[...], preferred_element_type=F32) + b3_ref[...]


# ----------------------------------------------------------------------------
# synthetic "torch-like" parameters + one-time preparation into kernel layout
# ----------------------------------------------------------------------------
def init_raw_params(key, *, channel=70, input_size=16, output_size=16,
                    n_classes=4, num_blocks=2, expert_dim=32):
    T, O = input_size, output_size
    keys = iter(jax.random.split(key, 512))

    def nrm(shape, scale=0.1):
        return (scale * jax.random.normal(next(keys), shape)).astype(F32)

    raw = {
        'dshs': {
            # BatchNorm1d(input_size) eval-mode stats / affine (torch defaults)
            'gamma_l': jnp.ones((T,), F32), 'beta_l': jnp.zeros((T,), F32),
            'mean_l': jnp.zeros((T,), F32), 'var_l': jnp.ones((T,), F32),
            'gamma_r': jnp.ones((T,), F32), 'beta_r': jnp.zeros((T,), F32),
            'mean_r': jnp.zeros((T,), F32), 'var_r': jnp.ones((T,), F32),
            # two GraphConvolution layers (Chebynet K=2; both adjacencies are identity)
            'w0': nrm((T, O)), 'b0': nrm((1, O), 0.01),
            'w1': nrm((T, O)), 'b1': nrm((1, O), 0.01),
        },
        'blocks': [],
        'head': {
            'w1': nrm((channel * O, 256)), 'b1': nrm((1, 256), 0.01),
            'w2': nrm((256, 32)), 'b2': nrm((1, 32), 0.01),
            'w3': nrm((32, n_classes)), 'b3': nrm((1, n_classes), 0.01),
        },
    }
    for _ in range(num_blocks):
        cha = {k: nrm((O, O)) for k in ('wq', 'wk', 'wv', 'wp', 'wres')}
        cha.update({k: nrm((1, O), 0.01) for k in ('bq', 'bk', 'bv', 'bp', 'bres')})
        moe = {
            'wr': nrm((2 * O, expert_dim)),               # router Linear(2*O, ED), (in, out)
            'br': nrm((1, expert_dim), 0.01),
            'centers': nrm((channel, expert_dim), 1.0),   # expert_centers
            'we': nrm((channel, O, O)),                   # per-expert Linear weight, (in, out)
            'be': nrm((channel, O), 0.01),
        }
        raw['blocks'].append({'cha': cha, 'moe': moe})
    return raw


def prepare_params(raw, *, bn_eps=1e-5):
    """Fold / concatenate raw module parameters into kernel-ready form (run once)."""
    d = raw['dshs']
    T, O = d['w0'].shape
    ne = raw['blocks'][0]['moe']['centers'].shape[0]    # num experts == channel
    c2 = ne // 2
    inv_scale = 1.0 / math.sqrt(O)                      # num_heads = 1 -> head_dim = E

    def bn_affine(g, b, m, v):
        scale = g / jnp.sqrt(v + bn_eps)
        return scale.reshape(1, T), (b - m * scale).reshape(1, T)

    sl, shl = bn_affine(d['gamma_l'], d['beta_l'], d['mean_l'], d['var_l'])
    sr, shr = bn_affine(d['gamma_r'], d['beta_r'], d['mean_r'], d['var_r'])

    params = {
        # per-row BN affine for the stacked [left ; right] layout
        'bn_scale': jnp.concatenate([jnp.broadcast_to(sl, (c2, T)),
                                     jnp.broadcast_to(sr, (c2, T))], axis=0),
        'bn_shift': jnp.concatenate([jnp.broadcast_to(shl, (c2, T)),
                                     jnp.broadcast_to(shr, (c2, T))], axis=0),
        'wg': d['w0'] + d['w1'],                 # x@w0 + x@w1 == x@(w0+w1)
        'bg': -(d['b0'] + d['b1']),              # GraphConvolution subtracts its bias
        'sel': jnp.tile(jnp.eye(O, dtype=F32), (ne, 1)),                  # (NE*O, O)
        'colid': jnp.repeat(jnp.arange(ne, dtype=jnp.int32), O).reshape(1, ne * O),
        'blocks': [],
        'head': dict(raw['head']),
    }
    for blk in raw['blocks']:
        c, m = blk['cha'], blk['moe']
        cen = m['centers']
        cen_n = cen / jnp.maximum(jnp.sqrt(jnp.sum(cen * cen, axis=-1, keepdims=True)), 1e-12)
        params['blocks'].append({
            # [wq/sqrt(E) | wk | wv | wres] -> one projection matmul, scale pre-folded
            'w_qkvr': jnp.concatenate([c['wq'] * inv_scale, c['wk'], c['wv'], c['wres']],
                                      axis=1),                              # (O, 4O)
            'bq': c['bq'] * inv_scale, 'bk': c['bk'], 'bv': c['bv'], 'bres': c['bres'],
            'wp': c['wp'], 'bp': c['bp'],
            'wr_cat': jnp.concatenate([m['wr'][:O], m['wr'][O:]], axis=1),  # (O, 2*ED)
            'br': m['br'],
            'cen_n': cen_n.T,                                               # (ED, NE)
            'we_all': jnp.transpose(m['we'], (1, 0, 2)).reshape(O, ne * O), # (O, NE*O)
            'be_all': m['be'].reshape(1, ne * O),
        })
    return params


# ----------------------------------------------------------------------------
# full forward pass: one fused backbone pallas_call + one head pallas_call
# ----------------------------------------------------------------------------
@jax.jit
def sharelink_forward(params, x_l, x_r):
    B, C2, T = x_l.shape
    O = params['wg'].shape[1]
    nc = params['head']['b3'].shape[1]
    num_blocks = len(params['blocks'])

    # Stack hemispheres along the channel (sublane) axis once; rows [0:C2] = left,
    # [C2:2*C2] = right -- exactly torch.cat([x_l, x_r], dim=1) ordering.
    x = jnp.concatenate([x_l, x_r], axis=1)                     # (B, 2*C2, T)

    inputs = [x, params['bn_scale'], params['bn_shift'],
              params['wg'], params['bg'], params['sel'], params['colid']]
    for blk in params['blocks']:
        inputs += [blk[k] for k in _BLOCK_KEYS]

    def full_spec(a):
        return pl.BlockSpec(a.shape, lambda b, n=a.ndim: (0,) * n)

    in_specs = [pl.BlockSpec((1, 2 * C2, T), lambda b: (b, 0, 0))]
    in_specs += [full_spec(a) for a in inputs[1:]]

    y = pl.pallas_call(
        functools.partial(backbone_kernel, num_blocks=num_blocks, c2=C2),
        grid=(B,),
        in_specs=in_specs,
        out_specs=pl.BlockSpec((1, 2 * C2, O), lambda b: (b, 0, 0)),
        out_shape=jax.ShapeDtypeStruct((B, 2 * C2, O), F32),
        compiler_params=pltpu.CompilerParams(
            dimension_semantics=("parallel",)),   # v7x: batch split over both TCs
    )(*inputs)

    # Single backbone output; the classifier input is a free contiguous flatten
    # (matches torch cat(dim=1) + .view(B, -1)).  No inter-kernel concatenate.
    feat = y.reshape(B, 2 * C2 * O)

    h = params['head']
    head_inputs = (feat, h['w1'], h['b1'], h['w2'], h['b2'], h['w3'], h['b3'])
    head_specs = [pl.BlockSpec(a.shape, lambda i, n=a.ndim: (0,) * n) for a in head_inputs]
    out = pl.pallas_call(
        head_kernel,
        grid=(1,),
        in_specs=head_specs,
        out_specs=pl.BlockSpec((B, nc), lambda i: (0, 0)),
        out_shape=jax.ShapeDtypeStruct((B, nc), F32),
        compiler_params=pltpu.CompilerParams(
            dimension_semantics=("arbitrary",)),
    )(*head_inputs)
    return out


# ----------------------------------------------------------------------------
if __name__ == "__main__":
    # channel=70 is implied by the hard-coded 70*output_size in ClassificationHead;
    # each hemisphere carries channel/2 = 35 electrodes.
    batch, channel, input_size, output_size, n_classes = 2, 70, 16, 16, 4
    c2 = channel // 2

    key = jax.random.PRNGKey(0)
    kx, kp = jax.random.split(key)
    kxl, kxr = jax.random.split(kx)
    x_l = jax.random.normal(kxl, (batch, c2, input_size), F32)
    x_r = jax.random.normal(kxr, (batch, c2, input_size), F32)

    raw = init_raw_params(kp, channel=channel, input_size=input_size,
                          output_size=output_size, n_classes=n_classes,
                          num_blocks=2, expert_dim=32)
    params = prepare_params(raw)

    out = sharelink_forward(params, x_l, x_r)
    jax.block_until_ready(out)
    assert out.shape == (batch, n_classes)
    print("KERNEL_OK")
</pallas_src>

<mosaic_0001>
module attributes {stable_mosaic.version = 11 : i64} {
  func.func @backbone_kernel(%arg0: i32, %arg1: memref<1x70x16xf32, #tpu.memory_space<vmem>>, %arg2: memref<70x16xf32, #tpu.memory_space<vmem>>, %arg3: memref<70x16xf32, #tpu.memory_space<vmem>>, %arg4: memref<16x16xf32, #tpu.memory_space<vmem>>, %arg5: memref<1x16xf32, #tpu.memory_space<vmem>>, %arg6: memref<1120x16xf32, #tpu.memory_space<vmem>>, %arg7: memref<1x1120xi32, #tpu.memory_space<vmem>>, %arg8: memref<16x64xf32, #tpu.memory_space<vmem>>, %arg9: memref<1x16xf32, #tpu.memory_space<vmem>>, %arg10: memref<1x16xf32, #tpu.memory_space<vmem>>, %arg11: memref<1x16xf32, #tpu.memory_space<vmem>>, %arg12: memref<1x16xf32, #tpu.memory_space<vmem>>, %arg13: memref<16x16xf32, #tpu.memory_space<vmem>>, %arg14: memref<1x16xf32, #tpu.memory_space<vmem>>, %arg15: memref<16x64xf32, #tpu.memory_space<vmem>>, %arg16: memref<1x32xf32, #tpu.memory_space<vmem>>, %arg17: memref<32x70xf32, #tpu.memory_space<vmem>>, %arg18: memref<16x1120xf32, #tpu.memory_space<vmem>>, %arg19: memref<1x1120xf32, #tpu.memory_space<vmem>>, %arg20: memref<16x64xf32, #tpu.memory_space<vmem>>, %arg21: memref<1x16xf32, #tpu.memory_space<vmem>>, %arg22: memref<1x16xf32, #tpu.memory_space<vmem>>, %arg23: memref<1x16xf32, #tpu.memory_space<vmem>>, %arg24: memref<1x16xf32, #tpu.memory_space<vmem>>, %arg25: memref<16x16xf32, #tpu.memory_space<vmem>>, %arg26: memref<1x16xf32, #tpu.memory_space<vmem>>, %arg27: memref<16x64xf32, #tpu.memory_space<vmem>>, %arg28: memref<1x32xf32, #tpu.memory_space<vmem>>, %arg29: memref<32x70xf32, #tpu.memory_space<vmem>>, %arg30: memref<16x1120xf32, #tpu.memory_space<vmem>>, %arg31: memref<1x1120xf32, #tpu.memory_space<vmem>>, %arg32: memref<1x70x16xf32, #tpu.memory_space<vmem>>) attributes {dimension_semantics = [#tpu.dimension_semantics<parallel>], iteration_bounds = array<i64: 2>, scalar_prefetch = 0 : i64, scratch_operands = 0 : i64, tpu.core_type = #tpu.core_type<tc>, window_params = [{transform_indices = @transform_0, window_bounds = array<i64: 1, 70, 16>}, {pipeline_mode = #tpu.pipeline_mode<synchronous>, transform_indices = @transform_1, window_bounds = array<i64: 70, 16>}, {pipeline_mode = #tpu.pipeline_mode<synchronous>, transform_indices = @transform_2, window_bounds = array<i64: 70, 16>}, {pipeline_mode = #tpu.pipeline_mode<synchronous>, transform_indices = @transform_3, window_bounds = array<i64: 16, 16>}, {pipeline_mode = #tpu.pipeline_mode<synchronous>, transform_indices = @transform_4, window_bounds = array<i64: 1, 16>}, {pipeline_mode = #tpu.pipeline_mode<synchronous>, transform_indices = @transform_5, window_bounds = array<i64: 1120, 16>}, {pipeline_mode = #tpu.pipeline_mode<synchronous>, transform_indices = @transform_6, window_bounds = array<i64: 1, 1120>}, {pipeline_mode = #tpu.pipeline_mode<synchronous>, transform_indices = @transform_7, window_bounds = array<i64: 16, 64>}, {pipeline_mode = #tpu.pipeline_mode<synchronous>, transform_indices = @transform_8, window_bounds = array<i64: 1, 16>}, {pipeline_mode = #tpu.pipeline_mode<synchronous>, transform_indices = @transform_9, window_bounds = array<i64: 1, 16>}, {pipeline_mode = #tpu.pipeline_mode<synchronous>, transform_indices = @transform_10, window_bounds = array<i64: 1, 16>}, {pipeline_mode = #tpu.pipeline_mode<synchronous>, transform_indices = @transform_11, window_bounds = array<i64: 1, 16>}, {pipeline_mode = #tpu.pipeline_mode<synchronous>, transform_indices = @transform_12, window_bounds = array<i64: 16, 16>}, {pipeline_mode = #tpu.pipeline_mode<synchronous>, transform_indices = @transform_13, window_bounds = array<i64: 1, 16>}, {pipeline_mode = #tpu.pipeline_mode<synchronous>, transform_indices = @transform_14, window_bounds = array<i64: 16, 64>}, {pipeline_mode = #tpu.pipeline_mode<synchronous>, transform_indices = @transform_15, window_bounds = array<i64: 1, 32>}, {pipeline_mode = #tpu.pipeline_mode<synchronous>, transform_indices = @transform_16, window_bounds = array<i64: 32, 70>}, {pipeline_mode = #tpu.pipeline_mode<synchronous>, transform_indices = @transform_17, window_bounds = array<i64: 16, 1120>}, {pipeline_mode = #tpu.pipeline_mode<synchronous>, transform_indices = @transform_18, window_bounds = array<i64: 1, 1120>}, {pipeline_mode = #tpu.pipeline_mode<synchronous>, transform_indices = @transform_19, window_bounds = array<i64: 16, 64>}, {pipeline_mode = #tpu.pipeline_mode<synchronous>, transform_indices = @transform_20, window_bounds = array<i64: 1, 16>}, {pipeline_mode = #tpu.pipeline_mode<synchronous>, transform_indices = @transform_21, window_bounds = array<i64: 1, 16>}, {pipeline_mode = #tpu.pipeline_mode<synchronous>, transform_indices = @transform_22, window_bounds = array<i64: 1, 16>}, {pipeline_mode = #tpu.pipeline_mode<synchronous>, transform_indices = @transform_23, window_bounds = array<i64: 1, 16>}, {pipeline_mode = #tpu.pipeline_mode<synchronous>, transform_indices = @transform_24, window_bounds = array<i64: 16, 16>}, {pipeline_mode = #tpu.pipeline_mode<synchronous>, transform_indices = @transform_25, window_bounds = array<i64: 1, 16>}, {pipeline_mode = #tpu.pipeline_mode<synchronous>, transform_indices = @transform_26, window_bounds = array<i64: 16, 64>}, {pipeline_mode = #tpu.pipeline_mode<synchronous>, transform_indices = @transform_27, window_bounds = array<i64: 1, 32>}, {pipeline_mode = #tpu.pipeline_mode<synchronous>, transform_indices = @transform_28, window_bounds = array<i64: 32, 70>}, {pipeline_mode = #tpu.pipeline_mode<synchronous>, transform_indices = @transform_29, window_bounds = array<i64: 16, 1120>}, {pipeline_mode = #tpu.pipeline_mode<synchronous>, transform_indices = @transform_30, window_bounds = array<i64: 1, 1120>}, {transform_indices = @transform_31, window_bounds = array<i64: 1, 70, 16>}]} {
    %c0 = arith.constant 0 : index
    %c0_0 = arith.constant 0 : index
    %0 = vector.load %arg6[%c0, %c0_0] : memref<1120x16xf32, #tpu.memory_space<vmem>>, vector<1120x16xf32>
    %c0_1 = arith.constant 0 : index
    %c0_2 = arith.constant 0 : index
    %1 = vector.load %arg7[%c0_1, %c0_2] : memref<1x1120xi32, #tpu.memory_space<vmem>>, vector<1x1120xi32>
    %c0_3 = arith.constant 0 : index
    %c0_4 = arith.constant 0 : index
    %c0_5 = arith.constant 0 : index
    %2 = vector.load %arg1[%c0_3, %c0_4, %c0_5] : memref<1x70x16xf32, #tpu.memory_space<vmem>>, vector<1x70x16xf32>
    %3 = vector.shape_cast %2 : vector<1x70x16xf32> to vector<70x16xf32>
    %c0_6 = arith.constant 0 : index
    %c0_7 = arith.constant 0 : index
    %4 = vector.load %arg2[%c0_6, %c0_7] : memref<70x16xf32, #tpu.memory_space<vmem>>, vector<70x16xf32>
    %5 = arith.mulf %3, %4 : vector<70x16xf32>
    %c0_8 = arith.constant 0 : index
    %c0_9 = arith.constant 0 : index
    %6 = vector.load %arg3[%c0_8, %c0_9] : memref<70x16xf32, #tpu.memory_space<vmem>>, vector<70x16xf32>
    %7 = arith.addf %5, %6 : vector<70x16xf32>
    %c0_10 = arith.constant 0 : index
    %c0_11 = arith.constant 0 : index
    %8 = vector.load %arg4[%c0_10, %c0_11] : memref<16x16xf32, #tpu.memory_space<vmem>>, vector<16x16xf32>
    %cst = arith.constant dense<0.000000e+00> : vector<70x16xf32>
    %9 = tpu.matmul %7, %8, %cst {dimension_numbers = #tpu.dot_dimension_numbers<[1], [0], [0], [1], [0, 0, 1, 1], [], []>} : vector<70x16xf32>, vector<16x16xf32>, vector<70x16xf32> -> vector<70x16xf32>
    %c0_12 = arith.constant 0 : index
    %c0_13 = arith.constant 0 : index
    %10 = vector.load %arg5[%c0_12, %c0_13] : memref<1x16xf32, #tpu.memory_space<vmem>>, vector<1x16xf32>
    %11 = vector.broadcast %10 : vector<1x16xf32> to vector<70x16xf32>
    %12 = arith.addf %9, %11 : vector<70x16xf32>
    %cst_14 = arith.constant 0.000000e+00 : f32
    %13 = vector.broadcast %cst_14 : f32 to vector<70x16xf32>
    %14 = arith.maximumf %12, %13 : vector<70x16xf32>
    %c0_15 = arith.constant 0 : index
    %c0_16 = arith.constant 0 : index
    %15 = vector.load %arg8[%c0_15, %c0_16] : memref<16x64xf32, #tpu.memory_space<vmem>>, vector<16x64xf32>
    %cst_17 = arith.constant dense<0.000000e+00> : vector<70x64xf32>
    %16 = tpu.matmul %14, %15, %cst_17 {dimension_numbers = #tpu.dot_dimension_numbers<[1], [0], [0], [1], [0, 0, 1, 1], [], []>} : vector<70x16xf32>, vector<16x64xf32>, vector<70x64xf32> -> vector<70x64xf32>
    %17 = vector.extract_strided_slice %16 {offsets = [0, 0], sizes = [35, 16], strides = [1, 1]} : vector<70x64xf32> to vector<35x16xf32>
    %c0_18 = arith.constant 0 : index
    %c0_19 = arith.constant 0 : index
    %18 = vector.load %arg9[%c0_18, %c0_19] : memref<1x16xf32, #tpu.memory_space<vmem>>, vector<1x16xf32>
    %19 = vector.broadcast %18 : vector<1x16xf32> to vector<35x16xf32>
    %20 = arith.addf %17, %19 : vector<35x16xf32>
    %21 = vector.extract_strided_slice %16 {offsets = [35, 16], sizes = [35, 16], strides = [1, 1]} : vector<70x64xf32> to vector<35x16xf32>
    %c0_20 = arith.constant 0 : index
    %c0_21 = arith.constant 0 : index
    %22 = vector.load %arg10[%c0_20, %c0_21] : memref<1x16xf32, #tpu.memory_space<vmem>>, vector<1x16xf32>
    %23 = vector.broadcast %22 : vector<1x16xf32> to vector<35x16xf32>
    %24 = arith.addf %21, %23 : vector<35x16xf32>
    %25 = vector.extract_strided_slice %16 {offsets = [0, 32], sizes = [35, 16], strides = [1, 1]} : vector<70x64xf32> to vector<35x16xf32>
    %26 = vector.extract_strided_slice %16 {offsets = [35, 32], sizes = [35, 16], strides = [1, 1]} : vector<70x64xf32> to vector<35x16xf32>
    %27 = arith.subf %25, %26 : vector<35x16xf32>
    %c0_22 = arith.constant 0 : index
    %c0_23 = arith.constant 0 : index
    %28 = vector.load %arg11[%c0_22, %c0_23] : memref<1x16xf32, #tpu.memory_space<vmem>>, vector<1x16xf32>
    %29 = vector.broadcast %28 : vector<1x16xf32> to vector<35x16xf32>
    %30 = arith.addf %27, %29 : vector<35x16xf32>
    %31 = vector.extract_strided_slice %16 {offsets = [0, 48], sizes = [70, 16], strides = [1, 1]} : vector<70x64xf32> to vector<70x16xf32>
    %c0_24 = arith.constant 0 : index
    %c0_25 = arith.constant 0 : index
    %32 = vector.load %arg12[%c0_24, %c0_25] : memref<1x16xf32, #tpu.memory_space<vmem>>, vector<1x16xf32>
    %33 = vector.broadcast %32 : vector<1x16xf32> to vector<70x16xf32>
    %34 = arith.addf %31, %33 : vector<70x16xf32>
    %cst_26 = arith.constant dense<0.000000e+00> : vector<35x35xf32>
    %35 = tpu.matmul %20, %24, %cst_26 {dimension_numbers = #tpu.dot_dimension_numbers<[1], [1], [0], [0], [0, 0, 1, 0], [], []>} : vector<35x16xf32>, vector<35x16xf32>, vector<35x35xf32> -> vector<35x35xf32>
    %cst_27 = arith.constant dense<0xFF800000> : vector<35xf32>
    %36 = vector.multi_reduction <maximumf>, %35, %cst_27 [1] : vector<35x35xf32> to vector<35xf32>
    %37 = vector.shape_cast %36 : vector<35xf32> to vector<35x1xf32>
    %38 = vector.broadcast %37 : vector<35x1xf32> to vector<35x35xf32>
    %39 = arith.subf %35, %38 : vector<35x35xf32>
    %40 = math.exp %39 : vector<35x35xf32>
    %cst_28 = arith.constant dense<0.000000e+00> : vector<35xf32>
    %41 = vector.multi_reduction <add>, %40, %cst_28 [1] : vector<35x35xf32> to vector<35xf32>
    %42 = vector.shape_cast %41 : vector<35xf32> to vector<35x1xf32>
    %43 = tpu.reciprocal %42 {approx = true} : vector<35x1xf32> -> vector<35x1xf32>
    %44 = vector.broadcast %43 : vector<35x1xf32> to vector<35x35xf32>
    %45 = arith.mulf %40, %44 : vector<35x35xf32>
    %cst_29 = arith.constant dense<0.000000e+00> : vector<35x16xf32>
    %46 = tpu.matmul %45, %30, %cst_29 {dimension_numbers = #tpu.dot_dimension_numbers<[1], [0], [0], [1], [0, 0, 1, 1], [], []>} : vector<35x35xf32>, vector<35x16xf32>, vector<35x16xf32> -> vector<35x16xf32>
    %cst_30 = arith.constant dense<0.000000e+00> : vector<35x16xf32>
    %47 = tpu.matmul %45, %30, %cst_30 {dimension_numbers = #tpu.dot_dimension_numbers<[0], [0], [1], [1], [0, 1, 1, 1], [], []>} : vector<35x35xf32>, vector<35x16xf32>, vector<35x16xf32> -> vector<35x16xf32>
    %48 = tpu.concatenate %46, %47 in 0 : vector<35x16xf32>, vector<35x16xf32> -> vector<70x16xf32>
    %c0_31 = arith.constant 0 : index
    %c0_32 = arith.constant 0 : index
    %49 = vector.load %arg13[%c0_31, %c0_32] : memref<16x16xf32, #tpu.memory_space<vmem>>, vector<16x16xf32>
    %cst_33 = arith.constant dense<0.000000e+00> : vector<70x16xf32>
    %50 = tpu.matmul %48, %49, %cst_33 {dimension_numbers = #tpu.dot_dimension_numbers<[1], [0], [0], [1], [0, 0, 1, 1], [], []>} : vector<70x16xf32>, vector<16x16xf32>, vector<70x16xf32> -> vector<70x16xf32>
    %c0_34 = arith.constant 0 : index
    %c0_35 = arith.constant 0 : index
    %51 = vector.load %arg14[%c0_34, %c0_35] : memref<1x16xf32, #tpu.memory_space<vmem>>, vector<1x16xf32>
    %52 = vector.broadcast %51 : vector<1x16xf32> to vector<70x16xf32>
    %53 = arith.addf %50, %52 : vector<70x16xf32>
    %54 = arith.addf %53, %34 : vector<70x16xf32>
    %c0_36 = arith.constant 0 : index
    %c0_37 = arith.constant 0 : index
    %55 = vector.load %arg15[%c0_36, %c0_37] : memref<16x64xf32, #tpu.memory_space<vmem>>, vector<16x64xf32>
    %cst_38 = arith.constant dense<0.000000e+00> : vector<70x64xf32>
    %56 = tpu.matmul %54, %55, %cst_38 {dimension_numbers = #tpu.dot_dimension_numbers<[1], [0], [0], [1], [0, 0, 1, 1], [], []>} : vector<70x16xf32>, vector<16x64xf32>, vector<70x64xf32> -> vector<70x64xf32>
    %57 = vector.extract_strided_slice %56 {offsets = [0, 0], sizes = [35, 32], strides = [1, 1]} : vector<70x64xf32> to vector<35x32xf32>
    %58 = vector.extract_strided_slice %56 {offsets = [35, 32], sizes = [35, 32], strides = [1, 1]} : vector<70x64xf32> to vector<35x32xf32>
    %59 = arith.addf %57, %58 : vector<35x32xf32>
    %c0_39 = arith.constant 0 : index
    %c0_40 = arith.constant 0 : index
    %60 = vector.load %arg16[%c0_39, %c0_40] : memref<1x32xf32, #tpu.memory_space<vmem>>, vector<1x32xf32>
    %61 = vector.broadcast %60 : vector<1x32xf32> to vector<35x32xf32>
    %62 = arith.addf %59, %61 : vector<35x32xf32>
    %63 = arith.mulf %62, %62 : vector<35x32xf32>
    %cst_41 = arith.constant dense<0.000000e+00> : vector<35xf32>
    %64 = vector.multi_reduction <add>, %63, %cst_41 [1] : vector<35x32xf32> to vector<35xf32>
    %65 = vector.shape_cast %64 : vector<35xf32> to vector<35x1xf32>
    %cst_42 = arith.constant 1.000000e-24 : f32
    %66 = vector.broadcast %cst_42 : f32 to vector<35x1xf32>
    %67 = arith.maximumf %65, %66 : vector<35x1xf32>
    %68 = math.rsqrt %67 : vector<35x1xf32>
    %69 = vector.broadcast %68 : vector<35x1xf32> to vector<35x32xf32>
    %70 = arith.mulf %62, %69 : vector<35x32xf32>
    %c0_43 = arith.constant 0 : index
    %c0_44 = arith.constant 0 : index
    %71 = vector.load %arg17[%c0_43, %c0_44] : memref<32x70xf32, #tpu.memory_space<vmem>>, vector<32x70xf32>
    %cst_45 = arith.constant dense<0.000000e+00> : vector<35x70xf32>
    %72 = tpu.matmul %70, %71, %cst_45 {dimension_numbers = #tpu.dot_dimension_numbers<[1], [0], [0], [1], [0, 0, 1, 1], [], []>} : vector<35x32xf32>, vector<32x70xf32>, vector<35x70xf32> -> vector<35x70xf32>
    %73 = tpu.iota {dimensions = array<i32: 1>} : vector<35x70xi32>
    %cst_46 = arith.constant dense<0xFF800000> : vector<35xf32>
    %74 = vector.multi_reduction <maximumf>, %72, %cst_46 [1] : vector<35x70xf32> to vector<35xf32>
    %75 = vector.shape_cast %74 : vector<35xf32> to vector<35x1xf32>
    %76 = vector.broadcast %75 : vector<35x1xf32> to vector<35x70xf32>
    %77 = arith.cmpf oge, %72, %76 : vector<35x70xf32>
    %c70_i32 = arith.constant 70 : i32
    %78 = vector.broadcast %c70_i32 : i32 to vector<35x70xi32>
    %79 = arith.select %77, %73, %78 : vector<35x70xi1>, vector<35x70xi32>
    %cst_47 = arith.constant dense<2147483647> : vector<35xi32>
    %80 = vector.multi_reduction <minsi>, %79, %cst_47 [1] : vector<35x70xi32> to vector<35xi32>
    %81 = vector.shape_cast %80 : vector<35xi32> to vector<35x1xi32>
    %82 = vector.broadcast %81 : vector<35x1xi32> to vector<35x70xi32>
    %83 = arith.cmpi eq, %73, %82 : vector<35x70xi32>
    %cst_48 = arith.constant -1.000000e+30 : f32
    %84 = vector.broadcast %cst_48 : f32 to vector<35x70xf32>
    %85 = arith.select %83, %84, %72 : vector<35x70xi1>, vector<35x70xf32>
    %cst_49 = arith.constant dense<0xFF800000> : vector<35xf32>
    %86 = vector.multi_reduction <maximumf>, %85, %cst_49 [1] : vector<35x70xf32> to vector<35xf32>
    %87 = vector.shape_cast %86 : vector<35xf32> to vector<35x1xf32>
    %88 = vector.broadcast %87 : vector<35x1xf32> to vector<35x70xf32>
    %89 = arith.cmpf oge, %85, %88 : vector<35x70xf32>
    %c70_i32_50 = arith.constant 70 : i32
    %90 = vector.broadcast %c70_i32_50 : i32 to vector<35x70xi32>
    %91 = arith.select %89, %73, %90 : vector<35x70xi1>, vector<35x70xi32>
    %cst_51 = arith.constant dense<2147483647> : vector<35xi32>
    %92 = vector.multi_reduction <minsi>, %91, %cst_51 [1] : vector<35x70xi32> to vector<35xi32>
    %93 = vector.shape_cast %92 : vector<35xi32> to vector<35x1xi32>
    %94 = tpu.concatenate %81, %81 in 0 : vector<35x1xi32>, vector<35x1xi32> -> vector<70x1xi32>
    %95 = tpu.concatenate %93, %93 in 0 : vector<35x1xi32>, vector<35x1xi32> -> vector<70x1xi32>
    %96 = vector.broadcast %1 : vector<1x1120xi32> to vector<70x1120xi32>
    %97 = vector.broadcast %94 : vector<70x1xi32> to vector<70x1120xi32>
    %98 = arith.cmpi eq, %96, %97 : vector<70x1120xi32>
    %99 = vector.broadcast %1 : vector<1x1120xi32> to vector<70x1120xi32>
    %100 = vector.broadcast %95 : vector<70x1xi32> to vector<70x1120xi32>
    %101 = arith.cmpi eq, %99, %100 : vector<70x1120xi32>
    %102 = arith.ori %98, %101 : vector<70x1120xi1>
    %103 = arith.extui %102 : vector<70x1120xi1> to vector<70x1120xi32>
    %104 = arith.sitofp %103 : vector<70x1120xi32> to vector<70x1120xf32>
    %c0_52 = arith.constant 0 : index
    %c0_53 = arith.constant 0 : index
    %105 = vector.load %arg18[%c0_52, %c0_53] : memref<16x1120xf32, #tpu.memory_space<vmem>>, vector<16x1120xf32>
    %cst_54 = arith.constant dense<0.000000e+00> : vector<70x1120xf32>
    %106 = tpu.matmul %54, %105, %cst_54 {dimension_numbers = #tpu.dot_dimension_numbers<[1], [0], [0], [1], [0, 0, 1, 1], [], []>} : vector<70x16xf32>, vector<16x1120xf32>, vector<70x1120xf32> -> vector<70x1120xf32>
    %c0_55 = arith.constant 0 : index
    %c0_56 = arith.constant 0 : index
    %107 = vector.load %arg19[%c0_55, %c0_56] : memref<1x1120xf32, #tpu.memory_space<vmem>>, vector<1x1120xf32>
    %108 = vector.broadcast %107 : vector<1x1120xf32> to vector<70x1120xf32>
    %109 = arith.addf %106, %108 : vector<70x1120xf32>
    %110 = arith.mulf %104, %109 : vector<70x1120xf32>
    %cst_57 = arith.constant dense<0.000000e+00> : vector<70x16xf32>
    %111 = tpu.matmul %110, %0, %cst_57 {dimension_numbers = #tpu.dot_dimension_numbers<[1], [0], [0], [1], [0, 0, 1, 1], [], []>} : vector<70x1120xf32>, vector<1120x16xf32>, vector<70x16xf32> -> vector<70x16xf32>
    %112 = arith.addf %111, %54 : vector<70x16xf32>
    %c0_58 = arith.constant 0 : index
    %c0_59 = arith.constant 0 : index
    %113 = vector.load %arg20[%c0_58, %c0_59] : memref<16x64xf32, #tpu.memory_space<vmem>>, vector<16x64xf32>
    %cst_60 = arith.constant dense<0.000000e+00> : vector<70x64xf32>
    %114 = tpu.matmul %112, %113, %cst_60 {dimension_numbers = #tpu.dot_dimension_numbers<[1], [0], [0], [1], [0, 0, 1, 1], [], []>} : vector<70x16xf32>, vector<16x64xf32>, vector<70x64xf32> -> vector<70x64xf32>
    %115 = vector.extract_strided_slice %114 {offsets = [0, 0], sizes = [35, 16], strides = [1, 1]} : vector<70x64xf32> to vector<35x16xf32>
    %c0_61 = arith.constant 0 : index
    %c0_62 = arith.constant 0 : index
    %116 = vector.load %arg21[%c0_61, %c0_62] : memref<1x16xf32, #tpu.memory_space<vmem>>, vector<1x16xf32>
    %117 = vector.broadcast %116 : vector<1x16xf32> to vector<35x16xf32>
    %118 = arith.addf %115, %117 : vector<35x16xf32>
    %119 = vector.extract_strided_slice %114 {offsets = [35, 16], sizes = [35, 16], strides = [1, 1]} : vector<70x64xf32> to vector<35x16xf32>
    %c0_63 = arith.constant 0 : index
    %c0_64 = arith.constant 0 : index
    %120 = vector.load %arg22[%c0_63, %c0_64] : memref<1x16xf32, #tpu.memory_space<vmem>>, vector<1x16xf32>
    %121 = vector.broadcast %120 : vector<1x16xf32> to vector<35x16xf32>
    %122 = arith.addf %119, %121 : vector<35x16xf32>
    %123 = vector.extract_strided_slice %114 {offsets = [0, 32], sizes = [35, 16], strides = [1, 1]} : vector<70x64xf32> to vector<35x16xf32>
    %124 = vector.extract_strided_slice %114 {offsets = [35, 32], sizes = [35, 16], strides = [1, 1]} : vector<70x64xf32> to vector<35x16xf32>
    %125 = arith.subf %123, %124 : vector<35x16xf32>
    %c0_65 = arith.constant 0 : index
    %c0_66 = arith.constant 0 : index
    %126 = vector.load %arg23[%c0_65, %c0_66] : memref<1x16xf32, #tpu.memory_space<vmem>>, vector<1x16xf32>
    %127 = vector.broadcast %126 : vector<1x16xf32> to vector<35x16xf32>
    %128 = arith.addf %125, %127 : vector<35x16xf32>
    %129 = vector.extract_strided_slice %114 {offsets = [0, 48], sizes = [70, 16], strides = [1, 1]} : vector<70x64xf32> to vector<70x16xf32>
    %c0_67 = arith.constant 0 : index
    %c0_68 = arith.constant 0 : index
    %130 = vector.load %arg24[%c0_67, %c0_68] : memref<1x16xf32, #tpu.memory_space<vmem>>, vector<1x16xf32>
    %131 = vector.broadcast %130 : vector<1x16xf32> to vector<70x16xf32>
    %132 = arith.addf %129, %131 : vector<70x16xf32>
    %cst_69 = arith.constant dense<0.000000e+00> : vector<35x35xf32>
    %133 = tpu.matmul %118, %122, %cst_69 {dimension_numbers = #tpu.dot_dimension_numbers<[1], [1], [0], [0], [0, 0, 1, 0], [], []>} : vector<35x16xf32>, vector<35x16xf32>, vector<35x35xf32> -> vector<35x35xf32>
    %cst_70 = arith.constant dense<0xFF800000> : vector<35xf32>
    %134 = vector.multi_reduction <maximumf>, %133, %cst_70 [1] : vector<35x35xf32> to vector<35xf32>
    %135 = vector.shape_cast %134 : vector<35xf32> to vector<35x1xf32>
    %136 = vector.broadcast %135 : vector<35x1xf32> to vector<35x35xf32>
    %137 = arith.subf %133, %136 : vector<35x35xf32>
    %138 = math.exp %137 : vector<35x35xf32>
    %cst_71 = arith.constant dense<0.000000e+00> : vector<35xf32>
    %139 = vector.multi_reduction <add>, %138, %cst_71 [1] : vector<35x35xf32> to vector<35xf32>
    %140 = vector.shape_cast %139 : vector<35xf32> to vector<35x1xf32>
    %141 = tpu.reciprocal %140 {approx = true} : vector<35x1xf32> -> vector<35x1xf32>
    %142 = vector.broadcast %141 : vector<35x1xf32> to vector<35x35xf32>
    %143 = arith.mulf %138, %142 : vector<35x35xf32>
    %cst_72 = arith.constant dense<0.000000e+00> : vector<35x16xf32>
    %144 = tpu.matmul %143, %128, %cst_72 {dimension_numbers = #tpu.dot_dimension_numbers<[1], [0], [0], [1], [0, 0, 1, 1], [], []>} : vector<35x35xf32>, vector<35x16xf32>, vector<35x16xf32> -> vector<35x16xf32>
    %cst_73 = arith.constant dense<0.000000e+00> : vector<35x16xf32>
    %145 = tpu.matmul %143, %128, %cst_73 {dimension_numbers = #tpu.dot_dimension_numbers<[0], [0], [1], [1], [0, 1, 1, 1], [], []>} : vector<35x35xf32>, vector<35x16xf32>, vector<35x16xf32> -> vector<35x16xf32>
    %146 = tpu.concatenate %144, %145 in 0 : vector<35x16xf32>, vector<35x16xf32> -> vector<70x16xf32>
    %c0_74 = arith.constant 0 : index
    %c0_75 = arith.constant 0 : index
    %147 = vector.load %arg25[%c0_74, %c0_75] : memref<16x16xf32, #tpu.memory_space<vmem>>, vector<16x16xf32>
    %cst_76 = arith.constant dense<0.000000e+00> : vector<70x16xf32>
    %148 = tpu.matmul %146, %147, %cst_76 {dimension_numbers = #tpu.dot_dimension_numbers<[1], [0], [0], [1], [0, 0, 1, 1], [], []>} : vector<70x16xf32>, vector<16x16xf32>, vector<70x16xf32> -> vector<70x16xf32>
    %c0_77 = arith.constant 0 : index
    %c0_78 = arith.constant 0 : index
    %149 = vector.load %arg26[%c0_77, %c0_78] : memref<1x16xf32, #tpu.memory_space<vmem>>, vector<1x16xf32>
    %150 = vector.broadcast %149 : vector<1x16xf32> to vector<70x16xf32>
    %151 = arith.addf %148, %150 : vector<70x16xf32>
    %152 = arith.addf %151, %132 : vector<70x16xf32>
    %c0_79 = arith.constant 0 : index
    %c0_80 = arith.constant 0 : index
    %153 = vector.load %arg27[%c0_79, %c0_80] : memref<16x64xf32, #tpu.memory_space<vmem>>, vector<16x64xf32>
    %cst_81 = arith.constant dense<0.000000e+00> : vector<70x64xf32>
    %154 = tpu.matmul %152, %153, %cst_81 {dimension_numbers = #tpu.dot_dimension_numbers<[1], [0], [0], [1], [0, 0, 1, 1], [], []>} : vector<70x16xf32>, vector<16x64xf32>, vector<70x64xf32> -> vector<70x64xf32>
    %155 = vector.extract_strided_slice %154 {offsets = [0, 0], sizes = [35, 32], strides = [1, 1]} : vector<70x64xf32> to vector<35x32xf32>
    %156 = vector.extract_strided_slice %154 {offsets = [35, 32], sizes = [35, 32], strides = [1, 1]} : vector<70x64xf32> to vector<35x32xf32>
    %157 = arith.addf %155, %156 : vector<35x32xf32>
    %c0_82 = arith.constant 0 : index
    %c0_83 = arith.constant 0 : index
    %158 = vector.load %arg28[%c0_82, %c0_83] : memref<1x32xf32, #tpu.memory_space<vmem>>, vector<1x32xf32>
    %159 = vector.broadcast %158 : vector<1x32xf32> to vector<35x32xf32>
    %160 = arith.addf %157, %159 : vector<35x32xf32>
    %161 = arith.mulf %160, %160 : vector<35x32xf32>
    %cst_84 = arith.constant dense<0.000000e+00> : vector<35xf32>
    %162 = vector.multi_reduction <add>, %161, %cst_84 [1] : vector<35x32xf32> to vector<35xf32>
    %163 = vector.shape_cast %162 : vector<35xf32> to vector<35x1xf32>
    %cst_85 = arith.constant 1.000000e-24 : f32
    %164 = vector.broadcast %cst_85 : f32 to vector<35x1xf32>
    %165 = arith.maximumf %163, %164 : vector<35x1xf32>
    %166 = math.rsqrt %165 : vector<35x1xf32>
    %167 = vector.broadcast %166 : vector<35x1xf32> to vector<35x32xf32>
    %168 = arith.mulf %160, %167 : vector<35x32xf32>
    %c0_86 = arith.constant 0 : index
    %c0_87 = arith.constant 0 : index
    %169 = vector.load %arg29[%c0_86, %c0_87] : memref<32x70xf32, #tpu.memory_space<vmem>>, vector<32x70xf32>
    %cst_88 = arith.constant dense<0.000000e+00> : vector<35x70xf32>
    %170 = tpu.matmul %168, %169, %cst_88 {dimension_numbers = #tpu.dot_dimension_numbers<[1], [0], [0], [1], [0, 0, 1, 1], [], []>} : vector<35x32xf32>, vector<32x70xf32>, vector<35x70xf32> -> vector<35x70xf32>
    %171 = tpu.iota {dimensions = array<i32: 1>} : vector<35x70xi32>
    %cst_89 = arith.constant dense<0xFF800000> : vector<35xf32>
    %172 = vector.multi_reduction <maximumf>, %170, %cst_89 [1] : vector<35x70xf32> to vector<35xf32>
    %173 = vector.shape_cast %172 : vector<35xf32> to vector<35x1xf32>
    %174 = vector.broadcast %173 : vector<35x1xf32> to vector<35x70xf32>
    %175 = arith.cmpf oge, %170, %174 : vector<35x70xf32>
    %c70_i32_90 = arith.constant 70 : i32
    %176 = vector.broadcast %c70_i32_90 : i32 to vector<35x70xi32>
    %177 = arith.select %175, %171, %176 : vector<35x70xi1>, vector<35x70xi32>
    %cst_91 = arith.constant dense<2147483647> : vector<35xi32>
    %178 = vector.multi_reduction <minsi>, %177, %cst_91 [1] : vector<35x70xi32> to vector<35xi32>
    %179 = vector.shape_cast %178 : vector<35xi32> to vector<35x1xi32>
    %180 = vector.broadcast %179 : vector<35x1xi32> to vector<35x70xi32>
    %181 = arith.cmpi eq, %171, %180 : vector<35x70xi32>
    %cst_92 = arith.constant -1.000000e+30 : f32
    %182 = vector.broadcast %cst_92 : f32 to vector<35x70xf32>
    %183 = arith.select %181, %182, %170 : vector<35x70xi1>, vector<35x70xf32>
    %cst_93 = arith.constant dense<0xFF800000> : vector<35xf32>
    %184 = vector.multi_reduction <maximumf>, %183, %cst_93 [1] : vector<35x70xf32> to vector<35xf32>
    %185 = vector.shape_cast %184 : vector<35xf32> to vector<35x1xf32>
    %186 = vector.broadcast %185 : vector<35x1xf32> to vector<35x70xf32>
    %187 = arith.cmpf oge, %183, %186 : vector<35x70xf32>
    %c70_i32_94 = arith.constant 70 : i32
    %188 = vector.broadcast %c70_i32_94 : i32 to vector<35x70xi32>
    %189 = arith.select %187, %171, %188 : vector<35x70xi1>, vector<35x70xi32>
    %cst_95 = arith.constant dense<2147483647> : vector<35xi32>
    %190 = vector.multi_reduction <minsi>, %189, %cst_95 [1] : vector<35x70xi32> to vector<35xi32>
    %191 = vector.shape_cast %190 : vector<35xi32> to vector<35x1xi32>
    %192 = tpu.concatenate %179, %179 in 0 : vector<35x1xi32>, vector<35x1xi32> -> vector<70x1xi32>
    %193 = tpu.concatenate %191, %191 in 0 : vector<35x1xi32>, vector<35x1xi32> -> vector<70x1xi32>
    %194 = vector.broadcast %1 : vector<1x1120xi32> to vector<70x1120xi32>
    %195 = vector.broadcast %192 : vector<70x1xi32> to vector<70x1120xi32>
    %196 = arith.cmpi eq, %194, %195 : vector<70x1120xi32>
    %197 = vector.broadcast %1 : vector<1x1120xi32> to vector<70x1120xi32>
    %198 = vector.broadcast %193 : vector<70x1xi32> to vector<70x1120xi32>
    %199 = arith.cmpi eq, %197, %198 : vector<70x1120xi32>
    %200 = arith.ori %196, %199 : vector<70x1120xi1>
    %201 = arith.extui %200 : vector<70x1120xi1> to vector<70x1120xi32>
    %202 = arith.sitofp %201 : vector<70x1120xi32> to vector<70x1120xf32>
    %c0_96 = arith.constant 0 : index
    %c0_97 = arith.constant 0 : index
    %203 = vector.load %arg30[%c0_96, %c0_97] : memref<16x1120xf32, #tpu.memory_space<vmem>>, vector<16x1120xf32>
    %cst_98 = arith.constant dense<0.000000e+00> : vector<70x1120xf32>
    %204 = tpu.matmul %152, %203, %cst_98 {dimension_numbers = #tpu.dot_dimension_numbers<[1], [0], [0], [1], [0, 0, 1, 1], [], []>} : vector<70x16xf32>, vector<16x1120xf32>, vector<70x1120xf32> -> vector<70x1120xf32>
    %c0_99 = arith.constant 0 : index
    %c0_100 = arith.constant 0 : index
    %205 = vector.load %arg31[%c0_99, %c0_100] : memref<1x1120xf32, #tpu.memory_space<vmem>>, vector<1x1120xf32>
    %206 = vector.broadcast %205 : vector<1x1120xf32> to vector<70x1120xf32>
    %207 = arith.addf %204, %206 : vector<70x1120xf32>
    %208 = arith.mulf %202, %207 : vector<70x1120xf32>
    %cst_101 = arith.constant dense<0.000000e+00> : vector<70x16xf32>
    %209 = tpu.matmul %208, %0, %cst_101 {dimension_numbers = #tpu.dot_dimension_numbers<[1], [0], [0], [1], [0, 0, 1, 1], [], []>} : vector<70x1120xf32>, vector<1120x16xf32>, vector<70x16xf32> -> vector<70x16xf32>
    %210 = arith.addf %209, %152 : vector<70x16xf32>
    %c0_102 = arith.constant 0 : index
    %c0_103 = arith.constant 0 : index
    %c0_104 = arith.constant 0 : index
    %211 = vector.load %arg32[%c0_102, %c0_103, %c0_104] : memref<1x70x16xf32, #tpu.memory_space<vmem>>, vector<1x70x16xf32>
    %212 = vector.shape_cast %211 : vector<1x70x16xf32> to vector<70x16xf32>
    %213 = vector.shape_cast %210 : vector<70x16xf32> to vector<1x70x16xf32>
    tpu.vector_store %arg32[%c0_102, %c0_103, %c0_104], %213 {strides = array<i32>} : memref<1x70x16xf32, #tpu.memory_space<vmem>>, vector<1x70x16xf32>,
    return
  }
  func.func @transform_0(%arg0: i32) -> (i32, i32, i32) {
    %c0_i32 = arith.constant 0 : i32
    %c0_i32_0 = arith.constant 0 : i32
    %c0_i32_1 = arith.constant 0 : i32
    return %arg0, %c0_i32, %c0_i32_0 : i32, i32, i32
  }
  func.func @transform_1(%arg0: i32) -> (i32, i32) {
    %c0_i32 = arith.constant 0 : i32
    %c0_i32_0 = arith.constant 0 : i32
    %c0_i32_1 = arith.constant 0 : i32
    return %c0_i32, %c0_i32_0 : i32, i32
  }
  func.func @transform_2(%arg0: i32) -> (i32, i32) {
    %c0_i32 = arith.constant 0 : i32
    %c0_i32_0 = arith.constant 0 : i32
    %c0_i32_1 = arith.constant 0 : i32
    return %c0_i32, %c0_i32_0 : i32, i32
  }
  func.func @transform_3(%arg0: i32) -> (i32, i32) {
    %c0_i32 = arith.constant 0 : i32
    %c0_i32_0 = arith.constant 0 : i32
    %c0_i32_1 = arith.constant 0 : i32
    return %c0_i32, %c0_i32_0 : i32, i32
  }
  func.func @transform_4(%arg0: i32) -> (i32, i32) {
    %c0_i32 = arith.constant 0 : i32
    %c0_i32_0 = arith.constant 0 : i32
    %c0_i32_1 = arith.constant 0 : i32
    return %c0_i32, %c0_i32_0 : i32, i32
  }
  func.func @transform_5(%arg0: i32) -> (i32, i32) {
    %c0_i32 = arith.constant 0 : i32
    %c0_i32_0 = arith.constant 0 : i32
    %c0_i32_1 = arith.constant 0 : i32
    return %c0_i32, %c0_i32_0 : i32, i32
  }
  func.func @transform_6(%arg0: i32) -> (i32, i32) {
    %c0_i32 = arith.constant 0 : i32
    %c0_i32_0 = arith.constant 0 : i32
    %c0_i32_1 = arith.constant 0 : i32
    return %c0_i32, %c0_i32_0 : i32, i32
  }
  func.func @transform_7(%arg0: i32) -> (i32, i32) {
    %c0_i32 = arith.constant 0 : i32
    %c0_i32_0 = arith.constant 0 : i32
    %c0_i32_1 = arith.constant 0 : i32
    return %c0_i32, %c0_i32_0 : i32, i32
  }
  func.func @transform_8(%arg0: i32) -> (i32, i32) {
    %c0_i32 = arith.constant 0 : i32
    %c0_i32_0 = arith.constant 0 : i32
    %c0_i32_1 = arith.constant 0 : i32
    return %c0_i32, %c0_i32_0 : i32, i32
  }
  func.func @transform_9(%arg0: i32) -> (i32, i32) {
    %c0_i32 = arith.constant 0 : i32
    %c0_i32_0 = arith.constant 0 : i32
    %c0_i32_1 = arith.constant 0 : i32
    return %c0_i32, %c0_i32_0 : i32, i32
  }
  func.func @transform_10(%arg0: i32) -> (i32, i32) {
    %c0_i32 = arith.constant 0 : i32
    %c0_i32_0 = arith.constant 0 : i32
    %c0_i32_1 = arith.constant 0 : i32
    return %c0_i32, %c0_i32_0 : i32, i32
  }
  func.func @transform_11(%arg0: i32) -> (i32, i32) {
    %c0_i32 = arith.constant 0 : i32
    %c0_i32_0 = arith.constant 0 : i32
    %c0_i32_1 = arith.constant 0 : i32
    return %c0_i32, %c0_i32_0 : i32, i32
  }
  func.func @transform_12(%arg0: i32) -> (i32, i32) {
    %c0_i32 = arith.constant 0 : i32
    %c0_i32_0 = arith.constant 0 : i32
    %c0_i32_1 = arith.constant 0 : i32
    return %c0_i32, %c0_i32_0 : i32, i32
  }
  func.func @transform_13(%arg0: i32) -> (i32, i32) {
    %c0_i32 = arith.constant 0 : i32
    %c0_i32_0 = arith.constant 0 : i32
    %c0_i32_1 = arith.constant 0 : i32
    return %c0_i32, %c0_i32_0 : i32, i32
  }
  func.func @transform_14(%arg0: i32) -> (i32, i32) {
    %c0_i32 = arith.constant 0 : i32
    %c0_i32_0 = arith.constant 0 : i32
    %c0_i32_1 = arith.constant 0 : i32
    return %c0_i32, %c0_i32_0 : i32, i32
  }
  func.func @transform_15(%arg0: i32) -> (i32, i32) {
    %c0_i32 = arith.constant 0 : i32
    %c0_i32_0 = arith.constant 0 : i32
    %c0_i32_1 = arith.constant 0 : i32
    return %c0_i32, %c0_i32_0 : i32, i32
  }
  func.func @transform_16(%arg0: i32) -> (i32, i32) {
    %c0_i32 = arith.constant 0 : i32
    %c0_i32_0 = arith.constant 0 : i32
    %c0_i32_1 = arith.constant 0 : i32
    return %c0_i32, %c0_i32_0 : i32, i32
  }
  func.func @transform_17(%arg0: i32) -> (i32, i32) {
    %c0_i32 = arith.constant 0 : i32
    %c0_i32_0 = arith.constant 0 : i32
    %c0_i32_1 = arith.constant 0 : i32
    return %c0_i32, %c0_i32_0 : i32, i32
  }
  func.func @transform_18(%arg0: i32) -> (i32, i32) {
    %c0_i32 = arith.constant 0 : i32
    %c0_i32_0 = arith.constant 0 : i32
    %c0_i32_1 = arith.constant 0 : i32
    return %c0_i32, %c0_i32_0 : i32, i32
  }
  func.func @transform_19(%arg0: i32) -> (i32, i32) {
    %c0_i32 = arith.constant 0 : i32
    %c0_i32_0 = arith.constant 0 : i32
    %c0_i32_1 = arith.constant 0 : i32
    return %c0_i32, %c0_i32_0 : i32, i32
  }
  func.func @transform_20(%arg0: i32) -> (i32, i32) {
    %c0_i32 = arith.constant 0 : i32
    %c0_i32_0 = arith.constant 0 : i32
    %c0_i32_1 = arith.constant 0 : i32
    return %c0_i32, %c0_i32_0 : i32, i32
  }
  func.func @transform_21(%arg0: i32) -> (i32, i32) {
    %c0_i32 = arith.constant 0 : i32
    %c0_i32_0 = arith.constant 0 : i32
    %c0_i32_1 = arith.constant 0 : i32
    return %c0_i32, %c0_i32_0 : i32, i32
  }
  func.func @transform_22(%arg0: i32) -> (i32, i32) {
    %c0_i32 = arith.constant 0 : i32
    %c0_i32_0 = arith.constant 0 : i32
    %c0_i32_1 = arith.constant 0 : i32
    return %c0_i32, %c0_i32_0 : i32, i32
  }
  func.func @transform_23(%arg0: i32) -> (i32, i32) {
    %c0_i32 = arith.constant 0 : i32
    %c0_i32_0 = arith.constant 0 : i32
    %c0_i32_1 = arith.constant 0 : i32
    return %c0_i32, %c0_i32_0 : i32, i32
  }
  func.func @transform_24(%arg0: i32) -> (i32, i32) {
    %c0_i32 = arith.constant 0 : i32
    %c0_i32_0 = arith.constant 0 : i32
    %c0_i32_1 = arith.constant 0 : i32
    return %c0_i32, %c0_i32_0 : i32, i32
  }
  func.func @transform_25(%arg0: i32) -> (i32, i32) {
    %c0_i32 = arith.constant 0 : i32
    %c0_i32_0 = arith.constant 0 : i32
    %c0_i32_1 = arith.constant 0 : i32
    return %c0_i32, %c0_i32_0 : i32, i32
  }
  func.func @transform_26(%arg0: i32) -> (i32, i32) {
    %c0_i32 = arith.constant 0 : i32
    %c0_i32_0 = arith.constant 0 : i32
    %c0_i32_1 = arith.constant 0 : i32
    return %c0_i32, %c0_i32_0 : i32, i32
  }
  func.func @transform_27(%arg0: i32) -> (i32, i32) {
    %c0_i32 = arith.constant 0 : i32
    %c0_i32_0 = arith.constant 0 : i32
    %c0_i32_1 = arith.constant 0 : i32
    return %c0_i32, %c0_i32_0 : i32, i32
  }
  func.func @transform_28(%arg0: i32) -> (i32, i32) {
    %c0_i32 = arith.constant 0 : i32
    %c0_i32_0 = arith.constant 0 : i32
    %c0_i32_1 = arith.constant 0 : i32
    return %c0_i32, %c0_i32_0 : i32, i32
  }
  func.func @transform_29(%arg0: i32) -> (i32, i32) {
    %c0_i32 = arith.constant 0 : i32
    %c0_i32_0 = arith.constant 0 : i32
    %c0_i32_1 = arith.constant 0 : i32
    return %c0_i32, %c0_i32_0 : i32, i32
  }
  func.func @transform_30(%arg0: i32) -> (i32, i32) {
    %c0_i32 = arith.constant 0 : i32
    %c0_i32_0 = arith.constant 0 : i32
    %c0_i32_1 = arith.constant 0 : i32
    return %c0_i32, %c0_i32_0 : i32, i32
  }
  func.func @transform_31(%arg0: i32) -> (i32, i32, i32) {
    %c0_i32 = arith.constant 0 : i32
    %c0_i32_0 = arith.constant 0 : i32
    %c0_i32_1 = arith.constant 0 : i32
    return %arg0, %c0_i32, %c0_i32_0 : i32, i32, i32
  }
}

module attributes {stable_mosaic.version = 11 : i64} {
  func.func @head_kernel(%arg0: i32, %arg1: memref<2x1120xf32, #tpu.memory_space<vmem>>, %arg2: memref<1120x256xf32, #tpu.memory_space<vmem>>, %arg3: memref<1x256xf32, #tpu.memory_space<vmem>>, %arg4: memref<256x32xf32, #tpu.memory_space<vmem>>, %arg5: memref<1x32xf32, #tpu.memory_space<vmem>>, %arg6: memref<32x4xf32, #tpu.memory_space<vmem>>, %arg7: memref<1x4xf32, #tpu.memory_space<vmem>>, %arg8: memref<2x4xf32, #tpu.memory_space<vmem>>) attributes {dimension_semantics = [#tpu.dimension_semantics<arbitrary>], iteration_bounds = array<i64: 1>, scalar_prefetch = 0 : i64, scratch_operands = 0 : i64, tpu.core_type = #tpu.core_type<tc>, window_params = [{pipeline_mode = #tpu.pipeline_mode<synchronous>, transform_indices = @transform_0, window_bounds = array<i64: 2, 1120>}, {pipeline_mode = #tpu.pipeline_mode<synchronous>, transform_indices = @transform_1, window_bounds = array<i64: 1120, 256>}, {pipeline_mode = #tpu.pipeline_mode<synchronous>, transform_indices = @transform_2, window_bounds = array<i64: 1, 256>}, {pipeline_mode = #tpu.pipeline_mode<synchronous>, transform_indices = @transform_3, window_bounds = array<i64: 256, 32>}, {pipeline_mode = #tpu.pipeline_mode<synchronous>, transform_indices = @transform_4, window_bounds = array<i64: 1, 32>}, {pipeline_mode = #tpu.pipeline_mode<synchronous>, transform_indices = @transform_5, window_bounds = array<i64: 32, 4>}, {pipeline_mode = #tpu.pipeline_mode<synchronous>, transform_indices = @transform_6, window_bounds = array<i64: 1, 4>}, {pipeline_mode = #tpu.pipeline_mode<synchronous>, transform_indices = @transform_7, window_bounds = array<i64: 2, 4>}]} {
    %c0 = arith.constant 0 : index
    %c0_0 = arith.constant 0 : index
    %0 = vector.load %arg1[%c0, %c0_0] : memref<2x1120xf32, #tpu.memory_space<vmem>>, vector<2x1120xf32>
    %c0_1 = arith.constant 0 : index
    %c0_2 = arith.constant 0 : index
    %1 = vector.load %arg2[%c0_1, %c0_2] : memref<1120x256xf32, #tpu.memory_space<vmem>>, vector<1120x256xf32>
    %cst = arith.constant dense<0.000000e+00> : vector<2x256xf32>
    %2 = tpu.matmul %0, %1, %cst {dimension_numbers = #tpu.dot_dimension_numbers<[1], [0], [0], [1], [0, 0, 1, 1], [], []>} : vector<2x1120xf32>, vector<1120x256xf32>, vector<2x256xf32> -> vector<2x256xf32>
    %c0_3 = arith.constant 0 : index
    %c0_4 = arith.constant 0 : index
    %3 = vector.load %arg3[%c0_3, %c0_4] : memref<1x256xf32, #tpu.memory_space<vmem>>, vector<1x256xf32>
    %4 = vector.broadcast %3 : vector<1x256xf32> to vector<2x256xf32>
    %5 = arith.addf %2, %4 : vector<2x256xf32>
    %cst_5 = arith.constant 0.000000e+00 : f32
    %6 = vector.broadcast %cst_5 : f32 to vector<2x256xf32>
    %7 = arith.cmpf ogt, %5, %6 : vector<2x256xf32>
    %cst_6 = arith.constant 0.000000e+00 : f32
    %8 = vector.broadcast %cst_6 : f32 to vector<2x256xf32>
    %9 = arith.minimumf %5, %8 : vector<2x256xf32>
    %10 = math.exp %9 : vector<2x256xf32>
    %cst_7 = arith.constant 1.000000e+00 : f32
    %11 = vector.broadcast %cst_7 : f32 to vector<2x256xf32>
    %12 = arith.subf %10, %11 : vector<2x256xf32>
    %13 = arith.select %7, %5, %12 : vector<2x256xi1>, vector<2x256xf32>
    %c0_8 = arith.constant 0 : index
    %c0_9 = arith.constant 0 : index
    %14 = vector.load %arg4[%c0_8, %c0_9] : memref<256x32xf32, #tpu.memory_space<vmem>>, vector<256x32xf32>
    %cst_10 = arith.constant dense<0.000000e+00> : vector<2x32xf32>
    %15 = tpu.matmul %13, %14, %cst_10 {dimension_numbers = #tpu.dot_dimension_numbers<[1], [0], [0], [1], [0, 0, 1, 1], [], []>} : vector<2x256xf32>, vector<256x32xf32>, vector<2x32xf32> -> vector<2x32xf32>
    %c0_11 = arith.constant 0 : index
    %c0_12 = arith.constant 0 : index
    %16 = vector.load %arg5[%c0_11, %c0_12] : memref<1x32xf32, #tpu.memory_space<vmem>>, vector<1x32xf32>
    %17 = vector.broadcast %16 : vector<1x32xf32> to vector<2x32xf32>
    %18 = arith.addf %15, %17 : vector<2x32xf32>
    %cst_13 = arith.constant 0.000000e+00 : f32
    %19 = vector.broadcast %cst_13 : f32 to vector<2x32xf32>
    %20 = arith.cmpf ogt, %18, %19 : vector<2x32xf32>
    %cst_14 = arith.constant 0.000000e+00 : f32
    %21 = vector.broadcast %cst_14 : f32 to vector<2x32xf32>
    %22 = arith.minimumf %18, %21 : vector<2x32xf32>
    %23 = math.exp %22 : vector<2x32xf32>
    %cst_15 = arith.constant 1.000000e+00 : f32
    %24 = vector.broadcast %cst_15 : f32 to vector<2x32xf32>
    %25 = arith.subf %23, %24 : vector<2x32xf32>
    %26 = arith.select %20, %18, %25 : vector<2x32xi1>, vector<2x32xf32>
    %c0_16 = arith.constant 0 : index
    %c0_17 = arith.constant 0 : index
    %27 = vector.load %arg6[%c0_16, %c0_17] : memref<32x4xf32, #tpu.memory_space<vmem>>, vector<32x4xf32>
    %cst_18 = arith.constant dense<0.000000e+00> : vector<2x4xf32>
    %28 = tpu.matmul %26, %27, %cst_18 {dimension_numbers = #tpu.dot_dimension_numbers<[1], [0], [0], [1], [0, 0, 1, 1], [], []>} : vector<2x32xf32>, vector<32x4xf32>, vector<2x4xf32> -> vector<2x4xf32>
    %c0_19 = arith.constant 0 : index
    %c0_20 = arith.constant 0 : index
    %29 = vector.load %arg7[%c0_19, %c0_20] : memref<1x4xf32, #tpu.memory_space<vmem>>, vector<1x4xf32>
    %30 = vector.broadcast %29 : vector<1x4xf32> to vector<2x4xf32>
    %31 = arith.addf %28, %30 : vector<2x4xf32>
    %c0_21 = arith.constant 0 : index
    %c0_22 = arith.constant 0 : index
    %32 = vector.load %arg8[%c0_21, %c0_22] : memref<2x4xf32, #tpu.memory_space<vmem>>, vector<2x4xf32>
    tpu.vector_store %arg8[%c0_21, %c0_22], %31 {strides = array<i32>} : memref<2x4xf32, #tpu.memory_space<vmem>>, vector<2x4xf32>,
    return
  }
  func.func @transform_0(%arg0: i32) -> (i32, i32) {
    %c0_i32 = arith.constant 0 : i32
    %c0_i32_0 = arith.constant 0 : i32
    %c0_i32_1 = arith.constant 0 : i32
    return %c0_i32, %c0_i32_0 : i32, i32
  }
  func.func @transform_1(%arg0: i32) -> (i32, i32) {
    %c0_i32 = arith.constant 0 : i32
    %c0_i32_0 = arith.constant 0 : i32
    %c0_i32_1 = arith.constant 0 : i32
    return %c0_i32, %c0_i32_0 : i32, i32
  }
  func.func @transform_2(%arg0: i32) -> (i32, i32) {
    %c0_i32 = arith.constant 0 : i32
    %c0_i32_0 = arith.constant 0 : i32
    %c0_i32_1 = arith.constant 0 : i32
    return %c0_i32, %c0_i32_0 : i32, i32
  }
  func.func @transform_3(%arg0: i32) -> (i32, i32) {
    %c0_i32 = arith.constant 0 : i32
    %c0_i32_0 = arith.constant 0 : i32
    %c0_i32_1 = arith.constant 0 : i32
    return %c0_i32, %c0_i32_0 : i32, i32
  }
  func.func @transform_4(%arg0: i32) -> (i32, i32) {
    %c0_i32 = arith.constant 0 : i32
    %c0_i32_0 = arith.constant 0 : i32
    %c0_i32_1 = arith.constant 0 : i32
    return %c0_i32, %c0_i32_0 : i32, i32
  }
  func.func @transform_5(%arg0: i32) -> (i32, i32) {
    %c0_i32 = arith.constant 0 : i32
    %c0_i32_0 = arith.constant 0 : i32
    %c0_i32_1 = arith.constant 0 : i32
    return %c0_i32, %c0_i32_0 : i32, i32
  }
  func.func @transform_6(%arg0: i32) -> (i32, i32) {
    %c0_i32 = arith.constant 0 : i32
    %c0_i32_0 = arith.constant 0 : i32
    %c0_i32_1 = arith.constant 0 : i32
    return %c0_i32, %c0_i32_0 : i32, i32
  }
  func.func @transform_7(%arg0: i32) -> (i32, i32) {
    %c0_i32 = arith.constant 0 : i32
    %c0_i32_0 = arith.constant 0 : i32
    %c0_i32_1 = arith.constant 0 : i32
    return %c0_i32, %c0_i32_0 : i32, i32
  }
}

</mosaic_0001>

<llo_original>
// kernel: sharelink_forward.3
$region0: #{sharelink_forward.3}
  #allocation0 [shape = 'u32[]', space=smem, size = 0x4, offset = 0x4, fixed_abs, tag = 'smem constant byte address 0x4 - core index']
  #allocation1 [shape = 'u32[144,128]{1,0:T(1,128)}', space=vmem, size = 0x12000, scoped, tag = 'internal scratch']
  %s0 = inlined_call_operand.vmem [shape: f32[2,1120], index: 0, kind: input, shape index: {}]
  %s1 = inlined_call_operand.vmem [shape: f32[1120,256], index: 1, kind: input, shape index: {}]
  %s2 = inlined_call_operand.vmem [shape: f32[1,256], index: 2, kind: input, shape index: {}]
  %s3 = inlined_call_operand.vmem [shape: f32[256,32], index: 3, kind: input, shape index: {}]
  %s4 = inlined_call_operand.vmem [shape: f32[1,32], index: 4, kind: input, shape index: {}]
  %s5 = inlined_call_operand.vmem [shape: f32[32,4], index: 5, kind: input, shape index: {}]
  %s6 = inlined_call_operand.vmem [shape: f32[1,4], index: 6, kind: input, shape index: {}]
  %s7 = inlined_call_operand.hbm [shape: f32[2,4], index: 7, kind: output, shape index: {}]
  %s8 = sld [smem:[#allocation0]]
  $region38: #{sharelink_forward.3} parent=0
    _
  %s10 = ssub.s32 1, %s8
  %s11 = scalar_select 0, %s10, %s8
  $region1: #{sharelink_forward.3} parent=0
    #allocation2 [shape = 'u8[1024]{0}', space=vmem, size = 0x400, scoped, tag = 'output window, operand 0, single buffered']
    #allocation3 [shape = 's32[1]{0}', space=sflag, size = 0x4, scoped, tag = 'scoped memory for sharelink_forward.3']
    %12 = vsyncpa [#allocation3], 0
    // Predicated region
    $region2: #{sharelink_forward.3} parent=1 // pred_check
      _
    $region3: #{sharelink_forward.3} parent=1 // pred_check_branch
      %14 = sbr.rel (0) target = $region5
    $region4: #{sharelink_forward.3} parent=1 // pred_region
      _
    $region5: #{sharelink_forward.3} parent=1 // pred_fallthru
      _
    // Predicated region
    $region6: #{sharelink_forward.3} parent=1 // pred_check
      _
    $region7: #{sharelink_forward.3} parent=1 // pred_check_branch
      %16 = sbr.rel (0) target = $region9
    $region8: #{sharelink_forward.3} parent=1 // pred_region
      _
    $region9: #{sharelink_forward.3} parent=1 // pred_fallthru
      _
    // Predicated region
    $region10: #{sharelink_forward.3} parent=1 // pred_check
      _
    $region11: #{sharelink_forward.3} parent=1 // pred_check_branch
      %18 = sbr.rel (0) target = $region13
    $region12: #{sharelink_forward.3} parent=1 // pred_region
      _
    $region13: #{sharelink_forward.3} parent=1 // pred_fallthru
      _
    // Predicated region
    $region14: #{sharelink_forward.3} parent=1 // pred_check
      _
    $region15: #{sharelink_forward.3} parent=1 // pred_check_branch
      %20 = sbr.rel (0) target = $region17
    $region16: #{sharelink_forward.3} parent=1 // pred_region
      _
    $region17: #{sharelink_forward.3} parent=1 // pred_fallthru
      _
    // Predicated region
    $region18: #{sharelink_forward.3} parent=1 // pred_check
      _
    $region19: #{sharelink_forward.3} parent=1 // pred_check_branch
      %22 = sbr.rel (0) target = $region21
    $region20: #{sharelink_forward.3} parent=1 // pred_region
      _
    $region21: #{sharelink_forward.3} parent=1 // pred_fallthru
      _
    // Predicated region
    $region22: #{sharelink_forward.3} parent=1 // pred_check
      _
    $region23: #{sharelink_forward.3} parent=1 // pred_check_branch
      %24 = sbr.rel (0) target = $region25
    $region24: #{sharelink_forward.3} parent=1 // pred_region
      _
    $region25: #{sharelink_forward.3} parent=1 // pred_fallthru
      _
    // Predicated region
    $region26: #{sharelink_forward.3} parent=1 // pred_check
      _
    $region27: #{sharelink_forward.3} parent=1 // pred_check_branch
      %26 = sbr.rel (0) target = $region29
    $region28: #{sharelink_forward.3} parent=1 // pred_region
      _
    $region29: #{sharelink_forward.3} parent=1 // pred_fallthru
      _
    %v27 = vld [vmem:[%s0] sm:$0xff]
    %v28 = vld [vmem:[%s0 + $0x8] sm:$0xff]
    %v29 = vld [vmem:[%s0 + $0x10] sm:$0x3]
    %v30 = vld [vmem:[%s1] sm:$0xff]
    %v31 = vld [vmem:[%s1 + $0x8] sm:$0xff]
    %v32 = vld [vmem:[%s1 + $0x10] sm:$0xff]
    %v33 = vld [vmem:[%s1 + $0x18] sm:$0xff]
    %v34 = vld [vmem:[%s1 + $0x20] sm:$0xff]
    %v35 = vld [vmem:[%s1 + $0x28] sm:$0xff]
    %v36 = vld [vmem:[%s1 + $0x30] sm:$0xff]
    %v37 = vld [vmem:[%s1 + $0x38] sm:$0xff]
    %v38 = vld [vmem:[%s1 + $0x40] sm:$0xff]
    %v39 = vld [vmem:[%s1 + $0x48] sm:$0xff]
    %v40 = vld [vmem:[%s1 + $0x50] sm:$0xff]
    %v41 = vld [vmem:[%s1 + $0x58] sm:$0xff]
    %v42 = vld [vmem:[%s1 + $0x60] sm:$0xff]
    %v43 = vld [vmem:[%s1 + $0x68] sm:$0xff]
    %v44 = vld [vmem:[%s1 + $0x70] sm:$0xff]
    %v45 = vld [vmem:[%s1 + $0x78] sm:$0xff]
    %v46 = vld [vmem:[%s1 + $0x80] sm:$0xff]
    %v47 = vld [vmem:[%s1 + $0x88] sm:$0xff]
    %v48 = vld [vmem:[%s1 + $0x90] sm:$0xff]
    %v49 = vld [vmem:[%s1 + $0x98] sm:$0xff]
    %v50 = vld [vmem:[%s1 + $0xa0] sm:$0xff]
    %v51 = vld [vmem:[%s1 + $0xa8] sm:$0xff]
    %v52 = vld [vmem:[%s1 + $0xb0] sm:$0xff]
    %v53 = vld [vmem:[%s1 + $0xb8] sm:$0xff]
    %v54 = vld [vmem:[%s1 + $0xc0] sm:$0xff]
    %v55 = vld [vmem:[%s1 + $0xc8] sm:$0xff]
    %v56 = vld [vmem:[%s1 + $0xd0] sm:$0xff]
    %v57 = vld [vmem:[%s1 + $0xd8] sm:$0xff]
    %v58 = vld [vmem:[%s1 + $0xe0] sm:$0xff]
    %v59 = vld [vmem:[%s1 + $0xe8] sm:$0xff]
    %v60 = vld [vmem:[%s1 + $0xf0] sm:$0xff]
    %v61 = vld [vmem:[%s1 + $0xf8] sm:$0xff]
    %v62 = vld [vmem:[%s1 + $0x100] sm:$0xff]
    %v63 = vld [vmem:[%s1 + $0x108] sm:$0xff]
    %v64 = vld [vmem:[%s1 + $0x110] sm:$0xff]
    %v65 = vld [vmem:[%s1 + $0x118] sm:$0xff]
    %v66 = vld [vmem:[%s1 + $0x120] sm:$0xff]
    %v67 = vld [vmem:[%s1 + $0x128] sm:$0xff]
    %v68 = vld [vmem:[%s1 + $0x130] sm:$0xff]
    %v69 = vld [vmem:[%s1 + $0x138] sm:$0xff]
    %v70 = vld [vmem:[%s1 + $0x140] sm:$0xff]
    %v71 = vld [vmem:[%s1 + $0x148] sm:$0xff]
    %v72 = vld [vmem:[%s1 + $0x150] sm:$0xff]
    %v73 = vld [vmem:[%s1 + $0x158] sm:$0xff]
    %v74 = vld [vmem:[%s1 + $0x160] sm:$0xff]
    %v75 = vld [vmem:[%s1 + $0x168] sm:$0xff]
    %v76 = vld [vmem:[%s1 + $0x170] sm:$0xff]
    %v77 = vld [vmem:[%s1 + $0x178] sm:$0xff]
    %v78 = vld [vmem:[%s1 + $0x180] sm:$0xff]
    %v79 = vld [vmem:[%s1 + $0x188] sm:$0xff]
    %v80 = vld [vmem:[%s1 + $0x190] sm:$0xff]
    %v81 = vld [vmem:[%s1 + $0x198] sm:$0xff]
    %v82 = vld [vmem:[%s1 + $0x1a0] sm:$0xff]
    %v83 = vld [vmem:[%s1 + $0x1a8] sm:$0xff]
    %v84 = vld [vmem:[%s1 + $0x1b0] sm:$0xff]
    %v85 = vld [vmem:[%s1 + $0x1b8] sm:$0xff]
    %v86 = vld [vmem:[%s1 + $0x1c0] sm:$0xff]
    %v87 = vld [vmem:[%s1 + $0x1c8] sm:$0xff]
    %v88 = vld [vmem:[%s1 + $0x1d0] sm:$0xff]
    %v89 = vld [vmem:[%s1 + $0x1d8] sm:$0xff]
    %v90 = vld [vmem:[%s1 + $0x1e0] sm:$0xff]
    %v91 = vld [vmem:[%s1 + $0x1e8] sm:$0xff]
    %v92 = vld [vmem:[%s1 + $0x1f0] sm:$0xff]
    %v93 = vld [vmem:[%s1 + $0x1f8] sm:$0xff]
    %v94 = vld [vmem:[%s1 + $0x200] sm:$0xff]
    %v95 = vld [vmem:[%s1 + $0x208] sm:$0xff]
    %v96 = vld [vmem:[%s1 + $0x210] sm:$0xff]
    %v97 = vld [vmem:[%s1 + $0x218] sm:$0xff]
    %v98 = vld [vmem:[%s1 + $0x220] sm:$0xff]
    %v99 = vld [vmem:[%s1 + $0x228] sm:$0xff]
    %v100 = vld [vmem:[%s1 + $0x230] sm:$0xff]
    %v101 = vld [vmem:[%s1 + $0x238] sm:$0xff]
    %v102 = vld [vmem:[%s1 + $0x240] sm:$0xff]
    %v103 = vld [vmem:[%s1 + $0x248] sm:$0xff]
    %v104 = vld [vmem:[%s1 + $0x250] sm:$0xff]
    %v105 = vld [vmem:[%s1 + $0x258] sm:$0xff]
    %v106 = vld [vmem:[%s1 + $0x260] sm:$0xff]
    %v107 = vld [vmem:[%s1 + $0x268] sm:$0xff]
    %v108 = vld [vmem:[%s1 + $0x270] sm:$0xff]
    %v109 = vld [vmem:[%s1 + $0x278] sm:$0xff]
    %v110 = vld [vmem:[%s1 + $0x280] sm:$0xff]
    %v111 = vld [vmem:[%s1 + $0x288] sm:$0xff]
    %v112 = vld [vmem:[%s1 + $0x290] sm:$0xff]
    %v113 = vld [vmem:[%s1 + $0x298] sm:$0xff]
    %v114 = vld [vmem:[%s1 + $0x2a0] sm:$0xff]
    %v115 = vld [vmem:[%s1 + $0x2a8] sm:$0xff]
    %v116 = vld [vmem:[%s1 + $0x2b0] sm:$0xff]
    %v117 = vld [vmem:[%s1 + $0x2b8] sm:$0xff]
    %v118 = vld [vmem:[%s1 + $0x2c0] sm:$0xff]
    %v119 = vld [vmem:[%s1 + $0x2c8] sm:$0xff]
    %v120 = vld [vmem:[%s1 + $0x2d0] sm:$0xff]
    %v121 = vld [vmem:[%s1 + $0x2d8] sm:$0xff]
    %v122 = vld [vmem:[%s1 + $0x2e0] sm:$0xff]
    %v123 = vld [vmem:[%s1 + $0x2e8] sm:$0xff]
    %v124 = vld [vmem:[%s1 + $0x2f0] sm:$0xff]
    %v125 = vld [vmem:[%s1 + $0x2f8] sm:$0xff]
    %v126 = vld [vmem:[%s1 + $0x300] sm:$0xff]
    %v127 = vld [vmem:[%s1 + $0x308] sm:$0xff]
    %v128 = vld [vmem:[%s1 + $0x310] sm:$0xff]
    %v129 = vld [vmem:[%s1 + $0x318] sm:$0xff]
    %v130 = vld [vmem:[%s1 + $0x320] sm:$0xff]
    %v131 = vld [vmem:[%s1 + $0x328] sm:$0xff]
    %v132 = vld [vmem:[%s1 + $0x330] sm:$0xff]
    %v133 = vld [vmem:[%s1 + $0x338] sm:$0xff]
    %v134 = vld [vmem:[%s1 + $0x340] sm:$0xff]
    %v135 = vld [vmem:[%s1 + $0x348] sm:$0xff]
    %v136 = vld [vmem:[%s1 + $0x350] sm:$0xff]
    %v137 = vld [vmem:[%s1 + $0x358] sm:$0xff]
    %v138 = vld [vmem:[%s1 + $0x360] sm:$0xff]
    %v139 = vld [vmem:[%s1 + $0x368] sm:$0xff]
    %v140 = vld [vmem:[%s1 + $0x370] sm:$0xff]
    %v141 = vld [vmem:[%s1 + $0x378] sm:$0xff]
    %v142 = vld [vmem:[%s1 + $0x380] sm:$0xff]
    %v143 = vld [vmem:[%s1 + $0x388] sm:$0xff]
    %v144 = vld [vmem:[%s1 + $0x390] sm:$0xff]
    %v145 = vld [vmem:[%s1 + $0x398] sm:$0xff]
    %v146 = vld [vmem:[%s1 + $0x3a0] sm:$0xff]
    %v147 = vld [vmem:[%s1 + $0x3a8] sm:$0xff]
    %v148 = vld [vmem:[%s1 + $0x3b0] sm:$0xff]
    %v149 = vld [vmem:[%s1 + $0x3b8] sm:$0xff]
    %v150 = vld [vmem:[%s1 + $0x3c0] sm:$0xff]
    %v151 = vld [vmem:[%s1 + $0x3c8] sm:$0xff]
    %v152 = vld [vmem:[%s1 + $0x3d0] sm:$0xff]
    %v153 = vld [vmem:[%s1 + $0x3d8] sm:$0xff]
    %v154 = vld [vmem:[%s1 + $0x3e0] sm:$0xff]
    %v155 = vld [vmem:[%s1 + $0x3e8] sm:$0xff]
    %v156 = vld [vmem:[%s1 + $0x3f0] sm:$0xff]
    %v157 = vld [vmem:[%s1 + $0x3f8] sm:$0xff]
    %v158 = vld [vmem:[%s1 + $0x400] sm:$0xff]
    %v159 = vld [vmem:[%s1 + $0x408] sm:$0xff]
    %v160 = vld [vmem:[%s1 + $0x410] sm:$0xff]
    %v161 = vld [vmem:[%s1 + $0x418] sm:$0xff]
    %v162 = vld [vmem:[%s1 + $0x420] sm:$0xff]
    %v163 = vld [vmem:[%s1 + $0x428] sm:$0xff]
    %v164 = vld [vmem:[%s1 + $0x430] sm:$0xff]
    %v165 = vld [vmem:[%s1 + $0x438] sm:$0xff]
    %v166 = vld [vmem:[%s1 + $0x440] sm:$0xff]
    %v167 = vld [vmem:[%s1 + $0x448] sm:$0xff]
    %v168 = vld [vmem:[%s1 + $0x450] sm:$0xff]
    %v169 = vld [vmem:[%s1 + $0x458] sm:$0xff]
    %v170 = vld [vmem:[%s1 + $0x460] sm:$0xff]
    %v171 = vld [vmem:[%s1 + $0x468] sm:$0xff]
    %v172 = vld [vmem:[%s1 + $0x470] sm:$0xff]
    %v173 = vld [vmem:[%s1 + $0x478] sm:$0xff]
    %v174 = vld [vmem:[%s1 + $0x480] sm:$0xff]
    %v175 = vld [vmem:[%s1 + $0x488] sm:$0xff]
    %v176 = vld [vmem:[%s1 + $0x490] sm:$0xff]
    %v177 = vld [vmem:[%s1 + $0x498] sm:$0xff]
    %v178 = vld [vmem:[%s1 + $0x4a0] sm:$0xff]
    %v179 = vld [vmem:[%s1 + $0x4a8] sm:$0xff]
    %v180 = vld [vmem:[%s1 + $0x4b0] sm:$0xff]
    %v181 = vld [vmem:[%s1 + $0x4b8] sm:$0xff]
    %v182 = vld [vmem:[%s1 + $0x4c0] sm:$0xff]
    %v183 = vld [vmem:[%s1 + $0x4c8] sm:$0xff]
    %v184 = vld [vmem:[%s1 + $0x4d0] sm:$0xff]
    %v185 = vld [vmem:[%s1 + $0x4d8] sm:$0xff]
    %v186 = vld [vmem:[%s1 + $0x4e0] sm:$0xff]
    %v187 = vld [vmem:[%s1 + $0x4e8] sm:$0xff]
    %v188 = vld [vmem:[%s1 + $0x4f0] sm:$0xff]
    %v189 = vld [vmem:[%s1 + $0x4f8] sm:$0xff]
    %v190 = vld [vmem:[%s1 + $0x500] sm:$0xff]
    %v191 = vld [vmem:[%s1 + $0x508] sm:$0xff]
    %v192 = vld [vmem:[%s1 + $0x510] sm:$0xff]
    %v193 = vld [vmem:[%s1 + $0x518] sm:$0xff]
    %v194 = vld [vmem:[%s1 + $0x520] sm:$0xff]
    %v195 = vld [vmem:[%s1 + $0x528] sm:$0xff]
    %v196 = vld [vmem:[%s1 + $0x530] sm:$0xff]
    %v197 = vld [vmem:[%s1 + $0x538] sm:$0xff]
    %v198 = vld [vmem:[%s1 + $0x540] sm:$0xff]
    %v199 = vld [vmem:[%s1 + $0x548] sm:$0xff]
    %v200 = vld [vmem:[%s1 + $0x550] sm:$0xff]
    %v201 = vld [vmem:[%s1 + $0x558] sm:$0xff]
    %v202 = vld [vmem:[%s1 + $0x560] sm:$0xff]
    %v203 = vld [vmem:[%s1 + $0x568] sm:$0xff]
    %v204 = vld [vmem:[%s1 + $0x570] sm:$0xff]
    %v205 = vld [vmem:[%s1 + $0x578] sm:$0xff]
    %v206 = vld [vmem:[%s1 + $0x580] sm:$0xff]
    %v207 = vld [vmem:[%s1 + $0x588] sm:$0xff]
    %v208 = vld [vmem:[%s1 + $0x590] sm:$0xff]
    %v209 = vld [vmem:[%s1 + $0x598] sm:$0xff]
    %v210 = vld [vmem:[%s1 + $0x5a0] sm:$0xff]
    %v211 = vld [vmem:[%s1 + $0x5a8] sm:$0xff]
    %v212 = vld [vmem:[%s1 + $0x5b0] sm:$0xff]
    %v213 = vld [vmem:[%s1 + $0x5b8] sm:$0xff]
    %v214 = vld [vmem:[%s1 + $0x5c0] sm:$0xff]
    %v215 = vld [vmem:[%s1 + $0x5c8] sm:$0xff]
    %v216 = vld [vmem:[%s1 + $0x5d0] sm:$0xff]
    %v217 = vld [vmem:[%s1 + $0x5d8] sm:$0xff]
    %v218 = vld [vmem:[%s1 + $0x5e0] sm:$0xff]
    %v219 = vld [vmem:[%s1 + $0x5e8] sm:$0xff]
    %v220 = vld [vmem:[%s1 + $0x5f0] sm:$0xff]
    %v221 = vld [vmem:[%s1 + $0x5f8] sm:$0xff]
    %v222 = vld [vmem:[%s1 + $0x600] sm:$0xff]
    %v223 = vld [vmem:[%s1 + $0x608] sm:$0xff]
    %v224 = vld [vmem:[%s1 + $0x610] sm:$0xff]
    %v225 = vld [vmem:[%s1 + $0x618] sm:$0xff]
    %v226 = vld [vmem:[%s1 + $0x620] sm:$0xff]
    %v227 = vld [vmem:[%s1 + $0x628] sm:$0xff]
    %v228 = vld [vmem:[%s1 + $0x630] sm:$0xff]
    %v229 = vld [vmem:[%s1 + $0x638] sm:$0xff]
    %v230 = vld [vmem:[%s1 + $0x640] sm:$0xff]
    %v231 = vld [vmem:[%s1 + $0x648] sm:$0xff]
    %v232 = vld [vmem:[%s1 + $0x650] sm:$0xff]
    %v233 = vld [vmem:[%s1 + $0x658] sm:$0xff]
    %v234 = vld [vmem:[%s1 + $0x660] sm:$0xff]
    %v235 = vld [vmem:[%s1 + $0x668] sm:$0xff]
    %v236 = vld [vmem:[%s1 + $0x670] sm:$0xff]
    %v237 = vld [vmem:[%s1 + $0x678] sm:$0xff]
    %v238 = vld [vmem:[%s1 + $0x680] sm:$0xff]
    %v239 = vld [vmem:[%s1 + $0x688] sm:$0xff]
    %v240 = vld [vmem:[%s1 + $0x690] sm:$0xff]
    %v241 = vld [vmem:[%s1 + $0x698] sm:$0xff]
    %v242 = vld [vmem:[%s1 + $0x6a0] sm:$0xff]
    %v243 = vld [vmem:[%s1 + $0x6a8] sm:$0xff]
    %v244 = vld [vmem:[%s1 + $0x6b0] sm:$0xff]
    %v245 = vld [vmem:[%s1 + $0x6b8] sm:$0xff]
    %v246 = vld [vmem:[%s1 + $0x6c0] sm:$0xff]
    %v247 = vld [vmem:[%s1 + $0x6c8] sm:$0xff]
    %v248 = vld [vmem:[%s1 + $0x6d0] sm:$0xff]
    %v249 = vld [vmem:[%s1 + $0x6d8] sm:$0xff]
    %v250 = vld [vmem:[%s1 + $0x6e0] sm:$0xff]
    %v251 = vld [vmem:[%s1 + $0x6e8] sm:$0xff]
    %v252 = vld [vmem:[%s1 + $0x6f0] sm:$0xff]
    %v253 = vld [vmem:[%s1 + $0x6f8] sm:$0xff]
    %v254 = vld [vmem:[%s1 + $0x700] sm:$0xff]
    %v255 = vld [vmem:[%s1 + $0x708] sm:$0xff]
    %v256 = vld [vmem:[%s1 + $0x710] sm:$0xff]
    %v257 = vld [vmem:[%s1 + $0x718] sm:$0xff]
    %v258 = vld [vmem:[%s1 + $0x720] sm:$0xff]
    %v259 = vld [vmem:[%s1 + $0x728] sm:$0xff]
    %v260 = vld [vmem:[%s1 + $0x730] sm:$0xff]
    %v261 = vld [vmem:[%s1 + $0x738] sm:$0xff]
    %v262 = vld [vmem:[%s1 + $0x740] sm:$0xff]
    %v263 = vld [vmem:[%s1 + $0x748] sm:$0xff]
    %v264 = vld [vmem:[%s1 + $0x750] sm:$0xff]
    %v265 = vld [vmem:[%s1 + $0x758] sm:$0xff]
    %v266 = vld [vmem:[%s1 + $0x760] sm:$0xff]
    %v267 = vld [vmem:[%s1 + $0x768] sm:$0xff]
    %v268 = vld [vmem:[%s1 + $0x770] sm:$0xff]
    %v269 = vld [vmem:[%s1 + $0x778] sm:$0xff]
    %v270 = vld [vmem:[%s1 + $0x780] sm:$0xff]
    %v271 = vld [vmem:[%s1 + $0x788] sm:$0xff]
    %v272 = vld [vmem:[%s1 + $0x790] sm:$0xff]
    %v273 = vld [vmem:[%s1 + $0x798] sm:$0xff]
    %v274 = vld [vmem:[%s1 + $0x7a0] sm:$0xff]
    %v275 = vld [vmem:[%s1 + $0x7a8] sm:$0xff]
    %v276 = vld [vmem:[%s1 + $0x7b0] sm:$0xff]
    %v277 = vld [vmem:[%s1 + $0x7b8] sm:$0xff]
    %v278 = vld [vmem:[%s1 + $0x7c0] sm:$0xff]
    %v279 = vld [vmem:[%s1 + $0x7c8] sm:$0xff]
    %v280 = vld [vmem:[%s1 + $0x7d0] sm:$0xff]
    %v281 = vld [vmem:[%s1 + $0x7d8] sm:$0xff]
    %v282 = vld [vmem:[%s1 + $0x7e0] sm:$0xff]
    %v283 = vld [vmem:[%s1 + $0x7e8] sm:$0xff]
    %v284 = vld [vmem:[%s1 + $0x7f0] sm:$0xff]
    %v285 = vld [vmem:[%s1 + $0x7f8] sm:$0xff]
    %v286 = vld [vmem:[%s1 + $0x800] sm:$0xff]
    %v287 = vld [vmem:[%s1 + $0x808] sm:$0xff]
    %v288 = vld [vmem:[%s1 + $0x810] sm:$0xff]
    %v289 = vld [vmem:[%s1 + $0x818] sm:$0xff]
    %v290 = vld [vmem:[%s1 + $0x820] sm:$0xff]
    %v291 = vld [vmem:[%s1 + $0x828] sm:$0xff]
    %v292 = vld [vmem:[%s1 + $0x830] sm:$0xff]
    %v293 = vld [vmem:[%s1 + $0x838] sm:$0xff]
    %v294 = vld [vmem:[%s1 + $0x840] sm:$0xff]
    %v295 = vld [vmem:[%s1 + $0x848] sm:$0xff]
    %v296 = vld [vmem:[%s1 + $0x850] sm:$0xff]
    %v297 = vld [vmem:[%s1 + $0x858] sm:$0xff]
    %v298 = vld [vmem:[%s1 + $0x860] sm:$0xff]
    %v299 = vld [vmem:[%s1 + $0x868] sm:$0xff]
    %v300 = vld [vmem:[%s1 + $0x870] sm:$0xff]
    %v301 = vld [vmem:[%s1 + $0x878] sm:$0xff]
    %v302 = vld [vmem:[%s1 + $0x880] sm:$0xff]
    %v303 = vld [vmem:[%s1 + $0x888] sm:$0xff]
    %v304 = vld [vmem:[%s1 + $0x890] sm:$0xff]
    %v305 = vld [vmem:[%s1 + $0x898] sm:$0xff]
    %v306 = vld [vmem:[%s1 + $0x8a0] sm:$0xff]
    %v307 = vld [vmem:[%s1 + $0x8a8] sm:$0xff]
    %v308 = vld [vmem:[%s1 + $0x8b0] sm:$0xff]
    %v309 = vld [vmem:[%s1 + $0x8b8] sm:$0xff]
    %v310 = vld [vmem:[%s2] sm:$0x3]
    %v312 = vlaneseq
    %v313 = vshrl.u32 %v312, 7
    %v314 = vsub.s32 0, %v313
    %v315 = vrot.slane %v310, %v314
    %v316 = vlaneseq
    %v317 = vshrl.u32 %v316, 7
    %v318 = vsub.s32 1, %v317
    %v319 = vrot.slane %v310, %v318
    %v325 = vcombine.high %v27, %v27
    %v327 = vunpack.c.l.s4 1983009808
    %v328 = vunpack.c.0.s8 %v327
    %v329 = vlaneseq
    %v330 = vshrl.u32 %v329, 7
    %v331 = vsub.s32 %v328, %v330
    %v332 = vrot.slane %v27, %v331
    %v334 = vunpack.c.l.s4 1983009808
    %v335 = vunpack.c.0.s8 %v334
    %v336 = vlaneseq
    %v337 = vshrl.u32 %v336, 7
    %v338 = vsub.s32 %v335, %v337
    %v339 = vrot.slane %v325, %v338
    %v340 = vcombine.high %v332, %v332
    %v341 = vcombine.high %v339, %v339
    %v342 = vcombine.high %v28, %v28
    %v344 = vunpack.c.l.s4 1983009808
    %v345 = vunpack.c.0.s8 %v344
    %v346 = vlaneseq
    %v347 = vshrl.u32 %v346, 7
    %v348 = vsub.s32 %v345, %v347
    %v349 = vrot.slane %v28, %v348
    %v351 = vunpack.c.l.s4 1983009808
    %v352 = vunpack.c.0.s8 %v351
    %v353 = vlaneseq
    %v354 = vshrl.u32 %v353, 7
    %v355 = vsub.s32 %v352, %v354
    %v356 = vrot.slane %v342, %v355
    %v357 = vcombine.high %v349, %v349
    %v358 = vcombine.high %v356, %v356
    %v360 = vunpack.c.l.s4 1983009808
    %v361 = vunpack.c.0.s8 %v360
    %v362 = vlaneseq
    %v363 = vshrl.u32 %v362, 7
    %v364 = vsub.s32 %v361, %v363
    %v365 = vrot.slane %v29, %v364
    %vm374 = vcmask 785408
    %v375 = vsel %vm374, %v365, 0
    %377 = vmatprep.subr.mxu0 %v61
    %378 = vmatpush1.msra.mxu0 %v60
    %379 = vmatprep.subr.mxu0 %v59
    %380 = vmatpush1.msra.mxu0 %v58
    %381 = vmatprep.subr.mxu0 %v57
    %382 = vmatpush1.msra.mxu0 %v56
    %383 = vmatprep.subr.mxu0 %v55
    %384 = vmatpush1.msra.mxu0 %v54
    %385 = vmatprep.subr.mxu0 %v53
    %386 = vmatpush1.msra.mxu0 %v52
    %387 = vmatprep.subr.mxu0 %v51
    %388 = vmatpush1.msra.mxu0 %v50
    %389 = vmatprep.subr.mxu0 %v49
    %390 = vmatpush1.msra.mxu0 %v48
    %391 = vmatprep.subr.mxu0 %v47
    %392 = vmatpush1.msra.mxu0 %v46
    %393 = vmatprep.subr.mxu0 %v45
    %394 = vmatpush1.msra.mxu0 %v44
    %395 = vmatprep.subr.mxu0 %v43
    %396 = vmatpush1.msra.mxu0 %v42
    %397 = vmatprep.subr.mxu0 %v41
    %398 = vmatpush1.msra.mxu0 %v40
    %399 = vmatprep.subr.mxu0 %v39
    %400 = vmatpush1.msra.mxu0 %v38
    %401 = vmatprep.subr.mxu0 %v37
    %402 = vmatpush1.msra.mxu0 %v36
    %403 = vmatprep.subr.mxu0 %v35
    %404 = vmatpush1.msra.mxu0 %v34
    %405 = vmatprep.subr.mxu0 %v33
    %406 = vmatpush1.msra.mxu0 %v32
    %407 = vmatprep.subr.mxu0 %v31
    %408 = vmatpush1.msra.mxu0 %v30
    %409 = vmatprep.subr.mxu0 %v93
    %410 = vmatpush2.msra.mxu0 %v92
    %411 = vmatprep.subr.mxu0 %v91
    %412 = vmatpush2.msra.mxu0 %v90
    %413 = vmatprep.subr.mxu0 %v89
    %414 = vmatpush2.msra.mxu0 %v88
    %415 = vmatprep.subr.mxu0 %v87
    %416 = vmatpush2.msra.mxu0 %v86
    %417 = vmatprep.subr.mxu0 %v85
    %418 = vmatpush2.msra.mxu0 %v84
    %419 = vmatprep.subr.mxu0 %v83
    %420 = vmatpush2.msra.mxu0 %v82
    %421 = vmatprep.subr.mxu0 %v81
    %422 = vmatpush2.msra.mxu0 %v80
    %423 = vmatprep.subr.mxu0 %v79
    %424 = vmatpush2.msra.mxu0 %v78
    %425 = vmatprep.subr.mxu0 %v77
    %426 = vmatpush2.msra.mxu0 %v76
    %427 = vmatprep.subr.mxu0 %v75
    %428 = vmatpush2.msra.mxu0 %v74
    %429 = vmatprep.subr.mxu0 %v73
    %430 = vmatpush2.msra.mxu0 %v72
    %431 = vmatprep.subr.mxu0 %v71
    %432 = vmatpush2.msra.mxu0 %v70
    %433 = vmatprep.subr.mxu0 %v69
    %434 = vmatpush2.msra.mxu0 %v68
    %435 = vmatprep.subr.mxu0 %v67
    %436 = vmatpush2.msra.mxu0 %v66
    %437 = vmatprep.subr.mxu0 %v65
    %438 = vmatpush2.msra.mxu0 %v64
    %439 = vmatprep.subr.mxu0 %v63
    %440 = vmatpush2.msra.mxu0 %v62
    %441 = vmatprep.mubr.f32.mxu0 %v340
    %442 = vmatmul.mubr.f32.gmra.mxu0 %v332
    %v443 = vpop.f32.mrf.mxu0
    %v444 = vadd.f32 %v315, %v443
    %v445 = vpop.f32.mrf.mxu0
    %v446 = vadd.f32 %v319, %v445
    %447 = vdwg.mxu0
    %448 = vmatprep.subr.mxu0 %v125
    %449 = vmatpush1.msra.mxu0 %v124
    %450 = vmatprep.subr.mxu0 %v123
    %451 = vmatpush1.msra.mxu0 %v122
    %452 = vmatprep.subr.mxu0 %v121
    %453 = vmatpush1.msra.mxu0 %v120
    %454 = vmatprep.subr.mxu0 %v119
    %455 = vmatpush1.msra.mxu0 %v118
    %456 = vmatprep.subr.mxu0 %v117
    %457 = vmatpush1.msra.mxu0 %v116
    %458 = vmatprep.subr.mxu0 %v115
    %459 = vmatpush1.msra.mxu0 %v114
    %460 = vmatprep.subr.mxu0 %v113
    %461 = vmatpush1.msra.mxu0 %v112
    %462 = vmatprep.subr.mxu0 %v111
    %463 = vmatpush1.msra.mxu0 %v110
    %464 = vmatprep.subr.mxu0 %v109
    %465 = vmatpush1.msra.mxu0 %v108
    %466 = vmatprep.subr.mxu0 %v107
    %467 = vmatpush1.msra.mxu0 %v106
    %468 = vmatprep.subr.mxu0 %v105
    %469 = vmatpush1.msra.mxu0 %v104
    %470 = vmatprep.subr.mxu0 %v103
    %471 = vmatpush1.msra.mxu0 %v102
    %472 = vmatprep.subr.mxu0 %v101
    %473 = vmatpush1.msra.mxu0 %v100
    %474 = vmatprep.subr.mxu0 %v99
    %475 = vmatpush1.msra.mxu0 %v98
    %476 = vmatprep.subr.mxu0 %v97
    %477 = vmatpush1.msra.mxu0 %v96
    %478 = vmatprep.subr.mxu0 %v95
    %479 = vmatpush1.msra.mxu0 %v94
    %480 = vmatprep.subr.mxu0 %v157
    %481 = vmatpush2.msra.mxu0 %v156
    %482 = vmatprep.subr.mxu0 %v155
    %483 = vmatpush2.msra.mxu0 %v154
    %484 = vmatprep.subr.mxu0 %v153
    %485 = vmatpush2.msra.mxu0 %v152
    %486 = vmatprep.subr.mxu0 %v151
    %487 = vmatpush2.msra.mxu0 %v150
    %488 = vmatprep.subr.mxu0 %v149
    %489 = vmatpush2.msra.mxu0 %v148
    %490 = vmatprep.subr.mxu0 %v147
    %491 = vmatpush2.msra.mxu0 %v146
    %492 = vmatprep.subr.mxu0 %v145
    %493 = vmatpush2.msra.mxu0 %v144
    %494 = vmatprep.subr.mxu0 %v143
    %495 = vmatpush2.msra.mxu0 %v142
    %496 = vmatprep.subr.mxu0 %v141
    %497 = vmatpush2.msra.mxu0 %v140
    %498 = vmatprep.subr.mxu0 %v139
    %499 = vmatpush2.msra.mxu0 %v138
    %500 = vmatprep.subr.mxu0 %v137
    %501 = vmatpush2.msra.mxu0 %v136
    %502 = vmatprep.subr.mxu0 %v135
    %503 = vmatpush2.msra.mxu0 %v134
    %504 = vmatprep.subr.mxu0 %v133
    %505 = vmatpush2.msra.mxu0 %v132
    %506 = vmatprep.subr.mxu0 %v131
    %507 = vmatpush2.msra.mxu0 %v130
    %508 = vmatprep.subr.mxu0 %v129
    %509 = vmatpush2.msra.mxu0 %v128
    %510 = vmatprep.subr.mxu0 %v127
    %511 = vmatpush2.msra.mxu0 %v126
    %512 = vmatprep.mubr.f32.mxu0 %v341
    %513 = vmatmul.mubr.f32.gmra.mxu0 %v339
    %v514 = vpop.f32.mrf.mxu0
    %v515 = vadd.f32 %v444, %v514
    %v516 = vpop.f32.mrf.mxu0
    %v517 = vadd.f32 %v446, %v516
    %518 = vdwg.mxu0
    %519 = vmatprep.subr.mxu0 %v189
    %520 = vmatpush1.msra.mxu0 %v188
    %521 = vmatprep.subr.mxu0 %v187
    %522 = vmatpush1.msra.mxu0 %v186
    %523 = vmatprep.subr.mxu0 %v185
    %524 = vmatpush1.msra.mxu0 %v184
    %525 = vmatprep.subr.mxu0 %v183
    %526 = vmatpush1.msra.mxu0 %v182
    %527 = vmatprep.subr.mxu0 %v181
    %528 = vmatpush1.msra.mxu0 %v180
    %529 = vmatprep.subr.mxu0 %v179
    %530 = vmatpush1.msra.mxu0 %v178
    %531 = vmatprep.subr.mxu0 %v177
    %532 = vmatpush1.msra.mxu0 %v176
    %533 = vmatprep.subr.mxu0 %v175
    %534 = vmatpush1.msra.mxu0 %v174
    %535 = vmatprep.subr.mxu0 %v173
    %536 = vmatpush1.msra.mxu0 %v172
    %537 = vmatprep.subr.mxu0 %v171
    %538 = vmatpush1.msra.mxu0 %v170
    %539 = vmatprep.subr.mxu0 %v169
    %540 = vmatpush1.msra.mxu0 %v168
    %541 = vmatprep.subr.mxu0 %v167
    %542 = vmatpush1.msra.mxu0 %v166
    %543 = vmatprep.subr.mxu0 %v165
    %544 = vmatpush1.msra.mxu0 %v164
    %545 = vmatprep.subr.mxu0 %v163
    %546 = vmatpush1.msra.mxu0 %v162
    %547 = vmatprep.subr.mxu0 %v161
    %548 = vmatpush1.msra.mxu0 %v160
    %549 = vmatprep.subr.mxu0 %v159
    %550 = vmatpush1.msra.mxu0 %v158
    %551 = vmatprep.subr.mxu0 %v221
    %552 = vmatpush2.msra.mxu0 %v220
    %553 = vmatprep.subr.mxu0 %v219
    %554 = vmatpush2.msra.mxu0 %v218
    %555 = vmatprep.subr.mxu0 %v217
    %556 = vmatpush2.msra.mxu0 %v216
    %557 = vmatprep.subr.mxu0 %v215
    %558 = vmatpush2.msra.mxu0 %v214
    %559 = vmatprep.subr.mxu0 %v213
    %560 = vmatpush2.msra.mxu0 %v212
    %561 = vmatprep.subr.mxu0 %v211
    %562 = vmatpush2.msra.mxu0 %v210
    %563 = vmatprep.subr.mxu0 %v209
    %564 = vmatpush2.msra.mxu0 %v208
    %565 = vmatprep.subr.mxu0 %v207
    %566 = vmatpush2.msra.mxu0 %v206
    %567 = vmatprep.subr.mxu0 %v205
    %568 = vmatpush2.msra.mxu0 %v204
    %569 = vmatprep.subr.mxu0 %v203
    %570 = vmatpush2.msra.mxu0 %v202
    %571 = vmatprep.subr.mxu0 %v201
    %572 = vmatpush2.msra.mxu0 %v200
    %573 = vmatprep.subr.mxu0 %v199
    %574 = vmatpush2.msra.mxu0 %v198
    %575 = vmatprep.subr.mxu0 %v197
    %576 = vmatpush2.msra.mxu0 %v196
    %577 = vmatprep.subr.mxu0 %v195
    %578 = vmatpush2.msra.mxu0 %v194
    %579 = vmatprep.subr.mxu0 %v193
    %580 = vmatpush2.msra.mxu0 %v192
    %581 = vmatprep.subr.mxu0 %v191
    %582 = vmatpush2.msra.mxu0 %v190
    %583 = vmatprep.mubr.f32.mxu0 %v357
    %584 = vmatmul.mubr.f32.gmra.mxu0 %v349
    %v585 = vpop.f32.mrf.mxu0
    %v586 = vadd.f32 %v515, %v585
    %v587 = vpop.f32.mrf.mxu0
    %v588 = vadd.f32 %v517, %v587
    %589 = vdwg.mxu0
    %590 = vmatprep.subr.mxu0 %v253
    %591 = vmatpush1.msra.mxu0 %v252
    %592 = vmatprep.subr.mxu0 %v251
    %593 = vmatpush1.msra.mxu0 %v250
    %594 = vmatprep.subr.mxu0 %v249
    %595 = vmatpush1.msra.mxu0 %v248
    %596 = vmatprep.subr.mxu0 %v247
    %597 = vmatpush1.msra.mxu0 %v246
    %598 = vmatprep.subr.mxu0 %v245
    %599 = vmatpush1.msra.mxu0 %v244
    %600 = vmatprep.subr.mxu0 %v243
    %601 = vmatpush1.msra.mxu0 %v242
    %602 = vmatprep.subr.mxu0 %v241
    %603 = vmatpush1.msra.mxu0 %v240
    %604 = vmatprep.subr.mxu0 %v239
    %605 = vmatpush1.msra.mxu0 %v238
    %606 = vmatprep.subr.mxu0 %v237
    %607 = vmatpush1.msra.mxu0 %v236
    %608 = vmatprep.subr.mxu0 %v235
    %609 = vmatpush1.msra.mxu0 %v234
    %610 = vmatprep.subr.mxu0 %v233
    %611 = vmatpush1.msra.mxu0 %v232
    %612 = vmatprep.subr.mxu0 %v231
    %613 = vmatpush1.msra.mxu0 %v230
    %614 = vmatprep.subr.mxu0 %v229
    %615 = vmatpush1.msra.mxu0 %v228
    %616 = vmatprep.subr.mxu0 %v227
    %617 = vmatpush1.msra.mxu0 %v226
    %618 = vmatprep.subr.mxu0 %v225
    %619 = vmatpush1.msra.mxu0 %v224
    %620 = vmatprep.subr.mxu0 %v223
    %621 = vmatpush1.msra.mxu0 %v222
    %622 = vmatprep.subr.mxu0 %v285
    %623 = vmatpush2.msra.mxu0 %v284
    %624 = vmatprep.subr.mxu0 %v283
    %625 = vmatpush2.msra.mxu0 %v282
    %626 = vmatprep.subr.mxu0 %v281
    %627 = vmatpush2.msra.mxu0 %v280
    %628 = vmatprep.subr.mxu0 %v279
    %629 = vmatpush2.msra.mxu0 %v278
    %630 = vmatprep.subr.mxu0 %v277
    %631 = vmatpush2.msra.mxu0 %v276
    %632 = vmatprep.subr.mxu0 %v275
    %633 = vmatpush2.msra.mxu0 %v274
    %634 = vmatprep.subr.mxu0 %v273
    %635 = vmatpush2.msra.mxu0 %v272
    %636 = vmatprep.subr.mxu0 %v271
    %637 = vmatpush2.msra.mxu0 %v270
    %638 = vmatprep.subr.mxu0 %v269
    %639 = vmatpush2.msra.mxu0 %v268
    %640 = vmatprep.subr.mxu0 %v267
    %641 = vmatpush2.msra.mxu0 %v266
    %642 = vmatprep.subr.mxu0 %v265
    %643 = vmatpush2.msra.mxu0 %v264
    %644 = vmatprep.subr.mxu0 %v263
    %645 = vmatpush2.msra.mxu0 %v262
    %646 = vmatprep.subr.mxu0 %v261
    %647 = vmatpush2.msra.mxu0 %v260
    %648 = vmatprep.subr.mxu0 %v259
    %649 = vmatpush2.msra.mxu0 %v258
    %650 = vmatprep.subr.mxu0 %v257
    %651 = vmatpush2.msra.mxu0 %v256
    %652 = vmatprep.subr.mxu0 %v255
    %653 = vmatpush2.msra.mxu0 %v254
    %654 = vmatprep.mubr.f32.mxu0 %v358
    %655 = vmatmul.mubr.f32.gmra.mxu0 %v356
    %v656 = vpop.f32.mrf.mxu0
    %v657 = vadd.f32 %v586, %v656
    %v658 = vpop.f32.mrf.mxu0
    %v659 = vadd.f32 %v588, %v658
    %660 = vdwg.mxu0
    %661 = vmatprep.subr.mxu0 0.0
    %662 = vmatpush1.msra.mxu0 0.0
    %663 = vmatprep.subr.mxu0 0.0
    %664 = vmatpush1.msra.mxu0 0.0
    %665 = vmatprep.subr.mxu0 0.0
    %666 = vmatpush1.msra.mxu0 0.0
    %667 = vmatprep.subr.mxu0 0.0
    %668 = vmatpush1.msra.mxu0 0.0
    %669 = vmatprep.subr.mxu0 %v309
    %670 = vmatpush1.msra.mxu0 %v308
    %671 = vmatprep.subr.mxu0 %v307
    %672 = vmatpush1.msra.mxu0 %v306
    %673 = vmatprep.subr.mxu0 %v305
    %674 = vmatpush1.msra.mxu0 %v304
    %675 = vmatprep.subr.mxu0 %v303
    %676 = vmatpush1.msra.mxu0 %v302
    %677 = vmatprep.subr.mxu0 %v301
    %678 = vmatpush1.msra.mxu0 %v300
    %679 = vmatprep.subr.mxu0 %v299
    %680 = vmatpush1.msra.mxu0 %v298
    %681 = vmatprep.subr.mxu0 %v297
    %682 = vmatpush1.msra.mxu0 %v296
    %683 = vmatprep.subr.mxu0 %v295
    %684 = vmatpush1.msra.mxu0 %v294
    %685 = vmatprep.subr.mxu0 %v293
    %686 = vmatpush1.msra.mxu0 %v292
    %687 = vmatprep.subr.mxu0 %v291
    %688 = vmatpush1.msra.mxu0 %v290
    %689 = vmatprep.subr.mxu0 %v289
    %690 = vmatpush1.msra.mxu0 %v288
    %691 = vmatprep.subr.mxu0 %v287
    %692 = vmatpush1.msra.mxu0 %v286
    %693 = vmatprep.subr.mxu0 0.0
    %694 = vmatpush2.msra.mxu0 0.0
    %695 = vmatprep.subr.mxu0 0.0
    %696 = vmatpush2.msra.mxu0 0.0
    %697 = vmatprep.subr.mxu0 0.0
    %698 = vmatpush2.msra.mxu0 0.0
    %699 = vmatprep.subr.mxu0 0.0
    %700 = vmatpush2.msra.mxu0 0.0
    %701 = vmatprep.subr.mxu0 0.0
    %702 = vmatpush2.msra.mxu0 0.0
    %703 = vmatprep.subr.mxu0 0.0
    %704 = vmatpush2.msra.mxu0 0.0
    %705 = vmatprep.subr.mxu0 0.0
    %706 = vmatpush2.msra.mxu0 0.0
    %707 = vmatprep.subr.mxu0 0.0
    %708 = vmatpush2.msra.mxu0 0.0
    %709 = vmatprep.subr.mxu0 0.0
    %710 = vmatpush2.msra.mxu0 0.0
    %711 = vmatprep.subr.mxu0 0.0
    %712 = vmatpush2.msra.mxu0 0.0
    %713 = vmatprep.subr.mxu0 0.0
    %714 = vmatpush2.msra.mxu0 0.0
    %715 = vmatprep.subr.mxu0 0.0
    %716 = vmatpush2.msra.mxu0 0.0
    %717 = vmatprep.subr.mxu0 0.0
    %718 = vmatpush2.msra.mxu0 0.0
    %719 = vmatprep.subr.mxu0 0.0
    %720 = vmatpush2.msra.mxu0 0.0
    %721 = vmatprep.subr.mxu0 0.0
    %722 = vmatpush2.msra.mxu0 0.0
    %723 = vmatprep.subr.mxu0 0.0
    %724 = vmatpush2.msra.mxu0 0.0
    %725 = vmatprep.mubr.f32.mxu0 0.0
    %726 = vmatmul.mubr.f32.gmra.mxu0 %v375
    %v727 = vpop.f32.mrf.mxu0
    %v728 = vadd.f32 %v657, %v727
    %v729 = vpop.f32.mrf.mxu0
    %v730 = vadd.f32 %v659, %v729
    %731 = vdwg.mxu0
    %vm732 = vcmp.gt.f32.partialorder %v728, 0.0
    %vm733 = vcmp.gt.f32.partialorder %v730, 0.0
    %v734 = vmin.f32 %v728, 0.0
    %v735 = vmin.f32 %v730, 0.0
    %v736 = vmul.f32 %v734, 1.442695
    %v737 = vpow.pop %v736
    %v738 = vmul.f32 %v735, 1.442695
    %v739 = vpow.pop %v738
    %v740 = vsub.f32 %v737, 1.0
    %v741 = vsub.f32 %v739, 1.0
    %v742 = vsel %vm732, %v728, %v740
    %v743 = vsel %vm733, %v730, %v741
    %v744 = vld [vmem:[%s3] sm:$0xff]
    %v745 = vld [vmem:[%s3 + $0x8] sm:$0xff]
    %v746 = vld [vmem:[%s3 + $0x10] sm:$0xff]
    %v747 = vld [vmem:[%s3 + $0x18] sm:$0xff]
    %v748 = vld [vmem:[%s3 + $0x20] sm:$0xff]
    %v749 = vld [vmem:[%s3 + $0x28] sm:$0xff]
    %v750 = vld [vmem:[%s3 + $0x30] sm:$0xff]
    %v751 = vld [vmem:[%s3 + $0x38] sm:$0xff]
    %v752 = vld [vmem:[%s3 + $0x40] sm:$0xff]
    %v753 = vld [vmem:[%s3 + $0x48] sm:$0xff]
    %v754 = vld [vmem:[%s3 + $0x50] sm:$0xff]
    %v755 = vld [vmem:[%s3 + $0x58] sm:$0xff]
    %v756 = vld [vmem:[%s3 + $0x60] sm:$0xff]
    %v757 = vld [vmem:[%s3 + $0x68] sm:$0xff]
    %v758 = vld [vmem:[%s3 + $0x70] sm:$0xff]
    %v759 = vld [vmem:[%s3 + $0x78] sm:$0xff]
    %v760 = vld [vmem:[%s3 + $0x80] sm:$0xff]
    %v761 = vld [vmem:[%s3 + $0x88] sm:$0xff]
    %v762 = vld [vmem:[%s3 + $0x90] sm:$0xff]
    %v763 = vld [vmem:[%s3 + $0x98] sm:$0xff]
    %v764 = vld [vmem:[%s3 + $0xa0] sm:$0xff]
    %v765 = vld [vmem:[%s3 + $0xa8] sm:$0xff]
    %v766 = vld [vmem:[%s3 + $0xb0] sm:$0xff]
    %v767 = vld [vmem:[%s3 + $0xb8] sm:$0xff]
    %v768 = vld [vmem:[%s3 + $0xc0] sm:$0xff]
    %v769 = vld [vmem:[%s3 + $0xc8] sm:$0xff]
    %v770 = vld [vmem:[%s3 + $0xd0] sm:$0xff]
    %v771 = vld [vmem:[%s3 + $0xd8] sm:$0xff]
    %v772 = vld [vmem:[%s3 + $0xe0] sm:$0xff]
    %v773 = vld [vmem:[%s3 + $0xe8] sm:$0xff]
    %v774 = vld [vmem:[%s3 + $0xf0] sm:$0xff]
    %v775 = vld [vmem:[%s3 + $0xf8] sm:$0xff]
    %v776 = vld [vmem:[%s4] sm:$0x1]
    %v778 = vlaneseq
    %v779 = vshrl.u32 %v778, 7
    %v780 = vsub.s32 0, %v779
    %v781 = vrot.slane %v776, %v780
    %783 = vmatprep.subr.mxu0 0.0
    %784 = vmatpush1.msra.mxu0 %v759
    %785 = vmatprep.subr.mxu0 0.0
    %786 = vmatpush1.msra.mxu0 %v758
    %787 = vmatprep.subr.mxu0 0.0
    %788 = vmatpush1.msra.mxu0 %v757
    %789 = vmatprep.subr.mxu0 0.0
    %790 = vmatpush1.msra.mxu0 %v756
    %791 = vmatprep.subr.mxu0 0.0
    %792 = vmatpush1.msra.mxu0 %v755
    %793 = vmatprep.subr.mxu0 0.0
    %794 = vmatpush1.msra.mxu0 %v754
    %795 = vmatprep.subr.mxu0 0.0
    %796 = vmatpush1.msra.mxu0 %v753
    %797 = vmatprep.subr.mxu0 0.0
    %798 = vmatpush1.msra.mxu0 %v752
    %799 = vmatprep.subr.mxu0 0.0
    %800 = vmatpush1.msra.mxu0 %v751
    %801 = vmatprep.subr.mxu0 0.0
    %802 = vmatpush1.msra.mxu0 %v750
    %803 = vmatprep.subr.mxu0 0.0
    %804 = vmatpush1.msra.mxu0 %v749
    %805 = vmatprep.subr.mxu0 0.0
    %806 = vmatpush1.msra.mxu0 %v748
    %807 = vmatprep.subr.mxu0 0.0
    %808 = vmatpush1.msra.mxu0 %v747
    %809 = vmatprep.subr.mxu0 0.0
    %810 = vmatpush1.msra.mxu0 %v746
    %811 = vmatprep.subr.mxu0 0.0
    %812 = vmatpush1.msra.mxu0 %v745
    %813 = vmatprep.subr.mxu0 0.0
    %814 = vmatpush1.msra.mxu0 %v744
    %815 = vmatprep.subr.mxu0 0.0
    %816 = vmatpush2.msra.mxu0 %v775
    %817 = vmatprep.subr.mxu0 0.0
    %818 = vmatpush2.msra.mxu0 %v774
    %819 = vmatprep.subr.mxu0 0.0
    %820 = vmatpush2.msra.mxu0 %v773
    %821 = vmatprep.subr.mxu0 0.0
    %822 = vmatpush2.msra.mxu0 %v772
    %823 = vmatprep.subr.mxu0 0.0
    %824 = vmatpush2.msra.mxu0 %v771
    %825 = vmatprep.subr.mxu0 0.0
    %826 = vmatpush2.msra.mxu0 %v770
    %827 = vmatprep.subr.mxu0 0.0
    %828 = vmatpush2.msra.mxu0 %v769
    %829 = vmatprep.subr.mxu0 0.0
    %830 = vmatpush2.msra.mxu0 %v768
    %831 = vmatprep.subr.mxu0 0.0
    %832 = vmatpush2.msra.mxu0 %v767
    %833 = vmatprep.subr.mxu0 0.0
    %834 = vmatpush2.msra.mxu0 %v766
    %835 = vmatprep.subr.mxu0 0.0
    %836 = vmatpush2.msra.mxu0 %v765
    %837 = vmatprep.subr.mxu0 0.0
    %838 = vmatpush2.msra.mxu0 %v764
    %839 = vmatprep.subr.mxu0 0.0
    %840 = vmatpush2.msra.mxu0 %v763
    %841 = vmatprep.subr.mxu0 0.0
    %842 = vmatpush2.msra.mxu0 %v762
    %843 = vmatprep.subr.mxu0 0.0
    %844 = vmatpush2.msra.mxu0 %v761
    %845 = vmatprep.subr.mxu0 0.0
    %846 = vmatpush2.msra.mxu0 %v760
    %847 = vmatprep.mubr.f32.mxu0 %v743
    %848 = vmatmul.mubr.f32.gmra.mxu0 %v742
    %v849 = vpop.f32.mrf.mxu0
    %v850 = vadd.f32 %v781, %v849
    %v851 = vpop.f32.mrf.mxu0
    %852 = vdwg.mxu0
    %vm853 = vcmp.gt.f32.partialorder %v850, 0.0
    %v854 = vmin.f32 %v850, 0.0
    %v855 = vmul.f32 %v854, 1.442695
    %v856 = vpow.pop %v855
    %v857 = vsub.f32 %v856, 1.0
    %v858 = vsel %vm853, %v850, %v857
    %v859 = vld [vmem:[%s5] sm:$0xff]
    %v860 = vld [vmem:[%s5 + $0x8] sm:$0xff]
    %v861 = vld [vmem:[%s5 + $0x10] sm:$0xff]
    %v862 = vld [vmem:[%s5 + $0x18] sm:$0xff]
    %v863 = vld [vmem:[%s6] sm:$0x1]
    %v865 = vlaneseq
    %v866 = vshrl.u32 %v865, 7
    %v867 = vsub.s32 0, %v866
    %v868 = vrot.slane %v863, %v867
    %vm870 = vcmask 261120
    %v872 = vsel %vm870, %v858, 0
    %874 = vmatprep.subr.mxu0 0.0
    %875 = vmatpush1.msra.mxu0 0.0
    %876 = vmatprep.subr.mxu0 0.0
    %877 = vmatpush1.msra.mxu0 0.0
    %878 = vmatprep.subr.mxu0 0.0
    %879 = vmatpush1.msra.mxu0 0.0
    %880 = vmatprep.subr.mxu0 0.0
    %881 = vmatpush1.msra.mxu0 0.0
    %882 = vmatprep.subr.mxu0 0.0
    %883 = vmatpush1.msra.mxu0 0.0
    %884 = vmatprep.subr.mxu0 0.0
    %885 = vmatpush1.msra.mxu0 0.0
    %886 = vmatprep.subr.mxu0 0.0
    %887 = vmatpush1.msra.mxu0 0.0
    %888 = vmatprep.subr.mxu0 0.0
    %889 = vmatpush1.msra.mxu0 0.0
    %890 = vmatprep.subr.mxu0 0.0
    %891 = vmatpush1.msra.mxu0 0.0
    %892 = vmatprep.subr.mxu0 0.0
    %893 = vmatpush1.msra.mxu0 0.0
    %894 = vmatprep.subr.mxu0 0.0
    %895 = vmatpush1.msra.mxu0 0.0
    %896 = vmatprep.subr.mxu0 0.0
    %897 = vmatpush1.msra.mxu0 0.0
    %898 = vmatprep.subr.mxu0 0.0
    %899 = vmatpush1.msra.mxu0 %v862
    %900 = vmatprep.subr.mxu0 0.0
    %901 = vmatpush1.msra.mxu0 %v861
    %902 = vmatprep.subr.mxu0 0.0
    %903 = vmatpush1.msra.mxu0 %v860
    %904 = vmatprep.subr.mxu0 0.0
    %905 = vmatpush1.msra.mxu0 %v859
    %906 = vmatprep.subr.mxu0 0.0
    %907 = vmatpush2.msra.mxu0 0.0
    %908 = vmatprep.subr.mxu0 0.0
    %909 = vmatpush2.msra.mxu0 0.0
    %910 = vmatprep.subr.mxu0 0.0
    %911 = vmatpush2.msra.mxu0 0.0
    %912 = vmatprep.subr.mxu0 0.0
    %913 = vmatpush2.msra.mxu0 0.0
    %914 = vmatprep.subr.mxu0 0.0
    %915 = vmatpush2.msra.mxu0 0.0
    %916 = vmatprep.subr.mxu0 0.0
    %917 = vmatpush2.msra.mxu0 0.0
    %918 = vmatprep.subr.mxu0 0.0
    %919 = vmatpush2.msra.mxu0 0.0
    %920 = vmatprep.subr.mxu0 0.0
    %921 = vmatpush2.msra.mxu0 0.0
    %922 = vmatprep.subr.mxu0 0.0
    %923 = vmatpush2.msra.mxu0 0.0
    %924 = vmatprep.subr.mxu0 0.0
    %925 = vmatpush2.msra.mxu0 0.0
    %926 = vmatprep.subr.mxu0 0.0
    %927 = vmatpush2.msra.mxu0 0.0
    %928 = vmatprep.subr.mxu0 0.0
    %929 = vmatpush2.msra.mxu0 0.0
    %930 = vmatprep.subr.mxu0 0.0
    %931 = vmatpush2.msra.mxu0 0.0
    %932 = vmatprep.subr.mxu0 0.0
    %933 = vmatpush2.msra.mxu0 0.0
    %934 = vmatprep.subr.mxu0 0.0
    %935 = vmatpush2.msra.mxu0 0.0
    %936 = vmatprep.subr.mxu0 0.0
    %937 = vmatpush2.msra.mxu0 0.0
    %938 = vmatprep.mubr.f32.mxu0 0.0
    %939 = vmatmul.mubr.f32.gmra.mxu0 %v872
    %v940 = vpop.f32.mrf.mxu0
    %v941 = vadd.f32 %v868, %v940
    %v942 = vpop.f32.mrf.mxu0
    %943 = vdwg.mxu0
    %vm944 = vcmask 25600
    %945 = vst.msk [vmem:[#allocation2] sm:$0x3] %vm944, %v941
    // Predicated region
    $region30: #{sharelink_forward.3} parent=1 // pred_check
      _
    $region31: #{sharelink_forward.3} parent=1 // pred_check_branch
      %947 = sbr.rel (0) target = $region33
    $region32: #{sharelink_forward.3} parent=1 // pred_region
      %s949 = ssub.s32 32, 32
      %950 = vsyncadd [#allocation3], %s949
      %s952 = sshll.u32 [#allocation2], 4
      %s953 = int_to_ptr.vmem [resolvable:$true] %s952
      %955 = dma.vmem_to_hbm [thread:$0]  %s953, 32, %s7, [#allocation3]
    $region33: #{sharelink_forward.3} parent=1 // pred_fallthru
      _
    // Predicated region
    $region34: #{sharelink_forward.3} parent=1 // pred_check
      _
    $region35: #{sharelink_forward.3} parent=1 // pred_check_branch
      %957 = sbr.rel (0) target = $region37
    $region36: #{sharelink_forward.3} parent=1 // pred_region
      %958 = dma.done [#allocation3], 32
    $region37: #{sharelink_forward.3} parent=1 // pred_fallthru
      _
    %959 = vsyncpa [#allocation3], 1

// kernel: sharelink_forward.2
$region0: #{sharelink_forward.2}
  #allocation0 [shape = 'u32[]', space=smem, size = 0x4, offset = 0x4, fixed_abs, tag = 'smem constant byte address 0x4 - core index']
  #allocation1 [shape = 'u32[144,128]{1,0:T(1,128)}', space=vmem, size = 0x12000, scoped, tag = 'internal scratch']
  %s0 = inlined_call_operand.smem [shape: u32[32], index: -1, kind: input, shape index: {}]
  %s1 = sld [smem:[%s0]]
  %s2 = scalar_lea.smem %s0, 1
  %s3 = sld [smem:[%s2]]
  %s4 = scalar_lea.smem %s0, 2
  %s5 = sld [smem:[%s4]]
  %s6 = scalar_lea.smem %s0, 3
  %s7 = sld [smem:[%s6]]
  %s8 = scalar_lea.smem %s0, 4
  %s9 = sld [smem:[%s8]]
  %s10 = scalar_lea.smem %s0, 5
  %s11 = sld [smem:[%s10]]
  %s12 = scalar_lea.smem %s0, 6
  %s13 = sld [smem:[%s12]]
  %s14 = scalar_lea.smem %s0, 7
  %s15 = sld [smem:[%s14]]
  %s16 = scalar_lea.smem %s0, 8
  %s17 = sld [smem:[%s16]]
  %s18 = scalar_lea.smem %s0, 9
  %s19 = sld [smem:[%s18]]
  %s20 = scalar_lea.smem %s0, 10
  %s21 = sld [smem:[%s20]]
  %s22 = scalar_lea.smem %s0, 11
  %s23 = sld [smem:[%s22]]
  %s24 = scalar_lea.smem %s0, 12
  %s25 = sld [smem:[%s24]]
  %s26 = scalar_lea.smem %s0, 13
  %s27 = sld [smem:[%s26]]
  %s28 = scalar_lea.smem %s0, 14
  %s29 = sld [smem:[%s28]]
  %s30 = scalar_lea.smem %s0, 15
  %s31 = sld [smem:[%s30]]
  %s32 = scalar_lea.smem %s0, 16
  %s33 = sld [smem:[%s32]]
  %s34 = scalar_lea.smem %s0, 17
  %s35 = sld [smem:[%s34]]
  %s36 = scalar_lea.smem %s0, 18
  %s37 = sld [smem:[%s36]]
  %s38 = scalar_lea.smem %s0, 19
  %s39 = sld [smem:[%s38]]
  %s40 = scalar_lea.smem %s0, 20
  %s41 = sld [smem:[%s40]]
  %s42 = scalar_lea.smem %s0, 21
  %s43 = sld [smem:[%s42]]
  %s44 = scalar_lea.smem %s0, 22
  %s45 = sld [smem:[%s44]]
  %s46 = scalar_lea.smem %s0, 23
  %s47 = sld [smem:[%s46]]
  %s48 = scalar_lea.smem %s0, 24
  %s49 = sld [smem:[%s48]]
  %s50 = scalar_lea.smem %s0, 25
  %s51 = sld [smem:[%s50]]
  %s52 = scalar_lea.smem %s0, 26
  %s53 = sld [smem:[%s52]]
  %s54 = scalar_lea.smem %s0, 27
  %s55 = sld [smem:[%s54]]
  %s56 = scalar_lea.smem %s0, 28
  %s57 = sld [smem:[%s56]]
  %s58 = scalar_lea.smem %s0, 29
  %s59 = sld [smem:[%s58]]
  %s60 = scalar_lea.smem %s0, 30
  %s61 = sld [smem:[%s60]]
  %s62 = scalar_lea.smem %s0, 31
  %s63 = sld [smem:[%s62]]
  %s64 = sld [smem:[#allocation0]]
  $region265: #{sharelink_forward.2} parent=0
    _
  %s66 = ssub.s32 1, %s64
  %s67 = scalar_select 0, %s66, %s64
  $region1: #{sharelink_forward.2} parent=0
    #allocation2 [shape = 'u8[8192]{0}', space=vmem, size = 0x2000, scoped, tag = 'input window, operand 3, single buffered']
    #allocation3 [shape = 's32[2]{0}', space=sflag, size = 0x8, scoped, tag = 'scoped memory for sharelink_forward.2']
    #allocation4 [shape = 'u8[512]{0}', space=vmem, size = 0x400, scoped, tag = 'input window, operand 4, single buffered']
    #allocation5 [shape = 's32[1]{0}', space=sflag, size = 0x4, scoped, tag = 'scoped memory for sharelink_forward.2']
    #allocation6 [shape = 'u8[4608]{0}', space=vmem, size = 0x1400, scoped, tag = 'input window, operand 6, single buffered']
    #allocation7 [shape = 'u8[8192]{0}', space=vmem, size = 0x2000, scoped, tag = 'input window, operand 7, single buffered']
    #allocation8 [shape = 's32[1]{0}', space=sflag, size = 0x4, scoped, tag = 'scoped memory for sharelink_forward.2']
    #allocation9 [shape = 'u8[512]{0}', space=vmem, size = 0x400, scoped, tag = 'input window, operand 8, single buffered']
    #allocation10 [shape = 'u8[512]{0}', space=vmem, size = 0x400, scoped, tag = 'input window, operand 9, single buffered']
    #allocation11 [shape = 's32[1]{0}', space=sflag, size = 0x4, scoped, tag = 'scoped memory for sharelink_forward.2']
    #allocation12 [shape = 'u8[512]{0}', space=vmem, size = 0x400, scoped, tag = 'input window, operand 10, single buffered']
    #allocation13 [shape = 'u8[512]{0}', space=vmem, size = 0x400, scoped, tag = 'input window, operand 11, single buffered']
    #allocation14 [shape = 's32[1]{0}', space=sflag, size = 0x4, scoped, tag = 'scoped memory for sharelink_forward.2']
    #allocation15 [shape = 'u8[8192]{0}', space=vmem, size = 0x2000, scoped, tag = 'input window, operand 12, single buffered']
    #allocation16 [shape = 'u8[512]{0}', space=vmem, size = 0x400, scoped, tag = 'input window, operand 13, single buffered']
    #allocation17 [shape = 's32[1]{0}', space=sflag, size = 0x4, scoped, tag = 'scoped memory for sharelink_forward.2']
    #allocation18 [shape = 'u8[8192]{0}', space=vmem, size = 0x2000, scoped, tag = 'input window, operand 14, single buffered']
    #allocation19 [shape = 'u8[512]{0}', space=vmem, size = 0x400, scoped, tag = 'input window, operand 15, single buffered']
    #allocation20 [shape = 's32[1]{0}', space=sflag, size = 0x4, scoped, tag = 'scoped memory for sharelink_forward.2']
    #allocation21 [shape = 'u8[16384]{0}', space=vmem, size = 0x4000, scoped, tag = 'input window, operand 16, single buffered']
    #allocation22 [shape = 'u8[73728]{0}', space=vmem, size = 0x12000, scoped, tag = 'input window, operand 17, single buffered']
    #allocation23 [shape = 's32[1]{0}', space=sflag, size = 0x4, scoped, tag = 'scoped memory for sharelink_forward.2']
    #allocation24 [shape = 'u8[4608]{0}', space=vmem, size = 0x1400, scoped, tag = 'input window, operand 18, single buffered']
    #allocation25 [shape = 'u8[8192]{0}', space=vmem, size = 0x2000, scoped, tag = 'input window, operand 19, single buffered']
    #allocation26 [shape = 's32[1]{0}', space=sflag, size = 0x4, scoped, tag = 'scoped memory for sharelink_forward.2']
    #allocation27 [shape = 'u8[512]{0}', space=vmem, size = 0x400, scoped, tag = 'input window, operand 20, single buffered']
    #allocation28 [shape = 'u8[512]{0}', space=vmem, size = 0x400, scoped, tag = 'input window, operand 21, single buffered']
    #allocation29 [shape = 's32[1]{0}', space=sflag, size = 0x4, scoped, tag = 'scoped memory for sharelink_forward.2']
    #allocation30 [shape = 'u8[512]{0}', space=vmem, size = 0x400, scoped, tag = 'input window, operand 22, single buffered']
    #allocation31 [shape = 'u8[512]{0}', space=vmem, size = 0x400, scoped, tag = 'input window, operand 23, single buffered']
    #allocation32 [shape = 's32[1]{0}', space=sflag, size = 0x4, scoped, tag = 'scoped memory for sharelink_forward.2']
    #allocation33 [shape = 'u8[8192]{0}', space=vmem, size = 0x2000, scoped, tag = 'input window, operand 24, single buffered']
    #allocation34 [shape = 'u8[512]{0}', space=vmem, size = 0x400, scoped, tag = 'input window, operand 25, single buffered']
    #allocation35 [shape = 's32[1]{0}', space=sflag, size = 0x4, scoped, tag = 'scoped memory for sharelink_forward.2']
    #allocation36 [shape = 'u8[8192]{0}', space=vmem, size = 0x2000, scoped, tag = 'input window, operand 26, single buffered']
    #allocation37 [shape = 'u8[512]{0}', space=vmem, size = 0x400, scoped, tag = 'input window, operand 27, single buffered']
    #allocation38 [shape = 's32[1]{0}', space=sflag, size = 0x4, scoped, tag = 'scoped memory for sharelink_forward.2']
    #allocation39 [shape = 'u8[16384]{0}', space=vmem, size = 0x4000, scoped, tag = 'input window, operand 28, single buffered']
    #allocation40 [shape = 'u8[73728]{0}', space=vmem, size = 0x12000, scoped, tag = 'input window, operand 29, single buffered']
    #allocation41 [shape = 's32[1]{0}', space=sflag, size = 0x4, scoped, tag = 'scoped memory for sharelink_forward.2']
    #allocation42 [shape = 'u8[4608]{0}', space=vmem, size = 0x1400, scoped, tag = 'input window, operand 30, single buffered']
    %68 = vsyncpa [#allocation3], 0
    %69 = vsyncpa [#allocation5], 0
    %70 = vsyncpa [#allocation8], 0
    %71 = vsyncpa [#allocation11], 0
    %72 = vsyncpa [#allocation14], 0
    %73 = vsyncpa [#allocation17], 0
    %74 = vsyncpa [#allocation20], 0
    %75 = vsyncpa [#allocation23], 0
    %76 = vsyncpa [#allocation26], 0
    %77 = vsyncpa [#allocation29], 0
    %78 = vsyncpa [#allocation32], 0
    %79 = vsyncpa [#allocation35], 0
    %80 = vsyncpa [#allocation38], 0
    %81 = vsyncpa [#allocation41], 0
    loop: start=0, step=1, limit=4
    $region2: #{sharelink_forward.2} parent=1 // loop_pre_header
      _
    $region3: #{sharelink_forward.2} parent=1 // loop_header
      %s83 = sphi 0, %s87
      %p84 = scmp.ge.s32.totalorder %s83, 4
      %s93 = sphi 0, %s95
      %s96 = sphi 0, %s93
      %s97 = sphi 0, %s96
      %s113 = sphi 0, %s97
      %s117 = sphi 0, %s117
      %s119 = sphi 0, %s117
      %s120 = sphi 0, %s119
      %s134 = sphi 0, %s120
      %s138 = sphi 0, %s138
      %s140 = sphi 0, %s138
      %s141 = sphi 0, %s140
      %s155 = sphi 0, %s141
      %s159 = sphi 0, %s159
      %s161 = sphi 0, %s159
      %s162 = sphi 0, %s161
      %s176 = sphi 0, %s162
      %s180 = sphi 0, %s180
      %s182 = sphi 0, %s180
      %s183 = sphi 0, %s182
      %s197 = sphi 0, %s183
      %s201 = sphi 0, %s201
      %s203 = sphi 0, %s201
      %s204 = sphi 0, %s203
      %s218 = sphi 0, %s204
      %s222 = sphi 0, %s222
      %s224 = sphi 0, %s222
      %s225 = sphi 0, %s224
      %s239 = sphi 0, %s225
      %s243 = sphi 0, %s243
      %s245 = sphi 0, %s243
      %s246 = sphi 0, %s245
      %s260 = sphi 0, %s246
      %s264 = sphi 0, %s264
      %s266 = sphi 0, %s264
      %s267 = sphi 0, %s266
      %s281 = sphi 0, %s267
      %s285 = sphi 0, %s285
      %s287 = sphi 0, %s285
      %s288 = sphi 0, %s287
      %s302 = sphi 0, %s288
      %s306 = sphi 0, %s306
      %s308 = sphi 0, %s306
      %s309 = sphi 0, %s308
      %s323 = sphi 0, %s309
      %s327 = sphi 0, %s327
      %s329 = sphi 0, %s327
      %s330 = sphi 0, %s329
      %s344 = sphi 0, %s330
      %s348 = sphi 0, %s348
      %s350 = sphi 0, %s348
      %s351 = sphi 0, %s350
      %s365 = sphi 0, %s351
      %s369 = sphi 0, %s369
      %s371 = sphi 0, %s369
      %s372 = sphi 0, %s371
      %s386 = sphi 0, %s372
      %s390 = sphi 0, %s390
      %s392 = sphi 0, %s390
      %s393 = sphi 0, %s392
      %s407 = sphi 0, %s393
      %s411 = sphi 0, %s411
      %s413 = sphi 0, %s411
      %s414 = sphi 0, %s413
      %s428 = sphi 0, %s414
      %s432 = sphi 0, %s432
      %s434 = sphi 0, %s432
      %s435 = sphi 0, %s434
      %s449 = sphi 0, %s435
      %s453 = sphi 0, %s453
      %s455 = sphi 0, %s453
      %s456 = sphi 0, %s455
      %s470 = sphi 0, %s456
      %s474 = sphi 0, %s474
      %s476 = sphi 0, %s474
      %s477 = sphi 0, %s476
      %s491 = sphi 0, %s477
      %s495 = sphi 0, %s495
      %s497 = sphi 0, %s495
      %s498 = sphi 0, %s497
      %s512 = sphi 0, %s498
      %s516 = sphi 0, %s516
      %s518 = sphi 0, %s516
      %s519 = sphi 0, %s518
      %s533 = sphi 0, %s519
      %s537 = sphi 0, %s537
      %s539 = sphi 0, %s537
      %s540 = sphi 0, %s539
      %s554 = sphi 0, %s540
      %s558 = sphi 0, %s558
      %s560 = sphi 0, %s558
      %s561 = sphi 0, %s560
      %s575 = sphi 0, %s561
      %s579 = sphi 0, %s579
      %s581 = sphi 0, %s579
      %s582 = sphi 0, %s581
      %s596 = sphi 0, %s582
      %s600 = sphi 0, %s600
      %s602 = sphi 0, %s600
      %s603 = sphi 0, %s602
      %s617 = sphi 0, %s603
      %s621 = sphi 0, %s621
      %s623 = sphi 0, %s621
      %s624 = sphi 0, %s623
      %s638 = sphi 0, %s624
      %s642 = sphi 0, %s642
      %s644 = sphi 0, %s642
      %s645 = sphi 0, %s644
      %s659 = sphi 0, %s645
      %s663 = sphi 0, %s663
      %s665 = sphi 0, %s663
      %s666 = sphi 0, %s665
      %s680 = sphi 0, %s666
      %s684 = sphi 0, %s684
      %s686 = sphi 0, %s684
      %s687 = sphi 0, %s686
      %s701 = sphi 0, %s687
      %s705 = sphi 0, %s705
      %s707 = sphi 0, %s705
      %s708 = sphi 0, %s707
      %s722 = sphi 0, %s708
      %s726 = sphi 0, %s726
      %s728 = sphi 0, %s726
      %s729 = sphi 0, %s728
      %s743 = sphi 0, %s729
      %s749 = sphi 0, %s751
      %s752 = sphi 0, %s749
      %s753 = sphi 0, %s752
      %s769 = sphi 0, %s753
    $region4: #{sharelink_forward.2} parent=1 // loop_header_branch
      %86 = sbr.rel (%p84) target = $region8
    $region5: #{sharelink_forward.2} parent=1 // loop_body
      %s88 = ssub.s32 %s83, 1
      %s89 = ssub.s32 %s83, 2
      %s90 = sadd.s32 %s83, 1
      %s91 = ssub.s32 %s83, %s90
      %p92 = scmp.eq.s32.totalorder %s91, 0
      %s94 = sadd.s32 %s93, 1
      %s95 = scalar_select %p92, %s93, %s94
      %p98 = pneg %p92
      %p99 = scmp.eq.s32.totalorder %s83, 1
      %p100 = por %p98, %p99
      %p101 = scmp.ne.s32.totalorder %s93, %s96
      %p102 = scmp.eq.s32.totalorder %s83, 0
      %p103 = por %p101, %p102
      %p104 = scmp.ne.s32.totalorder %s93, %s96
      %p105 = scmp.eq.s32.totalorder %s88, 1
      %p106 = por %p104, %p105
      %p107 = scmp.ne.s32.totalorder %s96, %s97
      %p108 = scmp.eq.s32.totalorder %s88, 0
      %p109 = por %p107, %p108
      %p110 = scmp.ne.s32.totalorder %s96, %s97
      %p111 = scmp.eq.s32.totalorder %s89, 1
      %p112 = por %p110, %p111
      %p114 = scmp.ne.s32.totalorder %s97, %s113
      %p115 = scmp.eq.s32.totalorder %s89, 0
      %p116 = por %p114, %p115
      %s118 = sadd.s32 %s117, 1
      %p121 = scmp.eq.s32.totalorder %s83, 1
      %p122 = scmp.ne.s32.totalorder %s117, %s119
      %p123 = scmp.eq.s32.totalorder %s83, 0
      %p124 = por %p122, %p123
      %p125 = scmp.ne.s32.totalorder %s117, %s119
      %p126 = scmp.eq.s32.totalorder %s88, 1
      %p127 = por %p125, %p126
      %p128 = scmp.ne.s32.totalorder %s119, %s120
      %p129 = scmp.eq.s32.totalorder %s88, 0
      %p130 = por %p128, %p129
      %p131 = scmp.ne.s32.totalorder %s119, %s120
      %p132 = scmp.eq.s32.totalorder %s89, 1
      %p133 = por %p131, %p132
      %p135 = scmp.ne.s32.totalorder %s120, %s134
      %p136 = scmp.eq.s32.totalorder %s89, 0
      %p137 = por %p135, %p136
      %s139 = sadd.s32 %s138, 1
      %p142 = scmp.eq.s32.totalorder %s83, 1
      %p143 = scmp.ne.s32.totalorder %s138, %s140
      %p144 = scmp.eq.s32.totalorder %s83, 0
      %p145 = por %p143, %p144
      %p146 = scmp.ne.s32.totalorder %s138, %s140
      %p147 = scmp.eq.s32.totalorder %s88, 1
      %p148 = por %p146, %p147
      %p149 = scmp.ne.s32.totalorder %s140, %s141
      %p150 = scmp.eq.s32.totalorder %s88, 0
      %p151 = por %p149, %p150
      %p152 = scmp.ne.s32.totalorder %s140, %s141
      %p153 = scmp.eq.s32.totalorder %s89, 1
      %p154 = por %p152, %p153
      %p156 = scmp.ne.s32.totalorder %s141, %s155
      %p157 = scmp.eq.s32.totalorder %s89, 0
      %p158 = por %p156, %p157
      %s160 = sadd.s32 %s159, 1
      %p163 = scmp.eq.s32.totalorder %s83, 1
      %p164 = scmp.ne.s32.totalorder %s159, %s161
      %p165 = scmp.eq.s32.totalorder %s83, 0
      %p166 = por %p164, %p165
      %p167 = scmp.ne.s32.totalorder %s159, %s161
      %p168 = scmp.eq.s32.totalorder %s88, 1
      %p169 = por %p167, %p168
      %p170 = scmp.ne.s32.totalorder %s161, %s162
      %p171 = scmp.eq.s32.totalorder %s88, 0
      %p172 = por %p170, %p171
      %p173 = scmp.ne.s32.totalorder %s161, %s162
      %p174 = scmp.eq.s32.totalorder %s89, 1
      %p175 = por %p173, %p174
      %p177 = scmp.ne.s32.totalorder %s162, %s176
      %p178 = scmp.eq.s32.totalorder %s89, 0
      %p179 = por %p177, %p178
      %s181 = sadd.s32 %s180, 1
      %p184 = scmp.eq.s32.totalorder %s83, 1
      %p185 = scmp.ne.s32.totalorder %s180, %s182
      %p186 = scmp.eq.s32.totalorder %s83, 0
      %p187 = por %p185, %p186
      %p188 = scmp.ne.s32.totalorder %s180, %s182
      %p189 = scmp.eq.s32.totalorder %s88, 1
      %p190 = por %p188, %p189
      %p191 = scmp.ne.s32.totalorder %s182, %s183
      %p192 = scmp.eq.s32.totalorder %s88, 0
      %p193 = por %p191, %p192
      %p194 = scmp.ne.s32.totalorder %s182, %s183
      %p195 = scmp.eq.s32.totalorder %s89, 1
      %p196 = por %p194, %p195
      %p198 = scmp.ne.s32.totalorder %s183, %s197
      %p199 = scmp.eq.s32.totalorder %s89, 0
      %p200 = por %p198, %p199
      %s202 = sadd.s32 %s201, 1
      %p205 = scmp.eq.s32.totalorder %s83, 1
      %p206 = scmp.ne.s32.totalorder %s201, %s203
      %p207 = scmp.eq.s32.totalorder %s83, 0
      %p208 = por %p206, %p207
      %p209 = scmp.ne.s32.totalorder %s201, %s203
      %p210 = scmp.eq.s32.totalorder %s88, 1
      %p211 = por %p209, %p210
      %p212 = scmp.ne.s32.totalorder %s203, %s204
      %p213 = scmp.eq.s32.totalorder %s88, 0
      %p214 = por %p212, %p213
      %p215 = scmp.ne.s32.totalorder %s203, %s204
      %p216 = scmp.eq.s32.totalorder %s89, 1
      %p217 = por %p215, %p216
      %p219 = scmp.ne.s32.totalorder %s204, %s218
      %p220 = scmp.eq.s32.totalorder %s89, 0
      %p221 = por %p219, %p220
      %s223 = sadd.s32 %s222, 1
      %p226 = scmp.eq.s32.totalorder %s83, 1
      %p227 = scmp.ne.s32.totalorder %s222, %s224
      %p228 = scmp.eq.s32.totalorder %s83, 0
      %p229 = por %p227, %p228
      %p230 = scmp.ne.s32.totalorder %s222, %s224
      %p231 = scmp.eq.s32.totalorder %s88, 1
      %p232 = por %p230, %p231
      %p233 = scmp.ne.s32.totalorder %s224, %s225
      %p234 = scmp.eq.s32.totalorder %s88, 0
      %p235 = por %p233, %p234
      %p236 = scmp.ne.s32.totalorder %s224, %s225
      %p237 = scmp.eq.s32.totalorder %s89, 1
      %p238 = por %p236, %p237
      %p240 = scmp.ne.s32.totalorder %s225, %s239
      %p241 = scmp.eq.s32.totalorder %s89, 0
      %p242 = por %p240, %p241
      %s244 = sadd.s32 %s243, 1
      %p247 = scmp.eq.s32.totalorder %s83, 1
      %p248 = scmp.ne.s32.totalorder %s243, %s245
      %p249 = scmp.eq.s32.totalorder %s83, 0
      %p250 = por %p248, %p249
      %p251 = scmp.ne.s32.totalorder %s243, %s245
      %p252 = scmp.eq.s32.totalorder %s88, 1
      %p253 = por %p251, %p252
      %p254 = scmp.ne.s32.totalorder %s245, %s246
      %p255 = scmp.eq.s32.totalorder %s88, 0
      %p256 = por %p254, %p255
      %p257 = scmp.ne.s32.totalorder %s245, %s246
      %p258 = scmp.eq.s32.totalorder %s89, 1
      %p259 = por %p257, %p258
      %p261 = scmp.ne.s32.totalorder %s246, %s260
      %p262 = scmp.eq.s32.totalorder %s89, 0
      %p263 = por %p261, %p262
      %s265 = sadd.s32 %s264, 1
      %p268 = scmp.eq.s32.totalorder %s83, 1
      %p269 = scmp.ne.s32.totalorder %s264, %s266
      %p270 = scmp.eq.s32.totalorder %s83, 0
      %p271 = por %p269, %p270
      %p272 = scmp.ne.s32.totalorder %s264, %s266
      %p273 = scmp.eq.s32.totalorder %s88, 1
      %p274 = por %p272, %p273
      %p275 = scmp.ne.s32.totalorder %s266, %s267
      %p276 = scmp.eq.s32.totalorder %s88, 0
      %p277 = por %p275, %p276
      %p278 = scmp.ne.s32.totalorder %s266, %s267
      %p279 = scmp.eq.s32.totalorder %s89, 1
      %p280 = por %p278, %p279
      %p282 = scmp.ne.s32.totalorder %s267, %s281
      %p283 = scmp.eq.s32.totalorder %s89, 0
      %p284 = por %p282, %p283
      %s286 = sadd.s32 %s285, 1
      %p289 = scmp.eq.s32.totalorder %s83, 1
      %p290 = scmp.ne.s32.totalorder %s285, %s287
      %p291 = scmp.eq.s32.totalorder %s83, 0
      %p292 = por %p290, %p291
      %p293 = scmp.ne.s32.totalorder %s285, %s287
      %p294 = scmp.eq.s32.totalorder %s88, 1
      %p295 = por %p293, %p294
      %p296 = scmp.ne.s32.totalorder %s287, %s288
      %p297 = scmp.eq.s32.totalorder %s88, 0
      %p298 = por %p296, %p297
      %p299 = scmp.ne.s32.totalorder %s287, %s288
      %p300 = scmp.eq.s32.totalorder %s89, 1
      %p301 = por %p299, %p300
      %p303 = scmp.ne.s32.totalorder %s288, %s302
      %p304 = scmp.eq.s32.totalorder %s89, 0
      %p305 = por %p303, %p304
      %s307 = sadd.s32 %s306, 1
      %p310 = scmp.eq.s32.totalorder %s83, 1
      %p311 = scmp.ne.s32.totalorder %s306, %s308
      %p312 = scmp.eq.s32.totalorder %s83, 0
      %p313 = por %p311, %p312
      %p314 = scmp.ne.s32.totalorder %s306, %s308
      %p315 = scmp.eq.s32.totalorder %s88, 1
      %p316 = por %p314, %p315
      %p317 = scmp.ne.s32.totalorder %s308, %s309
      %p318 = scmp.eq.s32.totalorder %s88, 0
      %p319 = por %p317, %p318
      %p320 = scmp.ne.s32.totalorder %s308, %s309
      %p321 = scmp.eq.s32.totalorder %s89, 1
      %p322 = por %p320, %p321
      %p324 = scmp.ne.s32.totalorder %s309, %s323
      %p325 = scmp.eq.s32.totalorder %s89, 0
      %p326 = por %p324, %p325
      %s328 = sadd.s32 %s327, 1
      %p331 = scmp.eq.s32.totalorder %s83, 1
      %p332 = scmp.ne.s32.totalorder %s327, %s329
      %p333 = scmp.eq.s32.totalorder %s83, 0
      %p334 = por %p332, %p333
      %p335 = scmp.ne.s32.totalorder %s327, %s329
      %p336 = scmp.eq.s32.totalorder %s88, 1
      %p337 = por %p335, %p336
      %p338 = scmp.ne.s32.totalorder %s329, %s330
      %p339 = scmp.eq.s32.totalorder %s88, 0
      %p340 = por %p338, %p339
      %p341 = scmp.ne.s32.totalorder %s329, %s330
      %p342 = scmp.eq.s32.totalorder %s89, 1
      %p343 = por %p341, %p342
      %p345 = scmp.ne.s32.totalorder %s330, %s344
      %p346 = scmp.eq.s32.totalorder %s89, 0
      %p347 = por %p345, %p346
      %s349 = sadd.s32 %s348, 1
      %p352 = scmp.eq.s32.totalorder %s83, 1
      %p353 = scmp.ne.s32.totalorder %s348, %s350
      %p354 = scmp.eq.s32.totalorder %s83, 0
      %p355 = por %p353, %p354
      %p356 = scmp.ne.s32.totalorder %s348, %s350
      %p357 = scmp.eq.s32.totalorder %s88, 1
      %p358 = por %p356, %p357
      %p359 = scmp.ne.s32.totalorder %s350, %s351
      %p360 = scmp.eq.s32.totalorder %s88, 0
      %p361 = por %p359, %p360
      %p362 = scmp.ne.s32.totalorder %s350, %s351
      %p363 = scmp.eq.s32.totalorder %s89, 1
      %p364 = por %p362, %p363
      %p366 = scmp.ne.s32.totalorder %s351, %s365
      %p367 = scmp.eq.s32.totalorder %s89, 0
      %p368 = por %p366, %p367
      %s370 = sadd.s32 %s369, 1
      %p373 = scmp.eq.s32.totalorder %s83, 1
      %p374 = scmp.ne.s32.totalorder %s369, %s371
      %p375 = scmp.eq.s32.totalorder %s83, 0
      %p376 = por %p374, %p375
      %p377 = scmp.ne.s32.totalorder %s369, %s371
      %p378 = scmp.eq.s32.totalorder %s88, 1
      %p379 = por %p377, %p378
      %p380 = scmp.ne.s32.totalorder %s371, %s372
      %p381 = scmp.eq.s32.totalorder %s88, 0
      %p382 = por %p380, %p381
      %p383 = scmp.ne.s32.totalorder %s371, %s372
      %p384 = scmp.eq.s32.totalorder %s89, 1
      %p385 = por %p383, %p384
      %p387 = scmp.ne.s32.totalorder %s372, %s386
      %p388 = scmp.eq.s32.totalorder %s89, 0
      %p389 = por %p387, %p388
      %s391 = sadd.s32 %s390, 1
      %p394 = scmp.eq.s32.totalorder %s83, 1
      %p395 = scmp.ne.s32.totalorder %s390, %s392
      %p396 = scmp.eq.s32.totalorder %s83, 0
      %p397 = por %p395, %p396
      %p398 = scmp.ne.s32.totalorder %s390, %s392
      %p399 = scmp.eq.s32.totalorder %s88, 1
      %p400 = por %p398, %p399
      %p401 = scmp.ne.s32.totalorder %s392, %s393
      %p402 = scmp.eq.s32.totalorder %s88, 0
      %p403 = por %p401, %p402
      %p404 = scmp.ne.s32.totalorder %s392, %s393
      %p405 = scmp.eq.s32.totalorder %s89, 1
      %p406 = por %p404, %p405
      %p408 = scmp.ne.s32.totalorder %s393, %s407
      %p409 = scmp.eq.s32.totalorder %s89, 0
      %p410 = por %p408, %p409
      %s412 = sadd.s32 %s411, 1
      %p415 = scmp.eq.s32.totalorder %s83, 1
      %p416 = scmp.ne.s32.totalorder %s411, %s413
      %p417 = scmp.eq.s32.totalorder %s83, 0
      %p418 = por %p416, %p417
      %p419 = scmp.ne.s32.totalorder %s411, %s413
      %p420 = scmp.eq.s32.totalorder %s88, 1
      %p421 = por %p419, %p420
      %p422 = scmp.ne.s32.totalorder %s413, %s414
      %p423 = scmp.eq.s32.totalorder %s88, 0
      %p424 = por %p422, %p423
      %p425 = scmp.ne.s32.totalorder %s413, %s414
      %p426 = scmp.eq.s32.totalorder %s89, 1
      %p427 = por %p425, %p426
      %p429 = scmp.ne.s32.totalorder %s414, %s428
      %p430 = scmp.eq.s32.totalorder %s89, 0
      %p431 = por %p429, %p430
      %s433 = sadd.s32 %s432, 1
      %p436 = scmp.eq.s32.totalorder %s83, 1
      %p437 = scmp.ne.s32.totalorder %s432, %s434
      %p438 = scmp.eq.s32.totalorder %s83, 0
      %p439 = por %p437, %p438
      %p440 = scmp.ne.s32.totalorder %s432, %s434
      %p441 = scmp.eq.s32.totalorder %s88, 1
      %p442 = por %p440, %p441
      %p443 = scmp.ne.s32.totalorder %s434, %s435
      %p444 = scmp.eq.s32.totalorder %s88, 0
      %p445 = por %p443, %p444
      %p446 = scmp.ne.s32.totalorder %s434, %s435
      %p447 = scmp.eq.s32.totalorder %s89, 1
      %p448 = por %p446, %p447
      %p450 = scmp.ne.s32.totalorder %s435, %s449
      %p451 = scmp.eq.s32.totalorder %s89, 0
      %p452 = por %p450, %p451
      %s454 = sadd.s32 %s453, 1
      %p457 = scmp.eq.s32.totalorder %s83, 1
      %p458 = scmp.ne.s32.totalorder %s453, %s455
      %p459 = scmp.eq.s32.totalorder %s83, 0
      %p460 = por %p458, %p459
      %p461 = scmp.ne.s32.totalorder %s453, %s455
      %p462 = scmp.eq.s32.totalorder %s88, 1
      %p463 = por %p461, %p462
      %p464 = scmp.ne.s32.totalorder %s455, %s456
      %p465 = scmp.eq.s32.totalorder %s88, 0
      %p466 = por %p464, %p465
      %p467 = scmp.ne.s32.totalorder %s455, %s456
      %p468 = scmp.eq.s32.totalorder %s89, 1
      %p469 = por %p467, %p468
      %p471 = scmp.ne.s32.totalorder %s456, %s470
      %p472 = scmp.eq.s32.totalorder %s89, 0
      %p473 = por %p471, %p472
      %s475 = sadd.s32 %s474, 1
      %p478 = scmp.eq.s32.totalorder %s83, 1
      %p479 = scmp.ne.s32.totalorder %s474, %s476
      %p480 = scmp.eq.s32.totalorder %s83, 0
      %p481 = por %p479, %p480
      %p482 = scmp.ne.s32.totalorder %s474, %s476
      %p483 = scmp.eq.s32.totalorder %s88, 1
      %p484 = por %p482, %p483
      %p485 = scmp.ne.s32.totalorder %s476, %s477
      %p486 = scmp.eq.s32.totalorder %s88, 0
      %p487 = por %p485, %p486
      %p488 = scmp.ne.s32.totalorder %s476, %s477
      %p489 = scmp.eq.s32.totalorder %s89, 1
      %p490 = por %p488, %p489
      %p492 = scmp.ne.s32.totalorder %s477, %s491
      %p493 = scmp.eq.s32.totalorder %s89, 0
      %p494 = por %p492, %p493
      %s496 = sadd.s32 %s495, 1
      %p499 = scmp.eq.s32.totalorder %s83, 1
      %p500 = scmp.ne.s32.totalorder %s495, %s497
      %p501 = scmp.eq.s32.totalorder %s83, 0
      %p502 = por %p500, %p501
      %p503 = scmp.ne.s32.totalorder %s495, %s497
      %p504 = scmp.eq.s32.totalorder %s88, 1
      %p505 = por %p503, %p504
      %p506 = scmp.ne.s32.totalorder %s497, %s498
      %p507 = scmp.eq.s32.totalorder %s88, 0
      %p508 = por %p506, %p507
      %p509 = scmp.ne.s32.totalorder %s497, %s498
      %p510 = scmp.eq.s32.totalorder %s89, 1
      %p511 = por %p509, %p510
      %p513 = scmp.ne.s32.totalorder %s498, %s512
      %p514 = scmp.eq.s32.totalorder %s89, 0
      %p515 = por %p513, %p514
      %s517 = sadd.s32 %s516, 1
      %p520 = scmp.eq.s32.totalorder %s83, 1
      %p521 = scmp.ne.s32.totalorder %s516, %s518
      %p522 = scmp.eq.s32.totalorder %s83, 0
      %p523 = por %p521, %p522
      %p524 = scmp.ne.s32.totalorder %s516, %s518
      %p525 = scmp.eq.s32.totalorder %s88, 1
      %p526 = por %p524, %p525
      %p527 = scmp.ne.s32.totalorder %s518, %s519
      %p528 = scmp.eq.s32.totalorder %s88, 0
      %p529 = por %p527, %p528
      %p530 = scmp.ne.s32.totalorder %s518, %s519
      %p531 = scmp.eq.s32.totalorder %s89, 1
      %p532 = por %p530, %p531
      %p534 = scmp.ne.s32.totalorder %s519, %s533
      %p535 = scmp.eq.s32.totalorder %s89, 0
      %p536 = por %p534, %p535
      %s538 = sadd.s32 %s537, 1
      %p541 = scmp.eq.s32.totalorder %s83, 1
      %p542 = scmp.ne.s32.totalorder %s537, %s539
      %p543 = scmp.eq.s32.totalorder %s83, 0
      %p544 = por %p542, %p543
      %p545 = scmp.ne.s32.totalorder %s537, %s539
      %p546 = scmp.eq.s32.totalorder %s88, 1
      %p547 = por %p545, %p546
      %p548 = scmp.ne.s32.totalorder %s539, %s540
      %p549 = scmp.eq.s32.totalorder %s88, 0
      %p550 = por %p548, %p549
      %p551 = scmp.ne.s32.totalorder %s539, %s540
      %p552 = scmp.eq.s32.totalorder %s89, 1
      %p553 = por %p551, %p552
      %p555 = scmp.ne.s32.totalorder %s540, %s554
      %p556 = scmp.eq.s32.totalorder %s89, 0
      %p557 = por %p555, %p556
      %s559 = sadd.s32 %s558, 1
      %p562 = scmp.eq.s32.totalorder %s83, 1
      %p563 = scmp.ne.s32.totalorder %s558, %s560
      %p564 = scmp.eq.s32.totalorder %s83, 0
      %p565 = por %p563, %p564
      %p566 = scmp.ne.s32.totalorder %s558, %s560
      %p567 = scmp.eq.s32.totalorder %s88, 1
      %p568 = por %p566, %p567
      %p569 = scmp.ne.s32.totalorder %s560, %s561
      %p570 = scmp.eq.s32.totalorder %s88, 0
      %p571 = por %p569, %p570
      %p572 = scmp.ne.s32.totalorder %s560, %s561
      %p573 = scmp.eq.s32.totalorder %s89, 1
      %p574 = por %p572, %p573
      %p576 = scmp.ne.s32.totalorder %s561, %s575
      %p577 = scmp.eq.s32.totalorder %s89, 0
      %p578 = por %p576, %p577
      %s580 = sadd.s32 %s579, 1
      %p583 = scmp.eq.s32.totalorder %s83, 1
      %p584 = scmp.ne.s32.totalorder %s579, %s581
      %p585 = scmp.eq.s32.totalorder %s83, 0
      %p586 = por %p584, %p585
      %p587 = scmp.ne.s32.totalorder %s579, %s581
      %p588 = scmp.eq.s32.totalorder %s88, 1
      %p589 = por %p587, %p588
      %p590 = scmp.ne.s32.totalorder %s581, %s582
      %p591 = scmp.eq.s32.totalorder %s88, 0
      %p592 = por %p590, %p591
      %p593 = scmp.ne.s32.totalorder %s581, %s582
      %p594 = scmp.eq.s32.totalorder %s89, 1
      %p595 = por %p593, %p594
      %p597 = scmp.ne.s32.totalorder %s582, %s596
      %p598 = scmp.eq.s32.totalorder %s89, 0
      %p599 = por %p597, %p598
      %s601 = sadd.s32 %s600, 1
      %p604 = scmp.eq.s32.totalorder %s83, 1
      %p605 = scmp.ne.s32.totalorder %s600, %s602
      %p606 = scmp.eq.s32.totalorder %s83, 0
      %p607 = por %p605, %p606
      %p608 = scmp.ne.s32.totalorder %s600, %s602
      %p609 = scmp.eq.s32.totalorder %s88, 1
      %p610 = por %p608, %p609
      %p611 = scmp.ne.s32.totalorder %s602, %s603
      %p612 = scmp.eq.s32.totalorder %s88, 0
      %p613 = por %p611, %p612
      %p614 = scmp.ne.s32.totalorder %s602, %s603
      %p615 = scmp.eq.s32.totalorder %s89, 1
      %p616 = por %p614, %p615
      %p618 = scmp.ne.s32.totalorder %s603, %s617
      %p619 = scmp.eq.s32.totalorder %s89, 0
      %p620 = por %p618, %p619
      %s622 = sadd.s32 %s621, 1
      %p625 = scmp.eq.s32.totalorder %s83, 1
      %p626 = scmp.ne.s32.totalorder %s621, %s623
      %p627 = scmp.eq.s32.totalorder %s83, 0
      %p628 = por %p626, %p627
      %p629 = scmp.ne.s32.totalorder %s621, %s623
      %p630 = scmp.eq.s32.totalorder %s88, 1
      %p631 = por %p629, %p630
      %p632 = scmp.ne.s32.totalorder %s623, %s624
      %p633 = scmp.eq.s32.totalorder %s88, 0
      %p634 = por %p632, %p633
      %p635 = scmp.ne.s32.totalorder %s623, %s624
      %p636 = scmp.eq.s32.totalorder %s89, 1
      %p637 = por %p635, %p636
      %p639 = scmp.ne.s32.totalorder %s624, %s638
      %p640 = scmp.eq.s32.totalorder %s89, 0
      %p641 = por %p639, %p640
      %s643 = sadd.s32 %s642, 1
      %p646 = scmp.eq.s32.totalorder %s83, 1
      %p647 = scmp.ne.s32.totalorder %s642, %s644
      %p648 = scmp.eq.s32.totalorder %s83, 0
      %p649 = por %p647, %p648
      %p650 = scmp.ne.s32.totalorder %s642, %s644
      %p651 = scmp.eq.s32.totalorder %s88, 1
      %p652 = por %p650, %p651
      %p653 = scmp.ne.s32.totalorder %s644, %s645
      %p654 = scmp.eq.s32.totalorder %s88, 0
      %p655 = por %p653, %p654
      %p656 = scmp.ne.s32.totalorder %s644, %s645
      %p657 = scmp.eq.s32.totalorder %s89, 1
      %p658 = por %p656, %p657
      %p660 = scmp.ne.s32.totalorder %s645, %s659
      %p661 = scmp.eq.s32.totalorder %s89, 0
      %p662 = por %p660, %p661
      %s664 = sadd.s32 %s663, 1
      %p667 = scmp.eq.s32.totalorder %s83, 1
      %p668 = scmp.ne.s32.totalorder %s663, %s665
      %p669 = scmp.eq.s32.totalorder %s83, 0
      %p670 = por %p668, %p669
      %p671 = scmp.ne.s32.totalorder %s663, %s665
      %p672 = scmp.eq.s32.totalorder %s88, 1
      %p673 = por %p671, %p672
      %p674 = scmp.ne.s32.totalorder %s665, %s666
      %p675 = scmp.eq.s32.totalorder %s88, 0
      %p676 = por %p674, %p675
      %p677 = scmp.ne.s32.totalorder %s665, %s666
      %p678 = scmp.eq.s32.totalorder %s89, 1
      %p679 = por %p677, %p678
      %p681 = scmp.ne.s32.totalorder %s666, %s680
      %p682 = scmp.eq.s32.totalorder %s89, 0
      %p683 = por %p681, %p682
      %s685 = sadd.s32 %s684, 1
      %p688 = scmp.eq.s32.totalorder %s83, 1
      %p689 = scmp.ne.s32.totalorder %s684, %s686
      %p690 = scmp.eq.s32.totalorder %s83, 0
      %p691 = por %p689, %p690
      %p692 = scmp.ne.s32.totalorder %s684, %s686
      %p693 = scmp.eq.s32.totalorder %s88, 1
      %p694 = por %p692, %p693
      %p695 = scmp.ne.s32.totalorder %s686, %s687
      %p696 = scmp.eq.s32.totalorder %s88, 0
      %p697 = por %p695, %p696
      %p698 = scmp.ne.s32.totalorder %s686, %s687
      %p699 = scmp.eq.s32.totalorder %s89, 1
      %p700 = por %p698, %p699
      %p702 = scmp.ne.s32.totalorder %s687, %s701
      %p703 = scmp.eq.s32.totalorder %s89, 0
      %p704 = por %p702, %p703
      %s706 = sadd.s32 %s705, 1
      %p709 = scmp.eq.s32.totalorder %s83, 1
      %p710 = scmp.ne.s32.totalorder %s705, %s707
      %p711 = scmp.eq.s32.totalorder %s83, 0
      %p712 = por %p710, %p711
      %p713 = scmp.ne.s32.totalorder %s705, %s707
      %p714 = scmp.eq.s32.totalorder %s88, 1
      %p715 = por %p713, %p714
      %p716 = scmp.ne.s32.totalorder %s707, %s708
      %p717 = scmp.eq.s32.totalorder %s88, 0
      %p718 = por %p716, %p717
      %p719 = scmp.ne.s32.totalorder %s707, %s708
      %p720 = scmp.eq.s32.totalorder %s89, 1
      %p721 = por %p719, %p720
      %p723 = scmp.ne.s32.totalorder %s708, %s722
      %p724 = scmp.eq.s32.totalorder %s89, 0
      %p725 = por %p723, %p724
      %s727 = sadd.s32 %s726, 1
      %p730 = scmp.eq.s32.totalorder %s83, 1
      %p731 = scmp.ne.s32.totalorder %s726, %s728
      %p732 = scmp.eq.s32.totalorder %s83, 0
      %p733 = por %p731, %p732
      %p734 = scmp.ne.s32.totalorder %s726, %s728
      %p735 = scmp.eq.s32.totalorder %s88, 1
      %p736 = por %p734, %p735
      %p737 = scmp.ne.s32.totalorder %s728, %s729
      %p738 = scmp.eq.s32.totalorder %s88, 0
      %p739 = por %p737, %p738
      %p740 = scmp.ne.s32.totalorder %s728, %s729
      %p741 = scmp.eq.s32.totalorder %s89, 1
      %p742 = por %p740, %p741
      %p744 = scmp.ne.s32.totalorder %s729, %s743
      %p745 = scmp.eq.s32.totalorder %s89, 0
      %p746 = por %p744, %p745
      %s747 = ssub.s32 %s83, %s90
      %p748 = scmp.eq.s32.totalorder %s747, 0
      %s750 = sadd.s32 %s749, 1
      %s751 = scalar_select %p748, %s749, %s750
      %p754 = pneg %p748
      %p755 = scmp.eq.s32.totalorder %s83, 1
      %p756 = por %p754, %p755
      %p757 = scmp.ne.s32.totalorder %s749, %s752
      %p758 = scmp.eq.s32.totalorder %s83, 0
      %p759 = por %p757, %p758
      %p760 = scmp.ne.s32.totalorder %s749, %s752
      %p761 = scmp.eq.s32.totalorder %s88, 1
      %p762 = por %p760, %p761
      %p763 = scmp.ne.s32.totalorder %s752, %s753
      %p764 = scmp.eq.s32.totalorder %s88, 0
      %p765 = por %p763, %p764
      %p766 = scmp.ne.s32.totalorder %s752, %s753
      %p767 = scmp.eq.s32.totalorder %s89, 1
      %p768 = por %p766, %p767
      %p770 = scmp.ne.s32.totalorder %s753, %s769
      %p771 = scmp.eq.s32.totalorder %s89, 0
      %p772 = por %p770, %p771
      %p773 = scmp.le.s32.totalorder 1, %s83
      %p774 = scmp.lt.s32.totalorder %s83, 3
      %p775 = pnand %p773, %p774
      %p776 = pneg %p775
      // Predicated region
      $region9: #{sharelink_forward.2} parent=5 // pred_check
        _
      $region10: #{sharelink_forward.2} parent=5 // pred_check_branch
        %778 = sbr.rel (%p775) target = $region12
      $region11: #{sharelink_forward.2} parent=5 // pred_region
        %s779 = ssub.s32 %s83, 1
        // Predicated region
        $region13: #{sharelink_forward.2} parent=11 // pred_check
          %p780 = pneg %p130
        $region14: #{sharelink_forward.2} parent=11 // pred_check_branch
          %782 = sbr.rel (%p780) target = $region16
        $region15: #{sharelink_forward.2} parent=11 // pred_region
          _
        $region16: #{sharelink_forward.2} parent=11 // pred_fallthru
          _
        // Predicated region
        $region17: #{sharelink_forward.2} parent=11 // pred_check
          %p783 = pneg %p151
        $region18: #{sharelink_forward.2} parent=11 // pred_check_branch
          %785 = sbr.rel (%p783) target = $region20
        $region19: #{sharelink_forward.2} parent=11 // pred_region
          _
        $region20: #{sharelink_forward.2} parent=11 // pred_fallthru
          _
        // Predicated region
        $region21: #{sharelink_forward.2} parent=11 // pred_check
          %p786 = pneg %p172
        $region22: #{sharelink_forward.2} parent=11 // pred_check_branch
          %788 = sbr.rel (%p786) target = $region24
        $region23: #{sharelink_forward.2} parent=11 // pred_region
          %s790 = ssub.s32 256, 256
          %791 = vsyncadd [#allocation3], %s790
          %s792 = sshll.u32 [#allocation2], 4
          %s793 = int_to_ptr.vmem [resolvable:$true] %s792
          %798 = dma.hbm_to_vmem [thread:$0]  %s7, 256, %s793, [#allocation3], 128, 128, 8
        $region24: #{sharelink_forward.2} parent=11 // pred_fallthru
          _
        // Predicated region
        $region25: #{sharelink_forward.2} parent=11 // pred_check
          %p799 = pneg %p193
        $region26: #{sharelink_forward.2} parent=11 // pred_check_branch
          %801 = sbr.rel (%p799) target = $region28
        $region27: #{sharelink_forward.2} parent=11 // pred_region
          %s803 = ssub.s32 16, 16
          %804 = vsyncadd [#allocation5], %s803
          %s806 = sshll.u32 [#allocation4], 4
          %s807 = int_to_ptr.vmem [resolvable:$true] %s806
          %809 = dma.hbm_to_vmem [thread:$0]  %s9, 16, %s807, [#allocation5]
        $region28: #{sharelink_forward.2} parent=11 // pred_fallthru
          _
        // Predicated region
        $region29: #{sharelink_forward.2} parent=11 // pred_check
          %p810 = pneg %p214
        $region30: #{sharelink_forward.2} parent=11 // pred_check_branch
          %812 = sbr.rel (%p810) target = $region32
        $region31: #{sharelink_forward.2} parent=11 // pred_region
          _
        $region32: #{sharelink_forward.2} parent=11 // pred_fallthru
          _
        // Predicated region
        $region33: #{sharelink_forward.2} parent=11 // pred_check
          %p813 = pneg %p235
        $region34: #{sharelink_forward.2} parent=11 // pred_check_branch
          %815 = sbr.rel (%p813) target = $region36
        $region35: #{sharelink_forward.2} parent=11 // pred_region
          %s817 = ssub.s32 144, 144
          %818 = vsyncadd [#allocation5], %s817
          %s820 = sshll.u32 [#allocation6], 4
          %s821 = int_to_ptr.vmem [resolvable:$true] %s820
          %823 = dma.hbm_to_vmem [thread:$0]  %s13, 144, %s821, [#allocation5]
        $region36: #{sharelink_forward.2} parent=11 // pred_fallthru
          _
        // Predicated region
        $region37: #{sharelink_forward.2} parent=11 // pred_check
          %p824 = pneg %p256
        $region38: #{sharelink_forward.2} parent=11 // pred_check_branch
          %826 = sbr.rel (%p824) target = $region40
        $region39: #{sharelink_forward.2} parent=11 // pred_region
          %s828 = ssub.s32 256, 256
          %829 = vsyncadd [#allocation8], %s828
          %s830 = sshll.u32 [#allocation7], 4
          %s831 = int_to_ptr.vmem [resolvable:$true] %s830
          %836 = dma.hbm_to_vmem [thread:$0]  %s15, 256, %s831, [#allocation8], 128, 128, 8
        $region40: #{sharelink_forward.2} parent=11 // pred_fallthru
          _
        // Predicated region
        $region41: #{sharelink_forward.2} parent=11 // pred_check
          %p837 = pneg %p277
        $region42: #{sharelink_forward.2} parent=11 // pred_check_branch
          %839 = sbr.rel (%p837) target = $region44
        $region43: #{sharelink_forward.2} parent=11 // pred_region
          %s841 = ssub.s32 16, 16
          %842 = vsyncadd [#allocation8], %s841
          %s844 = sshll.u32 [#allocation9], 4
          %s845 = int_to_ptr.vmem [resolvable:$true] %s844
          %847 = dma.hbm_to_vmem [thread:$0]  %s17, 16, %s845, [#allocation8]
        $region44: #{sharelink_forward.2} parent=11 // pred_fallthru
          _
        // Predicated region
        $region45: #{sharelink_forward.2} parent=11 // pred_check
          %p848 = pneg %p298
        $region46: #{sharelink_forward.2} parent=11 // pred_check_branch
          %850 = sbr.rel (%p848) target = $region48
        $region47: #{sharelink_forward.2} parent=11 // pred_region
          %s852 = ssub.s32 16, 16
          %853 = vsyncadd [#allocation11], %s852
          %s855 = sshll.u32 [#allocation10], 4
          %s856 = int_to_ptr.vmem [resolvable:$true] %s855
          %858 = dma.hbm_to_vmem [thread:$0]  %s19, 16, %s856, [#allocation11]
        $region48: #{sharelink_forward.2} parent=11 // pred_fallthru
          _
        // Predicated region
        $region49: #{sharelink_forward.2} parent=11 // pred_check
          %p859 = pneg %p319
        $region50: #{sharelink_forward.2} parent=11 // pred_check_branch
          %861 = sbr.rel (%p859) target = $region52
        $region51: #{sharelink_forward.2} parent=11 // pred_region
          %s863 = ssub.s32 16, 16
          %864 = vsyncadd [#allocation11], %s863
          %s866 = sshll.u32 [#allocation12], 4
          %s867 = int_to_ptr.vmem [resolvable:$true] %s866
          %869 = dma.hbm_to_vmem [thread:$0]  %s21, 16, %s867, [#allocation11]
        $region52: #{sharelink_forward.2} parent=11 // pred_fallthru
          _
        // Predicated region
        $region53: #{sharelink_forward.2} parent=11 // pred_check
          %p870 = pneg %p340
        $region54: #{sharelink_forward.2} parent=11 // pred_check_branch
          %872 = sbr.rel (%p870) target = $region56
        $region55: #{sharelink_forward.2} parent=11 // pred_region
          %s874 = ssub.s32 16, 16
          %875 = vsyncadd [#allocation14], %s874
          %s877 = sshll.u32 [#allocation13], 4
          %s878 = int_to_ptr.vmem [resolvable:$true] %s877
          %880 = dma.hbm_to_vmem [thread:$0]  %s23, 16, %s878, [#allocation14]
        $region56: #{sharelink_forward.2} parent=11 // pred_fallthru
          _
        // Predicated region
        $region57: #{sharelink_forward.2} parent=11 // pred_check
          %p881 = pneg %p361
        $region58: #{sharelink_forward.2} parent=11 // pred_check_branch
          %883 = sbr.rel (%p881) target = $region60
        $region59: #{sharelink_forward.2} parent=11 // pred_region
          %s885 = ssub.s32 256, 256
          %886 = vsyncadd [#allocation14], %s885
          %s887 = sshll.u32 [#allocation15], 4
          %s888 = int_to_ptr.vmem [resolvable:$true] %s887
          %893 = dma.hbm_to_vmem [thread:$0]  %s25, 256, %s888, [#allocation14], 128, 128, 8
        $region60: #{sharelink_forward.2} parent=11 // pred_fallthru
          _
        // Predicated region
        $region61: #{sharelink_forward.2} parent=11 // pred_check
          %p894 = pneg %p382
        $region62: #{sharelink_forward.2} parent=11 // pred_check_branch
          %896 = sbr.rel (%p894) target = $region64
        $region63: #{sharelink_forward.2} parent=11 // pred_region
          %s898 = ssub.s32 16, 16
          %899 = vsyncadd [#allocation17], %s898
          %s901 = sshll.u32 [#allocation16], 4
          %s902 = int_to_ptr.vmem [resolvable:$true] %s901
          %904 = dma.hbm_to_vmem [thread:$0]  %s27, 16, %s902, [#allocation17]
        $region64: #{sharelink_forward.2} parent=11 // pred_fallthru
          _
        // Predicated region
        $region65: #{sharelink_forward.2} parent=11 // pred_check
          %p905 = pneg %p403
        $region66: #{sharelink_forward.2} parent=11 // pred_check_branch
          %907 = sbr.rel (%p905) target = $region68
        $region67: #{sharelink_forward.2} parent=11 // pred_region
          %s909 = ssub.s32 256, 256
          %910 = vsyncadd [#allocation17], %s909
          %s911 = sshll.u32 [#allocation18], 4
          %s912 = int_to_ptr.vmem [resolvable:$true] %s911
          %917 = dma.hbm_to_vmem [thread:$0]  %s29, 256, %s912, [#allocation17], 128, 128, 8
        $region68: #{sharelink_forward.2} parent=11 // pred_fallthru
          _
        // Predicated region
        $region69: #{sharelink_forward.2} parent=11 // pred_check
          %p918 = pneg %p424
        $region70: #{sharelink_forward.2} parent=11 // pred_check_branch
          %920 = sbr.rel (%p918) target = $region72
        $region71: #{sharelink_forward.2} parent=11 // pred_region
          %s922 = ssub.s32 16, 16
          %923 = vsyncadd [#allocation20], %s922
          %s925 = sshll.u32 [#allocation19], 4
          %s926 = int_to_ptr.vmem [resolvable:$true] %s925
          %928 = dma.hbm_to_vmem [thread:$0]  %s31, 16, %s926, [#allocation20]
        $region72: #{sharelink_forward.2} parent=11 // pred_fallthru
          _
        // Predicated region
        $region73: #{sharelink_forward.2} parent=11 // pred_check
          %p929 = pneg %p445
        $region74: #{sharelink_forward.2} parent=11 // pred_check_branch
          %931 = sbr.rel (%p929) target = $region76
        $region75: #{sharelink_forward.2} parent=11 // pred_region
          %s933 = ssub.s32 512, 512
          %934 = vsyncadd [#allocation20], %s933
          %s935 = sshll.u32 [#allocation21], 4
          %s936 = int_to_ptr.vmem [resolvable:$true] %s935
          %941 = dma.hbm_to_vmem [thread:$0]  %s33, 512, %s936, [#allocation20], 128, 128, 8
        $region76: #{sharelink_forward.2} parent=11 // pred_fallthru
          _
        // Predicated region
        $region77: #{sharelink_forward.2} parent=11 // pred_check
          %p942 = pneg %p466
        $region78: #{sharelink_forward.2} parent=11 // pred_check_branch
          %944 = sbr.rel (%p942) target = $region80
        $region79: #{sharelink_forward.2} parent=11 // pred_region
          %s946 = ssub.s32 2304, 2304
          %947 = vsyncadd [#allocation23], %s946
          %s948 = sshll.u32 [#allocation22], 4
          %s949 = int_to_ptr.vmem [resolvable:$true] %s948
          %954 = dma.hbm_to_vmem [thread:$0]  %s35, 2304, %s949, [#allocation23], 1152, 1152, 72
        $region80: #{sharelink_forward.2} parent=11 // pred_fallthru
          _
        // Predicated region
        $region81: #{sharelink_forward.2} parent=11 // pred_check
          %p955 = pneg %p487
        $region82: #{sharelink_forward.2} parent=11 // pred_check_branch
          %957 = sbr.rel (%p955) target = $region84
        $region83: #{sharelink_forward.2} parent=11 // pred_region
          %s959 = ssub.s32 144, 144
          %960 = vsyncadd [#allocation23], %s959
          %s962 = sshll.u32 [#allocation24], 4
          %s963 = int_to_ptr.vmem [resolvable:$true] %s962
          %965 = dma.hbm_to_vmem [thread:$0]  %s37, 144, %s963, [#allocation23]
        $region84: #{sharelink_forward.2} parent=11 // pred_fallthru
          _
        // Predicated region
        $region85: #{sharelink_forward.2} parent=11 // pred_check
          %p966 = pneg %p508
        $region86: #{sharelink_forward.2} parent=11 // pred_check_branch
          %968 = sbr.rel (%p966) target = $region88
        $region87: #{sharelink_forward.2} parent=11 // pred_region
          %s970 = ssub.s32 256, 256
          %971 = vsyncadd [#allocation26], %s970
          %s972 = sshll.u32 [#allocation25], 4
          %s973 = int_to_ptr.vmem [resolvable:$true] %s972
          %978 = dma.hbm_to_vmem [thread:$0]  %s39, 256, %s973, [#allocation26], 128, 128, 8
        $region88: #{sharelink_forward.2} parent=11 // pred_fallthru
          _
        // Predicated region
        $region89: #{sharelink_forward.2} parent=11 // pred_check
          %p979 = pneg %p529
        $region90: #{sharelink_forward.2} parent=11 // pred_check_branch
          %981 = sbr.rel (%p979) target = $region92
        $region91: #{sharelink_forward.2} parent=11 // pred_region
          %s983 = ssub.s32 16, 16
          %984 = vsyncadd [#allocation26], %s983
          %s986 = sshll.u32 [#allocation27], 4
          %s987 = int_to_ptr.vmem [resolvable:$true] %s986
          %989 = dma.hbm_to_vmem [thread:$0]  %s41, 16, %s987, [#allocation26]
        $region92: #{sharelink_forward.2} parent=11 // pred_fallthru
          _
        // Predicated region
        $region93: #{sharelink_forward.2} parent=11 // pred_check
          %p990 = pneg %p550
        $region94: #{sharelink_forward.2} parent=11 // pred_check_branch
          %992 = sbr.rel (%p990) target = $region96
        $region95: #{sharelink_forward.2} parent=11 // pred_region
          %s994 = ssub.s32 16, 16
          %995 = vsyncadd [#allocation29], %s994
          %s997 = sshll.u32 [#allocation28], 4
          %s998 = int_to_ptr.vmem [resolvable:$true] %s997
          %1000 = dma.hbm_to_vmem [thread:$0]  %s43, 16, %s998, [#allocation29]
        $region96: #{sharelink_forward.2} parent=11 // pred_fallthru
          _
        // Predicated region
        $region97: #{sharelink_forward.2} parent=11 // pred_check
          %p1001 = pneg %p571
        $region98: #{sharelink_forward.2} parent=11 // pred_check_branch
          %1003 = sbr.rel (%p1001) target = $region100
        $region99: #{sharelink_forward.2} parent=11 // pred_region
          %s1005 = ssub.s32 16, 16
          %1006 = vsyncadd [#allocation29], %s1005
          %s1008 = sshll.u32 [#allocation30], 4
          %s1009 = int_to_ptr.vmem [resolvable:$true] %s1008
          %1011 = dma.hbm_to_vmem [thread:$0]  %s45, 16, %s1009, [#allocation29]
        $region100: #{sharelink_forward.2} parent=11 // pred_fallthru
          _
        // Predicated region
        $region101: #{sharelink_forward.2} parent=11 // pred_check
          %p1012 = pneg %p592
        $region102: #{sharelink_forward.2} parent=11 // pred_check_branch
          %1014 = sbr.rel (%p1012) target = $region104
        $region103: #{sharelink_forward.2} parent=11 // pred_region
          %s1016 = ssub.s32 16, 16
          %1017 = vsyncadd [#allocation32], %s1016
          %s1019 = sshll.u32 [#allocation31], 4
          %s1020 = int_to_ptr.vmem [resolvable:$true] %s1019
          %1022 = dma.hbm_to_vmem [thread:$0]  %s47, 16, %s1020, [#allocation32]
        $region104: #{sharelink_forward.2} parent=11 // pred_fallthru
          _
        // Predicated region
        $region105: #{sharelink_forward.2} parent=11 // pred_check
          %p1023 = pneg %p613
        $region106: #{sharelink_forward.2} parent=11 // pred_check_branch
          %1025 = sbr.rel (%p1023) target = $region108
        $region107: #{sharelink_forward.2} parent=11 // pred_region
          %s1027 = ssub.s32 256, 256
          %1028 = vsyncadd [#allocation32], %s1027
          %s1029 = sshll.u32 [#allocation33], 4
          %s1030 = int_to_ptr.vmem [resolvable:$true] %s1029
          %1035 = dma.hbm_to_vmem [thread:$0]  %s49, 256, %s1030, [#allocation32], 128, 128, 8
        $region108: #{sharelink_forward.2} parent=11 // pred_fallthru
          _
        // Predicated region
        $region109: #{sharelink_forward.2} parent=11 // pred_check
          %p1036 = pneg %p634
        $region110: #{sharelink_forward.2} parent=11 // pred_check_branch
          %1038 = sbr.rel (%p1036) target = $region112
        $region111: #{sharelink_forward.2} parent=11 // pred_region
          %s1040 = ssub.s32 16, 16
          %1041 = vsyncadd [#allocation35], %s1040
          %s1043 = sshll.u32 [#allocation34], 4
          %s1044 = int_to_ptr.vmem [resolvable:$true] %s1043
          %1046 = dma.hbm_to_vmem [thread:$0]  %s51, 16, %s1044, [#allocation35]
        $region112: #{sharelink_forward.2} parent=11 // pred_fallthru
          _
        // Predicated region
        $region113: #{sharelink_forward.2} parent=11 // pred_check
          %p1047 = pneg %p655
        $region114: #{sharelink_forward.2} parent=11 // pred_check_branch
          %1049 = sbr.rel (%p1047) target = $region116
        $region115: #{sharelink_forward.2} parent=11 // pred_region
          %s1051 = ssub.s32 256, 256
          %1052 = vsyncadd [#allocation35], %s1051
          %s1053 = sshll.u32 [#allocation36], 4
          %s1054 = int_to_ptr.vmem [resolvable:$true] %s1053
          %1059 = dma.hbm_to_vmem [thread:$0]  %s53, 256, %s1054, [#allocation35], 128, 128, 8
        $region116: #{sharelink_forward.2} parent=11 // pred_fallthru
          _
        // Predicated region
        $region117: #{sharelink_forward.2} parent=11 // pred_check
          %p1060 = pneg %p676
        $region118: #{sharelink_forward.2} parent=11 // pred_check_branch
          %1062 = sbr.rel (%p1060) target = $region120
        $region119: #{sharelink_forward.2} parent=11 // pred_region
          %s1064 = ssub.s32 16, 16
          %1065 = vsyncadd [#allocation38], %s1064
          %s1067 = sshll.u32 [#allocation37], 4
          %s1068 = int_to_ptr.vmem [resolvable:$true] %s1067
          %1070 = dma.hbm_to_vmem [thread:$0]  %s55, 16, %s1068, [#allocation38]
        $region120: #{sharelink_forward.2} parent=11 // pred_fallthru
          _
        // Predicated region
        $region121: #{sharelink_forward.2} parent=11 // pred_check
          %p1071 = pneg %p697
        $region122: #{sharelink_forward.2} parent=11 // pred_check_branch
          %1073 = sbr.rel (%p1071) target = $region124
        $region123: #{sharelink_forward.2} parent=11 // pred_region
          %s1075 = ssub.s32 512, 512
          %1076 = vsyncadd [#allocation38], %s1075
          %s1077 = sshll.u32 [#allocation39], 4
          %s1078 = int_to_ptr.vmem [resolvable:$true] %s1077
          %1083 = dma.hbm_to_vmem [thread:$0]  %s57, 512, %s1078, [#allocation38], 128, 128, 8
        $region124: #{sharelink_forward.2} parent=11 // pred_fallthru
          _
        // Predicated region
        $region125: #{sharelink_forward.2} parent=11 // pred_check
          %p1084 = pneg %p718
        $region126: #{sharelink_forward.2} parent=11 // pred_check_branch
          %1086 = sbr.rel (%p1084) target = $region128
        $region127: #{sharelink_forward.2} parent=11 // pred_region
          %s1088 = ssub.s32 2304, 2304
          %1089 = vsyncadd [#allocation41], %s1088
          %s1090 = sshll.u32 [#allocation40], 4
          %s1091 = int_to_ptr.vmem [resolvable:$true] %s1090
          %1096 = dma.hbm_to_vmem [thread:$0]  %s59, 2304, %s1091, [#allocation41], 1152, 1152, 72
        $region128: #{sharelink_forward.2} parent=11 // pred_fallthru
          _
        // Predicated region
        $region129: #{sharelink_forward.2} parent=11 // pred_check
          %p1097 = pneg %p739
        $region130: #{sharelink_forward.2} parent=11 // pred_check_branch
          %1099 = sbr.rel (%p1097) target = $region132
        $region131: #{sharelink_forward.2} parent=11 // pred_region
          %s1101 = ssub.s32 144, 144
          %1102 = vsyncadd [#allocation41], %s1101
          %s1104 = sshll.u32 [#allocation42], 4
          %s1105 = int_to_ptr.vmem [resolvable:$true] %s1104
          %1107 = dma.hbm_to_vmem [thread:$0]  %s61, 144, %s1105, [#allocation41]
        $region132: #{sharelink_forward.2} parent=11 // pred_fallthru
          _
      $region12: #{sharelink_forward.2} parent=5 // pred_fallthru
        _
      %p1108 = scmp.lt.s32.totalorder %s83, 2
      // Predicated region
      $region133: #{sharelink_forward.2} parent=5 // pred_check
        %p1109 = pneg %p1108
      $region134: #{sharelink_forward.2} parent=5 // pred_check_branch
        %1111 = sbr.rel (%p1109) target = $region136
      $region135: #{sharelink_forward.2} parent=5 // pred_region
        // Predicated region
        $region137: #{sharelink_forward.2} parent=135 // pred_check
          %p1112 = pneg %p103
        $region138: #{sharelink_forward.2} parent=135 // pred_check_branch
          %1114 = sbr.rel (%p1112) target = $region140
        $region139: #{sharelink_forward.2} parent=135 // pred_region
          %p1115 = scmp.lt.s32.totalorder %s83, 1
          %s1116 = scalar_select %p1115, %s83, 1
          %s1117 = smul.addr %s1116, 9
          %s1118 = smul.addr %s1117, 8
          %s1119 = scalar_lea.vmem %s1, %s1118
        $region140: #{sharelink_forward.2} parent=135 // pred_fallthru
          _
      $region136: #{sharelink_forward.2} parent=5 // pred_fallthru
        _
      %p1120 = scmp.le.s32.totalorder 1, %s83
      %p1121 = scmp.lt.s32.totalorder %s83, 3
      %p1122 = pnand %p1120, %p1121
      %p1123 = pneg %p1122
      // Predicated region
      $region141: #{sharelink_forward.2} parent=5 // pred_check
        _
      $region142: #{sharelink_forward.2} parent=5 // pred_check_branch
        %1125 = sbr.rel (%p1122) target = $region144
      $region143: #{sharelink_forward.2} parent=5 // pred_region
        %s1126 = ssub.s32 %s83, 1
        // Predicated region
        $region145: #{sharelink_forward.2} parent=143 // pred_check
          %p1127 = pneg %p172
        $region146: #{sharelink_forward.2} parent=143 // pred_check_branch
          %1129 = sbr.rel (%p1127) target = $region148
        $region147: #{sharelink_forward.2} parent=143 // pred_region
          %1130 = dma.done [#allocation3], 256
        $region148: #{sharelink_forward.2} parent=143 // pred_fallthru
          _
        // Predicated region
        $region149: #{sharelink_forward.2} parent=143 // pred_check
          %p1131 = pneg %p193
        $region150: #{sharelink_forward.2} parent=143 // pred_check_branch
          %1133 = sbr.rel (%p1131) target = $region152
        $region151: #{sharelink_forward.2} parent=143 // pred_region
          %1134 = dma.done [#allocation5], 16
        $region152: #{sharelink_forward.2} parent=143 // pred_fallthru
          _
        // Predicated region
        $region153: #{sharelink_forward.2} parent=143 // pred_check
          %p1135 = pneg %p235
        $region154: #{sharelink_forward.2} parent=143 // pred_check_branch
          %1137 = sbr.rel (%p1135) target = $region156
        $region155: #{sharelink_forward.2} parent=143 // pred_region
          %1138 = dma.done [#allocation5], 144
        $region156: #{sharelink_forward.2} parent=143 // pred_fallthru
          _
        // Predicated region
        $region157: #{sharelink_forward.2} parent=143 // pred_check
          %p1139 = pneg %p256
        $region158: #{sharelink_forward.2} parent=143 // pred_check_branch
          %1141 = sbr.rel (%p1139) target = $region160
        $region159: #{sharelink_forward.2} parent=143 // pred_region
          %1142 = dma.done [#allocation8], 256
        $region160: #{sharelink_forward.2} parent=143 // pred_fallthru
          _
        // Predicated region
        $region161: #{sharelink_forward.2} parent=143 // pred_check
          %p1143 = pneg %p277
        $region162: #{sharelink_forward.2} parent=143 // pred_check_branch
          %1145 = sbr.rel (%p1143) target = $region164
        $region163: #{sharelink_forward.2} parent=143 // pred_region
          %1146 = dma.done [#allocation8], 16
        $region164: #{sharelink_forward.2} parent=143 // pred_fallthru
          _
        // Predicated region
        $region165: #{sharelink_forward.2} parent=143 // pred_check
          %p1147 = pneg %p298
        $region166: #{sharelink_forward.2} parent=143 // pred_check_branch
          %1149 = sbr.rel (%p1147) target = $region168
        $region167: #{sharelink_forward.2} parent=143 // pred_region
          %1150 = dma.done [#allocation11], 16
        $region168: #{sharelink_forward.2} parent=143 // pred_fallthru
          _
        // Predicated region
        $region169: #{sharelink_forward.2} parent=143 // pred_check
          %p1151 = pneg %p319
        $region170: #{sharelink_forward.2} parent=143 // pred_check_branch
          %1153 = sbr.rel (%p1151) target = $region172
        $region171: #{sharelink_forward.2} parent=143 // pred_region
          %1154 = dma.done [#allocation11], 16
        $region172: #{sharelink_forward.2} parent=143 // pred_fallthru
          _
        // Predicated region
        $region173: #{sharelink_forward.2} parent=143 // pred_check
          %p1155 = pneg %p340
        $region174: #{sharelink_forward.2} parent=143 // pred_check_branch
          %1157 = sbr.rel (%p1155) target = $region176
        $region175: #{sharelink_forward.2} parent=143 // pred_region
          %1158 = dma.done [#allocation14], 16
        $region176: #{sharelink_forward.2} parent=143 // pred_fallthru
          _
        // Predicated region
        $region177: #{sharelink_forward.2} parent=143 // pred_check
          %p1159 = pneg %p361
        $region178: #{sharelink_forward.2} parent=143 // pred_check_branch
          %1161 = sbr.rel (%p1159) target = $region180
        $region179: #{sharelink_forward.2} parent=143 // pred_region
          %1162 = dma.done [#allocation14], 256
        $region180: #{sharelink_forward.2} parent=143 // pred_fallthru
          _
        // Predicated region
        $region181: #{sharelink_forward.2} parent=143 // pred_check
          %p1163 = pneg %p382
        $region182: #{sharelink_forward.2} parent=143 // pred_check_branch
          %1165 = sbr.rel (%p1163) target = $region184
        $region183: #{sharelink_forward.2} parent=143 // pred_region
          %1166 = dma.done [#allocation17], 16
        $region184: #{sharelink_forward.2} parent=143 // pred_fallthru
          _
        // Predicated region
        $region185: #{sharelink_forward.2} parent=143 // pred_check
          %p1167 = pneg %p403
        $region186: #{sharelink_forward.2} parent=143 // pred_check_branch
          %1169 = sbr.rel (%p1167) target = $region188
        $region187: #{sharelink_forward.2} parent=143 // pred_region
          %1170 = dma.done [#allocation17], 256
        $region188: #{sharelink_forward.2} parent=143 // pred_fallthru
          _
        // Predicated region
        $region189: #{sharelink_forward.2} parent=143 // pred_check
          %p1171 = pneg %p424
        $region190: #{sharelink_forward.2} parent=143 // pred_check_branch
          %1173 = sbr.rel (%p1171) target = $region192
        $region191: #{sharelink_forward.2} parent=143 // pred_region
          %1174 = dma.done [#allocation20], 16
        $region192: #{sharelink_forward.2} parent=143 // pred_fallthru
          _
        // Predicated region
        $region193: #{sharelink_forward.2} parent=143 // pred_check
          %p1175 = pneg %p445
        $region194: #{sharelink_forward.2} parent=143 // pred_check_branch
          %1177 = sbr.rel (%p1175) target = $region196
        $region195: #{sharelink_forward.2} parent=143 // pred_region
          %1178 = dma.done [#allocation20], 512
        $region196: #{sharelink_forward.2} parent=143 // pred_fallthru
          _
        // Predicated region
        $region197: #{sharelink_forward.2} parent=143 // pred_check
          %p1179 = pneg %p466
        $region198: #{sharelink_forward.2} parent=143 // pred_check_branch
          %1181 = sbr.rel (%p1179) target = $region200
        $region199: #{sharelink_forward.2} parent=143 // pred_region
          %1182 = dma.done [#allocation23], 2304
        $region200: #{sharelink_forward.2} parent=143 // pred_fallthru
          _
        // Predicated region
        $region201: #{sharelink_forward.2} parent=143 // pred_check
          %p1183 = pneg %p487
        $region202: #{sharelink_forward.2} parent=143 // pred_check_branch
          %1185 = sbr.rel (%p1183) target = $region204
        $region203: #{sharelink_forward.2} parent=143 // pred_region
          %1186 = dma.done [#allocation23], 144
        $region204: #{sharelink_forward.2} parent=143 // pred_fallthru
          _
        // Predicated region
        $region205: #{sharelink_forward.2} parent=143 // pred_check
          %p1187 = pneg %p508
        $region206: #{sharelink_forward.2} parent=143 // pred_check_branch
          %1189 = sbr.rel (%p1187) target = $region208
        $region207: #{sharelink_forward.2} parent=143 // pred_region
          %1190 = dma.done [#allocation26], 256
        $region208: #{sharelink_forward.2} parent=143 // pred_fallthru
          _
        // Predicated region
        $region209: #{sharelink_forward.2} parent=143 // pred_check
          %p1191 = pneg %p529
        $region210: #{sharelink_forward.2} parent=143 // pred_check_branch
          %1193 = sbr.rel (%p1191) target = $region212
        $region211: #{sharelink_forward.2} parent=143 // pred_region
          %1194 = dma.done [#allocation26], 16
        $region212: #{sharelink_forward.2} parent=143 // pred_fallthru
          _
        // Predicated region
        $region213: #{sharelink_forward.2} parent=143 // pred_check
          %p1195 = pneg %p550
        $region214: #{sharelink_forward.2} parent=143 // pred_check_branch
          %1197 = sbr.rel (%p1195) target = $region216
        $region215: #{sharelink_forward.2} parent=143 // pred_region
          %1198 = dma.done [#allocation29], 16
        $region216: #{sharelink_forward.2} parent=143 // pred_fallthru
          _
        // Predicated region
        $region217: #{sharelink_forward.2} parent=143 // pred_check
          %p1199 = pneg %p571
        $region218: #{sharelink_forward.2} parent=143 // pred_check_branch
          %1201 = sbr.rel (%p1199) target = $region220
        $region219: #{sharelink_forward.2} parent=143 // pred_region
          %1202 = dma.done [#allocation29], 16
        $region220: #{sharelink_forward.2} parent=143 // pred_fallthru
          _
        // Predicated region
        $region221: #{sharelink_forward.2} parent=143 // pred_check
          %p1203 = pneg %p592
        $region222: #{sharelink_forward.2} parent=143 // pred_check_branch
          %1205 = sbr.rel (%p1203) target = $region224
        $region223: #{sharelink_forward.2} parent=143 // pred_region
          %1206 = dma.done [#allocation32], 16
        $region224: #{sharelink_forward.2} parent=143 // pred_fallthru
          _
        // Predicated region
        $region225: #{sharelink_forward.2} parent=143 // pred_check
          %p1207 = pneg %p613
        $region226: #{sharelink_forward.2} parent=143 // pred_check_branch
          %1209 = sbr.rel (%p1207) target = $region228
        $region227: #{sharelink_forward.2} parent=143 // pred_region
          %1210 = dma.done [#allocation32], 256
        $region228: #{sharelink_forward.2} parent=143 // pred_fallthru
          _
        // Predicated region
        $region229: #{sharelink_forward.2} parent=143 // pred_check
          %p1211 = pneg %p634
        $region230: #{sharelink_forward.2} parent=143 // pred_check_branch
          %1213 = sbr.rel (%p1211) target = $region232
        $region231: #{sharelink_forward.2} parent=143 // pred_region
          %1214 = dma.done [#allocation35], 16
        $region232: #{sharelink_forward.2} parent=143 // pred_fallthru
          _
        // Predicated region
        $region233: #{sharelink_forward.2} parent=143 // pred_check
          %p1215 = pneg %p655
        $region234: #{sharelink_forward.2} parent=143 // pred_check_branch
          %1217 = sbr.rel (%p1215) target = $region236
        $region235: #{sharelink_forward.2} parent=143 // pred_region
          %1218 = dma.done [#allocation35], 256
        $region236: #{sharelink_forward.2} parent=143 // pred_fallthru
          _
        // Predicated region
        $region237: #{sharelink_forward.2} parent=143 // pred_check
          %p1219 = pneg %p676
        $region238: #{sharelink_forward.2} parent=143 // pred_check_branch
          %1221 = sbr.rel (%p1219) target = $region240
        $region239: #{sharelink_forward.2} parent=143 // pred_region
          %1222 = dma.done [#allocation38], 16
        $region240: #{sharelink_forward.2} parent=143 // pred_fallthru
          _
        // Predicated region
        $region241: #{sharelink_forward.2} parent=143 // pred_check
          %p1223 = pneg %p697
        $region242: #{sharelink_forward.2} parent=143 // pred_check_branch
          %1225 = sbr.rel (%p1223) target = $region244
        $region243: #{sharelink_forward.2} parent=143 // pred_region
          %1226 = dma.done [#allocation38], 512
        $region244: #{sharelink_forward.2} parent=143 // pred_fallthru
          _
        // Predicated region
        $region245: #{sharelink_forward.2} parent=143 // pred_check
          %p1227 = pneg %p718
        $region246: #{sharelink_forward.2} parent=143 // pred_check_branch
          %1229 = sbr.rel (%p1227) target = $region248
        $region247: #{sharelink_forward.2} parent=143 // pred_region
          %1230 = dma.done [#allocation41], 2304
        $region248: #{sharelink_forward.2} parent=143 // pred_fallthru
          _
        // Predicated region
        $region249: #{sharelink_forward.2} parent=143 // pred_check
          %p1231 = pneg %p739
        $region250: #{sharelink_forward.2} parent=143 // pred_check_branch
          %1233 = sbr.rel (%p1231) target = $region252
        $region251: #{sharelink_forward.2} parent=143 // pred_region
          %1234 = dma.done [#allocation41], 144
        $region252: #{sharelink_forward.2} parent=143 // pred_fallthru
          _
        %p1235 = scmp.lt.s32.totalorder %s88, 1
        %s1236 = scalar_select %p1235, %s88, 1
        %s1237 = smul.addr %s1236, 9
        %s1238 = smul.addr %s1237, 8
        %s1239 = scalar_lea.vmem %s1, %s1238
        %p1240 = pneg %p109
        %p1241 = pneg %p106
        %p1242 = pneg %p130
        %p1243 = pneg %p127
        %p1244 = pneg %p151
        %p1245 = pneg %p148
        %p1246 = pneg %p172
        %p1247 = pneg %p169
        %p1248 = pneg %p193
        %p1249 = pneg %p190
        %p1250 = pneg %p214
        %p1251 = pneg %p211
        %p1252 = pneg %p235
        %p1253 = pneg %p232
        %p1254 = pneg %p256
        %p1255 = pneg %p253
        %p1256 = pneg %p277
        %p1257 = pneg %p274
        %p1258 = pneg %p298
        %p1259 = pneg %p295
        %p1260 = pneg %p319
        %p1261 = pneg %p316
        %p1262 = pneg %p340
        %p1263 = pneg %p337
        %p1264 = pneg %p361
        %p1265 = pneg %p358
        %p1266 = pneg %p382
        %p1267 = pneg %p379
        %p1268 = pneg %p403
        %p1269 = pneg %p400
        %p1270 = pneg %p424
        %p1271 = pneg %p421
        %p1272 = pneg %p445
        %p1273 = pneg %p442
        %p1274 = pneg %p466
        %p1275 = pneg %p463
        %p1276 = pneg %p487
        %p1277 = pneg %p484
        %p1278 = pneg %p508
        %p1279 = pneg %p505
        %p1280 = pneg %p529
        %p1281 = pneg %p526
        %p1282 = pneg %p550
        %p1283 = pneg %p547
        %p1284 = pneg %p571
        %p1285 = pneg %p568
        %p1286 = pneg %p592
        %p1287 = pneg %p589
        %p1288 = pneg %p613
        %p1289 = pneg %p610
        %p1290 = pneg %p634
        %p1291 = pneg %p631
        %p1292 = pneg %p655
        %p1293 = pneg %p652
        %p1294 = pneg %p676
        %p1295 = pneg %p673
        %p1296 = pneg %p697
        %p1297 = pneg %p694
        %p1298 = pneg %p718
        %p1299 = pneg %p715
        %p1300 = pneg %p739
        %p1301 = pneg %p736
        %p1302 = pneg %p765
        %p1303 = pneg %p762
        %p1304 = scmp.lt.s32.totalorder %s88, 1
        %s1305 = scalar_select %p1304, %s88, 1
        %s1306 = smul.addr %s1305, 9
        %s1307 = smul.addr %s1306, 8
        %s1308 = scalar_lea.vmem %s63, %s1307
        %p1309 = scmp.lt.s32.totalorder %s88, 1
        %s1310 = scalar_select %p1309, %s88, 1
        %s1311 = smul.addr %s1310, 9
        %s1312 = smul.addr %s1311, 8
        %s1313 = scalar_lea.vmem %s1, %s1312
        %p1314 = scmp.lt.s32.totalorder %s88, 1
        %s1315 = scalar_select %p1314, %s88, 1
        %s1316 = smul.addr %s1315, 9
        %s1317 = smul.addr %s1316, 8
        %s1318 = scalar_lea.vmem %s63, %s1317
        %v1319 = vld [vmem:[%s11] sm:$0xff]
        %v1320 = vld [vmem:[%s11 + $0x8] sm:$0xff]
        %v1321 = vld [vmem:[%s11 + $0x10] sm:$0xff]
        %v1322 = vld [vmem:[%s11 + $0x18] sm:$0xff]
        %v1323 = vld [vmem:[%s11 + $0x20] sm:$0xff]
        %v1324 = vld [vmem:[%s11 + $0x28] sm:$0xff]
        %v1325 = vld [vmem:[%s11 + $0x30] sm:$0xff]
        %v1326 = vld [vmem:[%s11 + $0x38] sm:$0xff]
        %v1327 = vld [vmem:[%s11 + $0x40] sm:$0xff]
        %v1328 = vld [vmem:[%s11 + $0x48] sm:$0xff]
        %v1329 = vld [vmem:[%s11 + $0x50] sm:$0xff]
        %v1330 = vld [vmem:[%s11 + $0x58] sm:$0xff]
        %v1331 = vld [vmem:[%s11 + $0x60] sm:$0xff]
        %v1332 = vld [vmem:[%s11 + $0x68] sm:$0xff]
        %v1333 = vld [vmem:[%s11 + $0x70] sm:$0xff]
        %v1334 = vld [vmem:[%s11 + $0x78] sm:$0xff]
        %v1335 = vld [vmem:[%s11 + $0x80] sm:$0xff]
        %v1336 = vld [vmem:[%s11 + $0x88] sm:$0xff]
        %v1337 = vld [vmem:[%s11 + $0x90] sm:$0xff]
        %v1338 = vld [vmem:[%s11 + $0x98] sm:$0xff]
        %v1339 = vld [vmem:[%s11 + $0xa0] sm:$0xff]
        %v1340 = vld [vmem:[%s11 + $0xa8] sm:$0xff]
        %v1341 = vld [vmem:[%s11 + $0xb0] sm:$0xff]
        %v1342 = vld [vmem:[%s11 + $0xb8] sm:$0xff]
        %v1343 = vld [vmem:[%s11 + $0xc0] sm:$0xff]
        %v1344 = vld [vmem:[%s11 + $0xc8] sm:$0xff]
        %v1345 = vld [vmem:[%s11 + $0xd0] sm:$0xff]
        %v1346 = vld [vmem:[%s11 + $0xd8] sm:$0xff]
        %v1347 = vld [vmem:[%s11 + $0xe0] sm:$0xff]
        %v1348 = vld [vmem:[%s11 + $0xe8] sm:$0xff]
        %v1349 = vld [vmem:[%s11 + $0xf0] sm:$0xff]
        %v1350 = vld [vmem:[%s11 + $0xf8] sm:$0xff]
        %v1351 = vld [vmem:[%s11 + $0x100] sm:$0xff]
        %v1352 = vld [vmem:[%s11 + $0x108] sm:$0xff]
        %v1353 = vld [vmem:[%s11 + $0x110] sm:$0xff]
        %v1354 = vld [vmem:[%s11 + $0x118] sm:$0xff]
        %v1355 = vld [vmem:[%s11 + $0x120] sm:$0xff]
        %v1356 = vld [vmem:[%s11 + $0x128] sm:$0xff]
        %v1357 = vld [vmem:[%s11 + $0x130] sm:$0xff]
        %v1358 = vld [vmem:[%s11 + $0x138] sm:$0xff]
        %v1359 = vld [vmem:[%s11 + $0x140] sm:$0xff]
        %v1360 = vld [vmem:[%s11 + $0x148] sm:$0xff]
        %v1361 = vld [vmem:[%s11 + $0x150] sm:$0xff]
        %v1362 = vld [vmem:[%s11 + $0x158] sm:$0xff]
        %v1363 = vld [vmem:[%s11 + $0x160] sm:$0xff]
        %v1364 = vld [vmem:[%s11 + $0x168] sm:$0xff]
        %v1365 = vld [vmem:[%s11 + $0x170] sm:$0xff]
        %v1366 = vld [vmem:[%s11 + $0x178] sm:$0xff]
        %v1367 = vld [vmem:[%s11 + $0x180] sm:$0xff]
        %v1368 = vld [vmem:[%s11 + $0x188] sm:$0xff]
        %v1369 = vld [vmem:[%s11 + $0x190] sm:$0xff]
        %v1370 = vld [vmem:[%s11 + $0x198] sm:$0xff]
        %v1371 = vld [vmem:[%s11 + $0x1a0] sm:$0xff]
        %v1372 = vld [vmem:[%s11 + $0x1a8] sm:$0xff]
        %v1373 = vld [vmem:[%s11 + $0x1b0] sm:$0xff]
        %v1374 = vld [vmem:[%s11 + $0x1b8] sm:$0xff]
        %v1375 = vld [vmem:[%s11 + $0x1c0] sm:$0xff]
        %v1376 = vld [vmem:[%s11 + $0x1c8] sm:$0xff]
        %v1377 = vld [vmem:[%s11 + $0x1d0] sm:$0xff]
        %v1378 = vld [vmem:[%s11 + $0x1d8] sm:$0xff]
        %v1379 = vld [vmem:[%s11 + $0x1e0] sm:$0xff]
        %v1380 = vld [vmem:[%s11 + $0x1e8] sm:$0xff]
        %v1381 = vld [vmem:[%s11 + $0x1f0] sm:$0xff]
        %v1382 = vld [vmem:[%s11 + $0x1f8] sm:$0xff]
        %v1383 = vld [vmem:[%s11 + $0x200] sm:$0xff]
        %v1384 = vld [vmem:[%s11 + $0x208] sm:$0xff]
        %v1385 = vld [vmem:[%s11 + $0x210] sm:$0xff]
        %v1386 = vld [vmem:[%s11 + $0x218] sm:$0xff]
        %v1387 = vld [vmem:[%s11 + $0x220] sm:$0xff]
        %v1388 = vld [vmem:[%s11 + $0x228] sm:$0xff]
        %v1389 = vld [vmem:[%s11 + $0x230] sm:$0xff]
        %v1390 = vld [vmem:[%s11 + $0x238] sm:$0xff]
        %v1391 = vld [vmem:[%s11 + $0x240] sm:$0xff]
        %v1392 = vld [vmem:[%s11 + $0x248] sm:$0xff]
        %v1393 = vld [vmem:[%s11 + $0x250] sm:$0xff]
        %v1394 = vld [vmem:[%s11 + $0x258] sm:$0xff]
        %v1395 = vld [vmem:[%s11 + $0x260] sm:$0xff]
        %v1396 = vld [vmem:[%s11 + $0x268] sm:$0xff]
        %v1397 = vld [vmem:[%s11 + $0x270] sm:$0xff]
        %v1398 = vld [vmem:[%s11 + $0x278] sm:$0xff]
        %v1399 = vld [vmem:[%s11 + $0x280] sm:$0xff]
        %v1400 = vld [vmem:[%s11 + $0x288] sm:$0xff]
        %v1401 = vld [vmem:[%s11 + $0x290] sm:$0xff]
        %v1402 = vld [vmem:[%s11 + $0x298] sm:$0xff]
        %v1403 = vld [vmem:[%s11 + $0x2a0] sm:$0xff]
        %v1404 = vld [vmem:[%s11 + $0x2a8] sm:$0xff]
        %v1405 = vld [vmem:[%s11 + $0x2b0] sm:$0xff]
        %v1406 = vld [vmem:[%s11 + $0x2b8] sm:$0xff]
        %v1407 = vld [vmem:[%s11 + $0x2c0] sm:$0xff]
        %v1408 = vld [vmem:[%s11 + $0x2c8] sm:$0xff]
        %v1409 = vld [vmem:[%s11 + $0x2d0] sm:$0xff]
        %v1410 = vld [vmem:[%s11 + $0x2d8] sm:$0xff]
        %v1411 = vld [vmem:[%s11 + $0x2e0] sm:$0xff]
        %v1412 = vld [vmem:[%s11 + $0x2e8] sm:$0xff]
        %v1413 = vld [vmem:[%s11 + $0x2f0] sm:$0xff]
        %v1414 = vld [vmem:[%s11 + $0x2f8] sm:$0xff]
        %v1415 = vld [vmem:[%s11 + $0x300] sm:$0xff]
        %v1416 = vld [vmem:[%s11 + $0x308] sm:$0xff]
        %v1417 = vld [vmem:[%s11 + $0x310] sm:$0xff]
        %v1418 = vld [vmem:[%s11 + $0x318] sm:$0xff]
        %v1419 = vld [vmem:[%s11 + $0x320] sm:$0xff]
        %v1420 = vld [vmem:[%s11 + $0x328] sm:$0xff]
        %v1421 = vld [vmem:[%s11 + $0x330] sm:$0xff]
        %v1422 = vld [vmem:[%s11 + $0x338] sm:$0xff]
        %v1423 = vld [vmem:[%s11 + $0x340] sm:$0xff]
        %v1424 = vld [vmem:[%s11 + $0x348] sm:$0xff]
        %v1425 = vld [vmem:[%s11 + $0x350] sm:$0xff]
        %v1426 = vld [vmem:[%s11 + $0x358] sm:$0xff]
        %v1427 = vld [vmem:[%s11 + $0x360] sm:$0xff]
        %v1428 = vld [vmem:[%s11 + $0x368] sm:$0xff]
        %v1429 = vld [vmem:[%s11 + $0x370] sm:$0xff]
        %v1430 = vld [vmem:[%s11 + $0x378] sm:$0xff]
        %v1431 = vld [vmem:[%s11 + $0x380] sm:$0xff]
        %v1432 = vld [vmem:[%s11 + $0x388] sm:$0xff]
        %v1433 = vld [vmem:[%s11 + $0x390] sm:$0xff]
        %v1434 = vld [vmem:[%s11 + $0x398] sm:$0xff]
        %v1435 = vld [vmem:[%s11 + $0x3a0] sm:$0xff]
        %v1436 = vld [vmem:[%s11 + $0x3a8] sm:$0xff]
        %v1437 = vld [vmem:[%s11 + $0x3b0] sm:$0xff]
        %v1438 = vld [vmem:[%s11 + $0x3b8] sm:$0xff]
        %v1439 = vld [vmem:[%s11 + $0x3c0] sm:$0xff]
        %v1440 = vld [vmem:[%s11 + $0x3c8] sm:$0xff]
        %v1441 = vld [vmem:[%s11 + $0x3d0] sm:$0xff]
        %v1442 = vld [vmem:[%s11 + $0x3d8] sm:$0xff]
        %v1443 = vld [vmem:[%s11 + $0x3e0] sm:$0xff]
        %v1444 = vld [vmem:[%s11 + $0x3e8] sm:$0xff]
        %v1445 = vld [vmem:[%s11 + $0x3f0] sm:$0xff]
        %v1446 = vld [vmem:[%s11 + $0x3f8] sm:$0xff]
        %v1447 = vld [vmem:[%s11 + $0x400] sm:$0xff]
        %v1448 = vld [vmem:[%s11 + $0x408] sm:$0xff]
        %v1449 = vld [vmem:[%s11 + $0x410] sm:$0xff]
        %v1450 = vld [vmem:[%s11 + $0x418] sm:$0xff]
        %v1451 = vld [vmem:[%s11 + $0x420] sm:$0xff]
        %v1452 = vld [vmem:[%s11 + $0x428] sm:$0xff]
        %v1453 = vld [vmem:[%s11 + $0x430] sm:$0xff]
        %v1454 = vld [vmem:[%s11 + $0x438] sm:$0xff]
        %v1455 = vld [vmem:[%s11 + $0x440] sm:$0xff]
        %v1456 = vld [vmem:[%s11 + $0x448] sm:$0xff]
        %v1457 = vld [vmem:[%s11 + $0x450] sm:$0xff]
        %v1458 = vld [vmem:[%s11 + $0x458] sm:$0xff]
        %v1459 = vld [vmem:[#allocation6] sm:$0xff]
        %v1460 = vld [vmem:[#allocation6 + $0x8] sm:$0x1]
        %v1461 = vld [vmem:[%s1313] sm:$0xff]
        %v1462 = vld [vmem:[%s1313 + $0x8] sm:$0xff]
        %v1463 = vld [vmem:[%s1313 + $0x10] sm:$0xff]
        %v1464 = vld [vmem:[%s1313 + $0x18] sm:$0xff]
        %v1465 = vld [vmem:[%s1313 + $0x20] sm:$0xff]
        %v1466 = vld [vmem:[%s1313 + $0x28] sm:$0xff]
        %v1467 = vld [vmem:[%s1313 + $0x30] sm:$0xff]
        %v1468 = vld [vmem:[%s1313 + $0x38] sm:$0xff]
        %v1469 = vld [vmem:[%s1313 + $0x40] sm:$0x3f]
        %v1470 = vld [vmem:[%s3] sm:$0xff]
        %v1471 = vld [vmem:[%s3 + $0x8] sm:$0xff]
        %v1472 = vld [vmem:[%s3 + $0x10] sm:$0xff]
        %v1473 = vld [vmem:[%s3 + $0x18] sm:$0xff]
        %v1474 = vld [vmem:[%s3 + $0x20] sm:$0xff]
        %v1475 = vld [vmem:[%s3 + $0x28] sm:$0xff]
        %v1476 = vld [vmem:[%s3 + $0x30] sm:$0xff]
        %v1477 = vld [vmem:[%s3 + $0x38] sm:$0xff]
        %v1478 = vld [vmem:[%s3 + $0x40] sm:$0x3f]
        %v1479 = vmul.f32 %v1461, %v1470
        %v1480 = vmul.f32 %v1462, %v1471
        %v1481 = vmul.f32 %v1463, %v1472
        %v1482 = vmul.f32 %v1464, %v1473
        %v1483 = vmul.f32 %v1465, %v1474
        %v1484 = vmul.f32 %v1466, %v1475
        %v1485 = vmul.f32 %v1467, %v1476
        %v1486 = vmul.f32 %v1468, %v1477
        %v1487 = vmul.f32 %v1469, %v1478
        %v1488 = vld [vmem:[%s5] sm:$0xff]
        %v1489 = vld [vmem:[%s5 + $0x8] sm:$0xff]
        %v1490 = vld [vmem:[%s5 + $0x10] sm:$0xff]
        %v1491 = vld [vmem:[%s5 + $0x18] sm:$0xff]
        %v1492 = vld [vmem:[%s5 + $0x20] sm:$0xff]
        %v1493 = vld [vmem:[%s5 + $0x28] sm:$0xff]
        %v1494 = vld [vmem:[%s5 + $0x30] sm:$0xff]
        %v1495 = vld [vmem:[%s5 + $0x38] sm:$0xff]
        %v1496 = vld [vmem:[%s5 + $0x40] sm:$0x3f]
        %v1497 = vadd.f32 %v1479, %v1488
        %v1498 = vadd.f32 %v1480, %v1489
        %v1499 = vadd.f32 %v1481, %v1490
        %v1500 = vadd.f32 %v1482, %v1491
        %v1501 = vadd.f32 %v1483, %v1492
        %v1502 = vadd.f32 %v1484, %v1493
        %v1503 = vadd.f32 %v1485, %v1494
        %v1504 = vadd.f32 %v1486, %v1495
        %v1505 = vadd.f32 %v1487, %v1496
        %v1506 = vld [vmem:[#allocation2] sm:$0xff]
        %v1507 = vld [vmem:[#allocation2 + $0x8] sm:$0xff]
        %v1508 = vld [vmem:[#allocation4] sm:$0x1]
        %v1510 = vlaneseq
        %v1511 = vshrl.u32 %v1510, 7
        %v1512 = vsub.s32 0, %v1511
        %v1513 = vrot.slane %v1508, %v1512
        %vm1515 = vcmask 130048
        %v1517 = vsel %vm1515, %v1497, 0
        %v1520 = vsel %vm1515, %v1498, 0
        %v1523 = vsel %vm1515, %v1499, 0
        %v1526 = vsel %vm1515, %v1500, 0
        %v1529 = vsel %vm1515, %v1501, 0
        %v1532 = vsel %vm1515, %v1502, 0
        %v1535 = vsel %vm1515, %v1503, 0
        %v1538 = vsel %vm1515, %v1504, 0
        %v1541 = vsel %vm1515, %v1505, 0
        %1543 = vmatprep.subr.mxu0 0.0
        %1544 = vmatpush1.msra.mxu0 0.0
        %1545 = vmatprep.subr.mxu0 0.0
        %1546 = vmatpush1.msra.mxu0 0.0
        %1547 = vmatprep.subr.mxu0 0.0
        %1548 = vmatpush1.msra.mxu0 0.0
        %1549 = vmatprep.subr.mxu0 0.0
        %1550 = vmatpush1.msra.mxu0 0.0
        %1551 = vmatprep.subr.mxu0 0.0
        %1552 = vmatpush1.msra.mxu0 0.0
        %1553 = vmatprep.subr.mxu0 0.0
        %1554 = vmatpush1.msra.mxu0 0.0
        %1555 = vmatprep.subr.mxu0 0.0
        %1556 = vmatpush1.msra.mxu0 0.0
        %1557 = vmatprep.subr.mxu0 0.0
        %1558 = vmatpush1.msra.mxu0 0.0
        %1559 = vmatprep.subr.mxu0 0.0
        %1560 = vmatpush1.msra.mxu0 0.0
        %1561 = vmatprep.subr.mxu0 0.0
        %1562 = vmatpush1.msra.mxu0 0.0
        %1563 = vmatprep.subr.mxu0 0.0
        %1564 = vmatpush1.msra.mxu0 0.0
        %1565 = vmatprep.subr.mxu0 0.0
        %1566 = vmatpush1.msra.mxu0 0.0
        %1567 = vmatprep.subr.mxu0 0.0
        %1568 = vmatpush1.msra.mxu0 0.0
        %1569 = vmatprep.subr.mxu0 0.0
        %1570 = vmatpush1.msra.mxu0 0.0
        %1571 = vmatprep.subr.mxu0 0.0
        %1572 = vmatpush1.msra.mxu0 %v1507
        %1573 = vmatprep.subr.mxu0 0.0
        %1574 = vmatpush1.msra.mxu0 %v1506
        %1575 = vmatprep.subr.mxu0 0.0
        %1576 = vmatpush2.msra.mxu0 0.0
        %1577 = vmatprep.subr.mxu0 0.0
        %1578 = vmatpush2.msra.mxu0 0.0
        %1579 = vmatprep.subr.mxu0 0.0
        %1580 = vmatpush2.msra.mxu0 0.0
        %1581 = vmatprep.subr.mxu0 0.0
        %1582 = vmatpush2.msra.mxu0 0.0
        %1583 = vmatprep.subr.mxu0 0.0
        %1584 = vmatpush2.msra.mxu0 0.0
        %1585 = vmatprep.subr.mxu0 0.0
        %1586 = vmatpush2.msra.mxu0 0.0
        %1587 = vmatprep.subr.mxu0 0.0
        %1588 = vmatpush2.msra.mxu0 0.0
        %1589 = vmatprep.subr.mxu0 0.0
        %1590 = vmatpush2.msra.mxu0 0.0
        %1591 = vmatprep.subr.mxu0 0.0
        %1592 = vmatpush2.msra.mxu0 0.0
        %1593 = vmatprep.subr.mxu0 0.0
        %1594 = vmatpush2.msra.mxu0 0.0
        %1595 = vmatprep.subr.mxu0 0.0
        %1596 = vmatpush2.msra.mxu0 0.0
        %1597 = vmatprep.subr.mxu0 0.0
        %1598 = vmatpush2.msra.mxu0 0.0
        %1599 = vmatprep.subr.mxu0 0.0
        %1600 = vmatpush2.msra.mxu0 0.0
        %1601 = vmatprep.subr.mxu0 0.0
        %1602 = vmatpush2.msra.mxu0 0.0
        %1603 = vmatprep.subr.mxu0 0.0
        %1604 = vmatpush2.msra.mxu0 0.0
        %1605 = vmatprep.subr.mxu0 0.0
        %1606 = vmatpush2.msra.mxu0 0.0
        %1607 = vmatprep.mubr.f32.mxu0 0.0
        %1608 = vmatmul.mubr.f32.gmra.mxu0 %v1517
        %v1609 = vpop.f32.mrf.mxu0
        %v1610 = vadd.f32 %v1513, %v1609
        %v1611 = vpop.f32.mrf.mxu0
        %1612 = vmatprep.mubr.f32.mxu0 0.0
        %1613 = vmatmul.mubr.f32.gmra.mxu0 %v1520
        %v1614 = vpop.f32.mrf.mxu0
        %v1615 = vadd.f32 %v1513, %v1614
        %v1616 = vpop.f32.mrf.mxu0
        %1617 = vmatprep.mubr.f32.mxu0 0.0
        %1618 = vmatmul.mubr.f32.gmra.mxu0 %v1523
        %v1619 = vpop.f32.mrf.mxu0
        %v1620 = vadd.f32 %v1513, %v1619
        %v1621 = vpop.f32.mrf.mxu0
        %1622 = vmatprep.mubr.f32.mxu0 0.0
        %1623 = vmatmul.mubr.f32.gmra.mxu0 %v1526
        %v1624 = vpop.f32.mrf.mxu0
        %v1625 = vadd.f32 %v1513, %v1624
        %v1626 = vpop.f32.mrf.mxu0
        %1627 = vmatprep.mubr.f32.mxu0 0.0
        %1628 = vmatmul.mubr.f32.gmra.mxu0 %v1529
        %v1629 = vpop.f32.mrf.mxu0
        %v1630 = vadd.f32 %v1513, %v1629
        %v1631 = vpop.f32.mrf.mxu0
        %1632 = vmatprep.mubr.f32.mxu0 0.0
        %1633 = vmatmul.mubr.f32.gmra.mxu0 %v1532
        %v1634 = vpop.f32.mrf.mxu0
        %v1635 = vadd.f32 %v1513, %v1634
        %v1636 = vpop.f32.mrf.mxu0
        %1637 = vmatprep.mubr.f32.mxu0 0.0
        %1638 = vmatmul.mubr.f32.gmra.mxu0 %v1535
        %v1639 = vpop.f32.mrf.mxu0
        %v1640 = vadd.f32 %v1513, %v1639
        %v1641 = vpop.f32.mrf.mxu0
        %1642 = vmatprep.mubr.f32.mxu0 0.0
        %1643 = vmatmul.mubr.f32.gmra.mxu0 %v1538
        %v1644 = vpop.f32.mrf.mxu0
        %v1645 = vadd.f32 %v1513, %v1644
        %v1646 = vpop.f32.mrf.mxu0
        %1647 = vmatprep.mubr.f32.mxu0 0.0
        %1648 = vmatmul.mubr.f32.gmra.mxu0 %v1541
        %v1649 = vpop.f32.mrf.mxu0
        %v1650 = vadd.f32 %v1513, %v1649
        %v1651 = vpop.f32.mrf.mxu0
        %1652 = vdwg.mxu0
        %v1653 = vmax.f32 %v1610, 0.0
        %v1654 = vmax.f32 %v1615, 0.0
        %v1655 = vmax.f32 %v1620, 0.0
        %v1656 = vmax.f32 %v1625, 0.0
        %v1657 = vmax.f32 %v1630, 0.0
        %v1658 = vmax.f32 %v1635, 0.0
        %v1659 = vmax.f32 %v1640, 0.0
        %v1660 = vmax.f32 %v1645, 0.0
        %v1661 = vmax.f32 %v1650, 0.0
        %v1662 = vld [vmem:[#allocation7] sm:$0xff]
        %v1663 = vld [vmem:[#allocation7 + $0x8] sm:$0xff]
        %v1665 = vsel %vm1515, %v1653, 0
        %v1668 = vsel %vm1515, %v1654, 0
        %v1671 = vsel %vm1515, %v1655, 0
        %v1674 = vsel %vm1515, %v1656, 0
        %v1677 = vsel %vm1515, %v1657, 0
        %v1680 = vsel %vm1515, %v1658, 0
        %v1683 = vsel %vm1515, %v1659, 0
        %v1686 = vsel %vm1515, %v1660, 0
        %v1689 = vsel %vm1515, %v1661, 0
        %1691 = vmatprep.subr.mxu0 0.0
        %1692 = vmatpush1.msra.mxu0 0.0
        %1693 = vmatprep.subr.mxu0 0.0
        %1694 = vmatpush1.msra.mxu0 0.0
        %1695 = vmatprep.subr.mxu0 0.0
        %1696 = vmatpush1.msra.mxu0 0.0
        %1697 = vmatprep.subr.mxu0 0.0
        %1698 = vmatpush1.msra.mxu0 0.0
        %1699 = vmatprep.subr.mxu0 0.0
        %1700 = vmatpush1.msra.mxu0 0.0
        %1701 = vmatprep.subr.mxu0 0.0
        %1702 = vmatpush1.msra.mxu0 0.0
        %1703 = vmatprep.subr.mxu0 0.0
        %1704 = vmatpush1.msra.mxu0 0.0
        %1705 = vmatprep.subr.mxu0 0.0
        %1706 = vmatpush1.msra.mxu0 0.0
        %1707 = vmatprep.subr.mxu0 0.0
        %1708 = vmatpush1.msra.mxu0 0.0
        %1709 = vmatprep.subr.mxu0 0.0
        %1710 = vmatpush1.msra.mxu0 0.0
        %1711 = vmatprep.subr.mxu0 0.0
        %1712 = vmatpush1.msra.mxu0 0.0
        %1713 = vmatprep.subr.mxu0 0.0
        %1714 = vmatpush1.msra.mxu0 0.0
        %1715 = vmatprep.subr.mxu0 0.0
        %1716 = vmatpush1.msra.mxu0 0.0
        %1717 = vmatprep.subr.mxu0 0.0
        %1718 = vmatpush1.msra.mxu0 0.0
        %1719 = vmatprep.subr.mxu0 0.0
        %1720 = vmatpush1.msra.mxu0 %v1663
        %1721 = vmatprep.subr.mxu0 0.0
        %1722 = vmatpush1.msra.mxu0 %v1662
        %1723 = vmatprep.subr.mxu0 0.0
        %1724 = vmatpush2.msra.mxu0 0.0
        %1725 = vmatprep.subr.mxu0 0.0
        %1726 = vmatpush2.msra.mxu0 0.0
        %1727 = vmatprep.subr.mxu0 0.0
        %1728 = vmatpush2.msra.mxu0 0.0
        %1729 = vmatprep.subr.mxu0 0.0
        %1730 = vmatpush2.msra.mxu0 0.0
        %1731 = vmatprep.subr.mxu0 0.0
        %1732 = vmatpush2.msra.mxu0 0.0
        %1733 = vmatprep.subr.mxu0 0.0
        %1734 = vmatpush2.msra.mxu0 0.0
        %1735 = vmatprep.subr.mxu0 0.0
        %1736 = vmatpush2.msra.mxu0 0.0
        %1737 = vmatprep.subr.mxu0 0.0
        %1738 = vmatpush2.msra.mxu0 0.0
        %1739 = vmatprep.subr.mxu0 0.0
        %1740 = vmatpush2.msra.mxu0 0.0
        %1741 = vmatprep.subr.mxu0 0.0
        %1742 = vmatpush2.msra.mxu0 0.0
        %1743 = vmatprep.subr.mxu0 0.0
        %1744 = vmatpush2.msra.mxu0 0.0
        %1745 = vmatprep.subr.mxu0 0.0
        %1746 = vmatpush2.msra.mxu0 0.0
        %1747 = vmatprep.subr.mxu0 0.0
        %1748 = vmatpush2.msra.mxu0 0.0
        %1749 = vmatprep.subr.mxu0 0.0
        %1750 = vmatpush2.msra.mxu0 0.0
        %1751 = vmatprep.subr.mxu0 0.0
        %1752 = vmatpush2.msra.mxu0 0.0
        %1753 = vmatprep.subr.mxu0 0.0
        %1754 = vmatpush2.msra.mxu0 0.0
        %1755 = vmatprep.mubr.f32.mxu0 0.0
        %1756 = vmatmul.mubr.f32.gmra.mxu0 %v1665
        %v1757 = vpop.f32.mrf.mxu0
        %v1758 = vadd.f32 0.0, %v1757
        %v1759 = vpop.f32.mrf.mxu0
        %1760 = vmatprep.mubr.f32.mxu0 0.0
        %1761 = vmatmul.mubr.f32.gmra.mxu0 %v1668
        %v1762 = vpop.f32.mrf.mxu0
        %v1763 = vadd.f32 0.0, %v1762
        %v1764 = vpop.f32.mrf.mxu0
        %1765 = vmatprep.mubr.f32.mxu0 0.0
        %1766 = vmatmul.mubr.f32.gmra.mxu0 %v1671
        %v1767 = vpop.f32.mrf.mxu0
        %v1768 = vadd.f32 0.0, %v1767
        %v1769 = vpop.f32.mrf.mxu0
        %1770 = vmatprep.mubr.f32.mxu0 0.0
        %1771 = vmatmul.mubr.f32.gmra.mxu0 %v1674
        %v1772 = vpop.f32.mrf.mxu0
        %v1773 = vadd.f32 0.0, %v1772
        %v1774 = vpop.f32.mrf.mxu0
        %1775 = vmatprep.mubr.f32.mxu0 0.0
        %1776 = vmatmul.mubr.f32.gmra.mxu0 %v1677
        %v1777 = vpop.f32.mrf.mxu0
        %v1778 = vadd.f32 0.0, %v1777
        %v1779 = vpop.f32.mrf.mxu0
        %1780 = vmatprep.mubr.f32.mxu0 0.0
        %1781 = vmatmul.mubr.f32.gmra.mxu0 %v1680
        %v1782 = vpop.f32.mrf.mxu0
        %v1783 = vadd.f32 0.0, %v1782
        %v1784 = vpop.f32.mrf.mxu0
        %1785 = vmatprep.mubr.f32.mxu0 0.0
        %1786 = vmatmul.mubr.f32.gmra.mxu0 %v1683
        %v1787 = vpop.f32.mrf.mxu0
        %v1788 = vadd.f32 0.0, %v1787
        %v1789 = vpop.f32.mrf.mxu0
        %1790 = vmatprep.mubr.f32.mxu0 0.0
        %1791 = vmatmul.mubr.f32.gmra.mxu0 %v1686
        %v1792 = vpop.f32.mrf.mxu0
        %v1793 = vadd.f32 0.0, %v1792
        %v1794 = vpop.f32.mrf.mxu0
        %1795 = vmatprep.mubr.f32.mxu0 0.0
        %1796 = vmatmul.mubr.f32.gmra.mxu0 %v1689
        %v1797 = vpop.f32.mrf.mxu0
        %v1798 = vadd.f32 0.0, %v1797
        %v1799 = vpop.f32.mrf.mxu0
        %1800 = vdwg.mxu0
        %v1801 = vld [vmem:[#allocation9] sm:$0x1]
        %v1803 = vlaneseq
        %v1804 = vshrl.u32 %v1803, 7
        %v1805 = vsub.s32 0, %v1804
        %v1806 = vrot.slane %v1801, %v1805
        %v1808 = vadd.f32 %v1758, %v1806
        %v1809 = vadd.f32 %v1763, %v1806
        %v1810 = vadd.f32 %v1768, %v1806
        %v1811 = vadd.f32 %v1773, %v1806
        %v1812 = vadd.f32 %v1778, %v1806
        %v1813 = vld [vmem:[#allocation10] sm:$0x1]
        %v1815 = vlaneseq
        %v1816 = vshrl.u32 %v1815, 7
        %v1817 = vsub.s32 0, %v1816
        %v1818 = vrot.slane %v1813, %v1817
        %1819 = vrot.lane.b32.xlu0 %v1818, 16
        %v1820 = vpop.permute.xlu0 %1819
        %v1822 = vadd.f32 %v1778, %v1820
        %v1823 = vadd.f32 %v1783, %v1820
        %v1824 = vadd.f32 %v1788, %v1820
        %v1825 = vadd.f32 %v1793, %v1820
        %v1826 = vadd.f32 %v1798, %v1820
        %vm1832 = vcmask 1044480
        %v1833 = vrot.slane %v1778, 3
        %v1834 = vrot.slane %v1783, 3
        %v1835 = vsel %vm1832, %v1833, %v1834
        %v1836 = vrot.slane %v1788, 3
        %v1837 = vsel %vm1832, %v1834, %v1836
        %v1838 = vrot.slane %v1793, 3
        %v1839 = vsel %vm1832, %v1836, %v1838
        %v1840 = vrot.slane %v1798, 3
        %v1841 = vsel %vm1832, %v1838, %v1840
        %v1847 = vsub.f32 %v1758, %v1835
        %v1848 = vsub.f32 %v1763, %v1837
        %v1849 = vsub.f32 %v1768, %v1839
        %v1850 = vsub.f32 %v1773, %v1841
        %v1851 = vsub.f32 %v1778, %v1840
        %v1852 = vld [vmem:[#allocation12] sm:$0x1]
        %v1854 = vlaneseq
        %v1855 = vshrl.u32 %v1854, 7
        %v1856 = vsub.s32 0, %v1855
        %v1857 = vrot.slane %v1852, %v1856
        %1858 = vrot.lane.b32.xlu0 %v1857, 32
        %v1859 = vpop.permute.xlu0 %1858
        %v1861 = vadd.f32 %v1847, %v1859
        %v1862 = vadd.f32 %v1848, %v1859
        %v1863 = vadd.f32 %v1849, %v1859
        %v1864 = vadd.f32 %v1850, %v1859
        %v1865 = vadd.f32 %v1851, %v1859
        %v1866 = vld [vmem:[#allocation13] sm:$0x1]
        %v1868 = vlaneseq
        %v1869 = vshrl.u32 %v1868, 7
        %v1870 = vsub.s32 0, %v1869
        %v1871 = vrot.slane %v1866, %v1870
        %1872 = vrot.lane.b32.xlu0 %v1871, 48
        %v1873 = vpop.permute.xlu0 %1872
        %v1875 = vadd.f32 %v1758, %v1873
        %v1876 = vadd.f32 %v1763, %v1873
        %v1877 = vadd.f32 %v1768, %v1873
        %v1878 = vadd.f32 %v1773, %v1873
        %v1879 = vadd.f32 %v1778, %v1873
        %v1880 = vadd.f32 %v1783, %v1873
        %v1881 = vadd.f32 %v1788, %v1873
        %v1882 = vadd.f32 %v1793, %v1873
        %v1883 = vadd.f32 %v1798, %v1873
        %v1889 = vrot.slane %v1822, 3
        %v1890 = vrot.slane %v1823, 3
        %v1891 = vsel %vm1832, %v1889, %v1890
        %v1892 = vrot.slane %v1824, 3
        %v1893 = vsel %vm1832, %v1890, %v1892
        %v1894 = vrot.slane %v1825, 3
        %v1895 = vsel %vm1832, %v1892, %v1894
        %v1896 = vrot.slane %v1826, 3
        %v1897 = vsel %vm1832, %v1894, %v1896
        %1898 = vrot.lane.b32.xlu0 %v1891, 112
        %v1899 = vpop.permute.xlu0 %1898
        %1900 = vrot.lane.b32.xlu0 %v1893, 112
        %v1901 = vpop.permute.xlu0 %1900
        %1902 = vrot.lane.b32.xlu0 %v1895, 112
        %v1903 = vpop.permute.xlu0 %1902
        %1904 = vrot.lane.b32.xlu0 %v1897, 112
        %v1905 = vpop.permute.xlu0 %1904
        %1906 = vrot.lane.b32.xlu0 %v1896, 112
        %v1907 = vpop.permute.xlu0 %1906
        %v1909 = vsel %vm1515, %v1808, 0
        %v1912 = vsel %vm1515, %v1809, 0
        %v1915 = vsel %vm1515, %v1810, 0
        %v1918 = vsel %vm1515, %v1811, 0
        %v1921 = vsel %vm1515, %v1812, 0
        %v1923 = vsel %vm1515, %v1899, 0
        %v1925 = vsel %vm1515, %v1901, 0
        %v1927 = vsel %vm1515, %v1903, 0
        %v1929 = vsel %vm1515, %v1905, 0
        %v1931 = vsel %vm1515, %v1907, 0
        %1933 = vmatprep.subr.mxu0 0.0
        %1934 = vmatpush1.xpose.msra.mxu0 0.0
        %1935 = vmatprep.subr.mxu0 0.0
        %1936 = vmatpush1.xpose.msra.mxu0 0.0
        %1937 = vmatprep.subr.mxu0 0.0
        %1938 = vmatpush1.xpose.msra.mxu0 0.0
        %1939 = vmatprep.subr.mxu0 0.0
        %1940 = vmatpush1.xpose.msra.mxu0 0.0
        %1941 = vmatprep.subr.mxu0 0.0
        %1942 = vmatpush1.xpose.msra.mxu0 0.0
        %1943 = vmatprep.subr.mxu0 0.0
        %1944 = vmatpush1.xpose.msra.mxu0 0.0
        %1945 = vmatprep.subr.mxu0 0.0
        %1946 = vmatpush1.xpose.msra.mxu0 0.0
        %1947 = vmatprep.subr.mxu0 0.0
        %1948 = vmatpush1.xpose.msra.mxu0 0.0
        %1949 = vmatprep.subr.mxu0 0.0
        %1950 = vmatpush1.xpose.msra.mxu0 0.0
        %1951 = vmatprep.subr.mxu0 0.0
        %1952 = vmatpush1.xpose.msra.mxu0 0.0
        %1953 = vmatprep.subr.mxu0 0.0
        %1954 = vmatpush1.xpose.msra.mxu0 0.0
        %1955 = vmatprep.subr.mxu0 0.0
        %1956 = vmatpush1.xpose.msra.mxu0 %v1931
        %1957 = vmatprep.subr.mxu0 0.0
        %1958 = vmatpush1.xpose.msra.mxu0 %v1929
        %1959 = vmatprep.subr.mxu0 0.0
        %1960 = vmatpush1.xpose.msra.mxu0 %v1927
        %1961 = vmatprep.subr.mxu0 0.0
        %1962 = vmatpush1.xpose.msra.mxu0 %v1925
        %1963 = vmatprep.subr.mxu0 0.0
        %1964 = vmatpush1.xpose.msra.mxu0 %v1923
        %1965 = vmatprep.subr.mxu0 0.0
        %1966 = vmatpush2.xpose.msra.mxu0 0.0
        %1967 = vmatprep.subr.mxu0 0.0
        %1968 = vmatpush2.xpose.msra.mxu0 0.0
        %1969 = vmatprep.subr.mxu0 0.0
        %1970 = vmatpush2.xpose.msra.mxu0 0.0
        %1971 = vmatprep.subr.mxu0 0.0
        %1972 = vmatpush2.xpose.msra.mxu0 0.0
        %1973 = vmatprep.subr.mxu0 0.0
        %1974 = vmatpush2.xpose.msra.mxu0 0.0
        %1975 = vmatprep.subr.mxu0 0.0
        %1976 = vmatpush2.xpose.msra.mxu0 0.0
        %1977 = vmatprep.subr.mxu0 0.0
        %1978 = vmatpush2.xpose.msra.mxu0 0.0
        %1979 = vmatprep.subr.mxu0 0.0
        %1980 = vmatpush2.xpose.msra.mxu0 0.0
        %1981 = vmatprep.subr.mxu0 0.0
        %1982 = vmatpush2.xpose.msra.mxu0 0.0
        %1983 = vmatprep.subr.mxu0 0.0
        %1984 = vmatpush2.xpose.msra.mxu0 0.0
        %1985 = vmatprep.subr.mxu0 0.0
        %1986 = vmatpush2.xpose.msra.mxu0 0.0
        %1987 = vmatprep.subr.mxu0 0.0
        %1988 = vmatpush2.xpose.msra.mxu0 0.0
        %1989 = vmatprep.subr.mxu0 0.0
        %1990 = vmatpush2.xpose.msra.mxu0 0.0
        %1991 = vmatprep.subr.mxu0 0.0
        %1992 = vmatpush2.xpose.msra.mxu0 0.0
        %1993 = vmatprep.subr.mxu0 0.0
        %1994 = vmatpush2.xpose.msra.mxu0 0.0
        %1995 = vmatprep.subr.mxu0 0.0
        %1996 = vmatpush2.xpose.msra.mxu0 0.0
        %1997 = vmatprep.mubr.f32.mxu0 0.0
        %1998 = vmatmul.mubr.f32.gmra.mxu0 %v1909
        %v1999 = vpop.f32.mrf.mxu0
        %v2000 = vadd.f32 0.0, %v1999
        %v2001 = vpop.f32.mrf.mxu0
        %2002 = vmatprep.mubr.f32.mxu0 0.0
        %2003 = vmatmul.mubr.f32.gmra.mxu0 %v1912
        %v2004 = vpop.f32.mrf.mxu0
        %v2005 = vadd.f32 0.0, %v2004
        %v2006 = vpop.f32.mrf.mxu0
        %2007 = vmatprep.mubr.f32.mxu0 0.0
        %2008 = vmatmul.mubr.f32.gmra.mxu0 %v1915
        %v2009 = vpop.f32.mrf.mxu0
        %v2010 = vadd.f32 0.0, %v2009
        %v2011 = vpop.f32.mrf.mxu0
        %2012 = vmatprep.mubr.f32.mxu0 0.0
        %2013 = vmatmul.mubr.f32.gmra.mxu0 %v1918
        %v2014 = vpop.f32.mrf.mxu0
        %v2015 = vadd.f32 0.0, %v2014
        %v2016 = vpop.f32.mrf.mxu0
        %2017 = vmatprep.mubr.f32.mxu0 0.0
        %2018 = vmatmul.mubr.f32.gmra.mxu0 %v1921
        %v2019 = vpop.f32.mrf.mxu0
        %v2020 = vadd.f32 0.0, %v2019
        %v2021 = vpop.f32.mrf.mxu0
        %2022 = vdwg.mxu0
        %vm2023 = vcmask 285696
        %v2024 = vsel %vm2023, %v2000, -inf
        %2025 = vmax.xlane.f32.xlu0 %v2024
        %v2026 = vpop.xlane.xlu0 %2025
        %v2027 = vsel %vm2023, %v2005, -inf
        %2028 = vmax.xlane.f32.xlu0 %v2027
        %v2029 = vpop.xlane.xlu0 %2028
        %v2030 = vsel %vm2023, %v2010, -inf
        %2031 = vmax.xlane.f32.xlu0 %v2030
        %v2032 = vpop.xlane.xlu0 %2031
        %v2033 = vsel %vm2023, %v2015, -inf
        %2034 = vmax.xlane.f32.xlu0 %v2033
        %v2035 = vpop.xlane.xlu0 %2034
        %vm2036 = vcmask 280576
        %v2037 = vsel %vm2036, %v2020, -inf
        %2038 = vmax.xlane.f32.xlu0 %v2037
        %v2039 = vpop.xlane.xlu0 %2038
        %v2040 = vsub.f32 %v2000, %v2026
        %v2041 = vsub.f32 %v2005, %v2029
        %v2042 = vsub.f32 %v2010, %v2032
        %v2043 = vsub.f32 %v2015, %v2035
        %v2044 = vsub.f32 %v2020, %v2039
        %v2045 = vmul.f32 %v2040, 1.442695
        %v2046 = vpow.pop %v2045
        %v2047 = vmul.f32 %v2041, 1.442695
        %v2048 = vpow.pop %v2047
        %v2049 = vmul.f32 %v2042, 1.442695
        %v2050 = vpow.pop %v2049
        %v2051 = vmul.f32 %v2043, 1.442695
        %v2052 = vpow.pop %v2051
        %v2053 = vmul.f32 %v2044, 1.442695
        %v2054 = vpow.pop %v2053
        %v2055 = vsel %vm2023, %v2046, 0.0
        %2056 = vadd.xlane.f32.xlu0 %v2055
        %v2057 = vpop.xlane.xlu0 %2056
        %v2058 = vsel %vm2023, %v2048, 0.0
        %2059 = vadd.xlane.f32.xlu0 %v2058
        %v2060 = vpop.xlane.xlu0 %2059
        %v2061 = vsel %vm2023, %v2050, 0.0
        %2062 = vadd.xlane.f32.xlu0 %v2061
        %v2063 = vpop.xlane.xlu0 %2062
        %v2064 = vsel %vm2023, %v2052, 0.0
        %2065 = vadd.xlane.f32.xlu0 %v2064
        %v2066 = vpop.xlane.xlu0 %2065
        %v2067 = vsel %vm2036, %v2054, 0.0
        %2068 = vadd.xlane.f32.xlu0 %v2067
        %v2069 = vpop.xlane.xlu0 %2068
        %v2070 = vrcp.pop %v2057
        %v2071 = vrcp.pop %v2060
        %v2072 = vrcp.pop %v2063
        %v2073 = vrcp.pop %v2066
        %v2074 = vrcp.pop %v2069
        %v2075 = vmul.f32 %v2046, %v2070
        %v2076 = vmul.f32 %v2048, %v2071
        %v2077 = vmul.f32 %v2050, %v2072
        %v2078 = vmul.f32 %v2052, %v2073
        %v2079 = vmul.f32 %v2054, %v2074
        %2085 = vrot.lane.b32.xlu0 %v1861, 96
        %v2086 = vpop.permute.xlu0 %2085
        %2087 = vrot.lane.b32.xlu0 %v1862, 96
        %v2088 = vpop.permute.xlu0 %2087
        %2089 = vrot.lane.b32.xlu0 %v1863, 96
        %v2090 = vpop.permute.xlu0 %2089
        %2091 = vrot.lane.b32.xlu0 %v1864, 96
        %v2092 = vpop.permute.xlu0 %2091
        %2093 = vrot.lane.b32.xlu0 %v1865, 96
        %v2094 = vpop.permute.xlu0 %2093
        %v2100 = vsel %vm2023, %v2075, 0
        %v2103 = vsel %vm2023, %v2076, 0
        %v2106 = vsel %vm2023, %v2077, 0
        %v2109 = vsel %vm2023, %v2078, 0
        %v2112 = vsel %vm2023, %v2079, 0
        %vm2114 = vcmask 1042432
        %v2115 = vsel %vm2114, %v2094, 0
        %2117 = vmatprep.subr.mxu0 0.0
        %2118 = vmatpush1.msra.mxu0 0.0
        %2119 = vmatprep.subr.mxu0 0.0
        %2120 = vmatpush1.msra.mxu0 0.0
        %2121 = vmatprep.subr.mxu0 0.0
        %2122 = vmatpush1.msra.mxu0 0.0
        %2123 = vmatprep.subr.mxu0 0.0
        %2124 = vmatpush1.msra.mxu0 0.0
        %2125 = vmatprep.subr.mxu0 0.0
        %2126 = vmatpush1.msra.mxu0 0.0
        %2127 = vmatprep.subr.mxu0 0.0
        %2128 = vmatpush1.msra.mxu0 0.0
        %2129 = vmatprep.subr.mxu0 0.0
        %2130 = vmatpush1.msra.mxu0 0.0
        %2131 = vmatprep.subr.mxu0 0.0
        %2132 = vmatpush1.msra.mxu0 0.0
        %2133 = vmatprep.subr.mxu0 0.0
        %2134 = vmatpush1.msra.mxu0 0.0
        %2135 = vmatprep.subr.mxu0 0.0
        %2136 = vmatpush1.msra.mxu0 0.0
        %2137 = vmatprep.subr.mxu0 0.0
        %2138 = vmatpush1.msra.mxu0 0.0
        %2139 = vmatprep.subr.mxu0 0.0
        %2140 = vmatpush1.msra.mxu0 %v2115
        %2141 = vmatprep.subr.mxu0 0.0
        %2142 = vmatpush1.msra.mxu0 %v2092
        %2143 = vmatprep.subr.mxu0 0.0
        %2144 = vmatpush1.msra.mxu0 %v2090
        %2145 = vmatprep.subr.mxu0 0.0
        %2146 = vmatpush1.msra.mxu0 %v2088
        %2147 = vmatprep.subr.mxu0 0.0
        %2148 = vmatpush1.msra.mxu0 %v2086
        %2149 = vmatprep.subr.mxu0 0.0
        %2150 = vmatpush2.msra.mxu0 0.0
        %2151 = vmatprep.subr.mxu0 0.0
        %2152 = vmatpush2.msra.mxu0 0.0
        %2153 = vmatprep.subr.mxu0 0.0
        %2154 = vmatpush2.msra.mxu0 0.0
        %2155 = vmatprep.subr.mxu0 0.0
        %2156 = vmatpush2.msra.mxu0 0.0
        %2157 = vmatprep.subr.mxu0 0.0
        %2158 = vmatpush2.msra.mxu0 0.0
        %2159 = vmatprep.subr.mxu0 0.0
        %2160 = vmatpush2.msra.mxu0 0.0
        %2161 = vmatprep.subr.mxu0 0.0
        %2162 = vmatpush2.msra.mxu0 0.0
        %2163 = vmatprep.subr.mxu0 0.0
        %2164 = vmatpush2.msra.mxu0 0.0
        %2165 = vmatprep.subr.mxu0 0.0
        %2166 = vmatpush2.msra.mxu0 0.0
        %2167 = vmatprep.subr.mxu0 0.0
        %2168 = vmatpush2.msra.mxu0 0.0
        %2169 = vmatprep.subr.mxu0 0.0
        %2170 = vmatpush2.msra.mxu0 0.0
        %2171 = vmatprep.subr.mxu0 0.0
        %2172 = vmatpush2.msra.mxu0 0.0
        %2173 = vmatprep.subr.mxu0 0.0
        %2174 = vmatpush2.msra.mxu0 0.0
        %2175 = vmatprep.subr.mxu0 0.0
        %2176 = vmatpush2.msra.mxu0 0.0
        %2177 = vmatprep.subr.mxu0 0.0
        %2178 = vmatpush2.msra.mxu0 0.0
        %2179 = vmatprep.subr.mxu0 0.0
        %2180 = vmatpush2.msra.mxu0 0.0
        %2181 = vmatprep.mubr.f32.mxu0 0.0
        %2182 = vmatmul.mubr.f32.gmra.mxu0 %v2100
        %v2183 = vpop.f32.mrf.mxu0
        %v2184 = vadd.f32 0.0, %v2183
        %v2185 = vpop.f32.mrf.mxu0
        %2186 = vmatprep.mubr.f32.mxu0 0.0
        %2187 = vmatmul.mubr.f32.gmra.mxu0 %v2103
        %v2188 = vpop.f32.mrf.mxu0
        %v2189 = vadd.f32 0.0, %v2188
        %v2190 = vpop.f32.mrf.mxu0
        %2191 = vmatprep.mubr.f32.mxu0 0.0
        %2192 = vmatmul.mubr.f32.gmra.mxu0 %v2106
        %v2193 = vpop.f32.mrf.mxu0
        %v2194 = vadd.f32 0.0, %v2193
        %v2195 = vpop.f32.mrf.mxu0
        %2196 = vmatprep.mubr.f32.mxu0 0.0
        %2197 = vmatmul.mubr.f32.gmra.mxu0 %v2109
        %v2198 = vpop.f32.mrf.mxu0
        %v2199 = vadd.f32 0.0, %v2198
        %v2200 = vpop.f32.mrf.mxu0
        %2201 = vmatprep.mubr.f32.mxu0 0.0
        %2202 = vmatmul.mubr.f32.gmra.mxu0 %v2112
        %v2203 = vpop.f32.mrf.mxu0
        %v2204 = vadd.f32 0.0, %v2203
        %v2205 = vpop.f32.mrf.mxu0
        %2206 = vdwg.mxu0
        %2207 = vxpose.xlu0.b32.start [1/16] %v2075, 128
        %2208 = vxpose.xlu0.b32.cont [2/16] %v2076, 128
        %2209 = vxpose.xlu0.b32.cont [3/16] %v2077, 128
        %2210 = vxpose.xlu0.b32.cont [4/16] %v2078, 128
        %2211 = vxpose.xlu0.b32.cont [5/16] %v2079, 128
        %2212 = vxpose.xlu0.b32.cont [6/16] 0.0, 128
        %2213 = vxpose.xlu0.b32.cont [7/16] 0.0, 128
        %2214 = vxpose.xlu0.b32.cont [8/16] 0.0, 128
        %2215 = vxpose.xlu0.b32.cont [9/16] 0.0, 128
        %2216 = vxpose.xlu0.b32.cont [10/16] 0.0, 128
        %2217 = vxpose.xlu0.b32.cont [11/16] 0.0, 128
        %2218 = vxpose.xlu0.b32.cont [12/16] 0.0, 128
        %2219 = vxpose.xlu0.b32.cont [13/16] 0.0, 128
        %2220 = vxpose.xlu0.b32.cont [14/16] 0.0, 128
        %2221 = vxpose.xlu0.b32.cont [15/16] 0.0, 128
        %2222 = vxpose.xlu0.b32.end [16/16] 0.0, 128
        %v2223 = vpop.trf.xlu0
        %v2224 = vpop.trf.xlu0
        %v2225 = vpop.trf.xlu0
        %v2226 = vpop.trf.xlu0
        %v2227 = vpop.trf.xlu0
        %v2228 = vpop.trf.xlu0
        %v2229 = vpop.trf.xlu0
        %v2230 = vpop.trf.xlu0
        %v2231 = vpop.trf.xlu0
        %v2232 = vpop.trf.xlu0
        %v2233 = vpop.trf.xlu0
        %v2234 = vpop.trf.xlu0
        %v2235 = vpop.trf.xlu0
        %v2236 = vpop.trf.xlu0
        %v2237 = vpop.trf.xlu0
        %v2238 = vpop.trf.xlu0
        %v2240 = vsel %vm2023, %v2223, 0
        %v2243 = vsel %vm2023, %v2224, 0
        %v2246 = vsel %vm2023, %v2225, 0
        %v2249 = vsel %vm2023, %v2226, 0
        %v2252 = vsel %vm2023, %v2227, 0
        %2254 = vmatprep.subr.mxu0 0.0
        %2255 = vmatpush1.msra.mxu0 0.0
        %2256 = vmatprep.subr.mxu0 0.0
        %2257 = vmatpush1.msra.mxu0 0.0
        %2258 = vmatprep.subr.mxu0 0.0
        %2259 = vmatpush1.msra.mxu0 0.0
        %2260 = vmatprep.subr.mxu0 0.0
        %2261 = vmatpush1.msra.mxu0 0.0
        %2262 = vmatprep.subr.mxu0 0.0
        %2263 = vmatpush1.msra.mxu0 0.0
        %2264 = vmatprep.subr.mxu0 0.0
        %2265 = vmatpush1.msra.mxu0 0.0
        %2266 = vmatprep.subr.mxu0 0.0
        %2267 = vmatpush1.msra.mxu0 0.0
        %2268 = vmatprep.subr.mxu0 0.0
        %2269 = vmatpush1.msra.mxu0 0.0
        %2270 = vmatprep.subr.mxu0 0.0
        %2271 = vmatpush1.msra.mxu0 0.0
        %2272 = vmatprep.subr.mxu0 0.0
        %2273 = vmatpush1.msra.mxu0 0.0
        %2274 = vmatprep.subr.mxu0 0.0
        %2275 = vmatpush1.msra.mxu0 0.0
        %2276 = vmatprep.subr.mxu0 0.0
        %2277 = vmatpush1.msra.mxu0 %v2115
        %2278 = vmatprep.subr.mxu0 0.0
        %2279 = vmatpush1.msra.mxu0 %v2092
        %2280 = vmatprep.subr.mxu0 0.0
        %2281 = vmatpush1.msra.mxu0 %v2090
        %2282 = vmatprep.subr.mxu0 0.0
        %2283 = vmatpush1.msra.mxu0 %v2088
        %2284 = vmatprep.subr.mxu0 0.0
        %2285 = vmatpush1.msra.mxu0 %v2086
        %2286 = vmatprep.subr.mxu0 0.0
        %2287 = vmatpush2.msra.mxu0 0.0
        %2288 = vmatprep.subr.mxu0 0.0
        %2289 = vmatpush2.msra.mxu0 0.0
        %2290 = vmatprep.subr.mxu0 0.0
        %2291 = vmatpush2.msra.mxu0 0.0
        %2292 = vmatprep.subr.mxu0 0.0
        %2293 = vmatpush2.msra.mxu0 0.0
        %2294 = vmatprep.subr.mxu0 0.0
        %2295 = vmatpush2.msra.mxu0 0.0
        %2296 = vmatprep.subr.mxu0 0.0
        %2297 = vmatpush2.msra.mxu0 0.0
        %2298 = vmatprep.subr.mxu0 0.0
        %2299 = vmatpush2.msra.mxu0 0.0
        %2300 = vmatprep.subr.mxu0 0.0
        %2301 = vmatpush2.msra.mxu0 0.0
        %2302 = vmatprep.subr.mxu0 0.0
        %2303 = vmatpush2.msra.mxu0 0.0
        %2304 = vmatprep.subr.mxu0 0.0
        %2305 = vmatpush2.msra.mxu0 0.0
        %2306 = vmatprep.subr.mxu0 0.0
        %2307 = vmatpush2.msra.mxu0 0.0
        %2308 = vmatprep.subr.mxu0 0.0
        %2309 = vmatpush2.msra.mxu0 0.0
        %2310 = vmatprep.subr.mxu0 0.0
        %2311 = vmatpush2.msra.mxu0 0.0
        %2312 = vmatprep.subr.mxu0 0.0
        %2313 = vmatpush2.msra.mxu0 0.0
        %2314 = vmatprep.subr.mxu0 0.0
        %2315 = vmatpush2.msra.mxu0 0.0
        %2316 = vmatprep.subr.mxu0 0.0
        %2317 = vmatpush2.msra.mxu0 0.0
        %2318 = vmatprep.mubr.f32.mxu0 0.0
        %2319 = vmatmul.mubr.f32.gmra.mxu0 %v2240
        %v2320 = vpop.f32.mrf.mxu0
        %v2321 = vadd.f32 0.0, %v2320
        %v2322 = vpop.f32.mrf.mxu0
        %2323 = vmatprep.mubr.f32.mxu0 0.0
        %2324 = vmatmul.mubr.f32.gmra.mxu0 %v2243
        %v2325 = vpop.f32.mrf.mxu0
        %v2326 = vadd.f32 0.0, %v2325
        %v2327 = vpop.f32.mrf.mxu0
        %2328 = vmatprep.mubr.f32.mxu0 0.0
        %2329 = vmatmul.mubr.f32.gmra.mxu0 %v2246
        %v2330 = vpop.f32.mrf.mxu0
        %v2331 = vadd.f32 0.0, %v2330
        %v2332 = vpop.f32.mrf.mxu0
        %2333 = vmatprep.mubr.f32.mxu0 0.0
        %2334 = vmatmul.mubr.f32.gmra.mxu0 %v2249
        %v2335 = vpop.f32.mrf.mxu0
        %v2336 = vadd.f32 0.0, %v2335
        %v2337 = vpop.f32.mrf.mxu0
        %2338 = vmatprep.mubr.f32.mxu0 0.0
        %2339 = vmatmul.mubr.f32.gmra.mxu0 %v2252
        %v2340 = vpop.f32.mrf.mxu0
        %v2341 = vadd.f32 0.0, %v2340
        %v2342 = vpop.f32.mrf.mxu0
        %2343 = vdwg.mxu0
        %v2349 = vrot.slane %v2321, 5
        %v2350 = vrot.slane %v2326, 5
        %v2351 = vsel %vm2114, %v2349, %v2350
        %v2352 = vrot.slane %v2331, 5
        %v2353 = vsel %vm2114, %v2350, %v2352
        %v2354 = vrot.slane %v2336, 5
        %v2355 = vsel %vm2114, %v2352, %v2354
        %v2356 = vrot.slane %v2341, 5
        %v2357 = vsel %vm2114, %v2354, %v2356
        %v2359 = vsel %vm2114, %v2204, %v2349
        %v2360 = vld [vmem:[#allocation15] sm:$0xff]
        %v2361 = vld [vmem:[#allocation15 + $0x8] sm:$0xff]
        %v2362 = vld [vmem:[#allocation16] sm:$0x1]
        %v2364 = vlaneseq
        %v2365 = vshrl.u32 %v2364, 7
        %v2366 = vsub.s32 0, %v2365
        %v2367 = vrot.slane %v2362, %v2366
        %v2370 = vsel %vm1515, %v2184, 0
        %v2373 = vsel %vm1515, %v2189, 0
        %v2376 = vsel %vm1515, %v2194, 0
        %v2379 = vsel %vm1515, %v2199, 0
        %v2382 = vsel %vm1515, %v2359, 0
        %v2384 = vsel %vm1515, %v2351, 0
        %v2386 = vsel %vm1515, %v2353, 0
        %v2388 = vsel %vm1515, %v2355, 0
        %v2390 = vsel %vm1515, %v2357, 0
        %2392 = vmatprep.subr.mxu0 0.0
        %2393 = vmatpush1.msra.mxu0 0.0
        %2394 = vmatprep.subr.mxu0 0.0
        %2395 = vmatpush1.msra.mxu0 0.0
        %2396 = vmatprep.subr.mxu0 0.0
        %2397 = vmatpush1.msra.mxu0 0.0
        %2398 = vmatprep.subr.mxu0 0.0
        %2399 = vmatpush1.msra.mxu0 0.0
        %2400 = vmatprep.subr.mxu0 0.0
        %2401 = vmatpush1.msra.mxu0 0.0
        %2402 = vmatprep.subr.mxu0 0.0
        %2403 = vmatpush1.msra.mxu0 0.0
        %2404 = vmatprep.subr.mxu0 0.0
        %2405 = vmatpush1.msra.mxu0 0.0
        %2406 = vmatprep.subr.mxu0 0.0
        %2407 = vmatpush1.msra.mxu0 0.0
        %2408 = vmatprep.subr.mxu0 0.0
        %2409 = vmatpush1.msra.mxu0 0.0
        %2410 = vmatprep.subr.mxu0 0.0
        %2411 = vmatpush1.msra.mxu0 0.0
        %2412 = vmatprep.subr.mxu0 0.0
        %2413 = vmatpush1.msra.mxu0 0.0
        %2414 = vmatprep.subr.mxu0 0.0
        %2415 = vmatpush1.msra.mxu0 0.0
        %2416 = vmatprep.subr.mxu0 0.0
        %2417 = vmatpush1.msra.mxu0 0.0
        %2418 = vmatprep.subr.mxu0 0.0
        %2419 = vmatpush1.msra.mxu0 0.0
        %2420 = vmatprep.subr.mxu0 0.0
        %2421 = vmatpush1.msra.mxu0 %v2361
        %2422 = vmatprep.subr.mxu0 0.0
        %2423 = vmatpush1.msra.mxu0 %v2360
        %2424 = vmatprep.subr.mxu0 0.0
        %2425 = vmatpush2.msra.mxu0 0.0
        %2426 = vmatprep.subr.mxu0 0.0
        %2427 = vmatpush2.msra.mxu0 0.0
        %2428 = vmatprep.subr.mxu0 0.0
        %2429 = vmatpush2.msra.mxu0 0.0
        %2430 = vmatprep.subr.mxu0 0.0
        %2431 = vmatpush2.msra.mxu0 0.0
        %2432 = vmatprep.subr.mxu0 0.0
        %2433 = vmatpush2.msra.mxu0 0.0
        %2434 = vmatprep.subr.mxu0 0.0
        %2435 = vmatpush2.msra.mxu0 0.0
        %2436 = vmatprep.subr.mxu0 0.0
        %2437 = vmatpush2.msra.mxu0 0.0
        %2438 = vmatprep.subr.mxu0 0.0
        %2439 = vmatpush2.msra.mxu0 0.0
        %2440 = vmatprep.subr.mxu0 0.0
        %2441 = vmatpush2.msra.mxu0 0.0
        %2442 = vmatprep.subr.mxu0 0.0
        %2443 = vmatpush2.msra.mxu0 0.0
        %2444 = vmatprep.subr.mxu0 0.0
        %2445 = vmatpush2.msra.mxu0 0.0
        %2446 = vmatprep.subr.mxu0 0.0
        %2447 = vmatpush2.msra.mxu0 0.0
        %2448 = vmatprep.subr.mxu0 0.0
        %2449 = vmatpush2.msra.mxu0 0.0
        %2450 = vmatprep.subr.mxu0 0.0
        %2451 = vmatpush2.msra.mxu0 0.0
        %2452 = vmatprep.subr.mxu0 0.0
        %2453 = vmatpush2.msra.mxu0 0.0
        %2454 = vmatprep.subr.mxu0 0.0
        %2455 = vmatpush2.msra.mxu0 0.0
        %2456 = vmatprep.mubr.f32.mxu0 0.0
        %2457 = vmatmul.mubr.f32.gmra.mxu0 %v2370
        %v2458 = vpop.f32.mrf.mxu0
        %v2459 = vadd.f32 %v2367, %v2458
        %v2460 = vpop.f32.mrf.mxu0
        %2461 = vmatprep.mubr.f32.mxu0 0.0
        %2462 = vmatmul.mubr.f32.gmra.mxu0 %v2373
        %v2463 = vpop.f32.mrf.mxu0
        %v2464 = vadd.f32 %v2367, %v2463
        %v2465 = vpop.f32.mrf.mxu0
        %2466 = vmatprep.mubr.f32.mxu0 0.0
        %2467 = vmatmul.mubr.f32.gmra.mxu0 %v2376
        %v2468 = vpop.f32.mrf.mxu0
        %v2469 = vadd.f32 %v2367, %v2468
        %v2470 = vpop.f32.mrf.mxu0
        %2471 = vmatprep.mubr.f32.mxu0 0.0
        %2472 = vmatmul.mubr.f32.gmra.mxu0 %v2379
        %v2473 = vpop.f32.mrf.mxu0
        %v2474 = vadd.f32 %v2367, %v2473
        %v2475 = vpop.f32.mrf.mxu0
        %2476 = vmatprep.mubr.f32.mxu0 0.0
        %2477 = vmatmul.mubr.f32.gmra.mxu0 %v2382
        %v2478 = vpop.f32.mrf.mxu0
        %v2479 = vadd.f32 %v2367, %v2478
        %v2480 = vpop.f32.mrf.mxu0
        %2481 = vmatprep.mubr.f32.mxu0 0.0
        %2482 = vmatmul.mubr.f32.gmra.mxu0 %v2384
        %v2483 = vpop.f32.mrf.mxu0
        %v2484 = vadd.f32 %v2367, %v2483
        %v2485 = vpop.f32.mrf.mxu0
        %2486 = vmatprep.mubr.f32.mxu0 0.0
        %2487 = vmatmul.mubr.f32.gmra.mxu0 %v2386
        %v2488 = vpop.f32.mrf.mxu0
        %v2489 = vadd.f32 %v2367, %v2488
        %v2490 = vpop.f32.mrf.mxu0
        %2491 = vmatprep.mubr.f32.mxu0 0.0
        %2492 = vmatmul.mubr.f32.gmra.mxu0 %v2388
        %v2493 = vpop.f32.mrf.mxu0
        %v2494 = vadd.f32 %v2367, %v2493
        %v2495 = vpop.f32.mrf.mxu0
        %2496 = vmatprep.mubr.f32.mxu0 0.0
        %2497 = vmatmul.mubr.f32.gmra.mxu0 %v2390
        %v2498 = vpop.f32.mrf.mxu0
        %v2499 = vadd.f32 %v2367, %v2498
        %v2500 = vpop.f32.mrf.mxu0
        %2501 = vdwg.mxu0
        %2511 = vrot.lane.b32.xlu0 %v1875, 80
        %v2512 = vpop.permute.xlu0 %2511
        %2513 = vrot.lane.b32.xlu0 %v1876, 80
        %v2514 = vpop.permute.xlu0 %2513
        %2515 = vrot.lane.b32.xlu0 %v1877, 80
        %v2516 = vpop.permute.xlu0 %2515
        %2517 = vrot.lane.b32.xlu0 %v1878, 80
        %v2518 = vpop.permute.xlu0 %2517
        %2519 = vrot.lane.b32.xlu0 %v1879, 80
        %v2520 = vpop.permute.xlu0 %2519
        %2521 = vrot.lane.b32.xlu0 %v1880, 80
        %v2522 = vpop.permute.xlu0 %2521
        %2523 = vrot.lane.b32.xlu0 %v1881, 80
        %v2524 = vpop.permute.xlu0 %2523
        %2525 = vrot.lane.b32.xlu0 %v1882, 80
        %v2526 = vpop.permute.xlu0 %2525
        %2527 = vrot.lane.b32.xlu0 %v1883, 80
        %v2528 = vpop.permute.xlu0 %2527
        %v2538 = vadd.f32 %v2459, %v2512
        %v2539 = vadd.f32 %v2464, %v2514
        %v2540 = vadd.f32 %v2469, %v2516
        %v2541 = vadd.f32 %v2474, %v2518
        %v2542 = vadd.f32 %v2479, %v2520
        %v2543 = vadd.f32 %v2484, %v2522
        %v2544 = vadd.f32 %v2489, %v2524
        %v2545 = vadd.f32 %v2494, %v2526
        %v2546 = vadd.f32 %v2499, %v2528
        %v2547 = vld [vmem:[#allocation18] sm:$0xff]
        %v2548 = vld [vmem:[#allocation18 + $0x8] sm:$0xff]
        %v2550 = vsel %vm1515, %v2538, 0
        %v2553 = vsel %vm1515, %v2539, 0
        %v2556 = vsel %vm1515, %v2540, 0
        %v2559 = vsel %vm1515, %v2541, 0
        %v2562 = vsel %vm1515, %v2542, 0
        %v2565 = vsel %vm1515, %v2543, 0
        %v2568 = vsel %vm1515, %v2544, 0
        %v2571 = vsel %vm1515, %v2545, 0
        %v2574 = vsel %vm1515, %v2546, 0
        %2576 = vmatprep.subr.mxu0 0.0
        %2577 = vmatpush1.msra.mxu0 0.0
        %2578 = vmatprep.subr.mxu0 0.0
        %2579 = vmatpush1.msra.mxu0 0.0
        %2580 = vmatprep.subr.mxu0 0.0
        %2581 = vmatpush1.msra.mxu0 0.0
        %2582 = vmatprep.subr.mxu0 0.0
        %2583 = vmatpush1.msra.mxu0 0.0
        %2584 = vmatprep.subr.mxu0 0.0
        %2585 = vmatpush1.msra.mxu0 0.0
        %2586 = vmatprep.subr.mxu0 0.0
        %2587 = vmatpush1.msra.mxu0 0.0
        %2588 = vmatprep.subr.mxu0 0.0
        %2589 = vmatpush1.msra.mxu0 0.0
        %2590 = vmatprep.subr.mxu0 0.0
        %2591 = vmatpush1.msra.mxu0 0.0
        %2592 = vmatprep.subr.mxu0 0.0
        %2593 = vmatpush1.msra.mxu0 0.0
        %2594 = vmatprep.subr.mxu0 0.0
        %2595 = vmatpush1.msra.mxu0 0.0
        %2596 = vmatprep.subr.mxu0 0.0
        %2597 = vmatpush1.msra.mxu0 0.0
        %2598 = vmatprep.subr.mxu0 0.0
        %2599 = vmatpush1.msra.mxu0 0.0
        %2600 = vmatprep.subr.mxu0 0.0
        %2601 = vmatpush1.msra.mxu0 0.0
        %2602 = vmatprep.subr.mxu0 0.0
        %2603 = vmatpush1.msra.mxu0 0.0
        %2604 = vmatprep.subr.mxu0 0.0
        %2605 = vmatpush1.msra.mxu0 %v2548
        %2606 = vmatprep.subr.mxu0 0.0
        %2607 = vmatpush1.msra.mxu0 %v2547
        %2608 = vmatprep.subr.mxu0 0.0
        %2609 = vmatpush2.msra.mxu0 0.0
        %2610 = vmatprep.subr.mxu0 0.0
        %2611 = vmatpush2.msra.mxu0 0.0
        %2612 = vmatprep.subr.mxu0 0.0
        %2613 = vmatpush2.msra.mxu0 0.0
        %2614 = vmatprep.subr.mxu0 0.0
        %2615 = vmatpush2.msra.mxu0 0.0
        %2616 = vmatprep.subr.mxu0 0.0
        %2617 = vmatpush2.msra.mxu0 0.0
        %2618 = vmatprep.subr.mxu0 0.0
        %2619 = vmatpush2.msra.mxu0 0.0
        %2620 = vmatprep.subr.mxu0 0.0
        %2621 = vmatpush2.msra.mxu0 0.0
        %2622 = vmatprep.subr.mxu0 0.0
        %2623 = vmatpush2.msra.mxu0 0.0
        %2624 = vmatprep.subr.mxu0 0.0
        %2625 = vmatpush2.msra.mxu0 0.0
        %2626 = vmatprep.subr.mxu0 0.0
        %2627 = vmatpush2.msra.mxu0 0.0
        %2628 = vmatprep.subr.mxu0 0.0
        %2629 = vmatpush2.msra.mxu0 0.0
        %2630 = vmatprep.subr.mxu0 0.0
        %2631 = vmatpush2.msra.mxu0 0.0
        %2632 = vmatprep.subr.mxu0 0.0
        %2633 = vmatpush2.msra.mxu0 0.0
        %2634 = vmatprep.subr.mxu0 0.0
        %2635 = vmatpush2.msra.mxu0 0.0
        %2636 = vmatprep.subr.mxu0 0.0
        %2637 = vmatpush2.msra.mxu0 0.0
        %2638 = vmatprep.subr.mxu0 0.0
        %2639 = vmatpush2.msra.mxu0 0.0
        %2640 = vmatprep.mubr.f32.mxu0 0.0
        %2641 = vmatmul.mubr.f32.gmra.mxu0 %v2550
        %v2642 = vpop.f32.mrf.mxu0
        %v2643 = vadd.f32 0.0, %v2642
        %v2644 = vpop.f32.mrf.mxu0
        %2645 = vmatprep.mubr.f32.mxu0 0.0
        %2646 = vmatmul.mubr.f32.gmra.mxu0 %v2553
        %v2647 = vpop.f32.mrf.mxu0
        %v2648 = vadd.f32 0.0, %v2647
        %v2649 = vpop.f32.mrf.mxu0
        %2650 = vmatprep.mubr.f32.mxu0 0.0
        %2651 = vmatmul.mubr.f32.gmra.mxu0 %v2556
        %v2652 = vpop.f32.mrf.mxu0
        %v2653 = vadd.f32 0.0, %v2652
        %v2654 = vpop.f32.mrf.mxu0
        %2655 = vmatprep.mubr.f32.mxu0 0.0
        %2656 = vmatmul.mubr.f32.gmra.mxu0 %v2559
        %v2657 = vpop.f32.mrf.mxu0
        %v2658 = vadd.f32 0.0, %v2657
        %v2659 = vpop.f32.mrf.mxu0
        %2660 = vmatprep.mubr.f32.mxu0 0.0
        %2661 = vmatmul.mubr.f32.gmra.mxu0 %v2562
        %v2662 = vpop.f32.mrf.mxu0
        %v2663 = vadd.f32 0.0, %v2662
        %v2664 = vpop.f32.mrf.mxu0
        %2665 = vmatprep.mubr.f32.mxu0 0.0
        %2666 = vmatmul.mubr.f32.gmra.mxu0 %v2565
        %v2667 = vpop.f32.mrf.mxu0
        %v2668 = vadd.f32 0.0, %v2667
        %v2669 = vpop.f32.mrf.mxu0
        %2670 = vmatprep.mubr.f32.mxu0 0.0
        %2671 = vmatmul.mubr.f32.gmra.mxu0 %v2568
        %v2672 = vpop.f32.mrf.mxu0
        %v2673 = vadd.f32 0.0, %v2672
        %v2674 = vpop.f32.mrf.mxu0
        %2675 = vmatprep.mubr.f32.mxu0 0.0
        %2676 = vmatmul.mubr.f32.gmra.mxu0 %v2571
        %v2677 = vpop.f32.mrf.mxu0
        %v2678 = vadd.f32 0.0, %v2677
        %v2679 = vpop.f32.mrf.mxu0
        %2680 = vmatprep.mubr.f32.mxu0 0.0
        %2681 = vmatmul.mubr.f32.gmra.mxu0 %v2574
        %v2682 = vpop.f32.mrf.mxu0
        %v2683 = vadd.f32 0.0, %v2682
        %v2684 = vpop.f32.mrf.mxu0
        %2685 = vdwg.mxu0
        %v2691 = vrot.slane %v2663, 3
        %v2692 = vrot.slane %v2668, 3
        %v2693 = vsel %vm1832, %v2691, %v2692
        %v2694 = vrot.slane %v2673, 3
        %v2695 = vsel %vm1832, %v2692, %v2694
        %v2696 = vrot.slane %v2678, 3
        %v2697 = vsel %vm1832, %v2694, %v2696
        %v2698 = vrot.slane %v2683, 3
        %v2699 = vsel %vm1832, %v2696, %v2698
        %2700 = vrot.lane.b32.xlu0 %v2693, 96
        %v2701 = vpop.permute.xlu0 %2700
        %2702 = vrot.lane.b32.xlu0 %v2695, 96
        %v2703 = vpop.permute.xlu0 %2702
        %2704 = vrot.lane.b32.xlu0 %v2697, 96
        %v2705 = vpop.permute.xlu0 %2704
        %2706 = vrot.lane.b32.xlu0 %v2699, 96
        %v2707 = vpop.permute.xlu0 %2706
        %2708 = vrot.lane.b32.xlu0 %v2698, 96
        %v2709 = vpop.permute.xlu0 %2708
        %v2715 = vadd.f32 %v2643, %v2701
        %v2716 = vadd.f32 %v2648, %v2703
        %v2717 = vadd.f32 %v2653, %v2705
        %v2718 = vadd.f32 %v2658, %v2707
        %v2719 = vadd.f32 %v2663, %v2709
        %v2720 = vld [vmem:[#allocation19] sm:$0x1]
        %v2722 = vlaneseq
        %v2723 = vshrl.u32 %v2722, 7
        %v2724 = vsub.s32 0, %v2723
        %v2725 = vrot.slane %v2720, %v2724
        %v2727 = vadd.f32 %v2715, %v2725
        %v2728 = vadd.f32 %v2716, %v2725
        %v2729 = vadd.f32 %v2717, %v2725
        %v2730 = vadd.f32 %v2718, %v2725
        %v2731 = vadd.f32 %v2719, %v2725
        %v2732 = vmul.f32 %v2727, %v2727
        %v2733 = vmul.f32 %v2728, %v2728
        %v2734 = vmul.f32 %v2729, %v2729
        %v2735 = vmul.f32 %v2730, %v2730
        %v2736 = vmul.f32 %v2731, %v2731
        %vm2737 = vcmask 261120
        %v2738 = vsel %vm2737, %v2732, 0.0
        %2739 = vadd.xlane.f32.xlu0 %v2738
        %v2740 = vpop.xlane.xlu0 %2739
        %v2741 = vsel %vm2737, %v2733, 0.0
        %2742 = vadd.xlane.f32.xlu0 %v2741
        %v2743 = vpop.xlane.xlu0 %2742
        %v2744 = vsel %vm2737, %v2734, 0.0
        %2745 = vadd.xlane.f32.xlu0 %v2744
        %v2746 = vpop.xlane.xlu0 %2745
        %v2747 = vsel %vm2737, %v2735, 0.0
        %2748 = vadd.xlane.f32.xlu0 %v2747
        %v2749 = vpop.xlane.xlu0 %2748
        %vm2750 = vcmask 256000
        %v2751 = vsel %vm2750, %v2736, 0.0
        %2752 = vadd.xlane.f32.xlu0 %v2751
        %v2753 = vpop.xlane.xlu0 %2752
        %v2754 = vmax.f32 %v2740, 1e-24
        %v2755 = vmax.f32 %v2743, 1e-24
        %v2756 = vmax.f32 %v2746, 1e-24
        %v2757 = vmax.f32 %v2749, 1e-24
        %v2758 = vmax.f32 %v2753, 1e-24
        %v2759 = vrsqrt.pop %v2754
        %v2760 = vrsqrt.pop %v2755
        %v2761 = vrsqrt.pop %v2756
        %v2762 = vrsqrt.pop %v2757
        %v2763 = vrsqrt.pop %v2758
        %v2764 = vmul.f32 %v2727, %v2759
        %v2765 = vmul.f32 %v2728, %v2760
        %v2766 = vmul.f32 %v2729, %v2761
        %v2767 = vmul.f32 %v2730, %v2762
        %v2768 = vmul.f32 %v2731, %v2763
        %v2769 = vld [vmem:[#allocation21] sm:$0xff]
        %v2770 = vld [vmem:[#allocation21 + $0x8] sm:$0xff]
        %v2771 = vld [vmem:[#allocation21 + $0x10] sm:$0xff]
        %v2772 = vld [vmem:[#allocation21 + $0x18] sm:$0xff]
        %v2774 = vsel %vm2737, %v2764, 0
        %v2777 = vsel %vm2737, %v2765, 0
        %v2780 = vsel %vm2737, %v2766, 0
        %v2783 = vsel %vm2737, %v2767, 0
        %v2786 = vsel %vm2737, %v2768, 0
        %2788 = vmatprep.subr.mxu0 0.0
        %2789 = vmatpush1.msra.mxu0 0.0
        %2790 = vmatprep.subr.mxu0 0.0
        %2791 = vmatpush1.msra.mxu0 0.0
        %2792 = vmatprep.subr.mxu0 0.0
        %2793 = vmatpush1.msra.mxu0 0.0
        %2794 = vmatprep.subr.mxu0 0.0
        %2795 = vmatpush1.msra.mxu0 0.0
        %2796 = vmatprep.subr.mxu0 0.0
        %2797 = vmatpush1.msra.mxu0 0.0
        %2798 = vmatprep.subr.mxu0 0.0
        %2799 = vmatpush1.msra.mxu0 0.0
        %2800 = vmatprep.subr.mxu0 0.0
        %2801 = vmatpush1.msra.mxu0 0.0
        %2802 = vmatprep.subr.mxu0 0.0
        %2803 = vmatpush1.msra.mxu0 0.0
        %2804 = vmatprep.subr.mxu0 0.0
        %2805 = vmatpush1.msra.mxu0 0.0
        %2806 = vmatprep.subr.mxu0 0.0
        %2807 = vmatpush1.msra.mxu0 0.0
        %2808 = vmatprep.subr.mxu0 0.0
        %2809 = vmatpush1.msra.mxu0 0.0
        %2810 = vmatprep.subr.mxu0 0.0
        %2811 = vmatpush1.msra.mxu0 0.0
        %2812 = vmatprep.subr.mxu0 0.0
        %2813 = vmatpush1.msra.mxu0 %v2772
        %2814 = vmatprep.subr.mxu0 0.0
        %2815 = vmatpush1.msra.mxu0 %v2771
        %2816 = vmatprep.subr.mxu0 0.0
        %2817 = vmatpush1.msra.mxu0 %v2770
        %2818 = vmatprep.subr.mxu0 0.0
        %2819 = vmatpush1.msra.mxu0 %v2769
        %2820 = vmatprep.subr.mxu0 0.0
        %2821 = vmatpush2.msra.mxu0 0.0
        %2822 = vmatprep.subr.mxu0 0.0
        %2823 = vmatpush2.msra.mxu0 0.0
        %2824 = vmatprep.subr.mxu0 0.0
        %2825 = vmatpush2.msra.mxu0 0.0
        %2826 = vmatprep.subr.mxu0 0.0
        %2827 = vmatpush2.msra.mxu0 0.0
        %2828 = vmatprep.subr.mxu0 0.0
        %2829 = vmatpush2.msra.mxu0 0.0
        %2830 = vmatprep.subr.mxu0 0.0
        %2831 = vmatpush2.msra.mxu0 0.0
        %2832 = vmatprep.subr.mxu0 0.0
        %2833 = vmatpush2.msra.mxu0 0.0
        %2834 = vmatprep.subr.mxu0 0.0
        %2835 = vmatpush2.msra.mxu0 0.0
        %2836 = vmatprep.subr.mxu0 0.0
        %2837 = vmatpush2.msra.mxu0 0.0
        %2838 = vmatprep.subr.mxu0 0.0
        %2839 = vmatpush2.msra.mxu0 0.0
        %2840 = vmatprep.subr.mxu0 0.0
        %2841 = vmatpush2.msra.mxu0 0.0
        %2842 = vmatprep.subr.mxu0 0.0
        %2843 = vmatpush2.msra.mxu0 0.0
        %2844 = vmatprep.subr.mxu0 0.0
        %2845 = vmatpush2.msra.mxu0 0.0
        %2846 = vmatprep.subr.mxu0 0.0
        %2847 = vmatpush2.msra.mxu0 0.0
        %2848 = vmatprep.subr.mxu0 0.0
        %2849 = vmatpush2.msra.mxu0 0.0
        %2850 = vmatprep.subr.mxu0 0.0
        %2851 = vmatpush2.msra.mxu0 0.0
        %2852 = vmatprep.mubr.f32.mxu0 0.0
        %2853 = vmatmul.mubr.f32.gmra.mxu0 %v2774
        %v2854 = vpop.f32.mrf.mxu0
        %v2855 = vadd.f32 0.0, %v2854
        %v2856 = vpop.f32.mrf.mxu0
        %2857 = vmatprep.mubr.f32.mxu0 0.0
        %2858 = vmatmul.mubr.f32.gmra.mxu0 %v2777
        %v2859 = vpop.f32.mrf.mxu0
        %v2860 = vadd.f32 0.0, %v2859
        %v2861 = vpop.f32.mrf.mxu0
        %2862 = vmatprep.mubr.f32.mxu0 0.0
        %2863 = vmatmul.mubr.f32.gmra.mxu0 %v2780
        %v2864 = vpop.f32.mrf.mxu0
        %v2865 = vadd.f32 0.0, %v2864
        %v2866 = vpop.f32.mrf.mxu0
        %2867 = vmatprep.mubr.f32.mxu0 0.0
        %2868 = vmatmul.mubr.f32.gmra.mxu0 %v2783
        %v2869 = vpop.f32.mrf.mxu0
        %v2870 = vadd.f32 0.0, %v2869
        %v2871 = vpop.f32.mrf.mxu0
        %2872 = vmatprep.mubr.f32.mxu0 0.0
        %2873 = vmatmul.mubr.f32.gmra.mxu0 %v2786
        %v2874 = vpop.f32.mrf.mxu0
        %v2875 = vadd.f32 0.0, %v2874
        %v2876 = vpop.f32.mrf.mxu0
        %2877 = vdwg.mxu0
        %v2878 = vlaneseq
        %v2879 = vand.u32 %v2878, 127
        %vm2880 = vcmask 572416
        %v2881 = vsel %vm2880, %v2855, -inf
        %2882 = vmax.xlane.f32.xlu0 %v2881
        %v2883 = vpop.xlane.xlu0 %2882
        %v2884 = vsel %vm2880, %v2860, -inf
        %2885 = vmax.xlane.f32.xlu0 %v2884
        %v2886 = vpop.xlane.xlu0 %2885
        %v2887 = vsel %vm2880, %v2865, -inf
        %2888 = vmax.xlane.f32.xlu0 %v2887
        %v2889 = vpop.xlane.xlu0 %2888
        %v2890 = vsel %vm2880, %v2870, -inf
        %2891 = vmax.xlane.f32.xlu0 %v2890
        %v2892 = vpop.xlane.xlu0 %2891
        %vm2893 = vcmask 567296
        %v2894 = vsel %vm2893, %v2875, -inf
        %2895 = vmax.xlane.f32.xlu0 %v2894
        %v2896 = vpop.xlane.xlu0 %2895
        %vm2897 = vcmp.ge.f32.partialorder %v2855, %v2883
        %vm2898 = vcmp.ge.f32.partialorder %v2860, %v2886
        %vm2899 = vcmp.ge.f32.partialorder %v2865, %v2889
        %vm2900 = vcmp.ge.f32.partialorder %v2870, %v2892
        %vm2901 = vcmp.ge.f32.partialorder %v2875, %v2896
        %v2902 = vsel %vm2897, %v2879, 70
        %v2903 = vsel %vm2898, %v2879, 70
        %v2904 = vsel %vm2899, %v2879, 70
        %v2905 = vsel %vm2900, %v2879, 70
        %v2906 = vsel %vm2901, %v2879, 70
        %v2907 = vsel %vm2880, %v2902, 2147483647
        %v2908 = vand.u32 %v2907, 65535
        %v2909 = vshra.s32 %v2907, 16
        %v2910 = vcvt.s32.f32 %v2908
        %v2911 = vcvt.s32.f32 %v2909
        %2912 = vmin.xlane.f32.xlu0 %v2911
        %v2913 = vpop.xlane.xlu0 %2912
        %vm2914 = vcmp.eq.f32.partialorder %v2911, %v2913
        %v2915 = vsel %vm2914, %v2910, inf
        %2916 = vmin.xlane.f32.xlu0 %v2915
        %v2917 = vpop.xlane.xlu0 %2916
        %v2918 = vcvt.f32.s32 %v2917
        %v2919 = vcvt.f32.s32 %v2913
        %v2920 = vshll.u32 %v2919, 16
        %v2921 = vadd.s32 %v2920, %v2918
        %v2922 = vsel %vm2880, %v2903, 2147483647
        %v2923 = vand.u32 %v2922, 65535
        %v2924 = vshra.s32 %v2922, 16
        %v2925 = vcvt.s32.f32 %v2923
        %v2926 = vcvt.s32.f32 %v2924
        %2927 = vmin.xlane.f32.xlu0 %v2926
        %v2928 = vpop.xlane.xlu0 %2927
        %vm2929 = vcmp.eq.f32.partialorder %v2926, %v2928
        %v2930 = vsel %vm2929, %v2925, inf
        %2931 = vmin.xlane.f32.xlu0 %v2930
        %v2932 = vpop.xlane.xlu0 %2931
        %v2933 = vcvt.f32.s32 %v2932
        %v2934 = vcvt.f32.s32 %v2928
        %v2935 = vshll.u32 %v2934, 16
        %v2936 = vadd.s32 %v2935, %v2933
        %v2937 = vsel %vm2880, %v2904, 2147483647
        %v2938 = vand.u32 %v2937, 65535
        %v2939 = vshra.s32 %v2937, 16
        %v2940 = vcvt.s32.f32 %v2938
        %v2941 = vcvt.s32.f32 %v2939
        %2942 = vmin.xlane.f32.xlu0 %v2941
        %v2943 = vpop.xlane.xlu0 %2942
        %vm2944 = vcmp.eq.f32.partialorder %v2941, %v2943
        %v2945 = vsel %vm2944, %v2940, inf
        %2946 = vmin.xlane.f32.xlu0 %v2945
        %v2947 = vpop.xlane.xlu0 %2946
        %v2948 = vcvt.f32.s32 %v2947
        %v2949 = vcvt.f32.s32 %v2943
        %v2950 = vshll.u32 %v2949, 16
        %v2951 = vadd.s32 %v2950, %v2948
        %v2952 = vsel %vm2880, %v2905, 2147483647
        %v2953 = vand.u32 %v2952, 65535
        %v2954 = vshra.s32 %v2952, 16
        %v2955 = vcvt.s32.f32 %v2953
        %v2956 = vcvt.s32.f32 %v2954
        %2957 = vmin.xlane.f32.xlu0 %v2956
        %v2958 = vpop.xlane.xlu0 %2957
        %vm2959 = vcmp.eq.f32.partialorder %v2956, %v2958
        %v2960 = vsel %vm2959, %v2955, inf
        %2961 = vmin.xlane.f32.xlu0 %v2960
        %v2962 = vpop.xlane.xlu0 %2961
        %v2963 = vcvt.f32.s32 %v2962
        %v2964 = vcvt.f32.s32 %v2958
        %v2965 = vshll.u32 %v2964, 16
        %v2966 = vadd.s32 %v2965, %v2963
        %v2967 = vsel %vm2893, %v2906, 2147483647
        %v2968 = vand.u32 %v2967, 65535
        %v2969 = vshra.s32 %v2967, 16
        %v2970 = vcvt.s32.f32 %v2968
        %v2971 = vcvt.s32.f32 %v2969
        %2972 = vmin.xlane.f32.xlu0 %v2971
        %v2973 = vpop.xlane.xlu0 %2972
        %vm2974 = vcmp.eq.f32.partialorder %v2971, %v2973
        %v2975 = vsel %vm2974, %v2970, inf
        %2976 = vmin.xlane.f32.xlu0 %v2975
        %v2977 = vpop.xlane.xlu0 %2976
        %v2978 = vcvt.f32.s32 %v2977
        %v2979 = vcvt.f32.s32 %v2973
        %v2980 = vshll.u32 %v2979, 16
        %v2981 = vadd.s32 %v2980, %v2978
        %vm2982 = vcmp.eq.s32.totalorder %v2879, %v2921
        %vm2983 = vcmp.eq.s32.totalorder %v2879, %v2936
        %vm2984 = vcmp.eq.s32.totalorder %v2879, %v2951
        %vm2985 = vcmp.eq.s32.totalorder %v2879, %v2966
        %vm2986 = vcmp.eq.s32.totalorder %v2879, %v2981
        %v2987 = vsel %vm2982, -1e+30, %v2855
        %v2988 = vsel %vm2983, -1e+30, %v2860
        %v2989 = vsel %vm2984, -1e+30, %v2865
        %v2990 = vsel %vm2985, -1e+30, %v2870
        %v2991 = vsel %vm2986, -1e+30, %v2875
        %v2992 = vsel %vm2880, %v2987, -inf
        %2993 = vmax.xlane.f32.xlu0 %v2992
        %v2994 = vpop.xlane.xlu0 %2993
        %v2995 = vsel %vm2880, %v2988, -inf
        %2996 = vmax.xlane.f32.xlu0 %v2995
        %v2997 = vpop.xlane.xlu0 %2996
        %v2998 = vsel %vm2880, %v2989, -inf
        %2999 = vmax.xlane.f32.xlu0 %v2998
        %v3000 = vpop.xlane.xlu0 %2999
        %v3001 = vsel %vm2880, %v2990, -inf
        %3002 = vmax.xlane.f32.xlu0 %v3001
        %v3003 = vpop.xlane.xlu0 %3002
        %v3004 = vsel %vm2893, %v2991, -inf
        %3005 = vmax.xlane.f32.xlu0 %v3004
        %v3006 = vpop.xlane.xlu0 %3005
        %vm3007 = vcmp.ge.f32.partialorder %v2987, %v2994
        %vm3008 = vcmp.ge.f32.partialorder %v2988, %v2997
        %vm3009 = vcmp.ge.f32.partialorder %v2989, %v3000
        %vm3010 = vcmp.ge.f32.partialorder %v2990, %v3003
        %vm3011 = vcmp.ge.f32.partialorder %v2991, %v3006
        %v3012 = vsel %vm3007, %v2879, 70
        %v3013 = vsel %vm3008, %v2879, 70
        %v3014 = vsel %vm3009, %v2879, 70
        %v3015 = vsel %vm3010, %v2879, 70
        %v3016 = vsel %vm3011, %v2879, 70
        %v3017 = vsel %vm2880, %v3012, 2147483647
        %v3018 = vand.u32 %v3017, 65535
        %v3019 = vshra.s32 %v3017, 16
        %v3020 = vcvt.s32.f32 %v3018
        %v3021 = vcvt.s32.f32 %v3019
        %3022 = vmin.xlane.f32.xlu0 %v3021
        %v3023 = vpop.xlane.xlu0 %3022
        %vm3024 = vcmp.eq.f32.partialorder %v3021, %v3023
        %v3025 = vsel %vm3024, %v3020, inf
        %3026 = vmin.xlane.f32.xlu0 %v3025
        %v3027 = vpop.xlane.xlu0 %3026
        %v3028 = vcvt.f32.s32 %v3027
        %v3029 = vcvt.f32.s32 %v3023
        %v3030 = vshll.u32 %v3029, 16
        %v3031 = vadd.s32 %v3030, %v3028
        %v3032 = vsel %vm2880, %v3013, 2147483647
        %v3033 = vand.u32 %v3032, 65535
        %v3034 = vshra.s32 %v3032, 16
        %v3035 = vcvt.s32.f32 %v3033
        %v3036 = vcvt.s32.f32 %v3034
        %3037 = vmin.xlane.f32.xlu0 %v3036
        %v3038 = vpop.xlane.xlu0 %3037
        %vm3039 = vcmp.eq.f32.partialorder %v3036, %v3038
        %v3040 = vsel %vm3039, %v3035, inf
        %3041 = vmin.xlane.f32.xlu0 %v3040
        %v3042 = vpop.xlane.xlu0 %3041
        %v3043 = vcvt.f32.s32 %v3042
        %v3044 = vcvt.f32.s32 %v3038
        %v3045 = vshll.u32 %v3044, 16
        %v3046 = vadd.s32 %v3045, %v3043
        %v3047 = vsel %vm2880, %v3014, 2147483647
        %v3048 = vand.u32 %v3047, 65535
        %v3049 = vshra.s32 %v3047, 16
        %v3050 = vcvt.s32.f32 %v3048
        %v3051 = vcvt.s32.f32 %v3049
        %3052 = vmin.xlane.f32.xlu0 %v3051
        %v3053 = vpop.xlane.xlu0 %3052
        %vm3054 = vcmp.eq.f32.partialorder %v3051, %v3053
        %v3055 = vsel %vm3054, %v3050, inf
        %3056 = vmin.xlane.f32.xlu0 %v3055
        %v3057 = vpop.xlane.xlu0 %3056
        %v3058 = vcvt.f32.s32 %v3057
        %v3059 = vcvt.f32.s32 %v3053
        %v3060 = vshll.u32 %v3059, 16
        %v3061 = vadd.s32 %v3060, %v3058
        %v3062 = vsel %vm2880, %v3015, 2147483647
        %v3063 = vand.u32 %v3062, 65535
        %v3064 = vshra.s32 %v3062, 16
        %v3065 = vcvt.s32.f32 %v3063
        %v3066 = vcvt.s32.f32 %v3064
        %3067 = vmin.xlane.f32.xlu0 %v3066
        %v3068 = vpop.xlane.xlu0 %3067
        %vm3069 = vcmp.eq.f32.partialorder %v3066, %v3068
        %v3070 = vsel %vm3069, %v3065, inf
        %3071 = vmin.xlane.f32.xlu0 %v3070
        %v3072 = vpop.xlane.xlu0 %3071
        %v3073 = vcvt.f32.s32 %v3072
        %v3074 = vcvt.f32.s32 %v3068
        %v3075 = vshll.u32 %v3074, 16
        %v3076 = vadd.s32 %v3075, %v3073
        %v3077 = vsel %vm2893, %v3016, 2147483647
        %v3078 = vand.u32 %v3077, 65535
        %v3079 = vshra.s32 %v3077, 16
        %v3080 = vcvt.s32.f32 %v3078
        %v3081 = vcvt.s32.f32 %v3079
        %3082 = vmin.xlane.f32.xlu0 %v3081
        %v3083 = vpop.xlane.xlu0 %3082
        %vm3084 = vcmp.eq.f32.partialorder %v3081, %v3083
        %v3085 = vsel %vm3084, %v3080, inf
        %3086 = vmin.xlane.f32.xlu0 %v3085
        %v3087 = vpop.xlane.xlu0 %3086
        %v3088 = vcvt.f32.s32 %v3087
        %v3089 = vcvt.f32.s32 %v3083
        %v3090 = vshll.u32 %v3089, 16
        %v3091 = vadd.s32 %v3090, %v3088
        %v3092 = vrot.slane %v2921, 5
        %v3093 = vrot.slane %v2936, 5
        %v3094 = vsel %vm2114, %v3092, %v3093
        %v3095 = vrot.slane %v2951, 5
        %v3096 = vsel %vm2114, %v3093, %v3095
        %v3097 = vrot.slane %v2966, 5
        %v3098 = vsel %vm2114, %v3095, %v3097
        %v3099 = vrot.slane %v2981, 5
        %v3100 = vsel %vm2114, %v3097, %v3099
        %v3101 = vsel %vm2114, %v2981, %v3092
        %v3102 = vrot.slane %v3031, 5
        %v3103 = vrot.slane %v3046, 5
        %v3104 = vsel %vm2114, %v3102, %v3103
        %v3105 = vrot.slane %v3061, 5
        %v3106 = vsel %vm2114, %v3103, %v3105
        %v3107 = vrot.slane %v3076, 5
        %v3108 = vsel %vm2114, %v3105, %v3107
        %v3109 = vrot.slane %v3091, 5
        %v3110 = vsel %vm2114, %v3107, %v3109
        %v3111 = vsel %vm2114, %v3091, %v3102
        %v3112 = vlaneseq
        %v3113 = vshrl.u32 %v3112, 7
        %v3114 = vsub.s32 0, %v3113
        %v3115 = vrot.slane %v1459, %v3114
        %v3116 = vlaneseq
        %v3117 = vshrl.u32 %v3116, 7
        %v3118 = vsub.s32 1, %v3117
        %v3119 = vrot.slane %v1459, %v3118
        %v3120 = vlaneseq
        %v3121 = vshrl.u32 %v3120, 7
        %v3122 = vsub.s32 2, %v3121
        %v3123 = vrot.slane %v1459, %v3122
        %v3124 = vlaneseq
        %v3125 = vshrl.u32 %v3124, 7
        %v3126 = vsub.s32 3, %v3125
        %v3127 = vrot.slane %v1459, %v3126
        %v3128 = vlaneseq
        %v3129 = vshrl.u32 %v3128, 7
        %v3130 = vsub.s32 4, %v3129
        %v3131 = vrot.slane %v1459, %v3130
        %v3132 = vlaneseq
        %v3133 = vshrl.u32 %v3132, 7
        %v3134 = vsub.s32 5, %v3133
        %v3135 = vrot.slane %v1459, %v3134
        %v3136 = vlaneseq
        %v3137 = vshrl.u32 %v3136, 7
        %v3138 = vsub.s32 6, %v3137
        %v3139 = vrot.slane %v1459, %v3138
        %v3140 = vlaneseq
        %v3141 = vshrl.u32 %v3140, 7
        %v3142 = vsub.s32 7, %v3141
        %v3143 = vrot.slane %v1459, %v3142
        %v3144 = vlaneseq
        %v3145 = vshrl.u32 %v3144, 7
        %v3146 = vsub.s32 0, %v3145
        %v3147 = vrot.slane %v1460, %v3146
        %3148 = vset.pattern.permute.xlu0 0
        %3149 = vperm.xlu0 %3148, %v2921
        %v3150 = vpop.permute.xlu0 %3149
        %3151 = vset.pattern.permute.xlu0 0
        %3152 = vperm.xlu0 %3151, %v2936
        %v3153 = vpop.permute.xlu0 %3152
        %3154 = vset.pattern.permute.xlu0 0
        %3155 = vperm.xlu0 %3154, %v2951
        %v3156 = vpop.permute.xlu0 %3155
        %3157 = vset.pattern.permute.xlu0 0
        %3158 = vperm.xlu0 %3157, %v2966
        %v3159 = vpop.permute.xlu0 %3158
        %3160 = vset.pattern.permute.xlu0 0
        %3161 = vperm.xlu0 %3160, %v3101
        %v3162 = vpop.permute.xlu0 %3161
        %3163 = vset.pattern.permute.xlu0 0
        %3164 = vperm.xlu0 %3163, %v3094
        %v3165 = vpop.permute.xlu0 %3164
        %3166 = vset.pattern.permute.xlu0 0
        %3167 = vperm.xlu0 %3166, %v3096
        %v3168 = vpop.permute.xlu0 %3167
        %3169 = vset.pattern.permute.xlu0 0
        %3170 = vperm.xlu0 %3169, %v3098
        %v3171 = vpop.permute.xlu0 %3170
        %3172 = vset.pattern.permute.xlu0 0
        %3173 = vperm.xlu0 %3172, %v3100
        %v3174 = vpop.permute.xlu0 %3173
        %vm3175 = vcmp.eq.s32.totalorder %v3115, %v3150
        %vm3176 = vcmp.eq.s32.totalorder %v3119, %v3150
        %vm3177 = vcmp.eq.s32.totalorder %v3123, %v3150
        %vm3178 = vcmp.eq.s32.totalorder %v3127, %v3150
        %vm3179 = vcmp.eq.s32.totalorder %v3131, %v3150
        %vm3180 = vcmp.eq.s32.totalorder %v3135, %v3150
        %vm3181 = vcmp.eq.s32.totalorder %v3139, %v3150
        %vm3182 = vcmp.eq.s32.totalorder %v3143, %v3150
        %vm3183 = vcmp.eq.s32.totalorder %v3147, %v3150
        %vm3184 = vcmp.eq.s32.totalorder %v3115, %v3153
        %vm3185 = vcmp.eq.s32.totalorder %v3119, %v3153
        %vm3186 = vcmp.eq.s32.totalorder %v3123, %v3153
        %vm3187 = vcmp.eq.s32.totalorder %v3127, %v3153
        %vm3188 = vcmp.eq.s32.totalorder %v3131, %v3153
        %vm3189 = vcmp.eq.s32.totalorder %v3135, %v3153
        %vm3190 = vcmp.eq.s32.totalorder %v3139, %v3153
        %vm3191 = vcmp.eq.s32.totalorder %v3143, %v3153
        %vm3192 = vcmp.eq.s32.totalorder %v3147, %v3153
        %vm3193 = vcmp.eq.s32.totalorder %v3115, %v3156
        %vm3194 = vcmp.eq.s32.totalorder %v3119, %v3156
        %vm3195 = vcmp.eq.s32.totalorder %v3123, %v3156
        %vm3196 = vcmp.eq.s32.totalorder %v3127, %v3156
        %vm3197 = vcmp.eq.s32.totalorder %v3131, %v3156
        %vm3198 = vcmp.eq.s32.totalorder %v3135, %v3156
        %vm3199 = vcmp.eq.s32.totalorder %v3139, %v3156
        %vm3200 = vcmp.eq.s32.totalorder %v3143, %v3156
        %vm3201 = vcmp.eq.s32.totalorder %v3147, %v3156
        %vm3202 = vcmp.eq.s32.totalorder %v3115, %v3159
        %vm3203 = vcmp.eq.s32.totalorder %v3119, %v3159
        %vm3204 = vcmp.eq.s32.totalorder %v3123, %v3159
        %vm3205 = vcmp.eq.s32.totalorder %v3127, %v3159
        %vm3206 = vcmp.eq.s32.totalorder %v3131, %v3159
        %vm3207 = vcmp.eq.s32.totalorder %v3135, %v3159
        %vm3208 = vcmp.eq.s32.totalorder %v3139, %v3159
        %vm3209 = vcmp.eq.s32.totalorder %v3143, %v3159
        %vm3210 = vcmp.eq.s32.totalorder %v3147, %v3159
        %vm3211 = vcmp.eq.s32.totalorder %v3115, %v3162
        %vm3212 = vcmp.eq.s32.totalorder %v3119, %v3162
        %vm3213 = vcmp.eq.s32.totalorder %v3123, %v3162
        %vm3214 = vcmp.eq.s32.totalorder %v3127, %v3162
        %vm3215 = vcmp.eq.s32.totalorder %v3131, %v3162
        %vm3216 = vcmp.eq.s32.totalorder %v3135, %v3162
        %vm3217 = vcmp.eq.s32.totalorder %v3139, %v3162
        %vm3218 = vcmp.eq.s32.totalorder %v3143, %v3162
        %vm3219 = vcmp.eq.s32.totalorder %v3147, %v3162
        %vm3220 = vcmp.eq.s32.totalorder %v3115, %v3165
        %vm3221 = vcmp.eq.s32.totalorder %v3119, %v3165
        %vm3222 = vcmp.eq.s32.totalorder %v3123, %v3165
        %vm3223 = vcmp.eq.s32.totalorder %v3127, %v3165
        %vm3224 = vcmp.eq.s32.totalorder %v3131, %v3165
        %vm3225 = vcmp.eq.s32.totalorder %v3135, %v3165
        %vm3226 = vcmp.eq.s32.totalorder %v3139, %v3165
        %vm3227 = vcmp.eq.s32.totalorder %v3143, %v3165
        %vm3228 = vcmp.eq.s32.totalorder %v3147, %v3165
        %vm3229 = vcmp.eq.s32.totalorder %v3115, %v3168
        %vm3230 = vcmp.eq.s32.totalorder %v3119, %v3168
        %vm3231 = vcmp.eq.s32.totalorder %v3123, %v3168
        %vm3232 = vcmp.eq.s32.totalorder %v3127, %v3168
        %vm3233 = vcmp.eq.s32.totalorder %v3131, %v3168
        %vm3234 = vcmp.eq.s32.totalorder %v3135, %v3168
        %vm3235 = vcmp.eq.s32.totalorder %v3139, %v3168
        %vm3236 = vcmp.eq.s32.totalorder %v3143, %v3168
        %vm3237 = vcmp.eq.s32.totalorder %v3147, %v3168
        %vm3238 = vcmp.eq.s32.totalorder %v3115, %v3171
        %vm3239 = vcmp.eq.s32.totalorder %v3119, %v3171
        %vm3240 = vcmp.eq.s32.totalorder %v3123, %v3171
        %vm3241 = vcmp.eq.s32.totalorder %v3127, %v3171
        %vm3242 = vcmp.eq.s32.totalorder %v3131, %v3171
        %vm3243 = vcmp.eq.s32.totalorder %v3135, %v3171
        %vm3244 = vcmp.eq.s32.totalorder %v3139, %v3171
        %vm3245 = vcmp.eq.s32.totalorder %v3143, %v3171
        %vm3246 = vcmp.eq.s32.totalorder %v3147, %v3171
        %vm3247 = vcmp.eq.s32.totalorder %v3115, %v3174
        %vm3248 = vcmp.eq.s32.totalorder %v3119, %v3174
        %vm3249 = vcmp.eq.s32.totalorder %v3123, %v3174
        %vm3250 = vcmp.eq.s32.totalorder %v3127, %v3174
        %vm3251 = vcmp.eq.s32.totalorder %v3131, %v3174
        %vm3252 = vcmp.eq.s32.totalorder %v3135, %v3174
        %vm3253 = vcmp.eq.s32.totalorder %v3139, %v3174
        %vm3254 = vcmp.eq.s32.totalorder %v3143, %v3174
        %vm3255 = vcmp.eq.s32.totalorder %v3147, %v3174
        %3256 = vset.pattern.permute.xlu0 0
        %3257 = vperm.xlu0 %3256, %v3031
        %v3258 = vpop.permute.xlu0 %3257
        %3259 = vset.pattern.permute.xlu0 0
        %3260 = vperm.xlu0 %3259, %v3046
        %v3261 = vpop.permute.xlu0 %3260
        %3262 = vset.pattern.permute.xlu0 0
        %3263 = vperm.xlu0 %3262, %v3061
        %v3264 = vpop.permute.xlu0 %3263
        %3265 = vset.pattern.permute.xlu0 0
        %3266 = vperm.xlu0 %3265, %v3076
        %v3267 = vpop.permute.xlu0 %3266
        %3268 = vset.pattern.permute.xlu0 0
        %3269 = vperm.xlu0 %3268, %v3111
        %v3270 = vpop.permute.xlu0 %3269
        %3271 = vset.pattern.permute.xlu0 0
        %3272 = vperm.xlu0 %3271, %v3104
        %v3273 = vpop.permute.xlu0 %3272
        %3274 = vset.pattern.permute.xlu0 0
        %3275 = vperm.xlu0 %3274, %v3106
        %v3276 = vpop.permute.xlu0 %3275
        %3277 = vset.pattern.permute.xlu0 0
        %3278 = vperm.xlu0 %3277, %v3108
        %v3279 = vpop.permute.xlu0 %3278
        %3280 = vset.pattern.permute.xlu0 0
        %3281 = vperm.xlu0 %3280, %v3110
        %v3282 = vpop.permute.xlu0 %3281
        %vm3283 = vcmp.eq.s32.totalorder %v3115, %v3258
        %vm3284 = vcmp.eq.s32.totalorder %v3119, %v3258
        %vm3285 = vcmp.eq.s32.totalorder %v3123, %v3258
        %vm3286 = vcmp.eq.s32.totalorder %v3127, %v3258
        %vm3287 = vcmp.eq.s32.totalorder %v3131, %v3258
        %vm3288 = vcmp.eq.s32.totalorder %v3135, %v3258
        %vm3289 = vcmp.eq.s32.totalorder %v3139, %v3258
        %vm3290 = vcmp.eq.s32.totalorder %v3143, %v3258
        %vm3291 = vcmp.eq.s32.totalorder %v3147, %v3258
        %vm3292 = vcmp.eq.s32.totalorder %v3115, %v3261
        %vm3293 = vcmp.eq.s32.totalorder %v3119, %v3261
        %vm3294 = vcmp.eq.s32.totalorder %v3123, %v3261
        %vm3295 = vcmp.eq.s32.totalorder %v3127, %v3261
        %vm3296 = vcmp.eq.s32.totalorder %v3131, %v3261
        %vm3297 = vcmp.eq.s32.totalorder %v3135, %v3261
        %vm3298 = vcmp.eq.s32.totalorder %v3139, %v3261
        %vm3299 = vcmp.eq.s32.totalorder %v3143, %v3261
        %vm3300 = vcmp.eq.s32.totalorder %v3147, %v3261
        %vm3301 = vcmp.eq.s32.totalorder %v3115, %v3264
        %vm3302 = vcmp.eq.s32.totalorder %v3119, %v3264
        %vm3303 = vcmp.eq.s32.totalorder %v3123, %v3264
        %vm3304 = vcmp.eq.s32.totalorder %v3127, %v3264
        %vm3305 = vcmp.eq.s32.totalorder %v3131, %v3264
        %vm3306 = vcmp.eq.s32.totalorder %v3135, %v3264
        %vm3307 = vcmp.eq.s32.totalorder %v3139, %v3264
        %vm3308 = vcmp.eq.s32.totalorder %v3143, %v3264
        %vm3309 = vcmp.eq.s32.totalorder %v3147, %v3264
        %vm3310 = vcmp.eq.s32.totalorder %v3115, %v3267
        %vm3311 = vcmp.eq.s32.totalorder %v3119, %v3267
        %vm3312 = vcmp.eq.s32.totalorder %v3123, %v3267
        %vm3313 = vcmp.eq.s32.totalorder %v3127, %v3267
        %vm3314 = vcmp.eq.s32.totalorder %v3131, %v3267
        %vm3315 = vcmp.eq.s32.totalorder %v3135, %v3267
        %vm3316 = vcmp.eq.s32.totalorder %v3139, %v3267
        %vm3317 = vcmp.eq.s32.totalorder %v3143, %v3267
        %vm3318 = vcmp.eq.s32.totalorder %v3147, %v3267
        %vm3319 = vcmp.eq.s32.totalorder %v3115, %v3270
        %vm3320 = vcmp.eq.s32.totalorder %v3119, %v3270
        %vm3321 = vcmp.eq.s32.totalorder %v3123, %v3270
        %vm3322 = vcmp.eq.s32.totalorder %v3127, %v3270
        %vm3323 = vcmp.eq.s32.totalorder %v3131, %v3270
        %vm3324 = vcmp.eq.s32.totalorder %v3135, %v3270
        %vm3325 = vcmp.eq.s32.totalorder %v3139, %v3270
        %vm3326 = vcmp.eq.s32.totalorder %v3143, %v3270
        %vm3327 = vcmp.eq.s32.totalorder %v3147, %v3270
        %vm3328 = vcmp.eq.s32.totalorder %v3115, %v3273
        %vm3329 = vcmp.eq.s32.totalorder %v3119, %v3273
        %vm3330 = vcmp.eq.s32.totalorder %v3123, %v3273
        %vm3331 = vcmp.eq.s32.totalorder %v3127, %v3273
        %vm3332 = vcmp.eq.s32.totalorder %v3131, %v3273
        %vm3333 = vcmp.eq.s32.totalorder %v3135, %v3273
        %vm3334 = vcmp.eq.s32.totalorder %v3139, %v3273
        %vm3335 = vcmp.eq.s32.totalorder %v3143, %v3273
        %vm3336 = vcmp.eq.s32.totalorder %v3147, %v3273
        %vm3337 = vcmp.eq.s32.totalorder %v3115, %v3276
        %vm3338 = vcmp.eq.s32.totalorder %v3119, %v3276
        %vm3339 = vcmp.eq.s32.totalorder %v3123, %v3276
        %vm3340 = vcmp.eq.s32.totalorder %v3127, %v3276
        %vm3341 = vcmp.eq.s32.totalorder %v3131, %v3276
        %vm3342 = vcmp.eq.s32.totalorder %v3135, %v3276
        %vm3343 = vcmp.eq.s32.totalorder %v3139, %v3276
        %vm3344 = vcmp.eq.s32.totalorder %v3143, %v3276
        %vm3345 = vcmp.eq.s32.totalorder %v3147, %v3276
        %vm3346 = vcmp.eq.s32.totalorder %v3115, %v3279
        %vm3347 = vcmp.eq.s32.totalorder %v3119, %v3279
        %vm3348 = vcmp.eq.s32.totalorder %v3123, %v3279
        %vm3349 = vcmp.eq.s32.totalorder %v3127, %v3279
        %vm3350 = vcmp.eq.s32.totalorder %v3131, %v3279
        %vm3351 = vcmp.eq.s32.totalorder %v3135, %v3279
        %vm3352 = vcmp.eq.s32.totalorder %v3139, %v3279
        %vm3353 = vcmp.eq.s32.totalorder %v3143, %v3279
        %vm3354 = vcmp.eq.s32.totalorder %v3147, %v3279
        %vm3355 = vcmp.eq.s32.totalorder %v3115, %v3282
        %vm3356 = vcmp.eq.s32.totalorder %v3119, %v3282
        %vm3357 = vcmp.eq.s32.totalorder %v3123, %v3282
        %vm3358 = vcmp.eq.s32.totalorder %v3127, %v3282
        %vm3359 = vcmp.eq.s32.totalorder %v3131, %v3282
        %vm3360 = vcmp.eq.s32.totalorder %v3135, %v3282
        %vm3361 = vcmp.eq.s32.totalorder %v3139, %v3282
        %vm3362 = vcmp.eq.s32.totalorder %v3143, %v3282
        %vm3363 = vcmp.eq.s32.totalorder %v3147, %v3282
        %vm3364 = vmor %vm3175, %vm3283
        %vm3365 = vmor %vm3176, %vm3284
        %vm3366 = vmor %vm3177, %vm3285
        %vm3367 = vmor %vm3178, %vm3286
        %vm3368 = vmor %vm3179, %vm3287
        %vm3369 = vmor %vm3180, %vm3288
        %vm3370 = vmor %vm3181, %vm3289
        %vm3371 = vmor %vm3182, %vm3290
        %vm3372 = vmor %vm3183, %vm3291
        %vm3373 = vmor %vm3184, %vm3292
        %vm3374 = vmor %vm3185, %vm3293
        %vm3375 = vmor %vm3186, %vm3294
        %vm3376 = vmor %vm3187, %vm3295
        %vm3377 = vmor %vm3188, %vm3296
        %vm3378 = vmor %vm3189, %vm3297
        %vm3379 = vmor %vm3190, %vm3298
        %vm3380 = vmor %vm3191, %vm3299
        %vm3381 = vmor %vm3192, %vm3300
        %vm3382 = vmor %vm3193, %vm3301
        %vm3383 = vmor %vm3194, %vm3302
        %vm3384 = vmor %vm3195, %vm3303
        %vm3385 = vmor %vm3196, %vm3304
        %vm3386 = vmor %vm3197, %vm3305
        %vm3387 = vmor %vm3198, %vm3306
        %vm3388 = vmor %vm3199, %vm3307
        %vm3389 = vmor %vm3200, %vm3308
        %vm3390 = vmor %vm3201, %vm3309
        %vm3391 = vmor %vm3202, %vm3310
        %vm3392 = vmor %vm3203, %vm3311
        %vm3393 = vmor %vm3204, %vm3312
        %vm3394 = vmor %vm3205, %vm3313
        %vm3395 = vmor %vm3206, %vm3314
        %vm3396 = vmor %vm3207, %vm3315
        %vm3397 = vmor %vm3208, %vm3316
        %vm3398 = vmor %vm3209, %vm3317
        %vm3399 = vmor %vm3210, %vm3318
        %vm3400 = vmor %vm3211, %vm3319
        %vm3401 = vmor %vm3212, %vm3320
        %vm3402 = vmor %vm3213, %vm3321
        %vm3403 = vmor %vm3214, %vm3322
        %vm3404 = vmor %vm3215, %vm3323
        %vm3405 = vmor %vm3216, %vm3324
        %vm3406 = vmor %vm3217, %vm3325
        %vm3407 = vmor %vm3218, %vm3326
        %vm3408 = vmor %vm3219, %vm3327
        %vm3409 = vmor %vm3220, %vm3328
        %vm3410 = vmor %vm3221, %vm3329
        %vm3411 = vmor %vm3222, %vm3330
        %vm3412 = vmor %vm3223, %vm3331
        %vm3413 = vmor %vm3224, %vm3332
        %vm3414 = vmor %vm3225, %vm3333
        %vm3415 = vmor %vm3226, %vm3334
        %vm3416 = vmor %vm3227, %vm3335
        %vm3417 = vmor %vm3228, %vm3336
        %vm3418 = vmor %vm3229, %vm3337
        %vm3419 = vmor %vm3230, %vm3338
        %vm3420 = vmor %vm3231, %vm3339
        %vm3421 = vmor %vm3232, %vm3340
        %vm3422 = vmor %vm3233, %vm3341
        %vm3423 = vmor %vm3234, %vm3342
        %vm3424 = vmor %vm3235, %vm3343
        %vm3425 = vmor %vm3236, %vm3344
        %vm3426 = vmor %vm3237, %vm3345
        %vm3427 = vmor %vm3238, %vm3346
        %vm3428 = vmor %vm3239, %vm3347
        %vm3429 = vmor %vm3240, %vm3348
        %vm3430 = vmor %vm3241, %vm3349
        %vm3431 = vmor %vm3242, %vm3350
        %vm3432 = vmor %vm3243, %vm3351
        %vm3433 = vmor %vm3244, %vm3352
        %vm3434 = vmor %vm3245, %vm3353
        %vm3435 = vmor %vm3246, %vm3354
        %vm3436 = vmor %vm3247, %vm3355
        %vm3437 = vmor %vm3248, %vm3356
        %vm3438 = vmor %vm3249, %vm3357
        %vm3439 = vmor %vm3250, %vm3358
        %vm3440 = vmor %vm3251, %vm3359
        %vm3441 = vmor %vm3252, %vm3360
        %vm3442 = vmor %vm3253, %vm3361
        %vm3443 = vmor %vm3254, %vm3362
        %vm3444 = vmor %vm3255, %vm3363
        %v3445 = vsel %vm3364, 1, 0
        %v3446 = vsel %vm3365, 1, 0
        %v3447 = vsel %vm3366, 1, 0
        %v3448 = vsel %vm3367, 1, 0
        %v3449 = vsel %vm3368, 1, 0
        %v3450 = vsel %vm3369, 1, 0
        %v3451 = vsel %vm3370, 1, 0
        %v3452 = vsel %vm3371, 1, 0
        %v3453 = vsel %vm3372, 1, 0
        %v3454 = vsel %vm3373, 1, 0
        %v3455 = vsel %vm3374, 1, 0
        %v3456 = vsel %vm3375, 1, 0
        %v3457 = vsel %vm3376, 1, 0
        %v3458 = vsel %vm3377, 1, 0
        %v3459 = vsel %vm3378, 1, 0
        %v3460 = vsel %vm3379, 1, 0
        %v3461 = vsel %vm3380, 1, 0
        %v3462 = vsel %vm3381, 1, 0
        %v3463 = vsel %vm3382, 1, 0
        %v3464 = vsel %vm3383, 1, 0
        %v3465 = vsel %vm3384, 1, 0
        %v3466 = vsel %vm3385, 1, 0
        %v3467 = vsel %vm3386, 1, 0
        %v3468 = vsel %vm3387, 1, 0
        %v3469 = vsel %vm3388, 1, 0
        %v3470 = vsel %vm3389, 1, 0
        %v3471 = vsel %vm3390, 1, 0
        %v3472 = vsel %vm3391, 1, 0
        %v3473 = vsel %vm3392, 1, 0
        %v3474 = vsel %vm3393, 1, 0
        %v3475 = vsel %vm3394, 1, 0
        %v3476 = vsel %vm3395, 1, 0
        %v3477 = vsel %vm3396, 1, 0
        %v3478 = vsel %vm3397, 1, 0
        %v3479 = vsel %vm3398, 1, 0
        %v3480 = vsel %vm3399, 1, 0
        %v3481 = vsel %vm3400, 1, 0
        %v3482 = vsel %vm3401, 1, 0
        %v3483 = vsel %vm3402, 1, 0
        %v3484 = vsel %vm3403, 1, 0
        %v3485 = vsel %vm3404, 1, 0
        %v3486 = vsel %vm3405, 1, 0
        %v3487 = vsel %vm3406, 1, 0
        %v3488 = vsel %vm3407, 1, 0
        %v3489 = vsel %vm3408, 1, 0
        %v3490 = vsel %vm3409, 1, 0
        %v3491 = vsel %vm3410, 1, 0
        %v3492 = vsel %vm3411, 1, 0
        %v3493 = vsel %vm3412, 1, 0
        %v3494 = vsel %vm3413, 1, 0
        %v3495 = vsel %vm3414, 1, 0
        %v3496 = vsel %vm3415, 1, 0
        %v3497 = vsel %vm3416, 1, 0
        %v3498 = vsel %vm3417, 1, 0
        %v3499 = vsel %vm3418, 1, 0
        %v3500 = vsel %vm3419, 1, 0
        %v3501 = vsel %vm3420, 1, 0
        %v3502 = vsel %vm3421, 1, 0
        %v3503 = vsel %vm3422, 1, 0
        %v3504 = vsel %vm3423, 1, 0
        %v3505 = vsel %vm3424, 1, 0
        %v3506 = vsel %vm3425, 1, 0
        %v3507 = vsel %vm3426, 1, 0
        %v3508 = vsel %vm3427, 1, 0
        %v3509 = vsel %vm3428, 1, 0
        %v3510 = vsel %vm3429, 1, 0
        %v3511 = vsel %vm3430, 1, 0
        %v3512 = vsel %vm3431, 1, 0
        %v3513 = vsel %vm3432, 1, 0
        %v3514 = vsel %vm3433, 1, 0
        %v3515 = vsel %vm3434, 1, 0
        %v3516 = vsel %vm3435, 1, 0
        %v3517 = vsel %vm3436, 1, 0
        %v3518 = vsel %vm3437, 1, 0
        %v3519 = vsel %vm3438, 1, 0
        %v3520 = vsel %vm3439, 1, 0
        %v3521 = vsel %vm3440, 1, 0
        %v3522 = vsel %vm3441, 1, 0
        %v3523 = vsel %vm3442, 1, 0
        %v3524 = vsel %vm3443, 1, 0
        %v3525 = vsel %vm3444, 1, 0
        %v3526 = vcvt.s32.f32 %v3445
        %v3527 = vcvt.s32.f32 %v3446
        %v3528 = vcvt.s32.f32 %v3447
        %v3529 = vcvt.s32.f32 %v3448
        %v3530 = vcvt.s32.f32 %v3449
        %v3531 = vcvt.s32.f32 %v3450
        %v3532 = vcvt.s32.f32 %v3451
        %v3533 = vcvt.s32.f32 %v3452
        %v3534 = vcvt.s32.f32 %v3453
        %v3535 = vcvt.s32.f32 %v3454
        %v3536 = vcvt.s32.f32 %v3455
        %v3537 = vcvt.s32.f32 %v3456
        %v3538 = vcvt.s32.f32 %v3457
        %v3539 = vcvt.s32.f32 %v3458
        %v3540 = vcvt.s32.f32 %v3459
        %v3541 = vcvt.s32.f32 %v3460
        %v3542 = vcvt.s32.f32 %v3461
        %v3543 = vcvt.s32.f32 %v3462
        %v3544 = vcvt.s32.f32 %v3463
        %v3545 = vcvt.s32.f32 %v3464
        %v3546 = vcvt.s32.f32 %v3465
        %v3547 = vcvt.s32.f32 %v3466
        %v3548 = vcvt.s32.f32 %v3467
        %v3549 = vcvt.s32.f32 %v3468
        %v3550 = vcvt.s32.f32 %v3469
        %v3551 = vcvt.s32.f32 %v3470
        %v3552 = vcvt.s32.f32 %v3471
        %v3553 = vcvt.s32.f32 %v3472
        %v3554 = vcvt.s32.f32 %v3473
        %v3555 = vcvt.s32.f32 %v3474
        %v3556 = vcvt.s32.f32 %v3475
        %v3557 = vcvt.s32.f32 %v3476
        %v3558 = vcvt.s32.f32 %v3477
        %v3559 = vcvt.s32.f32 %v3478
        %v3560 = vcvt.s32.f32 %v3479
        %v3561 = vcvt.s32.f32 %v3480
        %v3562 = vcvt.s32.f32 %v3481
        %v3563 = vcvt.s32.f32 %v3482
        %v3564 = vcvt.s32.f32 %v3483
        %v3565 = vcvt.s32.f32 %v3484
        %v3566 = vcvt.s32.f32 %v3485
        %v3567 = vcvt.s32.f32 %v3486
        %v3568 = vcvt.s32.f32 %v3487
        %v3569 = vcvt.s32.f32 %v3488
        %v3570 = vcvt.s32.f32 %v3489
        %v3571 = vcvt.s32.f32 %v3490
        %v3572 = vcvt.s32.f32 %v3491
        %v3573 = vcvt.s32.f32 %v3492
        %v3574 = vcvt.s32.f32 %v3493
        %v3575 = vcvt.s32.f32 %v3494
        %v3576 = vcvt.s32.f32 %v3495
        %v3577 = vcvt.s32.f32 %v3496
        %v3578 = vcvt.s32.f32 %v3497
        %v3579 = vcvt.s32.f32 %v3498
        %v3580 = vcvt.s32.f32 %v3499
        %v3581 = vcvt.s32.f32 %v3500
        %v3582 = vcvt.s32.f32 %v3501
        %v3583 = vcvt.s32.f32 %v3502
        %v3584 = vcvt.s32.f32 %v3503
        %v3585 = vcvt.s32.f32 %v3504
        %v3586 = vcvt.s32.f32 %v3505
        %v3587 = vcvt.s32.f32 %v3506
        %v3588 = vcvt.s32.f32 %v3507
        %v3589 = vcvt.s32.f32 %v3508
        %v3590 = vcvt.s32.f32 %v3509
        %v3591 = vcvt.s32.f32 %v3510
        %v3592 = vcvt.s32.f32 %v3511
        %v3593 = vcvt.s32.f32 %v3512
        %v3594 = vcvt.s32.f32 %v3513
        %v3595 = vcvt.s32.f32 %v3514
        %v3596 = vcvt.s32.f32 %v3515
        %v3597 = vcvt.s32.f32 %v3516
        %v3598 = vcvt.s32.f32 %v3517
        %v3599 = vcvt.s32.f32 %v3518
        %v3600 = vcvt.s32.f32 %v3519
        %v3601 = vcvt.s32.f32 %v3520
        %v3602 = vcvt.s32.f32 %v3521
        %v3603 = vcvt.s32.f32 %v3522
        %v3604 = vcvt.s32.f32 %v3523
        %v3605 = vcvt.s32.f32 %v3524
        %v3606 = vcvt.s32.f32 %v3525
        %v3607 = vld [vmem:[#allocation22] sm:$0xff]
        %v3608 = vld [vmem:[#allocation22 + $0x8] sm:$0xff]
        %v3609 = vld [vmem:[#allocation22 + $0x10] sm:$0xff]
        %v3610 = vld [vmem:[#allocation22 + $0x18] sm:$0xff]
        %v3611 = vld [vmem:[#allocation22 + $0x20] sm:$0xff]
        %v3612 = vld [vmem:[#allocation22 + $0x28] sm:$0xff]
        %v3613 = vld [vmem:[#allocation22 + $0x30] sm:$0xff]
        %v3614 = vld [vmem:[#allocation22 + $0x38] sm:$0xff]
        %v3615 = vld [vmem:[#allocation22 + $0x40] sm:$0xff]
        %v3616 = vld [vmem:[#allocation22 + $0x48] sm:$0xff]
        %v3617 = vld [vmem:[#allocation22 + $0x50] sm:$0xff]
        %v3618 = vld [vmem:[#allocation22 + $0x58] sm:$0xff]
        %v3619 = vld [vmem:[#allocation22 + $0x60] sm:$0xff]
        %v3620 = vld [vmem:[#allocation22 + $0x68] sm:$0xff]
        %v3621 = vld [vmem:[#allocation22 + $0x70] sm:$0xff]
        %v3622 = vld [vmem:[#allocation22 + $0x78] sm:$0xff]
        %v3623 = vld [vmem:[#allocation22 + $0x80] sm:$0xff]
        %v3624 = vld [vmem:[#allocation22 + $0x88] sm:$0xff]
        %v3625 = vld [vmem:[#allocation24] sm:$0xff]
        %v3626 = vld [vmem:[#allocation24 + $0x8] sm:$0x1]
        %v3629 = vlaneseq
        %v3630 = vshrl.u32 %v3629, 7
        %v3631 = vsub.s32 0, %v3630
        %v3632 = vrot.slane %v3625, %v3631
        %v3633 = vlaneseq
        %v3634 = vshrl.u32 %v3633, 7
        %v3635 = vsub.s32 1, %v3634
        %v3636 = vrot.slane %v3625, %v3635
        %v3637 = vlaneseq
        %v3638 = vshrl.u32 %v3637, 7
        %v3639 = vsub.s32 2, %v3638
        %v3640 = vrot.slane %v3625, %v3639
        %v3641 = vlaneseq
        %v3642 = vshrl.u32 %v3641, 7
        %v3643 = vsub.s32 3, %v3642
        %v3644 = vrot.slane %v3625, %v3643
        %v3645 = vlaneseq
        %v3646 = vshrl.u32 %v3645, 7
        %v3647 = vsub.s32 4, %v3646
        %v3648 = vrot.slane %v3625, %v3647
        %v3649 = vlaneseq
        %v3650 = vshrl.u32 %v3649, 7
        %v3651 = vsub.s32 5, %v3650
        %v3652 = vrot.slane %v3625, %v3651
        %v3653 = vlaneseq
        %v3654 = vshrl.u32 %v3653, 7
        %v3655 = vsub.s32 6, %v3654
        %v3656 = vrot.slane %v3625, %v3655
        %v3657 = vlaneseq
        %v3658 = vshrl.u32 %v3657, 7
        %v3659 = vsub.s32 7, %v3658
        %v3660 = vrot.slane %v3625, %v3659
        %v3661 = vlaneseq
        %v3662 = vshrl.u32 %v3661, 7
        %v3663 = vsub.s32 0, %v3662
        %v3664 = vrot.slane %v3626, %v3663
        %3674 = vmatprep.subr.mxu0 0.0
        %3675 = vmatpush1.msra.mxu0 0.0
        %3676 = vmatprep.subr.mxu0 0.0
        %3677 = vmatpush1.msra.mxu0 0.0
        %3678 = vmatprep.subr.mxu0 0.0
        %3679 = vmatpush1.msra.mxu0 0.0
        %3680 = vmatprep.subr.mxu0 0.0
        %3681 = vmatpush1.msra.mxu0 0.0
        %3682 = vmatprep.subr.mxu0 0.0
        %3683 = vmatpush1.msra.mxu0 0.0
        %3684 = vmatprep.subr.mxu0 0.0
        %3685 = vmatpush1.msra.mxu0 0.0
        %3686 = vmatprep.subr.mxu0 0.0
        %3687 = vmatpush1.msra.mxu0 0.0
        %3688 = vmatprep.subr.mxu0 0.0
        %3689 = vmatpush1.msra.mxu0 0.0
        %3690 = vmatprep.subr.mxu0 0.0
        %3691 = vmatpush1.msra.mxu0 0.0
        %3692 = vmatprep.subr.mxu0 0.0
        %3693 = vmatpush1.msra.mxu0 0.0
        %3694 = vmatprep.subr.mxu0 0.0
        %3695 = vmatpush1.msra.mxu0 0.0
        %3696 = vmatprep.subr.mxu0 0.0
        %3697 = vmatpush1.msra.mxu0 0.0
        %3698 = vmatprep.subr.mxu0 0.0
        %3699 = vmatpush1.msra.mxu0 0.0
        %3700 = vmatprep.subr.mxu0 0.0
        %3701 = vmatpush1.msra.mxu0 0.0
        %3702 = vmatprep.subr.mxu0 %v3617
        %3703 = vmatpush1.msra.mxu0 %v3616
        %3704 = vmatprep.subr.mxu0 %v3608
        %3705 = vmatpush1.msra.mxu0 %v3607
        %3706 = vmatprep.subr.mxu0 0.0
        %3707 = vmatpush2.msra.mxu0 0.0
        %3708 = vmatprep.subr.mxu0 0.0
        %3709 = vmatpush2.msra.mxu0 0.0
        %3710 = vmatprep.subr.mxu0 0.0
        %3711 = vmatpush2.msra.mxu0 0.0
        %3712 = vmatprep.subr.mxu0 0.0
        %3713 = vmatpush2.msra.mxu0 0.0
        %3714 = vmatprep.subr.mxu0 0.0
        %3715 = vmatpush2.msra.mxu0 0.0
        %3716 = vmatprep.subr.mxu0 0.0
        %3717 = vmatpush2.msra.mxu0 0.0
        %3718 = vmatprep.subr.mxu0 0.0
        %3719 = vmatpush2.msra.mxu0 0.0
        %3720 = vmatprep.subr.mxu0 0.0
        %3721 = vmatpush2.msra.mxu0 0.0
        %3722 = vmatprep.subr.mxu0 0.0
        %3723 = vmatpush2.msra.mxu0 0.0
        %3724 = vmatprep.subr.mxu0 0.0
        %3725 = vmatpush2.msra.mxu0 0.0
        %3726 = vmatprep.subr.mxu0 0.0
        %3727 = vmatpush2.msra.mxu0 0.0
        %3728 = vmatprep.subr.mxu0 0.0
        %3729 = vmatpush2.msra.mxu0 0.0
        %3730 = vmatprep.subr.mxu0 0.0
        %3731 = vmatpush2.msra.mxu0 0.0
        %3732 = vmatprep.subr.mxu0 0.0
        %3733 = vmatpush2.msra.mxu0 0.0
        %3734 = vmatprep.subr.mxu0 0.0
        %3735 = vmatpush2.msra.mxu0 0.0
        %3736 = vmatprep.subr.mxu0 0.0
        %3737 = vmatpush2.msra.mxu0 0.0
        %3738 = vmatprep.mubr.f32.mxu0 0.0
        %3739 = vmatmul.mubr.f32.gmra.mxu0 %v2550
        %v3740 = vpop.f32.mrf.mxu0
        %v3741 = vadd.f32 %v3632, %v3740
        %v3742 = vpop.f32.mrf.mxu0
        %v3743 = vadd.f32 %v3636, %v3742
        %3744 = vmatprep.mubr.f32.mxu0 0.0
        %3745 = vmatmul.mubr.f32.gmra.mxu0 %v2553
        %v3746 = vpop.f32.mrf.mxu0
        %v3747 = vadd.f32 %v3632, %v3746
        %v3748 = vpop.f32.mrf.mxu0
        %v3749 = vadd.f32 %v3636, %v3748
        %3750 = vmatprep.mubr.f32.mxu0 0.0
        %3751 = vmatmul.mubr.f32.gmra.mxu0 %v2556
        %v3752 = vpop.f32.mrf.mxu0
        %v3753 = vadd.f32 %v3632, %v3752
        %v3754 = vpop.f32.mrf.mxu0
        %v3755 = vadd.f32 %v3636, %v3754
        %3756 = vmatprep.mubr.f32.mxu0 0.0
        %3757 = vmatmul.mubr.f32.gmra.mxu0 %v2559
        %v3758 = vpop.f32.mrf.mxu0
        %v3759 = vadd.f32 %v3632, %v3758
        %v3760 = vpop.f32.mrf.mxu0
        %v3761 = vadd.f32 %v3636, %v3760
        %3762 = vmatprep.mubr.f32.mxu0 0.0
        %3763 = vmatmul.mubr.f32.gmra.mxu0 %v2562
        %v3764 = vpop.f32.mrf.mxu0
        %v3765 = vadd.f32 %v3632, %v3764
        %v3766 = vpop.f32.mrf.mxu0
        %v3767 = vadd.f32 %v3636, %v3766
        %3768 = vmatprep.mubr.f32.mxu0 0.0
        %3769 = vmatmul.mubr.f32.gmra.mxu0 %v2565
        %v3770 = vpop.f32.mrf.mxu0
        %v3771 = vadd.f32 %v3632, %v3770
        %v3772 = vpop.f32.mrf.mxu0
        %v3773 = vadd.f32 %v3636, %v3772
        %3774 = vmatprep.mubr.f32.mxu0 0.0
        %3775 = vmatmul.mubr.f32.gmra.mxu0 %v2568
        %v3776 = vpop.f32.mrf.mxu0
        %v3777 = vadd.f32 %v3632, %v3776
        %v3778 = vpop.f32.mrf.mxu0
        %v3779 = vadd.f32 %v3636, %v3778
        %3780 = vmatprep.mubr.f32.mxu0 0.0
        %3781 = vmatmul.mubr.f32.gmra.mxu0 %v2571
        %v3782 = vpop.f32.mrf.mxu0
        %v3783 = vadd.f32 %v3632, %v3782
        %v3784 = vpop.f32.mrf.mxu0
        %v3785 = vadd.f32 %v3636, %v3784
        %3786 = vmatprep.mubr.f32.mxu0 0.0
        %3787 = vmatmul.mubr.f32.gmra.mxu0 %v2574
        %v3788 = vpop.f32.mrf.mxu0
        %v3789 = vadd.f32 %v3632, %v3788
        %v3790 = vpop.f32.mrf.mxu0
        %v3791 = vadd.f32 %v3636, %v3790
        %3792 = vdwg.mxu0
        %3793 = vmatprep.subr.mxu0 0.0
        %3794 = vmatpush1.msra.mxu0 0.0
        %3795 = vmatprep.subr.mxu0 0.0
        %3796 = vmatpush1.msra.mxu0 0.0
        %3797 = vmatprep.subr.mxu0 0.0
        %3798 = vmatpush1.msra.mxu0 0.0
        %3799 = vmatprep.subr.mxu0 0.0
        %3800 = vmatpush1.msra.mxu0 0.0
        %3801 = vmatprep.subr.mxu0 0.0
        %3802 = vmatpush1.msra.mxu0 0.0
        %3803 = vmatprep.subr.mxu0 0.0
        %3804 = vmatpush1.msra.mxu0 0.0
        %3805 = vmatprep.subr.mxu0 0.0
        %3806 = vmatpush1.msra.mxu0 0.0
        %3807 = vmatprep.subr.mxu0 0.0
        %3808 = vmatpush1.msra.mxu0 0.0
        %3809 = vmatprep.subr.mxu0 0.0
        %3810 = vmatpush1.msra.mxu0 0.0
        %3811 = vmatprep.subr.mxu0 0.0
        %3812 = vmatpush1.msra.mxu0 0.0
        %3813 = vmatprep.subr.mxu0 0.0
        %3814 = vmatpush1.msra.mxu0 0.0
        %3815 = vmatprep.subr.mxu0 0.0
        %3816 = vmatpush1.msra.mxu0 0.0
        %3817 = vmatprep.subr.mxu0 0.0
        %3818 = vmatpush1.msra.mxu0 0.0
        %3819 = vmatprep.subr.mxu0 0.0
        %3820 = vmatpush1.msra.mxu0 0.0
        %3821 = vmatprep.subr.mxu0 %v3619
        %3822 = vmatpush1.msra.mxu0 %v3618
        %3823 = vmatprep.subr.mxu0 %v3610
        %3824 = vmatpush1.msra.mxu0 %v3609
        %3825 = vmatprep.subr.mxu0 0.0
        %3826 = vmatpush2.msra.mxu0 0.0
        %3827 = vmatprep.subr.mxu0 0.0
        %3828 = vmatpush2.msra.mxu0 0.0
        %3829 = vmatprep.subr.mxu0 0.0
        %3830 = vmatpush2.msra.mxu0 0.0
        %3831 = vmatprep.subr.mxu0 0.0
        %3832 = vmatpush2.msra.mxu0 0.0
        %3833 = vmatprep.subr.mxu0 0.0
        %3834 = vmatpush2.msra.mxu0 0.0
        %3835 = vmatprep.subr.mxu0 0.0
        %3836 = vmatpush2.msra.mxu0 0.0
        %3837 = vmatprep.subr.mxu0 0.0
        %3838 = vmatpush2.msra.mxu0 0.0
        %3839 = vmatprep.subr.mxu0 0.0
        %3840 = vmatpush2.msra.mxu0 0.0
        %3841 = vmatprep.subr.mxu0 0.0
        %3842 = vmatpush2.msra.mxu0 0.0
        %3843 = vmatprep.subr.mxu0 0.0
        %3844 = vmatpush2.msra.mxu0 0.0
        %3845 = vmatprep.subr.mxu0 0.0
        %3846 = vmatpush2.msra.mxu0 0.0
        %3847 = vmatprep.subr.mxu0 0.0
        %3848 = vmatpush2.msra.mxu0 0.0
        %3849 = vmatprep.subr.mxu0 0.0
        %3850 = vmatpush2.msra.mxu0 0.0
        %3851 = vmatprep.subr.mxu0 0.0
        %3852 = vmatpush2.msra.mxu0 0.0
        %3853 = vmatprep.subr.mxu0 0.0
        %3854 = vmatpush2.msra.mxu0 0.0
        %3855 = vmatprep.subr.mxu0 0.0
        %3856 = vmatpush2.msra.mxu0 0.0
        %3857 = vmatprep.mubr.f32.mxu0 0.0
        %3858 = vmatmul.mubr.f32.gmra.mxu0 %v2550
        %v3859 = vpop.f32.mrf.mxu0
        %v3860 = vadd.f32 %v3640, %v3859
        %v3861 = vpop.f32.mrf.mxu0
        %v3862 = vadd.f32 %v3644, %v3861
        %3863 = vmatprep.mubr.f32.mxu0 0.0
        %3864 = vmatmul.mubr.f32.gmra.mxu0 %v2553
        %v3865 = vpop.f32.mrf.mxu0
        %v3866 = vadd.f32 %v3640, %v3865
        %v3867 = vpop.f32.mrf.mxu0
        %v3868 = vadd.f32 %v3644, %v3867
        %3869 = vmatprep.mubr.f32.mxu0 0.0
        %3870 = vmatmul.mubr.f32.gmra.mxu0 %v2556
        %v3871 = vpop.f32.mrf.mxu0
        %v3872 = vadd.f32 %v3640, %v3871
        %v3873 = vpop.f32.mrf.mxu0
        %v3874 = vadd.f32 %v3644, %v3873
        %3875 = vmatprep.mubr.f32.mxu0 0.0
        %3876 = vmatmul.mubr.f32.gmra.mxu0 %v2559
        %v3877 = vpop.f32.mrf.mxu0
        %v3878 = vadd.f32 %v3640, %v3877
        %v3879 = vpop.f32.mrf.mxu0
        %v3880 = vadd.f32 %v3644, %v3879
        %3881 = vmatprep.mubr.f32.mxu0 0.0
        %3882 = vmatmul.mubr.f32.gmra.mxu0 %v2562
        %v3883 = vpop.f32.mrf.mxu0
        %v3884 = vadd.f32 %v3640, %v3883
        %v3885 = vpop.f32.mrf.mxu0
        %v3886 = vadd.f32 %v3644, %v3885
        %3887 = vmatprep.mubr.f32.mxu0 0.0
        %3888 = vmatmul.mubr.f32.gmra.mxu0 %v2565
        %v3889 = vpop.f32.mrf.mxu0
        %v3890 = vadd.f32 %v3640, %v3889
        %v3891 = vpop.f32.mrf.mxu0
        %v3892 = vadd.f32 %v3644, %v3891
        %3893 = vmatprep.mubr.f32.mxu0 0.0
        %3894 = vmatmul.mubr.f32.gmra.mxu0 %v2568
        %v3895 = vpop.f32.mrf.mxu0
        %v3896 = vadd.f32 %v3640, %v3895
        %v3897 = vpop.f32.mrf.mxu0
        %v3898 = vadd.f32 %v3644, %v3897
        %3899 = vmatprep.mubr.f32.mxu0 0.0
        %3900 = vmatmul.mubr.f32.gmra.mxu0 %v2571
        %v3901 = vpop.f32.mrf.mxu0
        %v3902 = vadd.f32 %v3640, %v3901
        %v3903 = vpop.f32.mrf.mxu0
        %v3904 = vadd.f32 %v3644, %v3903
        %3905 = vmatprep.mubr.f32.mxu0 0.0
        %3906 = vmatmul.mubr.f32.gmra.mxu0 %v2574
        %v3907 = vpop.f32.mrf.mxu0
        %v3908 = vadd.f32 %v3640, %v3907
        %v3909 = vpop.f32.mrf.mxu0
        %v3910 = vadd.f32 %v3644, %v3909
        %3911 = vdwg.mxu0
        %3912 = vmatprep.subr.mxu0 0.0
        %3913 = vmatpush1.msra.mxu0 0.0
        %3914 = vmatprep.subr.mxu0 0.0
        %3915 = vmatpush1.msra.mxu0 0.0
        %3916 = vmatprep.subr.mxu0 0.0
        %3917 = vmatpush1.msra.mxu0 0.0
        %3918 = vmatprep.subr.mxu0 0.0
        %3919 = vmatpush1.msra.mxu0 0.0
        %3920 = vmatprep.subr.mxu0 0.0
        %3921 = vmatpush1.msra.mxu0 0.0
        %3922 = vmatprep.subr.mxu0 0.0
        %3923 = vmatpush1.msra.mxu0 0.0
        %3924 = vmatprep.subr.mxu0 0.0
        %3925 = vmatpush1.msra.mxu0 0.0
        %3926 = vmatprep.subr.mxu0 0.0
        %3927 = vmatpush1.msra.mxu0 0.0
        %3928 = vmatprep.subr.mxu0 0.0
        %3929 = vmatpush1.msra.mxu0 0.0
        %3930 = vmatprep.subr.mxu0 0.0
        %3931 = vmatpush1.msra.mxu0 0.0
        %3932 = vmatprep.subr.mxu0 0.0
        %3933 = vmatpush1.msra.mxu0 0.0
        %3934 = vmatprep.subr.mxu0 0.0
        %3935 = vmatpush1.msra.mxu0 0.0
        %3936 = vmatprep.subr.mxu0 0.0
        %3937 = vmatpush1.msra.mxu0 0.0
        %3938 = vmatprep.subr.mxu0 0.0
        %3939 = vmatpush1.msra.mxu0 0.0
        %3940 = vmatprep.subr.mxu0 %v3621
        %3941 = vmatpush1.msra.mxu0 %v3620
        %3942 = vmatprep.subr.mxu0 %v3612
        %3943 = vmatpush1.msra.mxu0 %v3611
        %3944 = vmatprep.subr.mxu0 0.0
        %3945 = vmatpush2.msra.mxu0 0.0
        %3946 = vmatprep.subr.mxu0 0.0
        %3947 = vmatpush2.msra.mxu0 0.0
        %3948 = vmatprep.subr.mxu0 0.0
        %3949 = vmatpush2.msra.mxu0 0.0
        %3950 = vmatprep.subr.mxu0 0.0
        %3951 = vmatpush2.msra.mxu0 0.0
        %3952 = vmatprep.subr.mxu0 0.0
        %3953 = vmatpush2.msra.mxu0 0.0
        %3954 = vmatprep.subr.mxu0 0.0
        %3955 = vmatpush2.msra.mxu0 0.0
        %3956 = vmatprep.subr.mxu0 0.0
        %3957 = vmatpush2.msra.mxu0 0.0
        %3958 = vmatprep.subr.mxu0 0.0
        %3959 = vmatpush2.msra.mxu0 0.0
        %3960 = vmatprep.subr.mxu0 0.0
        %3961 = vmatpush2.msra.mxu0 0.0
        %3962 = vmatprep.subr.mxu0 0.0
        %3963 = vmatpush2.msra.mxu0 0.0
        %3964 = vmatprep.subr.mxu0 0.0
        %3965 = vmatpush2.msra.mxu0 0.0
        %3966 = vmatprep.subr.mxu0 0.0
        %3967 = vmatpush2.msra.mxu0 0.0
        %3968 = vmatprep.subr.mxu0 0.0
        %3969 = vmatpush2.msra.mxu0 0.0
        %3970 = vmatprep.subr.mxu0 0.0
        %3971 = vmatpush2.msra.mxu0 0.0
        %3972 = vmatprep.subr.mxu0 0.0
        %3973 = vmatpush2.msra.mxu0 0.0
        %3974 = vmatprep.subr.mxu0 0.0
        %3975 = vmatpush2.msra.mxu0 0.0
        %3976 = vmatprep.mubr.f32.mxu0 0.0
        %3977 = vmatmul.mubr.f32.gmra.mxu0 %v2550
        %v3978 = vpop.f32.mrf.mxu0
        %v3979 = vadd.f32 %v3648, %v3978
        %v3980 = vpop.f32.mrf.mxu0
        %v3981 = vadd.f32 %v3652, %v3980
        %3982 = vmatprep.mubr.f32.mxu0 0.0
        %3983 = vmatmul.mubr.f32.gmra.mxu0 %v2553
        %v3984 = vpop.f32.mrf.mxu0
        %v3985 = vadd.f32 %v3648, %v3984
        %v3986 = vpop.f32.mrf.mxu0
        %v3987 = vadd.f32 %v3652, %v3986
        %3988 = vmatprep.mubr.f32.mxu0 0.0
        %3989 = vmatmul.mubr.f32.gmra.mxu0 %v2556
        %v3990 = vpop.f32.mrf.mxu0
        %v3991 = vadd.f32 %v3648, %v3990
        %v3992 = vpop.f32.mrf.mxu0
        %v3993 = vadd.f32 %v3652, %v3992
        %3994 = vmatprep.mubr.f32.mxu0 0.0
        %3995 = vmatmul.mubr.f32.gmra.mxu0 %v2559
        %v3996 = vpop.f32.mrf.mxu0
        %v3997 = vadd.f32 %v3648, %v3996
        %v3998 = vpop.f32.mrf.mxu0
        %v3999 = vadd.f32 %v3652, %v3998
        %4000 = vmatprep.mubr.f32.mxu0 0.0
        %4001 = vmatmul.mubr.f32.gmra.mxu0 %v2562
        %v4002 = vpop.f32.mrf.mxu0
        %v4003 = vadd.f32 %v3648, %v4002
        %v4004 = vpop.f32.mrf.mxu0
        %v4005 = vadd.f32 %v3652, %v4004
        %4006 = vmatprep.mubr.f32.mxu0 0.0
        %4007 = vmatmul.mubr.f32.gmra.mxu0 %v2565
        %v4008 = vpop.f32.mrf.mxu0
        %v4009 = vadd.f32 %v3648, %v4008
        %v4010 = vpop.f32.mrf.mxu0
        %v4011 = vadd.f32 %v3652, %v4010
        %4012 = vmatprep.mubr.f32.mxu0 0.0
        %4013 = vmatmul.mubr.f32.gmra.mxu0 %v2568
        %v4014 = vpop.f32.mrf.mxu0
        %v4015 = vadd.f32 %v3648, %v4014
        %v4016 = vpop.f32.mrf.mxu0
        %v4017 = vadd.f32 %v3652, %v4016
        %4018 = vmatprep.mubr.f32.mxu0 0.0
        %4019 = vmatmul.mubr.f32.gmra.mxu0 %v2571
        %v4020 = vpop.f32.mrf.mxu0
        %v4021 = vadd.f32 %v3648, %v4020
        %v4022 = vpop.f32.mrf.mxu0
        %v4023 = vadd.f32 %v3652, %v4022
        %4024 = vmatprep.mubr.f32.mxu0 0.0
        %4025 = vmatmul.mubr.f32.gmra.mxu0 %v2574
        %v4026 = vpop.f32.mrf.mxu0
        %v4027 = vadd.f32 %v3648, %v4026
        %v4028 = vpop.f32.mrf.mxu0
        %v4029 = vadd.f32 %v3652, %v4028
        %4030 = vdwg.mxu0
        %4031 = vmatprep.subr.mxu0 0.0
        %4032 = vmatpush1.msra.mxu0 0.0
        %4033 = vmatprep.subr.mxu0 0.0
        %4034 = vmatpush1.msra.mxu0 0.0
        %4035 = vmatprep.subr.mxu0 0.0
        %4036 = vmatpush1.msra.mxu0 0.0
        %4037 = vmatprep.subr.mxu0 0.0
        %4038 = vmatpush1.msra.mxu0 0.0
        %4039 = vmatprep.subr.mxu0 0.0
        %4040 = vmatpush1.msra.mxu0 0.0
        %4041 = vmatprep.subr.mxu0 0.0
        %4042 = vmatpush1.msra.mxu0 0.0
        %4043 = vmatprep.subr.mxu0 0.0
        %4044 = vmatpush1.msra.mxu0 0.0
        %4045 = vmatprep.subr.mxu0 0.0
        %4046 = vmatpush1.msra.mxu0 0.0
        %4047 = vmatprep.subr.mxu0 0.0
        %4048 = vmatpush1.msra.mxu0 0.0
        %4049 = vmatprep.subr.mxu0 0.0
        %4050 = vmatpush1.msra.mxu0 0.0
        %4051 = vmatprep.subr.mxu0 0.0
        %4052 = vmatpush1.msra.mxu0 0.0
        %4053 = vmatprep.subr.mxu0 0.0
        %4054 = vmatpush1.msra.mxu0 0.0
        %4055 = vmatprep.subr.mxu0 0.0
        %4056 = vmatpush1.msra.mxu0 0.0
        %4057 = vmatprep.subr.mxu0 0.0
        %4058 = vmatpush1.msra.mxu0 0.0
        %4059 = vmatprep.subr.mxu0 %v3623
        %4060 = vmatpush1.msra.mxu0 %v3622
        %4061 = vmatprep.subr.mxu0 %v3614
        %4062 = vmatpush1.msra.mxu0 %v3613
        %4063 = vmatprep.subr.mxu0 0.0
        %4064 = vmatpush2.msra.mxu0 0.0
        %4065 = vmatprep.subr.mxu0 0.0
        %4066 = vmatpush2.msra.mxu0 0.0
        %4067 = vmatprep.subr.mxu0 0.0
        %4068 = vmatpush2.msra.mxu0 0.0
        %4069 = vmatprep.subr.mxu0 0.0
        %4070 = vmatpush2.msra.mxu0 0.0
        %4071 = vmatprep.subr.mxu0 0.0
        %4072 = vmatpush2.msra.mxu0 0.0
        %4073 = vmatprep.subr.mxu0 0.0
        %4074 = vmatpush2.msra.mxu0 0.0
        %4075 = vmatprep.subr.mxu0 0.0
        %4076 = vmatpush2.msra.mxu0 0.0
        %4077 = vmatprep.subr.mxu0 0.0
        %4078 = vmatpush2.msra.mxu0 0.0
        %4079 = vmatprep.subr.mxu0 0.0
        %4080 = vmatpush2.msra.mxu0 0.0
        %4081 = vmatprep.subr.mxu0 0.0
        %4082 = vmatpush2.msra.mxu0 0.0
        %4083 = vmatprep.subr.mxu0 0.0
        %4084 = vmatpush2.msra.mxu0 0.0
        %4085 = vmatprep.subr.mxu0 0.0
        %4086 = vmatpush2.msra.mxu0 0.0
        %4087 = vmatprep.subr.mxu0 0.0
        %4088 = vmatpush2.msra.mxu0 0.0
        %4089 = vmatprep.subr.mxu0 0.0
        %4090 = vmatpush2.msra.mxu0 0.0
        %4091 = vmatprep.subr.mxu0 0.0
        %4092 = vmatpush2.msra.mxu0 0.0
        %4093 = vmatprep.subr.mxu0 0.0
        %4094 = vmatpush2.msra.mxu0 0.0
        %4095 = vmatprep.mubr.f32.mxu0 0.0
        %4096 = vmatmul.mubr.f32.gmra.mxu0 %v2550
        %v4097 = vpop.f32.mrf.mxu0
        %v4098 = vadd.f32 %v3656, %v4097
        %v4099 = vpop.f32.mrf.mxu0
        %v4100 = vadd.f32 %v3660, %v4099
        %4101 = vmatprep.mubr.f32.mxu0 0.0
        %4102 = vmatmul.mubr.f32.gmra.mxu0 %v2553
        %v4103 = vpop.f32.mrf.mxu0
        %v4104 = vadd.f32 %v3656, %v4103
        %v4105 = vpop.f32.mrf.mxu0
        %v4106 = vadd.f32 %v3660, %v4105
        %4107 = vmatprep.mubr.f32.mxu0 0.0
        %4108 = vmatmul.mubr.f32.gmra.mxu0 %v2556
        %v4109 = vpop.f32.mrf.mxu0
        %v4110 = vadd.f32 %v3656, %v4109
        %v4111 = vpop.f32.mrf.mxu0
        %v4112 = vadd.f32 %v3660, %v4111
        %4113 = vmatprep.mubr.f32.mxu0 0.0
        %4114 = vmatmul.mubr.f32.gmra.mxu0 %v2559
        %v4115 = vpop.f32.mrf.mxu0
        %v4116 = vadd.f32 %v3656, %v4115
        %v4117 = vpop.f32.mrf.mxu0
        %v4118 = vadd.f32 %v3660, %v4117
        %4119 = vmatprep.mubr.f32.mxu0 0.0
        %4120 = vmatmul.mubr.f32.gmra.mxu0 %v2562
        %v4121 = vpop.f32.mrf.mxu0
        %v4122 = vadd.f32 %v3656, %v4121
        %v4123 = vpop.f32.mrf.mxu0
        %v4124 = vadd.f32 %v3660, %v4123
        %4125 = vmatprep.mubr.f32.mxu0 0.0
        %4126 = vmatmul.mubr.f32.gmra.mxu0 %v2565
        %v4127 = vpop.f32.mrf.mxu0
        %v4128 = vadd.f32 %v3656, %v4127
        %v4129 = vpop.f32.mrf.mxu0
        %v4130 = vadd.f32 %v3660, %v4129
        %4131 = vmatprep.mubr.f32.mxu0 0.0
        %4132 = vmatmul.mubr.f32.gmra.mxu0 %v2568
        %v4133 = vpop.f32.mrf.mxu0
        %v4134 = vadd.f32 %v3656, %v4133
        %v4135 = vpop.f32.mrf.mxu0
        %v4136 = vadd.f32 %v3660, %v4135
        %4137 = vmatprep.mubr.f32.mxu0 0.0
        %4138 = vmatmul.mubr.f32.gmra.mxu0 %v2571
        %v4139 = vpop.f32.mrf.mxu0
        %v4140 = vadd.f32 %v3656, %v4139
        %v4141 = vpop.f32.mrf.mxu0
        %v4142 = vadd.f32 %v3660, %v4141
        %4143 = vmatprep.mubr.f32.mxu0 0.0
        %4144 = vmatmul.mubr.f32.gmra.mxu0 %v2574
        %v4145 = vpop.f32.mrf.mxu0
        %v4146 = vadd.f32 %v3656, %v4145
        %v4147 = vpop.f32.mrf.mxu0
        %v4148 = vadd.f32 %v3660, %v4147
        %4149 = vdwg.mxu0
        %4150 = vmatprep.subr.mxu0 0.0
        %4151 = vmatpush1.msra.mxu0 0.0
        %4152 = vmatprep.subr.mxu0 0.0
        %4153 = vmatpush1.msra.mxu0 0.0
        %4154 = vmatprep.subr.mxu0 0.0
        %4155 = vmatpush1.msra.mxu0 0.0
        %4156 = vmatprep.subr.mxu0 0.0
        %4157 = vmatpush1.msra.mxu0 0.0
        %4158 = vmatprep.subr.mxu0 0.0
        %4159 = vmatpush1.msra.mxu0 0.0
        %4160 = vmatprep.subr.mxu0 0.0
        %4161 = vmatpush1.msra.mxu0 0.0
        %4162 = vmatprep.subr.mxu0 0.0
        %4163 = vmatpush1.msra.mxu0 0.0
        %4164 = vmatprep.subr.mxu0 0.0
        %4165 = vmatpush1.msra.mxu0 0.0
        %4166 = vmatprep.subr.mxu0 0.0
        %4167 = vmatpush1.msra.mxu0 0.0
        %4168 = vmatprep.subr.mxu0 0.0
        %4169 = vmatpush1.msra.mxu0 0.0
        %4170 = vmatprep.subr.mxu0 0.0
        %4171 = vmatpush1.msra.mxu0 0.0
        %4172 = vmatprep.subr.mxu0 0.0
        %4173 = vmatpush1.msra.mxu0 0.0
        %4174 = vmatprep.subr.mxu0 0.0
        %4175 = vmatpush1.msra.mxu0 0.0
        %4176 = vmatprep.subr.mxu0 0.0
        %4177 = vmatpush1.msra.mxu0 0.0
        %4178 = vmatprep.subr.mxu0 0.0
        %4179 = vmatpush1.msra.mxu0 %v3624
        %4180 = vmatprep.subr.mxu0 0.0
        %4181 = vmatpush1.msra.mxu0 %v3615
        %4182 = vmatprep.subr.mxu0 0.0
        %4183 = vmatpush2.msra.mxu0 0.0
        %4184 = vmatprep.subr.mxu0 0.0
        %4185 = vmatpush2.msra.mxu0 0.0
        %4186 = vmatprep.subr.mxu0 0.0
        %4187 = vmatpush2.msra.mxu0 0.0
        %4188 = vmatprep.subr.mxu0 0.0
        %4189 = vmatpush2.msra.mxu0 0.0
        %4190 = vmatprep.subr.mxu0 0.0
        %4191 = vmatpush2.msra.mxu0 0.0
        %4192 = vmatprep.subr.mxu0 0.0
        %4193 = vmatpush2.msra.mxu0 0.0
        %4194 = vmatprep.subr.mxu0 0.0
        %4195 = vmatpush2.msra.mxu0 0.0
        %4196 = vmatprep.subr.mxu0 0.0
        %4197 = vmatpush2.msra.mxu0 0.0
        %4198 = vmatprep.subr.mxu0 0.0
        %4199 = vmatpush2.msra.mxu0 0.0
        %4200 = vmatprep.subr.mxu0 0.0
        %4201 = vmatpush2.msra.mxu0 0.0
        %4202 = vmatprep.subr.mxu0 0.0
        %4203 = vmatpush2.msra.mxu0 0.0
        %4204 = vmatprep.subr.mxu0 0.0
        %4205 = vmatpush2.msra.mxu0 0.0
        %4206 = vmatprep.subr.mxu0 0.0
        %4207 = vmatpush2.msra.mxu0 0.0
        %4208 = vmatprep.subr.mxu0 0.0
        %4209 = vmatpush2.msra.mxu0 0.0
        %4210 = vmatprep.subr.mxu0 0.0
        %4211 = vmatpush2.msra.mxu0 0.0
        %4212 = vmatprep.subr.mxu0 0.0
        %4213 = vmatpush2.msra.mxu0 0.0
        %4214 = vmatprep.mubr.f32.mxu0 0.0
        %4215 = vmatmul.mubr.f32.gmra.mxu0 %v2550
        %v4216 = vpop.f32.mrf.mxu0
        %v4217 = vadd.f32 %v3664, %v4216
        %v4218 = vpop.f32.mrf.mxu0
        %4219 = vmatprep.mubr.f32.mxu0 0.0
        %4220 = vmatmul.mubr.f32.gmra.mxu0 %v2553
        %v4221 = vpop.f32.mrf.mxu0
        %v4222 = vadd.f32 %v3664, %v4221
        %v4223 = vpop.f32.mrf.mxu0
        %4224 = vmatprep.mubr.f32.mxu0 0.0
        %4225 = vmatmul.mubr.f32.gmra.mxu0 %v2556
        %v4226 = vpop.f32.mrf.mxu0
        %v4227 = vadd.f32 %v3664, %v4226
        %v4228 = vpop.f32.mrf.mxu0
        %4229 = vmatprep.mubr.f32.mxu0 0.0
        %4230 = vmatmul.mubr.f32.gmra.mxu0 %v2559
        %v4231 = vpop.f32.mrf.mxu0
        %v4232 = vadd.f32 %v3664, %v4231
        %v4233 = vpop.f32.mrf.mxu0
        %4234 = vmatprep.mubr.f32.mxu0 0.0
        %4235 = vmatmul.mubr.f32.gmra.mxu0 %v2562
        %v4236 = vpop.f32.mrf.mxu0
        %v4237 = vadd.f32 %v3664, %v4236
        %v4238 = vpop.f32.mrf.mxu0
        %4239 = vmatprep.mubr.f32.mxu0 0.0
        %4240 = vmatmul.mubr.f32.gmra.mxu0 %v2565
        %v4241 = vpop.f32.mrf.mxu0
        %v4242 = vadd.f32 %v3664, %v4241
        %v4243 = vpop.f32.mrf.mxu0
        %4244 = vmatprep.mubr.f32.mxu0 0.0
        %4245 = vmatmul.mubr.f32.gmra.mxu0 %v2568
        %v4246 = vpop.f32.mrf.mxu0
        %v4247 = vadd.f32 %v3664, %v4246
        %v4248 = vpop.f32.mrf.mxu0
        %4249 = vmatprep.mubr.f32.mxu0 0.0
        %4250 = vmatmul.mubr.f32.gmra.mxu0 %v2571
        %v4251 = vpop.f32.mrf.mxu0
        %v4252 = vadd.f32 %v3664, %v4251
        %v4253 = vpop.f32.mrf.mxu0
        %4254 = vmatprep.mubr.f32.mxu0 0.0
        %4255 = vmatmul.mubr.f32.gmra.mxu0 %v2574
        %v4256 = vpop.f32.mrf.mxu0
        %v4257 = vadd.f32 %v3664, %v4256
        %v4258 = vpop.f32.mrf.mxu0
        %4259 = vdwg.mxu0
        %v4260 = vmul.f32 %v3526, %v3741
        %v4261 = vmul.f32 %v3527, %v3743
        %v4262 = vmul.f32 %v3528, %v3860
        %v4263 = vmul.f32 %v3529, %v3862
        %v4264 = vmul.f32 %v3530, %v3979
        %v4265 = vmul.f32 %v3531, %v3981
        %v4266 = vmul.f32 %v3532, %v4098
        %v4267 = vmul.f32 %v3533, %v4100
        %v4268 = vmul.f32 %v3534, %v4217
        %v4269 = vmul.f32 %v3535, %v3747
        %v4270 = vmul.f32 %v3536, %v3749
        %v4271 = vmul.f32 %v3537, %v3866
        %v4272 = vmul.f32 %v3538, %v3868
        %v4273 = vmul.f32 %v3539, %v3985
        %v4274 = vmul.f32 %v3540, %v3987
        %v4275 = vmul.f32 %v3541, %v4104
        %v4276 = vmul.f32 %v3542, %v4106
        %v4277 = vmul.f32 %v3543, %v4222
        %v4278 = vmul.f32 %v3544, %v3753
        %v4279 = vmul.f32 %v3545, %v3755
        %v4280 = vmul.f32 %v3546, %v3872
        %v4281 = vmul.f32 %v3547, %v3874
        %v4282 = vmul.f32 %v3548, %v3991
        %v4283 = vmul.f32 %v3549, %v3993
        %v4284 = vmul.f32 %v3550, %v4110
        %v4285 = vmul.f32 %v3551, %v4112
        %v4286 = vmul.f32 %v3552, %v4227
        %v4287 = vmul.f32 %v3553, %v3759
        %v4288 = vmul.f32 %v3554, %v3761
        %v4289 = vmul.f32 %v3555, %v3878
        %v4290 = vmul.f32 %v3556, %v3880
        %v4291 = vmul.f32 %v3557, %v3997
        %v4292 = vmul.f32 %v3558, %v3999
        %v4293 = vmul.f32 %v3559, %v4116
        %v4294 = vmul.f32 %v3560, %v4118
        %v4295 = vmul.f32 %v3561, %v4232
        %v4296 = vmul.f32 %v3562, %v3765
        %v4297 = vmul.f32 %v3563, %v3767
        %v4298 = vmul.f32 %v3564, %v3884
        %v4299 = vmul.f32 %v3565, %v3886
        %v4300 = vmul.f32 %v3566, %v4003
        %v4301 = vmul.f32 %v3567, %v4005
        %v4302 = vmul.f32 %v3568, %v4122
        %v4303 = vmul.f32 %v3569, %v4124
        %v4304 = vmul.f32 %v3570, %v4237
        %v4305 = vmul.f32 %v3571, %v3771
        %v4306 = vmul.f32 %v3572, %v3773
        %v4307 = vmul.f32 %v3573, %v3890
        %v4308 = vmul.f32 %v3574, %v3892
        %v4309 = vmul.f32 %v3575, %v4009
        %v4310 = vmul.f32 %v3576, %v4011
        %v4311 = vmul.f32 %v3577, %v4128
        %v4312 = vmul.f32 %v3578, %v4130
        %v4313 = vmul.f32 %v3579, %v4242
        %v4314 = vmul.f32 %v3580, %v3777
        %v4315 = vmul.f32 %v3581, %v3779
        %v4316 = vmul.f32 %v3582, %v3896
        %v4317 = vmul.f32 %v3583, %v3898
        %v4318 = vmul.f32 %v3584, %v4015
        %v4319 = vmul.f32 %v3585, %v4017
        %v4320 = vmul.f32 %v3586, %v4134
        %v4321 = vmul.f32 %v3587, %v4136
        %v4322 = vmul.f32 %v3588, %v4247
        %v4323 = vmul.f32 %v3589, %v3783
        %v4324 = vmul.f32 %v3590, %v3785
        %v4325 = vmul.f32 %v3591, %v3902
        %v4326 = vmul.f32 %v3592, %v3904
        %v4327 = vmul.f32 %v3593, %v4021
        %v4328 = vmul.f32 %v3594, %v4023
        %v4329 = vmul.f32 %v3595, %v4140
        %v4330 = vmul.f32 %v3596, %v4142
        %v4331 = vmul.f32 %v3597, %v4252
        %v4332 = vmul.f32 %v3598, %v3789
        %v4333 = vmul.f32 %v3599, %v3791
        %v4334 = vmul.f32 %v3600, %v3908
        %v4335 = vmul.f32 %v3601, %v3910
        %v4336 = vmul.f32 %v3602, %v4027
        %v4337 = vmul.f32 %v3603, %v4029
        %v4338 = vmul.f32 %v3604, %v4146
        %v4339 = vmul.f32 %v3605, %v4148
        %v4340 = vmul.f32 %v3606, %v4257
        %vm4341 = vcmask 785408
        %v4343 = vsel %vm4341, %v4268, 0
        %v4346 = vsel %vm4341, %v4277, 0
        %v4349 = vsel %vm4341, %v4286, 0
        %v4352 = vsel %vm4341, %v4295, 0
        %v4355 = vsel %vm4341, %v4304, 0
        %v4358 = vsel %vm4341, %v4313, 0
        %v4361 = vsel %vm4341, %v4322, 0
        %v4364 = vsel %vm4341, %v4331, 0
        %v4367 = vsel %vm4341, %v4340, 0
        %4369 = vmatprep.subr.mxu0 0.0
        %4370 = vmatpush1.msra.mxu0 %v1334
        %4371 = vmatprep.subr.mxu0 0.0
        %4372 = vmatpush1.msra.mxu0 %v1333
        %4373 = vmatprep.subr.mxu0 0.0
        %4374 = vmatpush1.msra.mxu0 %v1332
        %4375 = vmatprep.subr.mxu0 0.0
        %4376 = vmatpush1.msra.mxu0 %v1331
        %4377 = vmatprep.subr.mxu0 0.0
        %4378 = vmatpush1.msra.mxu0 %v1330
        %4379 = vmatprep.subr.mxu0 0.0
        %4380 = vmatpush1.msra.mxu0 %v1329
        %4381 = vmatprep.subr.mxu0 0.0
        %4382 = vmatpush1.msra.mxu0 %v1328
        %4383 = vmatprep.subr.mxu0 0.0
        %4384 = vmatpush1.msra.mxu0 %v1327
        %4385 = vmatprep.subr.mxu0 0.0
        %4386 = vmatpush1.msra.mxu0 %v1326
        %4387 = vmatprep.subr.mxu0 0.0
        %4388 = vmatpush1.msra.mxu0 %v1325
        %4389 = vmatprep.subr.mxu0 0.0
        %4390 = vmatpush1.msra.mxu0 %v1324
        %4391 = vmatprep.subr.mxu0 0.0
        %4392 = vmatpush1.msra.mxu0 %v1323
        %4393 = vmatprep.subr.mxu0 0.0
        %4394 = vmatpush1.msra.mxu0 %v1322
        %4395 = vmatprep.subr.mxu0 0.0
        %4396 = vmatpush1.msra.mxu0 %v1321
        %4397 = vmatprep.subr.mxu0 0.0
        %4398 = vmatpush1.msra.mxu0 %v1320
        %4399 = vmatprep.subr.mxu0 0.0
        %4400 = vmatpush1.msra.mxu0 %v1319
        %4401 = vmatprep.subr.mxu0 0.0
        %4402 = vmatpush2.msra.mxu0 %v1350
        %4403 = vmatprep.subr.mxu0 0.0
        %4404 = vmatpush2.msra.mxu0 %v1349
        %4405 = vmatprep.subr.mxu0 0.0
        %4406 = vmatpush2.msra.mxu0 %v1348
        %4407 = vmatprep.subr.mxu0 0.0
        %4408 = vmatpush2.msra.mxu0 %v1347
        %4409 = vmatprep.subr.mxu0 0.0
        %4410 = vmatpush2.msra.mxu0 %v1346
        %4411 = vmatprep.subr.mxu0 0.0
        %4412 = vmatpush2.msra.mxu0 %v1345
        %4413 = vmatprep.subr.mxu0 0.0
        %4414 = vmatpush2.msra.mxu0 %v1344
        %4415 = vmatprep.subr.mxu0 0.0
        %4416 = vmatpush2.msra.mxu0 %v1343
        %4417 = vmatprep.subr.mxu0 0.0
        %4418 = vmatpush2.msra.mxu0 %v1342
        %4419 = vmatprep.subr.mxu0 0.0
        %4420 = vmatpush2.msra.mxu0 %v1341
        %4421 = vmatprep.subr.mxu0 0.0
        %4422 = vmatpush2.msra.mxu0 %v1340
        %4423 = vmatprep.subr.mxu0 0.0
        %4424 = vmatpush2.msra.mxu0 %v1339
        %4425 = vmatprep.subr.mxu0 0.0
        %4426 = vmatpush2.msra.mxu0 %v1338
        %4427 = vmatprep.subr.mxu0 0.0
        %4428 = vmatpush2.msra.mxu0 %v1337
        %4429 = vmatprep.subr.mxu0 0.0
        %4430 = vmatpush2.msra.mxu0 %v1336
        %4431 = vmatprep.subr.mxu0 0.0
        %4432 = vmatpush2.msra.mxu0 %v1335
        %4433 = vmatprep.mubr.f32.mxu0 %v4261
        %4434 = vmatmul.mubr.f32.gmra.mxu0 %v4260
        %v4435 = vpop.f32.mrf.mxu0
        %v4436 = vadd.f32 %v2538, %v4435
        %v4437 = vpop.f32.mrf.mxu0
        %4438 = vmatprep.mubr.f32.mxu0 %v4270
        %4439 = vmatmul.mubr.f32.gmra.mxu0 %v4269
        %v4440 = vpop.f32.mrf.mxu0
        %v4441 = vadd.f32 %v2539, %v4440
        %v4442 = vpop.f32.mrf.mxu0
        %4443 = vmatprep.mubr.f32.mxu0 %v4279
        %4444 = vmatmul.mubr.f32.gmra.mxu0 %v4278
        %v4445 = vpop.f32.mrf.mxu0
        %v4446 = vadd.f32 %v2540, %v4445
        %v4447 = vpop.f32.mrf.mxu0
        %4448 = vmatprep.mubr.f32.mxu0 %v4288
        %4449 = vmatmul.mubr.f32.gmra.mxu0 %v4287
        %v4450 = vpop.f32.mrf.mxu0
        %v4451 = vadd.f32 %v2541, %v4450
        %v4452 = vpop.f32.mrf.mxu0
        %4453 = vmatprep.mubr.f32.mxu0 %v4297
        %4454 = vmatmul.mubr.f32.gmra.mxu0 %v4296
        %v4455 = vpop.f32.mrf.mxu0
        %v4456 = vadd.f32 %v2542, %v4455
        %v4457 = vpop.f32.mrf.mxu0
        %4458 = vmatprep.mubr.f32.mxu0 %v4306
        %4459 = vmatmul.mubr.f32.gmra.mxu0 %v4305
        %v4460 = vpop.f32.mrf.mxu0
        %v4461 = vadd.f32 %v2543, %v4460
        %v4462 = vpop.f32.mrf.mxu0
        %4463 = vmatprep.mubr.f32.mxu0 %v4315
        %4464 = vmatmul.mubr.f32.gmra.mxu0 %v4314
        %v4465 = vpop.f32.mrf.mxu0
        %v4466 = vadd.f32 %v2544, %v4465
        %v4467 = vpop.f32.mrf.mxu0
        %4468 = vmatprep.mubr.f32.mxu0 %v4324
        %4469 = vmatmul.mubr.f32.gmra.mxu0 %v4323
        %v4470 = vpop.f32.mrf.mxu0
        %v4471 = vadd.f32 %v2545, %v4470
        %v4472 = vpop.f32.mrf.mxu0
        %4473 = vmatprep.mubr.f32.mxu0 %v4333
        %4474 = vmatmul.mubr.f32.gmra.mxu0 %v4332
        %v4475 = vpop.f32.mrf.mxu0
        %v4476 = vadd.f32 %v2546, %v4475
        %v4477 = vpop.f32.mrf.mxu0
        %4478 = vdwg.mxu0
        %4479 = vmatprep.subr.mxu0 0.0
        %4480 = vmatpush1.msra.mxu0 %v1366
        %4481 = vmatprep.subr.mxu0 0.0
        %4482 = vmatpush1.msra.mxu0 %v1365
        %4483 = vmatprep.subr.mxu0 0.0
        %4484 = vmatpush1.msra.mxu0 %v1364
        %4485 = vmatprep.subr.mxu0 0.0
        %4486 = vmatpush1.msra.mxu0 %v1363
        %4487 = vmatprep.subr.mxu0 0.0
        %4488 = vmatpush1.msra.mxu0 %v1362
        %4489 = vmatprep.subr.mxu0 0.0
        %4490 = vmatpush1.msra.mxu0 %v1361
        %4491 = vmatprep.subr.mxu0 0.0
        %4492 = vmatpush1.msra.mxu0 %v1360
        %4493 = vmatprep.subr.mxu0 0.0
        %4494 = vmatpush1.msra.mxu0 %v1359
        %4495 = vmatprep.subr.mxu0 0.0
        %4496 = vmatpush1.msra.mxu0 %v1358
        %4497 = vmatprep.subr.mxu0 0.0
        %4498 = vmatpush1.msra.mxu0 %v1357
        %4499 = vmatprep.subr.mxu0 0.0
        %4500 = vmatpush1.msra.mxu0 %v1356
        %4501 = vmatprep.subr.mxu0 0.0
        %4502 = vmatpush1.msra.mxu0 %v1355
        %4503 = vmatprep.subr.mxu0 0.0
        %4504 = vmatpush1.msra.mxu0 %v1354
        %4505 = vmatprep.subr.mxu0 0.0
        %4506 = vmatpush1.msra.mxu0 %v1353
        %4507 = vmatprep.subr.mxu0 0.0
        %4508 = vmatpush1.msra.mxu0 %v1352
        %4509 = vmatprep.subr.mxu0 0.0
        %4510 = vmatpush1.msra.mxu0 %v1351
        %4511 = vmatprep.subr.mxu0 0.0
        %4512 = vmatpush2.msra.mxu0 %v1382
        %4513 = vmatprep.subr.mxu0 0.0
        %4514 = vmatpush2.msra.mxu0 %v1381
        %4515 = vmatprep.subr.mxu0 0.0
        %4516 = vmatpush2.msra.mxu0 %v1380
        %4517 = vmatprep.subr.mxu0 0.0
        %4518 = vmatpush2.msra.mxu0 %v1379
        %4519 = vmatprep.subr.mxu0 0.0
        %4520 = vmatpush2.msra.mxu0 %v1378
        %4521 = vmatprep.subr.mxu0 0.0
        %4522 = vmatpush2.msra.mxu0 %v1377
        %4523 = vmatprep.subr.mxu0 0.0
        %4524 = vmatpush2.msra.mxu0 %v1376
        %4525 = vmatprep.subr.mxu0 0.0
        %4526 = vmatpush2.msra.mxu0 %v1375
        %4527 = vmatprep.subr.mxu0 0.0
        %4528 = vmatpush2.msra.mxu0 %v1374
        %4529 = vmatprep.subr.mxu0 0.0
        %4530 = vmatpush2.msra.mxu0 %v1373
        %4531 = vmatprep.subr.mxu0 0.0
        %4532 = vmatpush2.msra.mxu0 %v1372
        %4533 = vmatprep.subr.mxu0 0.0
        %4534 = vmatpush2.msra.mxu0 %v1371
        %4535 = vmatprep.subr.mxu0 0.0
        %4536 = vmatpush2.msra.mxu0 %v1370
        %4537 = vmatprep.subr.mxu0 0.0
        %4538 = vmatpush2.msra.mxu0 %v1369
        %4539 = vmatprep.subr.mxu0 0.0
        %4540 = vmatpush2.msra.mxu0 %v1368
        %4541 = vmatprep.subr.mxu0 0.0
        %4542 = vmatpush2.msra.mxu0 %v1367
        %4543 = vmatprep.mubr.f32.mxu0 %v4263
        %4544 = vmatmul.mubr.f32.gmra.mxu0 %v4262
        %v4545 = vpop.f32.mrf.mxu0
        %v4546 = vadd.f32 %v4436, %v4545
        %v4547 = vpop.f32.mrf.mxu0
        %4548 = vmatprep.mubr.f32.mxu0 %v4272
        %4549 = vmatmul.mubr.f32.gmra.mxu0 %v4271
        %v4550 = vpop.f32.mrf.mxu0
        %v4551 = vadd.f32 %v4441, %v4550
        %v4552 = vpop.f32.mrf.mxu0
        %4553 = vmatprep.mubr.f32.mxu0 %v4281
        %4554 = vmatmul.mubr.f32.gmra.mxu0 %v4280
        %v4555 = vpop.f32.mrf.mxu0
        %v4556 = vadd.f32 %v4446, %v4555
        %v4557 = vpop.f32.mrf.mxu0
        %4558 = vmatprep.mubr.f32.mxu0 %v4290
        %4559 = vmatmul.mubr.f32.gmra.mxu0 %v4289
        %v4560 = vpop.f32.mrf.mxu0
        %v4561 = vadd.f32 %v4451, %v4560
        %v4562 = vpop.f32.mrf.mxu0
        %4563 = vmatprep.mubr.f32.mxu0 %v4299
        %4564 = vmatmul.mubr.f32.gmra.mxu0 %v4298
        %v4565 = vpop.f32.mrf.mxu0
        %v4566 = vadd.f32 %v4456, %v4565
        %v4567 = vpop.f32.mrf.mxu0
        %4568 = vmatprep.mubr.f32.mxu0 %v4308
        %4569 = vmatmul.mubr.f32.gmra.mxu0 %v4307
        %v4570 = vpop.f32.mrf.mxu0
        %v4571 = vadd.f32 %v4461, %v4570
        %v4572 = vpop.f32.mrf.mxu0
        %4573 = vmatprep.mubr.f32.mxu0 %v4317
        %4574 = vmatmul.mubr.f32.gmra.mxu0 %v4316
        %v4575 = vpop.f32.mrf.mxu0
        %v4576 = vadd.f32 %v4466, %v4575
        %v4577 = vpop.f32.mrf.mxu0
        %4578 = vmatprep.mubr.f32.mxu0 %v4326
        %4579 = vmatmul.mubr.f32.gmra.mxu0 %v4325
        %v4580 = vpop.f32.mrf.mxu0
        %v4581 = vadd.f32 %v4471, %v4580
        %v4582 = vpop.f32.mrf.mxu0
        %4583 = vmatprep.mubr.f32.mxu0 %v4335
        %4584 = vmatmul.mubr.f32.gmra.mxu0 %v4334
        %v4585 = vpop.f32.mrf.mxu0
        %v4586 = vadd.f32 %v4476, %v4585
        %v4587 = vpop.f32.mrf.mxu0
        %4588 = vdwg.mxu0
        %4589 = vmatprep.subr.mxu0 0.0
        %4590 = vmatpush1.msra.mxu0 %v1398
        %4591 = vmatprep.subr.mxu0 0.0
        %4592 = vmatpush1.msra.mxu0 %v1397
        %4593 = vmatprep.subr.mxu0 0.0
        %4594 = vmatpush1.msra.mxu0 %v1396
        %4595 = vmatprep.subr.mxu0 0.0
        %4596 = vmatpush1.msra.mxu0 %v1395
        %4597 = vmatprep.subr.mxu0 0.0
        %4598 = vmatpush1.msra.mxu0 %v1394
        %4599 = vmatprep.subr.mxu0 0.0
        %4600 = vmatpush1.msra.mxu0 %v1393
        %4601 = vmatprep.subr.mxu0 0.0
        %4602 = vmatpush1.msra.mxu0 %v1392
        %4603 = vmatprep.subr.mxu0 0.0
        %4604 = vmatpush1.msra.mxu0 %v1391
        %4605 = vmatprep.subr.mxu0 0.0
        %4606 = vmatpush1.msra.mxu0 %v1390
        %4607 = vmatprep.subr.mxu0 0.0
        %4608 = vmatpush1.msra.mxu0 %v1389
        %4609 = vmatprep.subr.mxu0 0.0
        %4610 = vmatpush1.msra.mxu0 %v1388
        %4611 = vmatprep.subr.mxu0 0.0
        %4612 = vmatpush1.msra.mxu0 %v1387
        %4613 = vmatprep.subr.mxu0 0.0
        %4614 = vmatpush1.msra.mxu0 %v1386
        %4615 = vmatprep.subr.mxu0 0.0
        %4616 = vmatpush1.msra.mxu0 %v1385
        %4617 = vmatprep.subr.mxu0 0.0
        %4618 = vmatpush1.msra.mxu0 %v1384
        %4619 = vmatprep.subr.mxu0 0.0
        %4620 = vmatpush1.msra.mxu0 %v1383
        %4621 = vmatprep.subr.mxu0 0.0
        %4622 = vmatpush2.msra.mxu0 %v1414
        %4623 = vmatprep.subr.mxu0 0.0
        %4624 = vmatpush2.msra.mxu0 %v1413
        %4625 = vmatprep.subr.mxu0 0.0
        %4626 = vmatpush2.msra.mxu0 %v1412
        %4627 = vmatprep.subr.mxu0 0.0
        %4628 = vmatpush2.msra.mxu0 %v1411
        %4629 = vmatprep.subr.mxu0 0.0
        %4630 = vmatpush2.msra.mxu0 %v1410
        %4631 = vmatprep.subr.mxu0 0.0
        %4632 = vmatpush2.msra.mxu0 %v1409
        %4633 = vmatprep.subr.mxu0 0.0
        %4634 = vmatpush2.msra.mxu0 %v1408
        %4635 = vmatprep.subr.mxu0 0.0
        %4636 = vmatpush2.msra.mxu0 %v1407
        %4637 = vmatprep.subr.mxu0 0.0
        %4638 = vmatpush2.msra.mxu0 %v1406
        %4639 = vmatprep.subr.mxu0 0.0
        %4640 = vmatpush2.msra.mxu0 %v1405
        %4641 = vmatprep.subr.mxu0 0.0
        %4642 = vmatpush2.msra.mxu0 %v1404
        %4643 = vmatprep.subr.mxu0 0.0
        %4644 = vmatpush2.msra.mxu0 %v1403
        %4645 = vmatprep.subr.mxu0 0.0
        %4646 = vmatpush2.msra.mxu0 %v1402
        %4647 = vmatprep.subr.mxu0 0.0
        %4648 = vmatpush2.msra.mxu0 %v1401
        %4649 = vmatprep.subr.mxu0 0.0
        %4650 = vmatpush2.msra.mxu0 %v1400
        %4651 = vmatprep.subr.mxu0 0.0
        %4652 = vmatpush2.msra.mxu0 %v1399
        %4653 = vmatprep.mubr.f32.mxu0 %v4265
        %4654 = vmatmul.mubr.f32.gmra.mxu0 %v4264
        %v4655 = vpop.f32.mrf.mxu0
        %v4656 = vadd.f32 %v4546, %v4655
        %v4657 = vpop.f32.mrf.mxu0
        %4658 = vmatprep.mubr.f32.mxu0 %v4274
        %4659 = vmatmul.mubr.f32.gmra.mxu0 %v4273
        %v4660 = vpop.f32.mrf.mxu0
        %v4661 = vadd.f32 %v4551, %v4660
        %v4662 = vpop.f32.mrf.mxu0
        %4663 = vmatprep.mubr.f32.mxu0 %v4283
        %4664 = vmatmul.mubr.f32.gmra.mxu0 %v4282
        %v4665 = vpop.f32.mrf.mxu0
        %v4666 = vadd.f32 %v4556, %v4665
        %v4667 = vpop.f32.mrf.mxu0
        %4668 = vmatprep.mubr.f32.mxu0 %v4292
        %4669 = vmatmul.mubr.f32.gmra.mxu0 %v4291
        %v4670 = vpop.f32.mrf.mxu0
        %v4671 = vadd.f32 %v4561, %v4670
        %v4672 = vpop.f32.mrf.mxu0
        %4673 = vmatprep.mubr.f32.mxu0 %v4301
        %4674 = vmatmul.mubr.f32.gmra.mxu0 %v4300
        %v4675 = vpop.f32.mrf.mxu0
        %v4676 = vadd.f32 %v4566, %v4675
        %v4677 = vpop.f32.mrf.mxu0
        %4678 = vmatprep.mubr.f32.mxu0 %v4310
        %4679 = vmatmul.mubr.f32.gmra.mxu0 %v4309
        %v4680 = vpop.f32.mrf.mxu0
        %v4681 = vadd.f32 %v4571, %v4680
        %v4682 = vpop.f32.mrf.mxu0
        %4683 = vmatprep.mubr.f32.mxu0 %v4319
        %4684 = vmatmul.mubr.f32.gmra.mxu0 %v4318
        %v4685 = vpop.f32.mrf.mxu0
        %v4686 = vadd.f32 %v4576, %v4685
        %v4687 = vpop.f32.mrf.mxu0
        %4688 = vmatprep.mubr.f32.mxu0 %v4328
        %4689 = vmatmul.mubr.f32.gmra.mxu0 %v4327
        %v4690 = vpop.f32.mrf.mxu0
        %v4691 = vadd.f32 %v4581, %v4690
        %v4692 = vpop.f32.mrf.mxu0
        %4693 = vmatprep.mubr.f32.mxu0 %v4337
        %4694 = vmatmul.mubr.f32.gmra.mxu0 %v4336
        %v4695 = vpop.f32.mrf.mxu0
        %v4696 = vadd.f32 %v4586, %v4695
        %v4697 = vpop.f32.mrf.mxu0
        %4698 = vdwg.mxu0
        %4699 = vmatprep.subr.mxu0 0.0
        %4700 = vmatpush1.msra.mxu0 %v1430
        %4701 = vmatprep.subr.mxu0 0.0
        %4702 = vmatpush1.msra.mxu0 %v1429
        %4703 = vmatprep.subr.mxu0 0.0
        %4704 = vmatpush1.msra.mxu0 %v1428
        %4705 = vmatprep.subr.mxu0 0.0
        %4706 = vmatpush1.msra.mxu0 %v1427
        %4707 = vmatprep.subr.mxu0 0.0
        %4708 = vmatpush1.msra.mxu0 %v1426
        %4709 = vmatprep.subr.mxu0 0.0
        %4710 = vmatpush1.msra.mxu0 %v1425
        %4711 = vmatprep.subr.mxu0 0.0
        %4712 = vmatpush1.msra.mxu0 %v1424
        %4713 = vmatprep.subr.mxu0 0.0
        %4714 = vmatpush1.msra.mxu0 %v1423
        %4715 = vmatprep.subr.mxu0 0.0
        %4716 = vmatpush1.msra.mxu0 %v1422
        %4717 = vmatprep.subr.mxu0 0.0
        %4718 = vmatpush1.msra.mxu0 %v1421
        %4719 = vmatprep.subr.mxu0 0.0
        %4720 = vmatpush1.msra.mxu0 %v1420
        %4721 = vmatprep.subr.mxu0 0.0
        %4722 = vmatpush1.msra.mxu0 %v1419
        %4723 = vmatprep.subr.mxu0 0.0
        %4724 = vmatpush1.msra.mxu0 %v1418
        %4725 = vmatprep.subr.mxu0 0.0
        %4726 = vmatpush1.msra.mxu0 %v1417
        %4727 = vmatprep.subr.mxu0 0.0
        %4728 = vmatpush1.msra.mxu0 %v1416
        %4729 = vmatprep.subr.mxu0 0.0
        %4730 = vmatpush1.msra.mxu0 %v1415
        %4731 = vmatprep.subr.mxu0 0.0
        %4732 = vmatpush2.msra.mxu0 %v1446
        %4733 = vmatprep.subr.mxu0 0.0
        %4734 = vmatpush2.msra.mxu0 %v1445
        %4735 = vmatprep.subr.mxu0 0.0
        %4736 = vmatpush2.msra.mxu0 %v1444
        %4737 = vmatprep.subr.mxu0 0.0
        %4738 = vmatpush2.msra.mxu0 %v1443
        %4739 = vmatprep.subr.mxu0 0.0
        %4740 = vmatpush2.msra.mxu0 %v1442
        %4741 = vmatprep.subr.mxu0 0.0
        %4742 = vmatpush2.msra.mxu0 %v1441
        %4743 = vmatprep.subr.mxu0 0.0
        %4744 = vmatpush2.msra.mxu0 %v1440
        %4745 = vmatprep.subr.mxu0 0.0
        %4746 = vmatpush2.msra.mxu0 %v1439
        %4747 = vmatprep.subr.mxu0 0.0
        %4748 = vmatpush2.msra.mxu0 %v1438
        %4749 = vmatprep.subr.mxu0 0.0
        %4750 = vmatpush2.msra.mxu0 %v1437
        %4751 = vmatprep.subr.mxu0 0.0
        %4752 = vmatpush2.msra.mxu0 %v1436
        %4753 = vmatprep.subr.mxu0 0.0
        %4754 = vmatpush2.msra.mxu0 %v1435
        %4755 = vmatprep.subr.mxu0 0.0
        %4756 = vmatpush2.msra.mxu0 %v1434
        %4757 = vmatprep.subr.mxu0 0.0
        %4758 = vmatpush2.msra.mxu0 %v1433
        %4759 = vmatprep.subr.mxu0 0.0
        %4760 = vmatpush2.msra.mxu0 %v1432
        %4761 = vmatprep.subr.mxu0 0.0
        %4762 = vmatpush2.msra.mxu0 %v1431
        %4763 = vmatprep.mubr.f32.mxu0 %v4267
        %4764 = vmatmul.mubr.f32.gmra.mxu0 %v4266
        %v4765 = vpop.f32.mrf.mxu0
        %v4766 = vadd.f32 %v4656, %v4765
        %v4767 = vpop.f32.mrf.mxu0
        %4768 = vmatprep.mubr.f32.mxu0 %v4276
        %4769 = vmatmul.mubr.f32.gmra.mxu0 %v4275
        %v4770 = vpop.f32.mrf.mxu0
        %v4771 = vadd.f32 %v4661, %v4770
        %v4772 = vpop.f32.mrf.mxu0
        %4773 = vmatprep.mubr.f32.mxu0 %v4285
        %4774 = vmatmul.mubr.f32.gmra.mxu0 %v4284
        %v4775 = vpop.f32.mrf.mxu0
        %v4776 = vadd.f32 %v4666, %v4775
        %v4777 = vpop.f32.mrf.mxu0
        %4778 = vmatprep.mubr.f32.mxu0 %v4294
        %4779 = vmatmul.mubr.f32.gmra.mxu0 %v4293
        %v4780 = vpop.f32.mrf.mxu0
        %v4781 = vadd.f32 %v4671, %v4780
        %v4782 = vpop.f32.mrf.mxu0
        %4783 = vmatprep.mubr.f32.mxu0 %v4303
        %4784 = vmatmul.mubr.f32.gmra.mxu0 %v4302
        %v4785 = vpop.f32.mrf.mxu0
        %v4786 = vadd.f32 %v4676, %v4785
        %v4787 = vpop.f32.mrf.mxu0
        %4788 = vmatprep.mubr.f32.mxu0 %v4312
        %4789 = vmatmul.mubr.f32.gmra.mxu0 %v4311
        %v4790 = vpop.f32.mrf.mxu0
        %v4791 = vadd.f32 %v4681, %v4790
        %v4792 = vpop.f32.mrf.mxu0
        %4793 = vmatprep.mubr.f32.mxu0 %v4321
        %4794 = vmatmul.mubr.f32.gmra.mxu0 %v4320
        %v4795 = vpop.f32.mrf.mxu0
        %v4796 = vadd.f32 %v4686, %v4795
        %v4797 = vpop.f32.mrf.mxu0
        %4798 = vmatprep.mubr.f32.mxu0 %v4330
        %4799 = vmatmul.mubr.f32.gmra.mxu0 %v4329
        %v4800 = vpop.f32.mrf.mxu0
        %v4801 = vadd.f32 %v4691, %v4800
        %v4802 = vpop.f32.mrf.mxu0
        %4803 = vmatprep.mubr.f32.mxu0 %v4339
        %4804 = vmatmul.mubr.f32.gmra.mxu0 %v4338
        %v4805 = vpop.f32.mrf.mxu0
        %v4806 = vadd.f32 %v4696, %v4805
        %v4807 = vpop.f32.mrf.mxu0
        %4808 = vdwg.mxu0
        %4809 = vmatprep.subr.mxu0 0.0
        %4810 = vmatpush1.msra.mxu0 0.0
        %4811 = vmatprep.subr.mxu0 0.0
        %4812 = vmatpush1.msra.mxu0 0.0
        %4813 = vmatprep.subr.mxu0 0.0
        %4814 = vmatpush1.msra.mxu0 0.0
        %4815 = vmatprep.subr.mxu0 0.0
        %4816 = vmatpush1.msra.mxu0 0.0
        %4817 = vmatprep.subr.mxu0 0.0
        %4818 = vmatpush1.msra.mxu0 %v1458
        %4819 = vmatprep.subr.mxu0 0.0
        %4820 = vmatpush1.msra.mxu0 %v1457
        %4821 = vmatprep.subr.mxu0 0.0
        %4822 = vmatpush1.msra.mxu0 %v1456
        %4823 = vmatprep.subr.mxu0 0.0
        %4824 = vmatpush1.msra.mxu0 %v1455
        %4825 = vmatprep.subr.mxu0 0.0
        %4826 = vmatpush1.msra.mxu0 %v1454
        %4827 = vmatprep.subr.mxu0 0.0
        %4828 = vmatpush1.msra.mxu0 %v1453
        %4829 = vmatprep.subr.mxu0 0.0
        %4830 = vmatpush1.msra.mxu0 %v1452
        %4831 = vmatprep.subr.mxu0 0.0
        %4832 = vmatpush1.msra.mxu0 %v1451
        %4833 = vmatprep.subr.mxu0 0.0
        %4834 = vmatpush1.msra.mxu0 %v1450
        %4835 = vmatprep.subr.mxu0 0.0
        %4836 = vmatpush1.msra.mxu0 %v1449
        %4837 = vmatprep.subr.mxu0 0.0
        %4838 = vmatpush1.msra.mxu0 %v1448
        %4839 = vmatprep.subr.mxu0 0.0
        %4840 = vmatpush1.msra.mxu0 %v1447
        %4841 = vmatprep.subr.mxu0 0.0
        %4842 = vmatpush2.msra.mxu0 0.0
        %4843 = vmatprep.subr.mxu0 0.0
        %4844 = vmatpush2.msra.mxu0 0.0
        %4845 = vmatprep.subr.mxu0 0.0
        %4846 = vmatpush2.msra.mxu0 0.0
        %4847 = vmatprep.subr.mxu0 0.0
        %4848 = vmatpush2.msra.mxu0 0.0
        %4849 = vmatprep.subr.mxu0 0.0
        %4850 = vmatpush2.msra.mxu0 0.0
        %4851 = vmatprep.subr.mxu0 0.0
        %4852 = vmatpush2.msra.mxu0 0.0
        %4853 = vmatprep.subr.mxu0 0.0
        %4854 = vmatpush2.msra.mxu0 0.0
        %4855 = vmatprep.subr.mxu0 0.0
        %4856 = vmatpush2.msra.mxu0 0.0
        %4857 = vmatprep.subr.mxu0 0.0
        %4858 = vmatpush2.msra.mxu0 0.0
        %4859 = vmatprep.subr.mxu0 0.0
        %4860 = vmatpush2.msra.mxu0 0.0
        %4861 = vmatprep.subr.mxu0 0.0
        %4862 = vmatpush2.msra.mxu0 0.0
        %4863 = vmatprep.subr.mxu0 0.0
        %4864 = vmatpush2.msra.mxu0 0.0
        %4865 = vmatprep.subr.mxu0 0.0
        %4866 = vmatpush2.msra.mxu0 0.0
        %4867 = vmatprep.subr.mxu0 0.0
        %4868 = vmatpush2.msra.mxu0 0.0
        %4869 = vmatprep.subr.mxu0 0.0
        %4870 = vmatpush2.msra.mxu0 0.0
        %4871 = vmatprep.subr.mxu0 0.0
        %4872 = vmatpush2.msra.mxu0 0.0
        %4873 = vmatprep.mubr.f32.mxu0 0.0
        %4874 = vmatmul.mubr.f32.gmra.mxu0 %v4343
        %v4875 = vpop.f32.mrf.mxu0
        %v4876 = vadd.f32 %v4766, %v4875
        %v4877 = vpop.f32.mrf.mxu0
        %4878 = vmatprep.mubr.f32.mxu0 0.0
        %4879 = vmatmul.mubr.f32.gmra.mxu0 %v4346
        %v4880 = vpop.f32.mrf.mxu0
        %v4881 = vadd.f32 %v4771, %v4880
        %v4882 = vpop.f32.mrf.mxu0
        %4883 = vmatprep.mubr.f32.mxu0 0.0
        %4884 = vmatmul.mubr.f32.gmra.mxu0 %v4349
        %v4885 = vpop.f32.mrf.mxu0
        %v4886 = vadd.f32 %v4776, %v4885
        %v4887 = vpop.f32.mrf.mxu0
        %4888 = vmatprep.mubr.f32.mxu0 0.0
        %4889 = vmatmul.mubr.f32.gmra.mxu0 %v4352
        %v4890 = vpop.f32.mrf.mxu0
        %v4891 = vadd.f32 %v4781, %v4890
        %v4892 = vpop.f32.mrf.mxu0
        %4893 = vmatprep.mubr.f32.mxu0 0.0
        %4894 = vmatmul.mubr.f32.gmra.mxu0 %v4355
        %v4895 = vpop.f32.mrf.mxu0
        %v4896 = vadd.f32 %v4786, %v4895
        %v4897 = vpop.f32.mrf.mxu0
        %4898 = vmatprep.mubr.f32.mxu0 0.0
        %4899 = vmatmul.mubr.f32.gmra.mxu0 %v4358
        %v4900 = vpop.f32.mrf.mxu0
        %v4901 = vadd.f32 %v4791, %v4900
        %v4902 = vpop.f32.mrf.mxu0
        %4903 = vmatprep.mubr.f32.mxu0 0.0
        %4904 = vmatmul.mubr.f32.gmra.mxu0 %v4361
        %v4905 = vpop.f32.mrf.mxu0
        %v4906 = vadd.f32 %v4796, %v4905
        %v4907 = vpop.f32.mrf.mxu0
        %4908 = vmatprep.mubr.f32.mxu0 0.0
        %4909 = vmatmul.mubr.f32.gmra.mxu0 %v4364
        %v4910 = vpop.f32.mrf.mxu0
        %v4911 = vadd.f32 %v4801, %v4910
        %v4912 = vpop.f32.mrf.mxu0
        %4913 = vmatprep.mubr.f32.mxu0 0.0
        %4914 = vmatmul.mubr.f32.gmra.mxu0 %v4367
        %v4915 = vpop.f32.mrf.mxu0
        %v4916 = vadd.f32 %v4806, %v4915
        %v4917 = vpop.f32.mrf.mxu0
        %4918 = vdwg.mxu0
        %v4919 = vld [vmem:[#allocation25] sm:$0xff]
        %v4920 = vld [vmem:[#allocation25 + $0x8] sm:$0xff]
        %v4922 = vsel %vm1515, %v4876, 0
        %v4925 = vsel %vm1515, %v4881, 0
        %v4928 = vsel %vm1515, %v4886, 0
        %v4931 = vsel %vm1515, %v4891, 0
        %v4934 = vsel %vm1515, %v4896, 0
        %v4937 = vsel %vm1515, %v4901, 0
        %v4940 = vsel %vm1515, %v4906, 0
        %v4943 = vsel %vm1515, %v4911, 0
        %v4946 = vsel %vm1515, %v4916, 0
        %4948 = vmatprep.subr.mxu0 0.0
        %4949 = vmatpush1.msra.mxu0 0.0
        %4950 = vmatprep.subr.mxu0 0.0
        %4951 = vmatpush1.msra.mxu0 0.0
        %4952 = vmatprep.subr.mxu0 0.0
        %4953 = vmatpush1.msra.mxu0 0.0
        %4954 = vmatprep.subr.mxu0 0.0
        %4955 = vmatpush1.msra.mxu0 0.0
        %4956 = vmatprep.subr.mxu0 0.0
        %4957 = vmatpush1.msra.mxu0 0.0
        %4958 = vmatprep.subr.mxu0 0.0
        %4959 = vmatpush1.msra.mxu0 0.0
        %4960 = vmatprep.subr.mxu0 0.0
        %4961 = vmatpush1.msra.mxu0 0.0
        %4962 = vmatprep.subr.mxu0 0.0
        %4963 = vmatpush1.msra.mxu0 0.0
        %4964 = vmatprep.subr.mxu0 0.0
        %4965 = vmatpush1.msra.mxu0 0.0
        %4966 = vmatprep.subr.mxu0 0.0
        %4967 = vmatpush1.msra.mxu0 0.0
        %4968 = vmatprep.subr.mxu0 0.0
        %4969 = vmatpush1.msra.mxu0 0.0
        %4970 = vmatprep.subr.mxu0 0.0
        %4971 = vmatpush1.msra.mxu0 0.0
        %4972 = vmatprep.subr.mxu0 0.0
        %4973 = vmatpush1.msra.mxu0 0.0
        %4974 = vmatprep.subr.mxu0 0.0
        %4975 = vmatpush1.msra.mxu0 0.0
        %4976 = vmatprep.subr.mxu0 0.0
        %4977 = vmatpush1.msra.mxu0 %v4920
        %4978 = vmatprep.subr.mxu0 0.0
        %4979 = vmatpush1.msra.mxu0 %v4919
        %4980 = vmatprep.subr.mxu0 0.0
        %4981 = vmatpush2.msra.mxu0 0.0
        %4982 = vmatprep.subr.mxu0 0.0
        %4983 = vmatpush2.msra.mxu0 0.0
        %4984 = vmatprep.subr.mxu0 0.0
        %4985 = vmatpush2.msra.mxu0 0.0
        %4986 = vmatprep.subr.mxu0 0.0
        %4987 = vmatpush2.msra.mxu0 0.0
        %4988 = vmatprep.subr.mxu0 0.0
        %4989 = vmatpush2.msra.mxu0 0.0
        %4990 = vmatprep.subr.mxu0 0.0
        %4991 = vmatpush2.msra.mxu0 0.0
        %4992 = vmatprep.subr.mxu0 0.0
        %4993 = vmatpush2.msra.mxu0 0.0
        %4994 = vmatprep.subr.mxu0 0.0
        %4995 = vmatpush2.msra.mxu0 0.0
        %4996 = vmatprep.subr.mxu0 0.0
        %4997 = vmatpush2.msra.mxu0 0.0
        %4998 = vmatprep.subr.mxu0 0.0
        %4999 = vmatpush2.msra.mxu0 0.0
        %5000 = vmatprep.subr.mxu0 0.0
        %5001 = vmatpush2.msra.mxu0 0.0
        %5002 = vmatprep.subr.mxu0 0.0
        %5003 = vmatpush2.msra.mxu0 0.0
        %5004 = vmatprep.subr.mxu0 0.0
        %5005 = vmatpush2.msra.mxu0 0.0
        %5006 = vmatprep.subr.mxu0 0.0
        %5007 = vmatpush2.msra.mxu0 0.0
        %5008 = vmatprep.subr.mxu0 0.0
        %5009 = vmatpush2.msra.mxu0 0.0
        %5010 = vmatprep.subr.mxu0 0.0
        %5011 = vmatpush2.msra.mxu0 0.0
        %5012 = vmatprep.mubr.f32.mxu0 0.0
        %5013 = vmatmul.mubr.f32.gmra.mxu0 %v4922
        %v5014 = vpop.f32.mrf.mxu0
        %v5015 = vadd.f32 0.0, %v5014
        %v5016 = vpop.f32.mrf.mxu0
        %5017 = vmatprep.mubr.f32.mxu0 0.0
        %5018 = vmatmul.mubr.f32.gmra.mxu0 %v4925
        %v5019 = vpop.f32.mrf.mxu0
        %v5020 = vadd.f32 0.0, %v5019
        %v5021 = vpop.f32.mrf.mxu0
        %5022 = vmatprep.mubr.f32.mxu0 0.0
        %5023 = vmatmul.mubr.f32.gmra.mxu0 %v4928
        %v5024 = vpop.f32.mrf.mxu0
        %v5025 = vadd.f32 0.0, %v5024
        %v5026 = vpop.f32.mrf.mxu0
        %5027 = vmatprep.mubr.f32.mxu0 0.0
        %5028 = vmatmul.mubr.f32.gmra.mxu0 %v4931
        %v5029 = vpop.f32.mrf.mxu0
        %v5030 = vadd.f32 0.0, %v5029
        %v5031 = vpop.f32.mrf.mxu0
        %5032 = vmatprep.mubr.f32.mxu0 0.0
        %5033 = vmatmul.mubr.f32.gmra.mxu0 %v4934
        %v5034 = vpop.f32.mrf.mxu0
        %v5035 = vadd.f32 0.0, %v5034
        %v5036 = vpop.f32.mrf.mxu0
        %5037 = vmatprep.mubr.f32.mxu0 0.0
        %5038 = vmatmul.mubr.f32.gmra.mxu0 %v4937
        %v5039 = vpop.f32.mrf.mxu0
        %v5040 = vadd.f32 0.0, %v5039
        %v5041 = vpop.f32.mrf.mxu0
        %5042 = vmatprep.mubr.f32.mxu0 0.0
        %5043 = vmatmul.mubr.f32.gmra.mxu0 %v4940
        %v5044 = vpop.f32.mrf.mxu0
        %v5045 = vadd.f32 0.0, %v5044
        %v5046 = vpop.f32.mrf.mxu0
        %5047 = vmatprep.mubr.f32.mxu0 0.0
        %5048 = vmatmul.mubr.f32.gmra.mxu0 %v4943
        %v5049 = vpop.f32.mrf.mxu0
        %v5050 = vadd.f32 0.0, %v5049
        %v5051 = vpop.f32.mrf.mxu0
        %5052 = vmatprep.mubr.f32.mxu0 0.0
        %5053 = vmatmul.mubr.f32.gmra.mxu0 %v4946
        %v5054 = vpop.f32.mrf.mxu0
        %v5055 = vadd.f32 0.0, %v5054
        %v5056 = vpop.f32.mrf.mxu0
        %5057 = vdwg.mxu0
        %v5058 = vld [vmem:[#allocation27] sm:$0x1]
        %v5060 = vlaneseq
        %v5061 = vshrl.u32 %v5060, 7
        %v5062 = vsub.s32 0, %v5061
        %v5063 = vrot.slane %v5058, %v5062
        %v5065 = vadd.f32 %v5015, %v5063
        %v5066 = vadd.f32 %v5020, %v5063
        %v5067 = vadd.f32 %v5025, %v5063
        %v5068 = vadd.f32 %v5030, %v5063
        %v5069 = vadd.f32 %v5035, %v5063
        %v5070 = vld [vmem:[#allocation28] sm:$0x1]
        %v5072 = vlaneseq
        %v5073 = vshrl.u32 %v5072, 7
        %v5074 = vsub.s32 0, %v5073
        %v5075 = vrot.slane %v5070, %v5074
        %5076 = vrot.lane.b32.xlu0 %v5075, 16
        %v5077 = vpop.permute.xlu0 %5076
        %v5079 = vadd.f32 %v5035, %v5077
        %v5080 = vadd.f32 %v5040, %v5077
        %v5081 = vadd.f32 %v5045, %v5077
        %v5082 = vadd.f32 %v5050, %v5077
        %v5083 = vadd.f32 %v5055, %v5077
        %v5089 = vrot.slane %v5035, 3
        %v5090 = vrot.slane %v5040, 3
        %v5091 = vsel %vm1832, %v5089, %v5090
        %v5092 = vrot.slane %v5045, 3
        %v5093 = vsel %vm1832, %v5090, %v5092
        %v5094 = vrot.slane %v5050, 3
        %v5095 = vsel %vm1832, %v5092, %v5094
        %v5096 = vrot.slane %v5055, 3
        %v5097 = vsel %vm1832, %v5094, %v5096
        %v5103 = vsub.f32 %v5015, %v5091
        %v5104 = vsub.f32 %v5020, %v5093
        %v5105 = vsub.f32 %v5025, %v5095
        %v5106 = vsub.f32 %v5030, %v5097
        %v5107 = vsub.f32 %v5035, %v5096
        %v5108 = vld [vmem:[#allocation30] sm:$0x1]
        %v5110 = vlaneseq
        %v5111 = vshrl.u32 %v5110, 7
        %v5112 = vsub.s32 0, %v5111
        %v5113 = vrot.slane %v5108, %v5112
        %5114 = vrot.lane.b32.xlu0 %v5113, 32
        %v5115 = vpop.permute.xlu0 %5114
        %v5117 = vadd.f32 %v5103, %v5115
        %v5118 = vadd.f32 %v5104, %v5115
        %v5119 = vadd.f32 %v5105, %v5115
        %v5120 = vadd.f32 %v5106, %v5115
        %v5121 = vadd.f32 %v5107, %v5115
        %v5122 = vld [vmem:[#allocation31] sm:$0x1]
        %v5124 = vlaneseq
        %v5125 = vshrl.u32 %v5124, 7
        %v5126 = vsub.s32 0, %v5125
        %v5127 = vrot.slane %v5122, %v5126
        %5128 = vrot.lane.b32.xlu0 %v5127, 48
        %v5129 = vpop.permute.xlu0 %5128
        %v5131 = vadd.f32 %v5015, %v5129
        %v5132 = vadd.f32 %v5020, %v5129
        %v5133 = vadd.f32 %v5025, %v5129
        %v5134 = vadd.f32 %v5030, %v5129
        %v5135 = vadd.f32 %v5035, %v5129
        %v5136 = vadd.f32 %v5040, %v5129
        %v5137 = vadd.f32 %v5045, %v5129
        %v5138 = vadd.f32 %v5050, %v5129
        %v5139 = vadd.f32 %v5055, %v5129
        %v5145 = vrot.slane %v5079, 3
        %v5146 = vrot.slane %v5080, 3
        %v5147 = vsel %vm1832, %v5145, %v5146
        %v5148 = vrot.slane %v5081, 3
        %v5149 = vsel %vm1832, %v5146, %v5148
        %v5150 = vrot.slane %v5082, 3
        %v5151 = vsel %vm1832, %v5148, %v5150
        %v5152 = vrot.slane %v5083, 3
        %v5153 = vsel %vm1832, %v5150, %v5152
        %5154 = vrot.lane.b32.xlu0 %v5147, 112
        %v5155 = vpop.permute.xlu0 %5154
        %5156 = vrot.lane.b32.xlu0 %v5149, 112
        %v5157 = vpop.permute.xlu0 %5156
        %5158 = vrot.lane.b32.xlu0 %v5151, 112
        %v5159 = vpop.permute.xlu0 %5158
        %5160 = vrot.lane.b32.xlu0 %v5153, 112
        %v5161 = vpop.permute.xlu0 %5160
        %5162 = vrot.lane.b32.xlu0 %v5152, 112
        %v5163 = vpop.permute.xlu0 %5162
        %v5165 = vsel %vm1515, %v5065, 0
        %v5168 = vsel %vm1515, %v5066, 0
        %v5171 = vsel %vm1515, %v5067, 0
        %v5174 = vsel %vm1515, %v5068, 0
        %v5177 = vsel %vm1515, %v5069, 0
        %v5179 = vsel %vm1515, %v5155, 0
        %v5181 = vsel %vm1515, %v5157, 0
        %v5183 = vsel %vm1515, %v5159, 0
        %v5185 = vsel %vm1515, %v5161, 0
        %v5187 = vsel %vm1515, %v5163, 0
        %5189 = vmatprep.subr.mxu0 0.0
        %5190 = vmatpush1.xpose.msra.mxu0 0.0
        %5191 = vmatprep.subr.mxu0 0.0
        %5192 = vmatpush1.xpose.msra.mxu0 0.0
        %5193 = vmatprep.subr.mxu0 0.0
        %5194 = vmatpush1.xpose.msra.mxu0 0.0
        %5195 = vmatprep.subr.mxu0 0.0
        %5196 = vmatpush1.xpose.msra.mxu0 0.0
        %5197 = vmatprep.subr.mxu0 0.0
        %5198 = vmatpush1.xpose.msra.mxu0 0.0
        %5199 = vmatprep.subr.mxu0 0.0
        %5200 = vmatpush1.xpose.msra.mxu0 0.0
        %5201 = vmatprep.subr.mxu0 0.0
        %5202 = vmatpush1.xpose.msra.mxu0 0.0
        %5203 = vmatprep.subr.mxu0 0.0
        %5204 = vmatpush1.xpose.msra.mxu0 0.0
        %5205 = vmatprep.subr.mxu0 0.0
        %5206 = vmatpush1.xpose.msra.mxu0 0.0
        %5207 = vmatprep.subr.mxu0 0.0
        %5208 = vmatpush1.xpose.msra.mxu0 0.0
        %5209 = vmatprep.subr.mxu0 0.0
        %5210 = vmatpush1.xpose.msra.mxu0 0.0
        %5211 = vmatprep.subr.mxu0 0.0
        %5212 = vmatpush1.xpose.msra.mxu0 %v5187
        %5213 = vmatprep.subr.mxu0 0.0
        %5214 = vmatpush1.xpose.msra.mxu0 %v5185
        %5215 = vmatprep.subr.mxu0 0.0
        %5216 = vmatpush1.xpose.msra.mxu0 %v5183
        %5217 = vmatprep.subr.mxu0 0.0
        %5218 = vmatpush1.xpose.msra.mxu0 %v5181
        %5219 = vmatprep.subr.mxu0 0.0
        %5220 = vmatpush1.xpose.msra.mxu0 %v5179
        %5221 = vmatprep.subr.mxu0 0.0
        %5222 = vmatpush2.xpose.msra.mxu0 0.0
        %5223 = vmatprep.subr.mxu0 0.0
        %5224 = vmatpush2.xpose.msra.mxu0 0.0
        %5225 = vmatprep.subr.mxu0 0.0
        %5226 = vmatpush2.xpose.msra.mxu0 0.0
        %5227 = vmatprep.subr.mxu0 0.0
        %5228 = vmatpush2.xpose.msra.mxu0 0.0
        %5229 = vmatprep.subr.mxu0 0.0
        %5230 = vmatpush2.xpose.msra.mxu0 0.0
        %5231 = vmatprep.subr.mxu0 0.0
        %5232 = vmatpush2.xpose.msra.mxu0 0.0
        %5233 = vmatprep.subr.mxu0 0.0
        %5234 = vmatpush2.xpose.msra.mxu0 0.0
        %5235 = vmatprep.subr.mxu0 0.0
        %5236 = vmatpush2.xpose.msra.mxu0 0.0
        %5237 = vmatprep.subr.mxu0 0.0
        %5238 = vmatpush2.xpose.msra.mxu0 0.0
        %5239 = vmatprep.subr.mxu0 0.0
        %5240 = vmatpush2.xpose.msra.mxu0 0.0
        %5241 = vmatprep.subr.mxu0 0.0
        %5242 = vmatpush2.xpose.msra.mxu0 0.0
        %5243 = vmatprep.subr.mxu0 0.0
        %5244 = vmatpush2.xpose.msra.mxu0 0.0
        %5245 = vmatprep.subr.mxu0 0.0
        %5246 = vmatpush2.xpose.msra.mxu0 0.0
        %5247 = vmatprep.subr.mxu0 0.0
        %5248 = vmatpush2.xpose.msra.mxu0 0.0
        %5249 = vmatprep.subr.mxu0 0.0
        %5250 = vmatpush2.xpose.msra.mxu0 0.0
        %5251 = vmatprep.subr.mxu0 0.0
        %5252 = vmatpush2.xpose.msra.mxu0 0.0
        %5253 = vmatprep.mubr.f32.mxu0 0.0
        %5254 = vmatmul.mubr.f32.gmra.mxu0 %v5165
        %v5255 = vpop.f32.mrf.mxu0
        %v5256 = vadd.f32 0.0, %v5255
        %v5257 = vpop.f32.mrf.mxu0
        %5258 = vmatprep.mubr.f32.mxu0 0.0
        %5259 = vmatmul.mubr.f32.gmra.mxu0 %v5168
        %v5260 = vpop.f32.mrf.mxu0
        %v5261 = vadd.f32 0.0, %v5260
        %v5262 = vpop.f32.mrf.mxu0
        %5263 = vmatprep.mubr.f32.mxu0 0.0
        %5264 = vmatmul.mubr.f32.gmra.mxu0 %v5171
        %v5265 = vpop.f32.mrf.mxu0
        %v5266 = vadd.f32 0.0, %v5265
        %v5267 = vpop.f32.mrf.mxu0
        %5268 = vmatprep.mubr.f32.mxu0 0.0
        %5269 = vmatmul.mubr.f32.gmra.mxu0 %v5174
        %v5270 = vpop.f32.mrf.mxu0
        %v5271 = vadd.f32 0.0, %v5270
        %v5272 = vpop.f32.mrf.mxu0
        %5273 = vmatprep.mubr.f32.mxu0 0.0
        %5274 = vmatmul.mubr.f32.gmra.mxu0 %v5177
        %v5275 = vpop.f32.mrf.mxu0
        %v5276 = vadd.f32 0.0, %v5275
        %v5277 = vpop.f32.mrf.mxu0
        %5278 = vdwg.mxu0
        %v5279 = vsel %vm2023, %v5256, -inf
        %5280 = vmax.xlane.f32.xlu0 %v5279
        %v5281 = vpop.xlane.xlu0 %5280
        %v5282 = vsel %vm2023, %v5261, -inf
        %5283 = vmax.xlane.f32.xlu0 %v5282
        %v5284 = vpop.xlane.xlu0 %5283
        %v5285 = vsel %vm2023, %v5266, -inf
        %5286 = vmax.xlane.f32.xlu0 %v5285
        %v5287 = vpop.xlane.xlu0 %5286
        %v5288 = vsel %vm2023, %v5271, -inf
        %5289 = vmax.xlane.f32.xlu0 %v5288
        %v5290 = vpop.xlane.xlu0 %5289
        %v5291 = vsel %vm2036, %v5276, -inf
        %5292 = vmax.xlane.f32.xlu0 %v5291
        %v5293 = vpop.xlane.xlu0 %5292
        %v5294 = vsub.f32 %v5256, %v5281
        %v5295 = vsub.f32 %v5261, %v5284
        %v5296 = vsub.f32 %v5266, %v5287
        %v5297 = vsub.f32 %v5271, %v5290
        %v5298 = vsub.f32 %v5276, %v5293
        %v5299 = vmul.f32 %v5294, 1.442695
        %v5300 = vpow.pop %v5299
        %v5301 = vmul.f32 %v5295, 1.442695
        %v5302 = vpow.pop %v5301
        %v5303 = vmul.f32 %v5296, 1.442695
        %v5304 = vpow.pop %v5303
        %v5305 = vmul.f32 %v5297, 1.442695
        %v5306 = vpow.pop %v5305
        %v5307 = vmul.f32 %v5298, 1.442695
        %v5308 = vpow.pop %v5307
        %v5309 = vsel %vm2023, %v5300, 0.0
        %5310 = vadd.xlane.f32.xlu0 %v5309
        %v5311 = vpop.xlane.xlu0 %5310
        %v5312 = vsel %vm2023, %v5302, 0.0
        %5313 = vadd.xlane.f32.xlu0 %v5312
        %v5314 = vpop.xlane.xlu0 %5313
        %v5315 = vsel %vm2023, %v5304, 0.0
        %5316 = vadd.xlane.f32.xlu0 %v5315
        %v5317 = vpop.xlane.xlu0 %5316
        %v5318 = vsel %vm2023, %v5306, 0.0
        %5319 = vadd.xlane.f32.xlu0 %v5318
        %v5320 = vpop.xlane.xlu0 %5319
        %v5321 = vsel %vm2036, %v5308, 0.0
        %5322 = vadd.xlane.f32.xlu0 %v5321
        %v5323 = vpop.xlane.xlu0 %5322
        %v5324 = vrcp.pop %v5311
        %v5325 = vrcp.pop %v5314
        %v5326 = vrcp.pop %v5317
        %v5327 = vrcp.pop %v5320
        %v5328 = vrcp.pop %v5323
        %v5329 = vmul.f32 %v5300, %v5324
        %v5330 = vmul.f32 %v5302, %v5325
        %v5331 = vmul.f32 %v5304, %v5326
        %v5332 = vmul.f32 %v5306, %v5327
        %v5333 = vmul.f32 %v5308, %v5328
        %5339 = vrot.lane.b32.xlu0 %v5117, 96
        %v5340 = vpop.permute.xlu0 %5339
        %5341 = vrot.lane.b32.xlu0 %v5118, 96
        %v5342 = vpop.permute.xlu0 %5341
        %5343 = vrot.lane.b32.xlu0 %v5119, 96
        %v5344 = vpop.permute.xlu0 %5343
        %5345 = vrot.lane.b32.xlu0 %v5120, 96
        %v5346 = vpop.permute.xlu0 %5345
        %5347 = vrot.lane.b32.xlu0 %v5121, 96
        %v5348 = vpop.permute.xlu0 %5347
        %v5354 = vsel %vm2023, %v5329, 0
        %v5357 = vsel %vm2023, %v5330, 0
        %v5360 = vsel %vm2023, %v5331, 0
        %v5363 = vsel %vm2023, %v5332, 0
        %v5366 = vsel %vm2023, %v5333, 0
        %v5368 = vsel %vm2114, %v5348, 0
        %5370 = vmatprep.subr.mxu0 0.0
        %5371 = vmatpush1.msra.mxu0 0.0
        %5372 = vmatprep.subr.mxu0 0.0
        %5373 = vmatpush1.msra.mxu0 0.0
        %5374 = vmatprep.subr.mxu0 0.0
        %5375 = vmatpush1.msra.mxu0 0.0
        %5376 = vmatprep.subr.mxu0 0.0
        %5377 = vmatpush1.msra.mxu0 0.0
        %5378 = vmatprep.subr.mxu0 0.0
        %5379 = vmatpush1.msra.mxu0 0.0
        %5380 = vmatprep.subr.mxu0 0.0
        %5381 = vmatpush1.msra.mxu0 0.0
        %5382 = vmatprep.subr.mxu0 0.0
        %5383 = vmatpush1.msra.mxu0 0.0
        %5384 = vmatprep.subr.mxu0 0.0
        %5385 = vmatpush1.msra.mxu0 0.0
        %5386 = vmatprep.subr.mxu0 0.0
        %5387 = vmatpush1.msra.mxu0 0.0
        %5388 = vmatprep.subr.mxu0 0.0
        %5389 = vmatpush1.msra.mxu0 0.0
        %5390 = vmatprep.subr.mxu0 0.0
        %5391 = vmatpush1.msra.mxu0 0.0
        %5392 = vmatprep.subr.mxu0 0.0
        %5393 = vmatpush1.msra.mxu0 %v5368
        %5394 = vmatprep.subr.mxu0 0.0
        %5395 = vmatpush1.msra.mxu0 %v5346
        %5396 = vmatprep.subr.mxu0 0.0
        %5397 = vmatpush1.msra.mxu0 %v5344
        %5398 = vmatprep.subr.mxu0 0.0
        %5399 = vmatpush1.msra.mxu0 %v5342
        %5400 = vmatprep.subr.mxu0 0.0
        %5401 = vmatpush1.msra.mxu0 %v5340
        %5402 = vmatprep.subr.mxu0 0.0
        %5403 = vmatpush2.msra.mxu0 0.0
        %5404 = vmatprep.subr.mxu0 0.0
        %5405 = vmatpush2.msra.mxu0 0.0
        %5406 = vmatprep.subr.mxu0 0.0
        %5407 = vmatpush2.msra.mxu0 0.0
        %5408 = vmatprep.subr.mxu0 0.0
        %5409 = vmatpush2.msra.mxu0 0.0
        %5410 = vmatprep.subr.mxu0 0.0
        %5411 = vmatpush2.msra.mxu0 0.0
        %5412 = vmatprep.subr.mxu0 0.0
        %5413 = vmatpush2.msra.mxu0 0.0
        %5414 = vmatprep.subr.mxu0 0.0
        %5415 = vmatpush2.msra.mxu0 0.0
        %5416 = vmatprep.subr.mxu0 0.0
        %5417 = vmatpush2.msra.mxu0 0.0
        %5418 = vmatprep.subr.mxu0 0.0
        %5419 = vmatpush2.msra.mxu0 0.0
        %5420 = vmatprep.subr.mxu0 0.0
        %5421 = vmatpush2.msra.mxu0 0.0
        %5422 = vmatprep.subr.mxu0 0.0
        %5423 = vmatpush2.msra.mxu0 0.0
        %5424 = vmatprep.subr.mxu0 0.0
        %5425 = vmatpush2.msra.mxu0 0.0
        %5426 = vmatprep.subr.mxu0 0.0
        %5427 = vmatpush2.msra.mxu0 0.0
        %5428 = vmatprep.subr.mxu0 0.0
        %5429 = vmatpush2.msra.mxu0 0.0
        %5430 = vmatprep.subr.mxu0 0.0
        %5431 = vmatpush2.msra.mxu0 0.0
        %5432 = vmatprep.subr.mxu0 0.0
        %5433 = vmatpush2.msra.mxu0 0.0
        %5434 = vmatprep.mubr.f32.mxu0 0.0
        %5435 = vmatmul.mubr.f32.gmra.mxu0 %v5354
        %v5436 = vpop.f32.mrf.mxu0
        %v5437 = vadd.f32 0.0, %v5436
        %v5438 = vpop.f32.mrf.mxu0
        %5439 = vmatprep.mubr.f32.mxu0 0.0
        %5440 = vmatmul.mubr.f32.gmra.mxu0 %v5357
        %v5441 = vpop.f32.mrf.mxu0
        %v5442 = vadd.f32 0.0, %v5441
        %v5443 = vpop.f32.mrf.mxu0
        %5444 = vmatprep.mubr.f32.mxu0 0.0
        %5445 = vmatmul.mubr.f32.gmra.mxu0 %v5360
        %v5446 = vpop.f32.mrf.mxu0
        %v5447 = vadd.f32 0.0, %v5446
        %v5448 = vpop.f32.mrf.mxu0
        %5449 = vmatprep.mubr.f32.mxu0 0.0
        %5450 = vmatmul.mubr.f32.gmra.mxu0 %v5363
        %v5451 = vpop.f32.mrf.mxu0
        %v5452 = vadd.f32 0.0, %v5451
        %v5453 = vpop.f32.mrf.mxu0
        %5454 = vmatprep.mubr.f32.mxu0 0.0
        %5455 = vmatmul.mubr.f32.gmra.mxu0 %v5366
        %v5456 = vpop.f32.mrf.mxu0
        %v5457 = vadd.f32 0.0, %v5456
        %v5458 = vpop.f32.mrf.mxu0
        %5459 = vdwg.mxu0
        %5460 = vxpose.xlu0.b32.start [1/16] %v5329, 128
        %5461 = vxpose.xlu0.b32.cont [2/16] %v5330, 128
        %5462 = vxpose.xlu0.b32.cont [3/16] %v5331, 128
        %5463 = vxpose.xlu0.b32.cont [4/16] %v5332, 128
        %5464 = vxpose.xlu0.b32.cont [5/16] %v5333, 128
        %5465 = vxpose.xlu0.b32.cont [6/16] 0.0, 128
        %5466 = vxpose.xlu0.b32.cont [7/16] 0.0, 128
        %5467 = vxpose.xlu0.b32.cont [8/16] 0.0, 128
        %5468 = vxpose.xlu0.b32.cont [9/16] 0.0, 128
        %5469 = vxpose.xlu0.b32.cont [10/16] 0.0, 128
        %5470 = vxpose.xlu0.b32.cont [11/16] 0.0, 128
        %5471 = vxpose.xlu0.b32.cont [12/16] 0.0, 128
        %5472 = vxpose.xlu0.b32.cont [13/16] 0.0, 128
        %5473 = vxpose.xlu0.b32.cont [14/16] 0.0, 128
        %5474 = vxpose.xlu0.b32.cont [15/16] 0.0, 128
        %5475 = vxpose.xlu0.b32.end [16/16] 0.0, 128
        %v5476 = vpop.trf.xlu0
        %v5477 = vpop.trf.xlu0
        %v5478 = vpop.trf.xlu0
        %v5479 = vpop.trf.xlu0
        %v5480 = vpop.trf.xlu0
        %v5481 = vpop.trf.xlu0
        %v5482 = vpop.trf.xlu0
        %v5483 = vpop.trf.xlu0
        %v5484 = vpop.trf.xlu0
        %v5485 = vpop.trf.xlu0
        %v5486 = vpop.trf.xlu0
        %v5487 = vpop.trf.xlu0
        %v5488 = vpop.trf.xlu0
        %v5489 = vpop.trf.xlu0
        %v5490 = vpop.trf.xlu0
        %v5491 = vpop.trf.xlu0
        %v5493 = vsel %vm2023, %v5476, 0
        %v5496 = vsel %vm2023, %v5477, 0
        %v5499 = vsel %vm2023, %v5478, 0
        %v5502 = vsel %vm2023, %v5479, 0
        %v5505 = vsel %vm2023, %v5480, 0
        %5507 = vmatprep.subr.mxu0 0.0
        %5508 = vmatpush1.msra.mxu0 0.0
        %5509 = vmatprep.subr.mxu0 0.0
        %5510 = vmatpush1.msra.mxu0 0.0
        %5511 = vmatprep.subr.mxu0 0.0
        %5512 = vmatpush1.msra.mxu0 0.0
        %5513 = vmatprep.subr.mxu0 0.0
        %5514 = vmatpush1.msra.mxu0 0.0
        %5515 = vmatprep.subr.mxu0 0.0
        %5516 = vmatpush1.msra.mxu0 0.0
        %5517 = vmatprep.subr.mxu0 0.0
        %5518 = vmatpush1.msra.mxu0 0.0
        %5519 = vmatprep.subr.mxu0 0.0
        %5520 = vmatpush1.msra.mxu0 0.0
        %5521 = vmatprep.subr.mxu0 0.0
        %5522 = vmatpush1.msra.mxu0 0.0
        %5523 = vmatprep.subr.mxu0 0.0
        %5524 = vmatpush1.msra.mxu0 0.0
        %5525 = vmatprep.subr.mxu0 0.0
        %5526 = vmatpush1.msra.mxu0 0.0
        %5527 = vmatprep.subr.mxu0 0.0
        %5528 = vmatpush1.msra.mxu0 0.0
        %5529 = vmatprep.subr.mxu0 0.0
        %5530 = vmatpush1.msra.mxu0 %v5368
        %5531 = vmatprep.subr.mxu0 0.0
        %5532 = vmatpush1.msra.mxu0 %v5346
        %5533 = vmatprep.subr.mxu0 0.0
        %5534 = vmatpush1.msra.mxu0 %v5344
        %5535 = vmatprep.subr.mxu0 0.0
        %5536 = vmatpush1.msra.mxu0 %v5342
        %5537 = vmatprep.subr.mxu0 0.0
        %5538 = vmatpush1.msra.mxu0 %v5340
        %5539 = vmatprep.subr.mxu0 0.0
        %5540 = vmatpush2.msra.mxu0 0.0
        %5541 = vmatprep.subr.mxu0 0.0
        %5542 = vmatpush2.msra.mxu0 0.0
        %5543 = vmatprep.subr.mxu0 0.0
        %5544 = vmatpush2.msra.mxu0 0.0
        %5545 = vmatprep.subr.mxu0 0.0
        %5546 = vmatpush2.msra.mxu0 0.0
        %5547 = vmatprep.subr.mxu0 0.0
        %5548 = vmatpush2.msra.mxu0 0.0
        %5549 = vmatprep.subr.mxu0 0.0
        %5550 = vmatpush2.msra.mxu0 0.0
        %5551 = vmatprep.subr.mxu0 0.0
        %5552 = vmatpush2.msra.mxu0 0.0
        %5553 = vmatprep.subr.mxu0 0.0
        %5554 = vmatpush2.msra.mxu0 0.0
        %5555 = vmatprep.subr.mxu0 0.0
        %5556 = vmatpush2.msra.mxu0 0.0
        %5557 = vmatprep.subr.mxu0 0.0
        %5558 = vmatpush2.msra.mxu0 0.0
        %5559 = vmatprep.subr.mxu0 0.0
        %5560 = vmatpush2.msra.mxu0 0.0
        %5561 = vmatprep.subr.mxu0 0.0
        %5562 = vmatpush2.msra.mxu0 0.0
        %5563 = vmatprep.subr.mxu0 0.0
        %5564 = vmatpush2.msra.mxu0 0.0
        %5565 = vmatprep.subr.mxu0 0.0
        %5566 = vmatpush2.msra.mxu0 0.0
        %5567 = vmatprep.subr.mxu0 0.0
        %5568 = vmatpush2.msra.mxu0 0.0
        %5569 = vmatprep.subr.mxu0 0.0
        %5570 = vmatpush2.msra.mxu0 0.0
        %5571 = vmatprep.mubr.f32.mxu0 0.0
        %5572 = vmatmul.mubr.f32.gmra.mxu0 %v5493
        %v5573 = vpop.f32.mrf.mxu0
        %v5574 = vadd.f32 0.0, %v5573
        %v5575 = vpop.f32.mrf.mxu0
        %5576 = vmatprep.mubr.f32.mxu0 0.0
        %5577 = vmatmul.mubr.f32.gmra.mxu0 %v5496
        %v5578 = vpop.f32.mrf.mxu0
        %v5579 = vadd.f32 0.0, %v5578
        %v5580 = vpop.f32.mrf.mxu0
        %5581 = vmatprep.mubr.f32.mxu0 0.0
        %5582 = vmatmul.mubr.f32.gmra.mxu0 %v5499
        %v5583 = vpop.f32.mrf.mxu0
        %v5584 = vadd.f32 0.0, %v5583
        %v5585 = vpop.f32.mrf.mxu0
        %5586 = vmatprep.mubr.f32.mxu0 0.0
        %5587 = vmatmul.mubr.f32.gmra.mxu0 %v5502
        %v5588 = vpop.f32.mrf.mxu0
        %v5589 = vadd.f32 0.0, %v5588
        %v5590 = vpop.f32.mrf.mxu0
        %5591 = vmatprep.mubr.f32.mxu0 0.0
        %5592 = vmatmul.mubr.f32.gmra.mxu0 %v5505
        %v5593 = vpop.f32.mrf.mxu0
        %v5594 = vadd.f32 0.0, %v5593
        %v5595 = vpop.f32.mrf.mxu0
        %5596 = vdwg.mxu0
        %v5602 = vrot.slane %v5574, 5
        %v5603 = vrot.slane %v5579, 5
        %v5604 = vsel %vm2114, %v5602, %v5603
        %v5605 = vrot.slane %v5584, 5
        %v5606 = vsel %vm2114, %v5603, %v5605
        %v5607 = vrot.slane %v5589, 5
        %v5608 = vsel %vm2114, %v5605, %v5607
        %v5609 = vrot.slane %v5594, 5
        %v5610 = vsel %vm2114, %v5607, %v5609
        %v5612 = vsel %vm2114, %v5457, %v5602
        %v5613 = vld [vmem:[#allocation33] sm:$0xff]
        %v5614 = vld [vmem:[#allocation33 + $0x8] sm:$0xff]
        %v5615 = vld [vmem:[#allocation34] sm:$0x1]
        %v5617 = vlaneseq
        %v5618 = vshrl.u32 %v5617, 7
        %v5619 = vsub.s32 0, %v5618
        %v5620 = vrot.slane %v5615, %v5619
        %v5623 = vsel %vm1515, %v5437, 0
        %v5626 = vsel %vm1515, %v5442, 0
        %v5629 = vsel %vm1515, %v5447, 0
        %v5632 = vsel %vm1515, %v5452, 0
        %v5635 = vsel %vm1515, %v5612, 0
        %v5637 = vsel %vm1515, %v5604, 0
        %v5639 = vsel %vm1515, %v5606, 0
        %v5641 = vsel %vm1515, %v5608, 0
        %v5643 = vsel %vm1515, %v5610, 0
        %5645 = vmatprep.subr.mxu0 0.0
        %5646 = vmatpush1.msra.mxu0 0.0
        %5647 = vmatprep.subr.mxu0 0.0
        %5648 = vmatpush1.msra.mxu0 0.0
        %5649 = vmatprep.subr.mxu0 0.0
        %5650 = vmatpush1.msra.mxu0 0.0
        %5651 = vmatprep.subr.mxu0 0.0
        %5652 = vmatpush1.msra.mxu0 0.0
        %5653 = vmatprep.subr.mxu0 0.0
        %5654 = vmatpush1.msra.mxu0 0.0
        %5655 = vmatprep.subr.mxu0 0.0
        %5656 = vmatpush1.msra.mxu0 0.0
        %5657 = vmatprep.subr.mxu0 0.0
        %5658 = vmatpush1.msra.mxu0 0.0
        %5659 = vmatprep.subr.mxu0 0.0
        %5660 = vmatpush1.msra.mxu0 0.0
        %5661 = vmatprep.subr.mxu0 0.0
        %5662 = vmatpush1.msra.mxu0 0.0
        %5663 = vmatprep.subr.mxu0 0.0
        %5664 = vmatpush1.msra.mxu0 0.0
        %5665 = vmatprep.subr.mxu0 0.0
        %5666 = vmatpush1.msra.mxu0 0.0
        %5667 = vmatprep.subr.mxu0 0.0
        %5668 = vmatpush1.msra.mxu0 0.0
        %5669 = vmatprep.subr.mxu0 0.0
        %5670 = vmatpush1.msra.mxu0 0.0
        %5671 = vmatprep.subr.mxu0 0.0
        %5672 = vmatpush1.msra.mxu0 0.0
        %5673 = vmatprep.subr.mxu0 0.0
        %5674 = vmatpush1.msra.mxu0 %v5614
        %5675 = vmatprep.subr.mxu0 0.0
        %5676 = vmatpush1.msra.mxu0 %v5613
        %5677 = vmatprep.subr.mxu0 0.0
        %5678 = vmatpush2.msra.mxu0 0.0
        %5679 = vmatprep.subr.mxu0 0.0
        %5680 = vmatpush2.msra.mxu0 0.0
        %5681 = vmatprep.subr.mxu0 0.0
        %5682 = vmatpush2.msra.mxu0 0.0
        %5683 = vmatprep.subr.mxu0 0.0
        %5684 = vmatpush2.msra.mxu0 0.0
        %5685 = vmatprep.subr.mxu0 0.0
        %5686 = vmatpush2.msra.mxu0 0.0
        %5687 = vmatprep.subr.mxu0 0.0
        %5688 = vmatpush2.msra.mxu0 0.0
        %5689 = vmatprep.subr.mxu0 0.0
        %5690 = vmatpush2.msra.mxu0 0.0
        %5691 = vmatprep.subr.mxu0 0.0
        %5692 = vmatpush2.msra.mxu0 0.0
        %5693 = vmatprep.subr.mxu0 0.0
        %5694 = vmatpush2.msra.mxu0 0.0
        %5695 = vmatprep.subr.mxu0 0.0
        %5696 = vmatpush2.msra.mxu0 0.0
        %5697 = vmatprep.subr.mxu0 0.0
        %5698 = vmatpush2.msra.mxu0 0.0
        %5699 = vmatprep.subr.mxu0 0.0
        %5700 = vmatpush2.msra.mxu0 0.0
        %5701 = vmatprep.subr.mxu0 0.0
        %5702 = vmatpush2.msra.mxu0 0.0
        %5703 = vmatprep.subr.mxu0 0.0
        %5704 = vmatpush2.msra.mxu0 0.0
        %5705 = vmatprep.subr.mxu0 0.0
        %5706 = vmatpush2.msra.mxu0 0.0
        %5707 = vmatprep.subr.mxu0 0.0
        %5708 = vmatpush2.msra.mxu0 0.0
        %5709 = vmatprep.mubr.f32.mxu0 0.0
        %5710 = vmatmul.mubr.f32.gmra.mxu0 %v5623
        %v5711 = vpop.f32.mrf.mxu0
        %v5712 = vadd.f32 %v5620, %v5711
        %v5713 = vpop.f32.mrf.mxu0
        %5714 = vmatprep.mubr.f32.mxu0 0.0
        %5715 = vmatmul.mubr.f32.gmra.mxu0 %v5626
        %v5716 = vpop.f32.mrf.mxu0
        %v5717 = vadd.f32 %v5620, %v5716
        %v5718 = vpop.f32.mrf.mxu0
        %5719 = vmatprep.mubr.f32.mxu0 0.0
        %5720 = vmatmul.mubr.f32.gmra.mxu0 %v5629
        %v5721 = vpop.f32.mrf.mxu0
        %v5722 = vadd.f32 %v5620, %v5721
        %v5723 = vpop.f32.mrf.mxu0
        %5724 = vmatprep.mubr.f32.mxu0 0.0
        %5725 = vmatmul.mubr.f32.gmra.mxu0 %v5632
        %v5726 = vpop.f32.mrf.mxu0
        %v5727 = vadd.f32 %v5620, %v5726
        %v5728 = vpop.f32.mrf.mxu0
        %5729 = vmatprep.mubr.f32.mxu0 0.0
        %5730 = vmatmul.mubr.f32.gmra.mxu0 %v5635
        %v5731 = vpop.f32.mrf.mxu0
        %v5732 = vadd.f32 %v5620, %v5731
        %v5733 = vpop.f32.mrf.mxu0
        %5734 = vmatprep.mubr.f32.mxu0 0.0
        %5735 = vmatmul.mubr.f32.gmra.mxu0 %v5637
        %v5736 = vpop.f32.mrf.mxu0
        %v5737 = vadd.f32 %v5620, %v5736
        %v5738 = vpop.f32.mrf.mxu0
        %5739 = vmatprep.mubr.f32.mxu0 0.0
        %5740 = vmatmul.mubr.f32.gmra.mxu0 %v5639
        %v5741 = vpop.f32.mrf.mxu0
        %v5742 = vadd.f32 %v5620, %v5741
        %v5743 = vpop.f32.mrf.mxu0
        %5744 = vmatprep.mubr.f32.mxu0 0.0
        %5745 = vmatmul.mubr.f32.gmra.mxu0 %v5641
        %v5746 = vpop.f32.mrf.mxu0
        %v5747 = vadd.f32 %v5620, %v5746
        %v5748 = vpop.f32.mrf.mxu0
        %5749 = vmatprep.mubr.f32.mxu0 0.0
        %5750 = vmatmul.mubr.f32.gmra.mxu0 %v5643
        %v5751 = vpop.f32.mrf.mxu0
        %v5752 = vadd.f32 %v5620, %v5751
        %v5753 = vpop.f32.mrf.mxu0
        %5754 = vdwg.mxu0
        %5764 = vrot.lane.b32.xlu0 %v5131, 80
        %v5765 = vpop.permute.xlu0 %5764
        %5766 = vrot.lane.b32.xlu0 %v5132, 80
        %v5767 = vpop.permute.xlu0 %5766
        %5768 = vrot.lane.b32.xlu0 %v5133, 80
        %v5769 = vpop.permute.xlu0 %5768
        %5770 = vrot.lane.b32.xlu0 %v5134, 80
        %v5771 = vpop.permute.xlu0 %5770
        %5772 = vrot.lane.b32.xlu0 %v5135, 80
        %v5773 = vpop.permute.xlu0 %5772
        %5774 = vrot.lane.b32.xlu0 %v5136, 80
        %v5775 = vpop.permute.xlu0 %5774
        %5776 = vrot.lane.b32.xlu0 %v5137, 80
        %v5777 = vpop.permute.xlu0 %5776
        %5778 = vrot.lane.b32.xlu0 %v5138, 80
        %v5779 = vpop.permute.xlu0 %5778
        %5780 = vrot.lane.b32.xlu0 %v5139, 80
        %v5781 = vpop.permute.xlu0 %5780
        %v5791 = vadd.f32 %v5712, %v5765
        %v5792 = vadd.f32 %v5717, %v5767
        %v5793 = vadd.f32 %v5722, %v5769
        %v5794 = vadd.f32 %v5727, %v5771
        %v5795 = vadd.f32 %v5732, %v5773
        %v5796 = vadd.f32 %v5737, %v5775
        %v5797 = vadd.f32 %v5742, %v5777
        %v5798 = vadd.f32 %v5747, %v5779
        %v5799 = vadd.f32 %v5752, %v5781
        %v5800 = vld [vmem:[#allocation36] sm:$0xff]
        %v5801 = vld [vmem:[#allocation36 + $0x8] sm:$0xff]
        %v5803 = vsel %vm1515, %v5791, 0
        %v5806 = vsel %vm1515, %v5792, 0
        %v5809 = vsel %vm1515, %v5793, 0
        %v5812 = vsel %vm1515, %v5794, 0
        %v5815 = vsel %vm1515, %v5795, 0
        %v5818 = vsel %vm1515, %v5796, 0
        %v5821 = vsel %vm1515, %v5797, 0
        %v5824 = vsel %vm1515, %v5798, 0
        %v5827 = vsel %vm1515, %v5799, 0
        %5829 = vmatprep.subr.mxu0 0.0
        %5830 = vmatpush1.msra.mxu0 0.0
        %5831 = vmatprep.subr.mxu0 0.0
        %5832 = vmatpush1.msra.mxu0 0.0
        %5833 = vmatprep.subr.mxu0 0.0
        %5834 = vmatpush1.msra.mxu0 0.0
        %5835 = vmatprep.subr.mxu0 0.0
        %5836 = vmatpush1.msra.mxu0 0.0
        %5837 = vmatprep.subr.mxu0 0.0
        %5838 = vmatpush1.msra.mxu0 0.0
        %5839 = vmatprep.subr.mxu0 0.0
        %5840 = vmatpush1.msra.mxu0 0.0
        %5841 = vmatprep.subr.mxu0 0.0
        %5842 = vmatpush1.msra.mxu0 0.0
        %5843 = vmatprep.subr.mxu0 0.0
        %5844 = vmatpush1.msra.mxu0 0.0
        %5845 = vmatprep.subr.mxu0 0.0
        %5846 = vmatpush1.msra.mxu0 0.0
        %5847 = vmatprep.subr.mxu0 0.0
        %5848 = vmatpush1.msra.mxu0 0.0
        %5849 = vmatprep.subr.mxu0 0.0
        %5850 = vmatpush1.msra.mxu0 0.0
        %5851 = vmatprep.subr.mxu0 0.0
        %5852 = vmatpush1.msra.mxu0 0.0
        %5853 = vmatprep.subr.mxu0 0.0
        %5854 = vmatpush1.msra.mxu0 0.0
        %5855 = vmatprep.subr.mxu0 0.0
        %5856 = vmatpush1.msra.mxu0 0.0
        %5857 = vmatprep.subr.mxu0 0.0
        %5858 = vmatpush1.msra.mxu0 %v5801
        %5859 = vmatprep.subr.mxu0 0.0
        %5860 = vmatpush1.msra.mxu0 %v5800
        %5861 = vmatprep.subr.mxu0 0.0
        %5862 = vmatpush2.msra.mxu0 0.0
        %5863 = vmatprep.subr.mxu0 0.0
        %5864 = vmatpush2.msra.mxu0 0.0
        %5865 = vmatprep.subr.mxu0 0.0
        %5866 = vmatpush2.msra.mxu0 0.0
        %5867 = vmatprep.subr.mxu0 0.0
        %5868 = vmatpush2.msra.mxu0 0.0
        %5869 = vmatprep.subr.mxu0 0.0
        %5870 = vmatpush2.msra.mxu0 0.0
        %5871 = vmatprep.subr.mxu0 0.0
        %5872 = vmatpush2.msra.mxu0 0.0
        %5873 = vmatprep.subr.mxu0 0.0
        %5874 = vmatpush2.msra.mxu0 0.0
        %5875 = vmatprep.subr.mxu0 0.0
        %5876 = vmatpush2.msra.mxu0 0.0
        %5877 = vmatprep.subr.mxu0 0.0
        %5878 = vmatpush2.msra.mxu0 0.0
        %5879 = vmatprep.subr.mxu0 0.0
        %5880 = vmatpush2.msra.mxu0 0.0
        %5881 = vmatprep.subr.mxu0 0.0
        %5882 = vmatpush2.msra.mxu0 0.0
        %5883 = vmatprep.subr.mxu0 0.0
        %5884 = vmatpush2.msra.mxu0 0.0
        %5885 = vmatprep.subr.mxu0 0.0
        %5886 = vmatpush2.msra.mxu0 0.0
        %5887 = vmatprep.subr.mxu0 0.0
        %5888 = vmatpush2.msra.mxu0 0.0
        %5889 = vmatprep.subr.mxu0 0.0
        %5890 = vmatpush2.msra.mxu0 0.0
        %5891 = vmatprep.subr.mxu0 0.0
        %5892 = vmatpush2.msra.mxu0 0.0
        %5893 = vmatprep.mubr.f32.mxu0 0.0
        %5894 = vmatmul.mubr.f32.gmra.mxu0 %v5803
        %v5895 = vpop.f32.mrf.mxu0
        %v5896 = vadd.f32 0.0, %v5895
        %v5897 = vpop.f32.mrf.mxu0
        %5898 = vmatprep.mubr.f32.mxu0 0.0
        %5899 = vmatmul.mubr.f32.gmra.mxu0 %v5806
        %v5900 = vpop.f32.mrf.mxu0
        %v5901 = vadd.f32 0.0, %v5900
        %v5902 = vpop.f32.mrf.mxu0
        %5903 = vmatprep.mubr.f32.mxu0 0.0
        %5904 = vmatmul.mubr.f32.gmra.mxu0 %v5809
        %v5905 = vpop.f32.mrf.mxu0
        %v5906 = vadd.f32 0.0, %v5905
        %v5907 = vpop.f32.mrf.mxu0
        %5908 = vmatprep.mubr.f32.mxu0 0.0
        %5909 = vmatmul.mubr.f32.gmra.mxu0 %v5812
        %v5910 = vpop.f32.mrf.mxu0
        %v5911 = vadd.f32 0.0, %v5910
        %v5912 = vpop.f32.mrf.mxu0
        %5913 = vmatprep.mubr.f32.mxu0 0.0
        %5914 = vmatmul.mubr.f32.gmra.mxu0 %v5815
        %v5915 = vpop.f32.mrf.mxu0
        %v5916 = vadd.f32 0.0, %v5915
        %v5917 = vpop.f32.mrf.mxu0
        %5918 = vmatprep.mubr.f32.mxu0 0.0
        %5919 = vmatmul.mubr.f32.gmra.mxu0 %v5818
        %v5920 = vpop.f32.mrf.mxu0
        %v5921 = vadd.f32 0.0, %v5920
        %v5922 = vpop.f32.mrf.mxu0
        %5923 = vmatprep.mubr.f32.mxu0 0.0
        %5924 = vmatmul.mubr.f32.gmra.mxu0 %v5821
        %v5925 = vpop.f32.mrf.mxu0
        %v5926 = vadd.f32 0.0, %v5925
        %v5927 = vpop.f32.mrf.mxu0
        %5928 = vmatprep.mubr.f32.mxu0 0.0
        %5929 = vmatmul.mubr.f32.gmra.mxu0 %v5824
        %v5930 = vpop.f32.mrf.mxu0
        %v5931 = vadd.f32 0.0, %v5930
        %v5932 = vpop.f32.mrf.mxu0
        %5933 = vmatprep.mubr.f32.mxu0 0.0
        %5934 = vmatmul.mubr.f32.gmra.mxu0 %v5827
        %v5935 = vpop.f32.mrf.mxu0
        %v5936 = vadd.f32 0.0, %v5935
        %v5937 = vpop.f32.mrf.mxu0
        %5938 = vdwg.mxu0
        %v5944 = vrot.slane %v5916, 3
        %v5945 = vrot.slane %v5921, 3
        %v5946 = vsel %vm1832, %v5944, %v5945
        %v5947 = vrot.slane %v5926, 3
        %v5948 = vsel %vm1832, %v5945, %v5947
        %v5949 = vrot.slane %v5931, 3
        %v5950 = vsel %vm1832, %v5947, %v5949
        %v5951 = vrot.slane %v5936, 3
        %v5952 = vsel %vm1832, %v5949, %v5951
        %5953 = vrot.lane.b32.xlu0 %v5946, 96
        %v5954 = vpop.permute.xlu0 %5953
        %5955 = vrot.lane.b32.xlu0 %v5948, 96
        %v5956 = vpop.permute.xlu0 %5955
        %5957 = vrot.lane.b32.xlu0 %v5950, 96
        %v5958 = vpop.permute.xlu0 %5957
        %5959 = vrot.lane.b32.xlu0 %v5952, 96
        %v5960 = vpop.permute.xlu0 %5959
        %5961 = vrot.lane.b32.xlu0 %v5951, 96
        %v5962 = vpop.permute.xlu0 %5961
        %v5968 = vadd.f32 %v5896, %v5954
        %v5969 = vadd.f32 %v5901, %v5956
        %v5970 = vadd.f32 %v5906, %v5958
        %v5971 = vadd.f32 %v5911, %v5960
        %v5972 = vadd.f32 %v5916, %v5962
        %v5973 = vld [vmem:[#allocation37] sm:$0x1]
        %v5975 = vlaneseq
        %v5976 = vshrl.u32 %v5975, 7
        %v5977 = vsub.s32 0, %v5976
        %v5978 = vrot.slane %v5973, %v5977
        %v5980 = vadd.f32 %v5968, %v5978
        %v5981 = vadd.f32 %v5969, %v5978
        %v5982 = vadd.f32 %v5970, %v5978
        %v5983 = vadd.f32 %v5971, %v5978
        %v5984 = vadd.f32 %v5972, %v5978
        %v5985 = vmul.f32 %v5980, %v5980
        %v5986 = vmul.f32 %v5981, %v5981
        %v5987 = vmul.f32 %v5982, %v5982
        %v5988 = vmul.f32 %v5983, %v5983
        %v5989 = vmul.f32 %v5984, %v5984
        %v5990 = vsel %vm2737, %v5985, 0.0
        %5991 = vadd.xlane.f32.xlu0 %v5990
        %v5992 = vpop.xlane.xlu0 %5991
        %v5993 = vsel %vm2737, %v5986, 0.0
        %5994 = vadd.xlane.f32.xlu0 %v5993
        %v5995 = vpop.xlane.xlu0 %5994
        %v5996 = vsel %vm2737, %v5987, 0.0
        %5997 = vadd.xlane.f32.xlu0 %v5996
        %v5998 = vpop.xlane.xlu0 %5997
        %v5999 = vsel %vm2737, %v5988, 0.0
        %6000 = vadd.xlane.f32.xlu0 %v5999
        %v6001 = vpop.xlane.xlu0 %6000
        %v6002 = vsel %vm2750, %v5989, 0.0
        %6003 = vadd.xlane.f32.xlu0 %v6002
        %v6004 = vpop.xlane.xlu0 %6003
        %v6005 = vmax.f32 %v5992, 1e-24
        %v6006 = vmax.f32 %v5995, 1e-24
        %v6007 = vmax.f32 %v5998, 1e-24
        %v6008 = vmax.f32 %v6001, 1e-24
        %v6009 = vmax.f32 %v6004, 1e-24
        %v6010 = vrsqrt.pop %v6005
        %v6011 = vrsqrt.pop %v6006
        %v6012 = vrsqrt.pop %v6007
        %v6013 = vrsqrt.pop %v6008
        %v6014 = vrsqrt.pop %v6009
        %v6015 = vmul.f32 %v5980, %v6010
        %v6016 = vmul.f32 %v5981, %v6011
        %v6017 = vmul.f32 %v5982, %v6012
        %v6018 = vmul.f32 %v5983, %v6013
        %v6019 = vmul.f32 %v5984, %v6014
        %v6020 = vld [vmem:[#allocation39] sm:$0xff]
        %v6021 = vld [vmem:[#allocation39 + $0x8] sm:$0xff]
        %v6022 = vld [vmem:[#allocation39 + $0x10] sm:$0xff]
        %v6023 = vld [vmem:[#allocation39 + $0x18] sm:$0xff]
        %v6025 = vsel %vm2737, %v6015, 0
        %v6028 = vsel %vm2737, %v6016, 0
        %v6031 = vsel %vm2737, %v6017, 0
        %v6034 = vsel %vm2737, %v6018, 0
        %v6037 = vsel %vm2737, %v6019, 0
        %6039 = vmatprep.subr.mxu0 0.0
        %6040 = vmatpush1.msra.mxu0 0.0
        %6041 = vmatprep.subr.mxu0 0.0
        %6042 = vmatpush1.msra.mxu0 0.0
        %6043 = vmatprep.subr.mxu0 0.0
        %6044 = vmatpush1.msra.mxu0 0.0
        %6045 = vmatprep.subr.mxu0 0.0
        %6046 = vmatpush1.msra.mxu0 0.0
        %6047 = vmatprep.subr.mxu0 0.0
        %6048 = vmatpush1.msra.mxu0 0.0
        %6049 = vmatprep.subr.mxu0 0.0
        %6050 = vmatpush1.msra.mxu0 0.0
        %6051 = vmatprep.subr.mxu0 0.0
        %6052 = vmatpush1.msra.mxu0 0.0
        %6053 = vmatprep.subr.mxu0 0.0
        %6054 = vmatpush1.msra.mxu0 0.0
        %6055 = vmatprep.subr.mxu0 0.0
        %6056 = vmatpush1.msra.mxu0 0.0
        %6057 = vmatprep.subr.mxu0 0.0
        %6058 = vmatpush1.msra.mxu0 0.0
        %6059 = vmatprep.subr.mxu0 0.0
        %6060 = vmatpush1.msra.mxu0 0.0
        %6061 = vmatprep.subr.mxu0 0.0
        %6062 = vmatpush1.msra.mxu0 0.0
        %6063 = vmatprep.subr.mxu0 0.0
        %6064 = vmatpush1.msra.mxu0 %v6023
        %6065 = vmatprep.subr.mxu0 0.0
        %6066 = vmatpush1.msra.mxu0 %v6022
        %6067 = vmatprep.subr.mxu0 0.0
        %6068 = vmatpush1.msra.mxu0 %v6021
        %6069 = vmatprep.subr.mxu0 0.0
        %6070 = vmatpush1.msra.mxu0 %v6020
        %6071 = vmatprep.subr.mxu0 0.0
        %6072 = vmatpush2.msra.mxu0 0.0
        %6073 = vmatprep.subr.mxu0 0.0
        %6074 = vmatpush2.msra.mxu0 0.0
        %6075 = vmatprep.subr.mxu0 0.0
        %6076 = vmatpush2.msra.mxu0 0.0
        %6077 = vmatprep.subr.mxu0 0.0
        %6078 = vmatpush2.msra.mxu0 0.0
        %6079 = vmatprep.subr.mxu0 0.0
        %6080 = vmatpush2.msra.mxu0 0.0
        %6081 = vmatprep.subr.mxu0 0.0
        %6082 = vmatpush2.msra.mxu0 0.0
        %6083 = vmatprep.subr.mxu0 0.0
        %6084 = vmatpush2.msra.mxu0 0.0
        %6085 = vmatprep.subr.mxu0 0.0
        %6086 = vmatpush2.msra.mxu0 0.0
        %6087 = vmatprep.subr.mxu0 0.0
        %6088 = vmatpush2.msra.mxu0 0.0
        %6089 = vmatprep.subr.mxu0 0.0
        %6090 = vmatpush2.msra.mxu0 0.0
        %6091 = vmatprep.subr.mxu0 0.0
        %6092 = vmatpush2.msra.mxu0 0.0
        %6093 = vmatprep.subr.mxu0 0.0
        %6094 = vmatpush2.msra.mxu0 0.0
        %6095 = vmatprep.subr.mxu0 0.0
        %6096 = vmatpush2.msra.mxu0 0.0
        %6097 = vmatprep.subr.mxu0 0.0
        %6098 = vmatpush2.msra.mxu0 0.0
        %6099 = vmatprep.subr.mxu0 0.0
        %6100 = vmatpush2.msra.mxu0 0.0
        %6101 = vmatprep.subr.mxu0 0.0
        %6102 = vmatpush2.msra.mxu0 0.0
        %6103 = vmatprep.mubr.f32.mxu0 0.0
        %6104 = vmatmul.mubr.f32.gmra.mxu0 %v6025
        %v6105 = vpop.f32.mrf.mxu0
        %v6106 = vadd.f32 0.0, %v6105
        %v6107 = vpop.f32.mrf.mxu0
        %6108 = vmatprep.mubr.f32.mxu0 0.0
        %6109 = vmatmul.mubr.f32.gmra.mxu0 %v6028
        %v6110 = vpop.f32.mrf.mxu0
        %v6111 = vadd.f32 0.0, %v6110
        %v6112 = vpop.f32.mrf.mxu0
        %6113 = vmatprep.mubr.f32.mxu0 0.0
        %6114 = vmatmul.mubr.f32.gmra.mxu0 %v6031
        %v6115 = vpop.f32.mrf.mxu0
        %v6116 = vadd.f32 0.0, %v6115
        %v6117 = vpop.f32.mrf.mxu0
        %6118 = vmatprep.mubr.f32.mxu0 0.0
        %6119 = vmatmul.mubr.f32.gmra.mxu0 %v6034
        %v6120 = vpop.f32.mrf.mxu0
        %v6121 = vadd.f32 0.0, %v6120
        %v6122 = vpop.f32.mrf.mxu0
        %6123 = vmatprep.mubr.f32.mxu0 0.0
        %6124 = vmatmul.mubr.f32.gmra.mxu0 %v6037
        %v6125 = vpop.f32.mrf.mxu0
        %v6126 = vadd.f32 0.0, %v6125
        %v6127 = vpop.f32.mrf.mxu0
        %6128 = vdwg.mxu0
        %v6129 = vsel %vm2880, %v6106, -inf
        %6130 = vmax.xlane.f32.xlu0 %v6129
        %v6131 = vpop.xlane.xlu0 %6130
        %v6132 = vsel %vm2880, %v6111, -inf
        %6133 = vmax.xlane.f32.xlu0 %v6132
        %v6134 = vpop.xlane.xlu0 %6133
        %v6135 = vsel %vm2880, %v6116, -inf
        %6136 = vmax.xlane.f32.xlu0 %v6135
        %v6137 = vpop.xlane.xlu0 %6136
        %v6138 = vsel %vm2880, %v6121, -inf
        %6139 = vmax.xlane.f32.xlu0 %v6138
        %v6140 = vpop.xlane.xlu0 %6139
        %v6141 = vsel %vm2893, %v6126, -inf
        %6142 = vmax.xlane.f32.xlu0 %v6141
        %v6143 = vpop.xlane.xlu0 %6142
        %vm6144 = vcmp.ge.f32.partialorder %v6106, %v6131
        %vm6145 = vcmp.ge.f32.partialorder %v6111, %v6134
        %vm6146 = vcmp.ge.f32.partialorder %v6116, %v6137
        %vm6147 = vcmp.ge.f32.partialorder %v6121, %v6140
        %vm6148 = vcmp.ge.f32.partialorder %v6126, %v6143
        %v6149 = vsel %vm6144, %v2879, 70
        %v6150 = vsel %vm6145, %v2879, 70
        %v6151 = vsel %vm6146, %v2879, 70
        %v6152 = vsel %vm6147, %v2879, 70
        %v6153 = vsel %vm6148, %v2879, 70
        %v6154 = vsel %vm2880, %v6149, 2147483647
        %v6155 = vand.u32 %v6154, 65535
        %v6156 = vshra.s32 %v6154, 16
        %v6157 = vcvt.s32.f32 %v6155
        %v6158 = vcvt.s32.f32 %v6156
        %6159 = vmin.xlane.f32.xlu0 %v6158
        %v6160 = vpop.xlane.xlu0 %6159
        %vm6161 = vcmp.eq.f32.partialorder %v6158, %v6160
        %v6162 = vsel %vm6161, %v6157, inf
        %6163 = vmin.xlane.f32.xlu0 %v6162
        %v6164 = vpop.xlane.xlu0 %6163
        %v6165 = vcvt.f32.s32 %v6164
        %v6166 = vcvt.f32.s32 %v6160
        %v6167 = vshll.u32 %v6166, 16
        %v6168 = vadd.s32 %v6167, %v6165
        %v6169 = vsel %vm2880, %v6150, 2147483647
        %v6170 = vand.u32 %v6169, 65535
        %v6171 = vshra.s32 %v6169, 16
        %v6172 = vcvt.s32.f32 %v6170
        %v6173 = vcvt.s32.f32 %v6171
        %6174 = vmin.xlane.f32.xlu0 %v6173
        %v6175 = vpop.xlane.xlu0 %6174
        %vm6176 = vcmp.eq.f32.partialorder %v6173, %v6175
        %v6177 = vsel %vm6176, %v6172, inf
        %6178 = vmin.xlane.f32.xlu0 %v6177
        %v6179 = vpop.xlane.xlu0 %6178
        %v6180 = vcvt.f32.s32 %v6179
        %v6181 = vcvt.f32.s32 %v6175
        %v6182 = vshll.u32 %v6181, 16
        %v6183 = vadd.s32 %v6182, %v6180
        %v6184 = vsel %vm2880, %v6151, 2147483647
        %v6185 = vand.u32 %v6184, 65535
        %v6186 = vshra.s32 %v6184, 16
        %v6187 = vcvt.s32.f32 %v6185
        %v6188 = vcvt.s32.f32 %v6186
        %6189 = vmin.xlane.f32.xlu0 %v6188
        %v6190 = vpop.xlane.xlu0 %6189
        %vm6191 = vcmp.eq.f32.partialorder %v6188, %v6190
        %v6192 = vsel %vm6191, %v6187, inf
        %6193 = vmin.xlane.f32.xlu0 %v6192
        %v6194 = vpop.xlane.xlu0 %6193
        %v6195 = vcvt.f32.s32 %v6194
        %v6196 = vcvt.f32.s32 %v6190
        %v6197 = vshll.u32 %v6196, 16
        %v6198 = vadd.s32 %v6197, %v6195
        %v6199 = vsel %vm2880, %v6152, 2147483647
        %v6200 = vand.u32 %v6199, 65535
        %v6201 = vshra.s32 %v6199, 16
        %v6202 = vcvt.s32.f32 %v6200
        %v6203 = vcvt.s32.f32 %v6201
        %6204 = vmin.xlane.f32.xlu0 %v6203
        %v6205 = vpop.xlane.xlu0 %6204
        %vm6206 = vcmp.eq.f32.partialorder %v6203, %v6205
        %v6207 = vsel %vm6206, %v6202, inf
        %6208 = vmin.xlane.f32.xlu0 %v6207
        %v6209 = vpop.xlane.xlu0 %6208
        %v6210 = vcvt.f32.s32 %v6209
        %v6211 = vcvt.f32.s32 %v6205
        %v6212 = vshll.u32 %v6211, 16
        %v6213 = vadd.s32 %v6212, %v6210
        %v6214 = vsel %vm2893, %v6153, 2147483647
        %v6215 = vand.u32 %v6214, 65535
        %v6216 = vshra.s32 %v6214, 16
        %v6217 = vcvt.s32.f32 %v6215
        %v6218 = vcvt.s32.f32 %v6216
        %6219 = vmin.xlane.f32.xlu0 %v6218
        %v6220 = vpop.xlane.xlu0 %6219
        %vm6221 = vcmp.eq.f32.partialorder %v6218, %v6220
        %v6222 = vsel %vm6221, %v6217, inf
        %6223 = vmin.xlane.f32.xlu0 %v6222
        %v6224 = vpop.xlane.xlu0 %6223
        %v6225 = vcvt.f32.s32 %v6224
        %v6226 = vcvt.f32.s32 %v6220
        %v6227 = vshll.u32 %v6226, 16
        %v6228 = vadd.s32 %v6227, %v6225
        %vm6229 = vcmp.eq.s32.totalorder %v2879, %v6168
        %vm6230 = vcmp.eq.s32.totalorder %v2879, %v6183
        %vm6231 = vcmp.eq.s32.totalorder %v2879, %v6198
        %vm6232 = vcmp.eq.s32.totalorder %v2879, %v6213
        %vm6233 = vcmp.eq.s32.totalorder %v2879, %v6228
        %v6234 = vsel %vm6229, -1e+30, %v6106
        %v6235 = vsel %vm6230, -1e+30, %v6111
        %v6236 = vsel %vm6231, -1e+30, %v6116
        %v6237 = vsel %vm6232, -1e+30, %v6121
        %v6238 = vsel %vm6233, -1e+30, %v6126
        %v6239 = vsel %vm2880, %v6234, -inf
        %6240 = vmax.xlane.f32.xlu0 %v6239
        %v6241 = vpop.xlane.xlu0 %6240
        %v6242 = vsel %vm2880, %v6235, -inf
        %6243 = vmax.xlane.f32.xlu0 %v6242
        %v6244 = vpop.xlane.xlu0 %6243
        %v6245 = vsel %vm2880, %v6236, -inf
        %6246 = vmax.xlane.f32.xlu0 %v6245
        %v6247 = vpop.xlane.xlu0 %6246
        %v6248 = vsel %vm2880, %v6237, -inf
        %6249 = vmax.xlane.f32.xlu0 %v6248
        %v6250 = vpop.xlane.xlu0 %6249
        %v6251 = vsel %vm2893, %v6238, -inf
        %6252 = vmax.xlane.f32.xlu0 %v6251
        %v6253 = vpop.xlane.xlu0 %6252
        %vm6254 = vcmp.ge.f32.partialorder %v6234, %v6241
        %vm6255 = vcmp.ge.f32.partialorder %v6235, %v6244
        %vm6256 = vcmp.ge.f32.partialorder %v6236, %v6247
        %vm6257 = vcmp.ge.f32.partialorder %v6237, %v6250
        %vm6258 = vcmp.ge.f32.partialorder %v6238, %v6253
        %v6259 = vsel %vm6254, %v2879, 70
        %v6260 = vsel %vm6255, %v2879, 70
        %v6261 = vsel %vm6256, %v2879, 70
        %v6262 = vsel %vm6257, %v2879, 70
        %v6263 = vsel %vm6258, %v2879, 70
        %v6264 = vsel %vm2880, %v6259, 2147483647
        %v6265 = vand.u32 %v6264, 65535
        %v6266 = vshra.s32 %v6264, 16
        %v6267 = vcvt.s32.f32 %v6265
        %v6268 = vcvt.s32.f32 %v6266
        %6269 = vmin.xlane.f32.xlu0 %v6268
        %v6270 = vpop.xlane.xlu0 %6269
        %vm6271 = vcmp.eq.f32.partialorder %v6268, %v6270
        %v6272 = vsel %vm6271, %v6267, inf
        %6273 = vmin.xlane.f32.xlu0 %v6272
        %v6274 = vpop.xlane.xlu0 %6273
        %v6275 = vcvt.f32.s32 %v6274
        %v6276 = vcvt.f32.s32 %v6270
        %v6277 = vshll.u32 %v6276, 16
        %v6278 = vadd.s32 %v6277, %v6275
        %v6279 = vsel %vm2880, %v6260, 2147483647
        %v6280 = vand.u32 %v6279, 65535
        %v6281 = vshra.s32 %v6279, 16
        %v6282 = vcvt.s32.f32 %v6280
        %v6283 = vcvt.s32.f32 %v6281
        %6284 = vmin.xlane.f32.xlu0 %v6283
        %v6285 = vpop.xlane.xlu0 %6284
        %vm6286 = vcmp.eq.f32.partialorder %v6283, %v6285
        %v6287 = vsel %vm6286, %v6282, inf
        %6288 = vmin.xlane.f32.xlu0 %v6287
        %v6289 = vpop.xlane.xlu0 %6288
        %v6290 = vcvt.f32.s32 %v6289
        %v6291 = vcvt.f32.s32 %v6285
        %v6292 = vshll.u32 %v6291, 16
        %v6293 = vadd.s32 %v6292, %v6290
        %v6294 = vsel %vm2880, %v6261, 2147483647
        %v6295 = vand.u32 %v6294, 65535
        %v6296 = vshra.s32 %v6294, 16
        %v6297 = vcvt.s32.f32 %v6295
        %v6298 = vcvt.s32.f32 %v6296
        %6299 = vmin.xlane.f32.xlu0 %v6298
        %v6300 = vpop.xlane.xlu0 %6299
        %vm6301 = vcmp.eq.f32.partialorder %v6298, %v6300
        %v6302 = vsel %vm6301, %v6297, inf
        %6303 = vmin.xlane.f32.xlu0 %v6302
        %v6304 = vpop.xlane.xlu0 %6303
        %v6305 = vcvt.f32.s32 %v6304
        %v6306 = vcvt.f32.s32 %v6300
        %v6307 = vshll.u32 %v6306, 16
        %v6308 = vadd.s32 %v6307, %v6305
        %v6309 = vsel %vm2880, %v6262, 2147483647
        %v6310 = vand.u32 %v6309, 65535
        %v6311 = vshra.s32 %v6309, 16
        %v6312 = vcvt.s32.f32 %v6310
        %v6313 = vcvt.s32.f32 %v6311
        %6314 = vmin.xlane.f32.xlu0 %v6313
        %v6315 = vpop.xlane.xlu0 %6314
        %vm6316 = vcmp.eq.f32.partialorder %v6313, %v6315
        %v6317 = vsel %vm6316, %v6312, inf
        %6318 = vmin.xlane.f32.xlu0 %v6317
        %v6319 = vpop.xlane.xlu0 %6318
        %v6320 = vcvt.f32.s32 %v6319
        %v6321 = vcvt.f32.s32 %v6315
        %v6322 = vshll.u32 %v6321, 16
        %v6323 = vadd.s32 %v6322, %v6320
        %v6324 = vsel %vm2893, %v6263, 2147483647
        %v6325 = vand.u32 %v6324, 65535
        %v6326 = vshra.s32 %v6324, 16
        %v6327 = vcvt.s32.f32 %v6325
        %v6328 = vcvt.s32.f32 %v6326
        %6329 = vmin.xlane.f32.xlu0 %v6328
        %v6330 = vpop.xlane.xlu0 %6329
        %vm6331 = vcmp.eq.f32.partialorder %v6328, %v6330
        %v6332 = vsel %vm6331, %v6327, inf
        %6333 = vmin.xlane.f32.xlu0 %v6332
        %v6334 = vpop.xlane.xlu0 %6333
        %v6335 = vcvt.f32.s32 %v6334
        %v6336 = vcvt.f32.s32 %v6330
        %v6337 = vshll.u32 %v6336, 16
        %v6338 = vadd.s32 %v6337, %v6335
        %v6339 = vrot.slane %v6168, 5
        %v6340 = vrot.slane %v6183, 5
        %v6341 = vsel %vm2114, %v6339, %v6340
        %v6342 = vrot.slane %v6198, 5
        %v6343 = vsel %vm2114, %v6340, %v6342
        %v6344 = vrot.slane %v6213, 5
        %v6345 = vsel %vm2114, %v6342, %v6344
        %v6346 = vrot.slane %v6228, 5
        %v6347 = vsel %vm2114, %v6344, %v6346
        %v6348 = vsel %vm2114, %v6228, %v6339
        %v6349 = vrot.slane %v6278, 5
        %v6350 = vrot.slane %v6293, 5
        %v6351 = vsel %vm2114, %v6349, %v6350
        %v6352 = vrot.slane %v6308, 5
        %v6353 = vsel %vm2114, %v6350, %v6352
        %v6354 = vrot.slane %v6323, 5
        %v6355 = vsel %vm2114, %v6352, %v6354
        %v6356 = vrot.slane %v6338, 5
        %v6357 = vsel %vm2114, %v6354, %v6356
        %v6358 = vsel %vm2114, %v6338, %v6349
        %6359 = vset.pattern.permute.xlu0 0
        %6360 = vperm.xlu0 %6359, %v6168
        %v6361 = vpop.permute.xlu0 %6360
        %6362 = vset.pattern.permute.xlu0 0
        %6363 = vperm.xlu0 %6362, %v6183
        %v6364 = vpop.permute.xlu0 %6363
        %6365 = vset.pattern.permute.xlu0 0
        %6366 = vperm.xlu0 %6365, %v6198
        %v6367 = vpop.permute.xlu0 %6366
        %6368 = vset.pattern.permute.xlu0 0
        %6369 = vperm.xlu0 %6368, %v6213
        %v6370 = vpop.permute.xlu0 %6369
        %6371 = vset.pattern.permute.xlu0 0
        %6372 = vperm.xlu0 %6371, %v6348
        %v6373 = vpop.permute.xlu0 %6372
        %6374 = vset.pattern.permute.xlu0 0
        %6375 = vperm.xlu0 %6374, %v6341
        %v6376 = vpop.permute.xlu0 %6375
        %6377 = vset.pattern.permute.xlu0 0
        %6378 = vperm.xlu0 %6377, %v6343
        %v6379 = vpop.permute.xlu0 %6378
        %6380 = vset.pattern.permute.xlu0 0
        %6381 = vperm.xlu0 %6380, %v6345
        %v6382 = vpop.permute.xlu0 %6381
        %6383 = vset.pattern.permute.xlu0 0
        %6384 = vperm.xlu0 %6383, %v6347
        %v6385 = vpop.permute.xlu0 %6384
        %vm6386 = vcmp.eq.s32.totalorder %v3115, %v6361
        %vm6387 = vcmp.eq.s32.totalorder %v3119, %v6361
        %vm6388 = vcmp.eq.s32.totalorder %v3123, %v6361
        %vm6389 = vcmp.eq.s32.totalorder %v3127, %v6361
        %vm6390 = vcmp.eq.s32.totalorder %v3131, %v6361
        %vm6391 = vcmp.eq.s32.totalorder %v3135, %v6361
        %vm6392 = vcmp.eq.s32.totalorder %v3139, %v6361
        %vm6393 = vcmp.eq.s32.totalorder %v3143, %v6361
        %vm6394 = vcmp.eq.s32.totalorder %v3147, %v6361
        %vm6395 = vcmp.eq.s32.totalorder %v3115, %v6364
        %vm6396 = vcmp.eq.s32.totalorder %v3119, %v6364
        %vm6397 = vcmp.eq.s32.totalorder %v3123, %v6364
        %vm6398 = vcmp.eq.s32.totalorder %v3127, %v6364
        %vm6399 = vcmp.eq.s32.totalorder %v3131, %v6364
        %vm6400 = vcmp.eq.s32.totalorder %v3135, %v6364
        %vm6401 = vcmp.eq.s32.totalorder %v3139, %v6364
        %vm6402 = vcmp.eq.s32.totalorder %v3143, %v6364
        %vm6403 = vcmp.eq.s32.totalorder %v3147, %v6364
        %vm6404 = vcmp.eq.s32.totalorder %v3115, %v6367
        %vm6405 = vcmp.eq.s32.totalorder %v3119, %v6367
        %vm6406 = vcmp.eq.s32.totalorder %v3123, %v6367
        %vm6407 = vcmp.eq.s32.totalorder %v3127, %v6367
        %vm6408 = vcmp.eq.s32.totalorder %v3131, %v6367
        %vm6409 = vcmp.eq.s32.totalorder %v3135, %v6367
        %vm6410 = vcmp.eq.s32.totalorder %v3139, %v6367
        %vm6411 = vcmp.eq.s32.totalorder %v3143, %v6367
        %vm6412 = vcmp.eq.s32.totalorder %v3147, %v6367
        %vm6413 = vcmp.eq.s32.totalorder %v3115, %v6370
        %vm6414 = vcmp.eq.s32.totalorder %v3119, %v6370
        %vm6415 = vcmp.eq.s32.totalorder %v3123, %v6370
        %vm6416 = vcmp.eq.s32.totalorder %v3127, %v6370
        %vm6417 = vcmp.eq.s32.totalorder %v3131, %v6370
        %vm6418 = vcmp.eq.s32.totalorder %v3135, %v6370
        %vm6419 = vcmp.eq.s32.totalorder %v3139, %v6370
        %vm6420 = vcmp.eq.s32.totalorder %v3143, %v6370
        %vm6421 = vcmp.eq.s32.totalorder %v3147, %v6370
        %vm6422 = vcmp.eq.s32.totalorder %v3115, %v6373
        %vm6423 = vcmp.eq.s32.totalorder %v3119, %v6373
        %vm6424 = vcmp.eq.s32.totalorder %v3123, %v6373
        %vm6425 = vcmp.eq.s32.totalorder %v3127, %v6373
        %vm6426 = vcmp.eq.s32.totalorder %v3131, %v6373
        %vm6427 = vcmp.eq.s32.totalorder %v3135, %v6373
        %vm6428 = vcmp.eq.s32.totalorder %v3139, %v6373
        %vm6429 = vcmp.eq.s32.totalorder %v3143, %v6373
        %vm6430 = vcmp.eq.s32.totalorder %v3147, %v6373
        %vm6431 = vcmp.eq.s32.totalorder %v3115, %v6376
        %vm6432 = vcmp.eq.s32.totalorder %v3119, %v6376
        %vm6433 = vcmp.eq.s32.totalorder %v3123, %v6376
        %vm6434 = vcmp.eq.s32.totalorder %v3127, %v6376
        %vm6435 = vcmp.eq.s32.totalorder %v3131, %v6376
        %vm6436 = vcmp.eq.s32.totalorder %v3135, %v6376
        %vm6437 = vcmp.eq.s32.totalorder %v3139, %v6376
        %vm6438 = vcmp.eq.s32.totalorder %v3143, %v6376
        %vm6439 = vcmp.eq.s32.totalorder %v3147, %v6376
        %vm6440 = vcmp.eq.s32.totalorder %v3115, %v6379
        %vm6441 = vcmp.eq.s32.totalorder %v3119, %v6379
        %vm6442 = vcmp.eq.s32.totalorder %v3123, %v6379
        %vm6443 = vcmp.eq.s32.totalorder %v3127, %v6379
        %vm6444 = vcmp.eq.s32.totalorder %v3131, %v6379
        %vm6445 = vcmp.eq.s32.totalorder %v3135, %v6379
        %vm6446 = vcmp.eq.s32.totalorder %v3139, %v6379
        %vm6447 = vcmp.eq.s32.totalorder %v3143, %v6379
        %vm6448 = vcmp.eq.s32.totalorder %v3147, %v6379
        %vm6449 = vcmp.eq.s32.totalorder %v3115, %v6382
        %vm6450 = vcmp.eq.s32.totalorder %v3119, %v6382
        %vm6451 = vcmp.eq.s32.totalorder %v3123, %v6382
        %vm6452 = vcmp.eq.s32.totalorder %v3127, %v6382
        %vm6453 = vcmp.eq.s32.totalorder %v3131, %v6382
        %vm6454 = vcmp.eq.s32.totalorder %v3135, %v6382
        %vm6455 = vcmp.eq.s32.totalorder %v3139, %v6382
        %vm6456 = vcmp.eq.s32.totalorder %v3143, %v6382
        %vm6457 = vcmp.eq.s32.totalorder %v3147, %v6382
        %vm6458 = vcmp.eq.s32.totalorder %v3115, %v6385
        %vm6459 = vcmp.eq.s32.totalorder %v3119, %v6385
        %vm6460 = vcmp.eq.s32.totalorder %v3123, %v6385
        %vm6461 = vcmp.eq.s32.totalorder %v3127, %v6385
        %vm6462 = vcmp.eq.s32.totalorder %v3131, %v6385
        %vm6463 = vcmp.eq.s32.totalorder %v3135, %v6385
        %vm6464 = vcmp.eq.s32.totalorder %v3139, %v6385
        %vm6465 = vcmp.eq.s32.totalorder %v3143, %v6385
        %vm6466 = vcmp.eq.s32.totalorder %v3147, %v6385
        %6467 = vset.pattern.permute.xlu0 0
        %6468 = vperm.xlu0 %6467, %v6278
        %v6469 = vpop.permute.xlu0 %6468
        %6470 = vset.pattern.permute.xlu0 0
        %6471 = vperm.xlu0 %6470, %v6293
        %v6472 = vpop.permute.xlu0 %6471
        %6473 = vset.pattern.permute.xlu0 0
        %6474 = vperm.xlu0 %6473, %v6308
        %v6475 = vpop.permute.xlu0 %6474
        %6476 = vset.pattern.permute.xlu0 0
        %6477 = vperm.xlu0 %6476, %v6323
        %v6478 = vpop.permute.xlu0 %6477
        %6479 = vset.pattern.permute.xlu0 0
        %6480 = vperm.xlu0 %6479, %v6358
        %v6481 = vpop.permute.xlu0 %6480
        %6482 = vset.pattern.permute.xlu0 0
        %6483 = vperm.xlu0 %6482, %v6351
        %v6484 = vpop.permute.xlu0 %6483
        %6485 = vset.pattern.permute.xlu0 0
        %6486 = vperm.xlu0 %6485, %v6353
        %v6487 = vpop.permute.xlu0 %6486
        %6488 = vset.pattern.permute.xlu0 0
        %6489 = vperm.xlu0 %6488, %v6355
        %v6490 = vpop.permute.xlu0 %6489
        %6491 = vset.pattern.permute.xlu0 0
        %6492 = vperm.xlu0 %6491, %v6357
        %v6493 = vpop.permute.xlu0 %6492
        %vm6494 = vcmp.eq.s32.totalorder %v3115, %v6469
        %vm6495 = vcmp.eq.s32.totalorder %v3119, %v6469
        %vm6496 = vcmp.eq.s32.totalorder %v3123, %v6469
        %vm6497 = vcmp.eq.s32.totalorder %v3127, %v6469
        %vm6498 = vcmp.eq.s32.totalorder %v3131, %v6469
        %vm6499 = vcmp.eq.s32.totalorder %v3135, %v6469
        %vm6500 = vcmp.eq.s32.totalorder %v3139, %v6469
        %vm6501 = vcmp.eq.s32.totalorder %v3143, %v6469
        %vm6502 = vcmp.eq.s32.totalorder %v3147, %v6469
        %vm6503 = vcmp.eq.s32.totalorder %v3115, %v6472
        %vm6504 = vcmp.eq.s32.totalorder %v3119, %v6472
        %vm6505 = vcmp.eq.s32.totalorder %v3123, %v6472
        %vm6506 = vcmp.eq.s32.totalorder %v3127, %v6472
        %vm6507 = vcmp.eq.s32.totalorder %v3131, %v6472
        %vm6508 = vcmp.eq.s32.totalorder %v3135, %v6472
        %vm6509 = vcmp.eq.s32.totalorder %v3139, %v6472
        %vm6510 = vcmp.eq.s32.totalorder %v3143, %v6472
        %vm6511 = vcmp.eq.s32.totalorder %v3147, %v6472
        %vm6512 = vcmp.eq.s32.totalorder %v3115, %v6475
        %vm6513 = vcmp.eq.s32.totalorder %v3119, %v6475
        %vm6514 = vcmp.eq.s32.totalorder %v3123, %v6475
        %vm6515 = vcmp.eq.s32.totalorder %v3127, %v6475
        %vm6516 = vcmp.eq.s32.totalorder %v3131, %v6475
        %vm6517 = vcmp.eq.s32.totalorder %v3135, %v6475
        %vm6518 = vcmp.eq.s32.totalorder %v3139, %v6475
        %vm6519 = vcmp.eq.s32.totalorder %v3143, %v6475
        %vm6520 = vcmp.eq.s32.totalorder %v3147, %v6475
        %vm6521 = vcmp.eq.s32.totalorder %v3115, %v6478
        %vm6522 = vcmp.eq.s32.totalorder %v3119, %v6478
        %vm6523 = vcmp.eq.s32.totalorder %v3123, %v6478
        %vm6524 = vcmp.eq.s32.totalorder %v3127, %v6478
        %vm6525 = vcmp.eq.s32.totalorder %v3131, %v6478
        %vm6526 = vcmp.eq.s32.totalorder %v3135, %v6478
        %vm6527 = vcmp.eq.s32.totalorder %v3139, %v6478
        %vm6528 = vcmp.eq.s32.totalorder %v3143, %v6478
        %vm6529 = vcmp.eq.s32.totalorder %v3147, %v6478
        %vm6530 = vcmp.eq.s32.totalorder %v3115, %v6481
        %vm6531 = vcmp.eq.s32.totalorder %v3119, %v6481
        %vm6532 = vcmp.eq.s32.totalorder %v3123, %v6481
        %vm6533 = vcmp.eq.s32.totalorder %v3127, %v6481
        %vm6534 = vcmp.eq.s32.totalorder %v3131, %v6481
        %vm6535 = vcmp.eq.s32.totalorder %v3135, %v6481
        %vm6536 = vcmp.eq.s32.totalorder %v3139, %v6481
        %vm6537 = vcmp.eq.s32.totalorder %v3143, %v6481
        %vm6538 = vcmp.eq.s32.totalorder %v3147, %v6481
        %vm6539 = vcmp.eq.s32.totalorder %v3115, %v6484
        %vm6540 = vcmp.eq.s32.totalorder %v3119, %v6484
        %vm6541 = vcmp.eq.s32.totalorder %v3123, %v6484
        %vm6542 = vcmp.eq.s32.totalorder %v3127, %v6484
        %vm6543 = vcmp.eq.s32.totalorder %v3131, %v6484
        %vm6544 = vcmp.eq.s32.totalorder %v3135, %v6484
        %vm6545 = vcmp.eq.s32.totalorder %v3139, %v6484
        %vm6546 = vcmp.eq.s32.totalorder %v3143, %v6484
        %vm6547 = vcmp.eq.s32.totalorder %v3147, %v6484
        %vm6548 = vcmp.eq.s32.totalorder %v3115, %v6487
        %vm6549 = vcmp.eq.s32.totalorder %v3119, %v6487
        %vm6550 = vcmp.eq.s32.totalorder %v3123, %v6487
        %vm6551 = vcmp.eq.s32.totalorder %v3127, %v6487
        %vm6552 = vcmp.eq.s32.totalorder %v3131, %v6487
        %vm6553 = vcmp.eq.s32.totalorder %v3135, %v6487
        %vm6554 = vcmp.eq.s32.totalorder %v3139, %v6487
        %vm6555 = vcmp.eq.s32.totalorder %v3143, %v6487
        %vm6556 = vcmp.eq.s32.totalorder %v3147, %v6487
        %vm6557 = vcmp.eq.s32.totalorder %v3115, %v6490
        %vm6558 = vcmp.eq.s32.totalorder %v3119, %v6490
        %vm6559 = vcmp.eq.s32.totalorder %v3123, %v6490
        %vm6560 = vcmp.eq.s32.totalorder %v3127, %v6490
        %vm6561 = vcmp.eq.s32.totalorder %v3131, %v6490
        %vm6562 = vcmp.eq.s32.totalorder %v3135, %v6490
        %vm6563 = vcmp.eq.s32.totalorder %v3139, %v6490
        %vm6564 = vcmp.eq.s32.totalorder %v3143, %v6490
        %vm6565 = vcmp.eq.s32.totalorder %v3147, %v6490
        %vm6566 = vcmp.eq.s32.totalorder %v3115, %v6493
        %vm6567 = vcmp.eq.s32.totalorder %v3119, %v6493
        %vm6568 = vcmp.eq.s32.totalorder %v3123, %v6493
        %vm6569 = vcmp.eq.s32.totalorder %v3127, %v6493
        %vm6570 = vcmp.eq.s32.totalorder %v3131, %v6493
        %vm6571 = vcmp.eq.s32.totalorder %v3135, %v6493
        %vm6572 = vcmp.eq.s32.totalorder %v3139, %v6493
        %vm6573 = vcmp.eq.s32.totalorder %v3143, %v6493
        %vm6574 = vcmp.eq.s32.totalorder %v3147, %v6493
        %vm6575 = vmor %vm6386, %vm6494
        %vm6576 = vmor %vm6387, %vm6495
        %vm6577 = vmor %vm6388, %vm6496
        %vm6578 = vmor %vm6389, %vm6497
        %vm6579 = vmor %vm6390, %vm6498
        %vm6580 = vmor %vm6391, %vm6499
        %vm6581 = vmor %vm6392, %vm6500
        %vm6582 = vmor %vm6393, %vm6501
        %vm6583 = vmor %vm6394, %vm6502
        %vm6584 = vmor %vm6395, %vm6503
        %vm6585 = vmor %vm6396, %vm6504
        %vm6586 = vmor %vm6397, %vm6505
        %vm6587 = vmor %vm6398, %vm6506
        %vm6588 = vmor %vm6399, %vm6507
        %vm6589 = vmor %vm6400, %vm6508
        %vm6590 = vmor %vm6401, %vm6509
        %vm6591 = vmor %vm6402, %vm6510
        %vm6592 = vmor %vm6403, %vm6511
        %vm6593 = vmor %vm6404, %vm6512
        %vm6594 = vmor %vm6405, %vm6513
        %vm6595 = vmor %vm6406, %vm6514
        %vm6596 = vmor %vm6407, %vm6515
        %vm6597 = vmor %vm6408, %vm6516
        %vm6598 = vmor %vm6409, %vm6517
        %vm6599 = vmor %vm6410, %vm6518
        %vm6600 = vmor %vm6411, %vm6519
        %vm6601 = vmor %vm6412, %vm6520
        %vm6602 = vmor %vm6413, %vm6521
        %vm6603 = vmor %vm6414, %vm6522
        %vm6604 = vmor %vm6415, %vm6523
        %vm6605 = vmor %vm6416, %vm6524
        %vm6606 = vmor %vm6417, %vm6525
        %vm6607 = vmor %vm6418, %vm6526
        %vm6608 = vmor %vm6419, %vm6527
        %vm6609 = vmor %vm6420, %vm6528
        %vm6610 = vmor %vm6421, %vm6529
        %vm6611 = vmor %vm6422, %vm6530
        %vm6612 = vmor %vm6423, %vm6531
        %vm6613 = vmor %vm6424, %vm6532
        %vm6614 = vmor %vm6425, %vm6533
        %vm6615 = vmor %vm6426, %vm6534
        %vm6616 = vmor %vm6427, %vm6535
        %vm6617 = vmor %vm6428, %vm6536
        %vm6618 = vmor %vm6429, %vm6537
        %vm6619 = vmor %vm6430, %vm6538
        %vm6620 = vmor %vm6431, %vm6539
        %vm6621 = vmor %vm6432, %vm6540
        %vm6622 = vmor %vm6433, %vm6541
        %vm6623 = vmor %vm6434, %vm6542
        %vm6624 = vmor %vm6435, %vm6543
        %vm6625 = vmor %vm6436, %vm6544
        %vm6626 = vmor %vm6437, %vm6545
        %vm6627 = vmor %vm6438, %vm6546
        %vm6628 = vmor %vm6439, %vm6547
        %vm6629 = vmor %vm6440, %vm6548
        %vm6630 = vmor %vm6441, %vm6549
        %vm6631 = vmor %vm6442, %vm6550
        %vm6632 = vmor %vm6443, %vm6551
        %vm6633 = vmor %vm6444, %vm6552
        %vm6634 = vmor %vm6445, %vm6553
        %vm6635 = vmor %vm6446, %vm6554
        %vm6636 = vmor %vm6447, %vm6555
        %vm6637 = vmor %vm6448, %vm6556
        %vm6638 = vmor %vm6449, %vm6557
        %vm6639 = vmor %vm6450, %vm6558
        %vm6640 = vmor %vm6451, %vm6559
        %vm6641 = vmor %vm6452, %vm6560
        %vm6642 = vmor %vm6453, %vm6561
        %vm6643 = vmor %vm6454, %vm6562
        %vm6644 = vmor %vm6455, %vm6563
        %vm6645 = vmor %vm6456, %vm6564
        %vm6646 = vmor %vm6457, %vm6565
        %vm6647 = vmor %vm6458, %vm6566
        %vm6648 = vmor %vm6459, %vm6567
        %vm6649 = vmor %vm6460, %vm6568
        %vm6650 = vmor %vm6461, %vm6569
        %vm6651 = vmor %vm6462, %vm6570
        %vm6652 = vmor %vm6463, %vm6571
        %vm6653 = vmor %vm6464, %vm6572
        %vm6654 = vmor %vm6465, %vm6573
        %vm6655 = vmor %vm6466, %vm6574
        %v6656 = vsel %vm6575, 1, 0
        %v6657 = vsel %vm6576, 1, 0
        %v6658 = vsel %vm6577, 1, 0
        %v6659 = vsel %vm6578, 1, 0
        %v6660 = vsel %vm6579, 1, 0
        %v6661 = vsel %vm6580, 1, 0
        %v6662 = vsel %vm6581, 1, 0
        %v6663 = vsel %vm6582, 1, 0
        %v6664 = vsel %vm6583, 1, 0
        %v6665 = vsel %vm6584, 1, 0
        %v6666 = vsel %vm6585, 1, 0
        %v6667 = vsel %vm6586, 1, 0
        %v6668 = vsel %vm6587, 1, 0
        %v6669 = vsel %vm6588, 1, 0
        %v6670 = vsel %vm6589, 1, 0
        %v6671 = vsel %vm6590, 1, 0
        %v6672 = vsel %vm6591, 1, 0
        %v6673 = vsel %vm6592, 1, 0
        %v6674 = vsel %vm6593, 1, 0
        %v6675 = vsel %vm6594, 1, 0
        %v6676 = vsel %vm6595, 1, 0
        %v6677 = vsel %vm6596, 1, 0
        %v6678 = vsel %vm6597, 1, 0
        %v6679 = vsel %vm6598, 1, 0
        %v6680 = vsel %vm6599, 1, 0
        %v6681 = vsel %vm6600, 1, 0
        %v6682 = vsel %vm6601, 1, 0
        %v6683 = vsel %vm6602, 1, 0
        %v6684 = vsel %vm6603, 1, 0
        %v6685 = vsel %vm6604, 1, 0
        %v6686 = vsel %vm6605, 1, 0
        %v6687 = vsel %vm6606, 1, 0
        %v6688 = vsel %vm6607, 1, 0
        %v6689 = vsel %vm6608, 1, 0
        %v6690 = vsel %vm6609, 1, 0
        %v6691 = vsel %vm6610, 1, 0
        %v6692 = vsel %vm6611, 1, 0
        %v6693 = vsel %vm6612, 1, 0
        %v6694 = vsel %vm6613, 1, 0
        %v6695 = vsel %vm6614, 1, 0
        %v6696 = vsel %vm6615, 1, 0
        %v6697 = vsel %vm6616, 1, 0
        %v6698 = vsel %vm6617, 1, 0
        %v6699 = vsel %vm6618, 1, 0
        %v6700 = vsel %vm6619, 1, 0
        %v6701 = vsel %vm6620, 1, 0
        %v6702 = vsel %vm6621, 1, 0
        %v6703 = vsel %vm6622, 1, 0
        %v6704 = vsel %vm6623, 1, 0
        %v6705 = vsel %vm6624, 1, 0
        %v6706 = vsel %vm6625, 1, 0
        %v6707 = vsel %vm6626, 1, 0
        %v6708 = vsel %vm6627, 1, 0
        %v6709 = vsel %vm6628, 1, 0
        %v6710 = vsel %vm6629, 1, 0
        %v6711 = vsel %vm6630, 1, 0
        %v6712 = vsel %vm6631, 1, 0
        %v6713 = vsel %vm6632, 1, 0
        %v6714 = vsel %vm6633, 1, 0
        %v6715 = vsel %vm6634, 1, 0
        %v6716 = vsel %vm6635, 1, 0
        %v6717 = vsel %vm6636, 1, 0
        %v6718 = vsel %vm6637, 1, 0
        %v6719 = vsel %vm6638, 1, 0
        %v6720 = vsel %vm6639, 1, 0
        %v6721 = vsel %vm6640, 1, 0
        %v6722 = vsel %vm6641, 1, 0
        %v6723 = vsel %vm6642, 1, 0
        %v6724 = vsel %vm6643, 1, 0
        %v6725 = vsel %vm6644, 1, 0
        %v6726 = vsel %vm6645, 1, 0
        %v6727 = vsel %vm6646, 1, 0
        %v6728 = vsel %vm6647, 1, 0
        %v6729 = vsel %vm6648, 1, 0
        %v6730 = vsel %vm6649, 1, 0
        %v6731 = vsel %vm6650, 1, 0
        %v6732 = vsel %vm6651, 1, 0
        %v6733 = vsel %vm6652, 1, 0
        %v6734 = vsel %vm6653, 1, 0
        %v6735 = vsel %vm6654, 1, 0
        %v6736 = vsel %vm6655, 1, 0
        %v6737 = vcvt.s32.f32 %v6656
        %v6738 = vcvt.s32.f32 %v6657
        %v6739 = vcvt.s32.f32 %v6658
        %v6740 = vcvt.s32.f32 %v6659
        %v6741 = vcvt.s32.f32 %v6660
        %v6742 = vcvt.s32.f32 %v6661
        %v6743 = vcvt.s32.f32 %v6662
        %v6744 = vcvt.s32.f32 %v6663
        %v6745 = vcvt.s32.f32 %v6664
        %v6746 = vcvt.s32.f32 %v6665
        %v6747 = vcvt.s32.f32 %v6666
        %v6748 = vcvt.s32.f32 %v6667
        %v6749 = vcvt.s32.f32 %v6668
        %v6750 = vcvt.s32.f32 %v6669
        %v6751 = vcvt.s32.f32 %v6670
        %v6752 = vcvt.s32.f32 %v6671
        %v6753 = vcvt.s32.f32 %v6672
        %v6754 = vcvt.s32.f32 %v6673
        %v6755 = vcvt.s32.f32 %v6674
        %v6756 = vcvt.s32.f32 %v6675
        %v6757 = vcvt.s32.f32 %v6676
        %v6758 = vcvt.s32.f32 %v6677
        %v6759 = vcvt.s32.f32 %v6678
        %v6760 = vcvt.s32.f32 %v6679
        %v6761 = vcvt.s32.f32 %v6680
        %v6762 = vcvt.s32.f32 %v6681
        %v6763 = vcvt.s32.f32 %v6682
        %v6764 = vcvt.s32.f32 %v6683
        %v6765 = vcvt.s32.f32 %v6684
        %v6766 = vcvt.s32.f32 %v6685
        %v6767 = vcvt.s32.f32 %v6686
        %v6768 = vcvt.s32.f32 %v6687
        %v6769 = vcvt.s32.f32 %v6688
        %v6770 = vcvt.s32.f32 %v6689
        %v6771 = vcvt.s32.f32 %v6690
        %v6772 = vcvt.s32.f32 %v6691
        %v6773 = vcvt.s32.f32 %v6692
        %v6774 = vcvt.s32.f32 %v6693
        %v6775 = vcvt.s32.f32 %v6694
        %v6776 = vcvt.s32.f32 %v6695
        %v6777 = vcvt.s32.f32 %v6696
        %v6778 = vcvt.s32.f32 %v6697
        %v6779 = vcvt.s32.f32 %v6698
        %v6780 = vcvt.s32.f32 %v6699
        %v6781 = vcvt.s32.f32 %v6700
        %v6782 = vcvt.s32.f32 %v6701
        %v6783 = vcvt.s32.f32 %v6702
        %v6784 = vcvt.s32.f32 %v6703
        %v6785 = vcvt.s32.f32 %v6704
        %v6786 = vcvt.s32.f32 %v6705
        %v6787 = vcvt.s32.f32 %v6706
        %v6788 = vcvt.s32.f32 %v6707
        %v6789 = vcvt.s32.f32 %v6708
        %v6790 = vcvt.s32.f32 %v6709
        %v6791 = vcvt.s32.f32 %v6710
        %v6792 = vcvt.s32.f32 %v6711
        %v6793 = vcvt.s32.f32 %v6712
        %v6794 = vcvt.s32.f32 %v6713
        %v6795 = vcvt.s32.f32 %v6714
        %v6796 = vcvt.s32.f32 %v6715
        %v6797 = vcvt.s32.f32 %v6716
        %v6798 = vcvt.s32.f32 %v6717
        %v6799 = vcvt.s32.f32 %v6718
        %v6800 = vcvt.s32.f32 %v6719
        %v6801 = vcvt.s32.f32 %v6720
        %v6802 = vcvt.s32.f32 %v6721
        %v6803 = vcvt.s32.f32 %v6722
        %v6804 = vcvt.s32.f32 %v6723
        %v6805 = vcvt.s32.f32 %v6724
        %v6806 = vcvt.s32.f32 %v6725
        %v6807 = vcvt.s32.f32 %v6726
        %v6808 = vcvt.s32.f32 %v6727
        %v6809 = vcvt.s32.f32 %v6728
        %v6810 = vcvt.s32.f32 %v6729
        %v6811 = vcvt.s32.f32 %v6730
        %v6812 = vcvt.s32.f32 %v6731
        %v6813 = vcvt.s32.f32 %v6732
        %v6814 = vcvt.s32.f32 %v6733
        %v6815 = vcvt.s32.f32 %v6734
        %v6816 = vcvt.s32.f32 %v6735
        %v6817 = vcvt.s32.f32 %v6736
        %v6818 = vld [vmem:[#allocation40] sm:$0xff]
        %v6819 = vld [vmem:[#allocation40 + $0x8] sm:$0xff]
        %v6820 = vld [vmem:[#allocation40 + $0x10] sm:$0xff]
        %v6821 = vld [vmem:[#allocation40 + $0x18] sm:$0xff]
        %v6822 = vld [vmem:[#allocation40 + $0x20] sm:$0xff]
        %v6823 = vld [vmem:[#allocation40 + $0x28] sm:$0xff]
        %v6824 = vld [vmem:[#allocation40 + $0x30] sm:$0xff]
        %v6825 = vld [vmem:[#allocation40 + $0x38] sm:$0xff]
        %v6826 = vld [vmem:[#allocation40 + $0x40] sm:$0xff]
        %v6827 = vld [vmem:[#allocation40 + $0x48] sm:$0xff]
        %v6828 = vld [vmem:[#allocation40 + $0x50] sm:$0xff]
        %v6829 = vld [vmem:[#allocation40 + $0x58] sm:$0xff]
        %v6830 = vld [vmem:[#allocation40 + $0x60] sm:$0xff]
        %v6831 = vld [vmem:[#allocation40 + $0x68] sm:$0xff]
        %v6832 = vld [vmem:[#allocation40 + $0x70] sm:$0xff]
        %v6833 = vld [vmem:[#allocation40 + $0x78] sm:$0xff]
        %v6834 = vld [vmem:[#allocation40 + $0x80] sm:$0xff]
        %v6835 = vld [vmem:[#allocation40 + $0x88] sm:$0xff]
        %v6836 = vld [vmem:[#allocation42] sm:$0xff]
        %v6837 = vld [vmem:[#allocation42 + $0x8] sm:$0x1]
        %v6840 = vlaneseq
        %v6841 = vshrl.u32 %v6840, 7
        %v6842 = vsub.s32 0, %v6841
        %v6843 = vrot.slane %v6836, %v6842
        %v6844 = vlaneseq
        %v6845 = vshrl.u32 %v6844, 7
        %v6846 = vsub.s32 1, %v6845
        %v6847 = vrot.slane %v6836, %v6846
        %v6848 = vlaneseq
        %v6849 = vshrl.u32 %v6848, 7
        %v6850 = vsub.s32 2, %v6849
        %v6851 = vrot.slane %v6836, %v6850
        %v6852 = vlaneseq
        %v6853 = vshrl.u32 %v6852, 7
        %v6854 = vsub.s32 3, %v6853
        %v6855 = vrot.slane %v6836, %v6854
        %v6856 = vlaneseq
        %v6857 = vshrl.u32 %v6856, 7
        %v6858 = vsub.s32 4, %v6857
        %v6859 = vrot.slane %v6836, %v6858
        %v6860 = vlaneseq
        %v6861 = vshrl.u32 %v6860, 7
        %v6862 = vsub.s32 5, %v6861
        %v6863 = vrot.slane %v6836, %v6862
        %v6864 = vlaneseq
        %v6865 = vshrl.u32 %v6864, 7
        %v6866 = vsub.s32 6, %v6865
        %v6867 = vrot.slane %v6836, %v6866
        %v6868 = vlaneseq
        %v6869 = vshrl.u32 %v6868, 7
        %v6870 = vsub.s32 7, %v6869
        %v6871 = vrot.slane %v6836, %v6870
        %v6872 = vlaneseq
        %v6873 = vshrl.u32 %v6872, 7
        %v6874 = vsub.s32 0, %v6873
        %v6875 = vrot.slane %v6837, %v6874
        %6885 = vmatprep.subr.mxu0 0.0
        %6886 = vmatpush1.msra.mxu0 0.0
        %6887 = vmatprep.subr.mxu0 0.0
        %6888 = vmatpush1.msra.mxu0 0.0
        %6889 = vmatprep.subr.mxu0 0.0
        %6890 = vmatpush1.msra.mxu0 0.0
        %6891 = vmatprep.subr.mxu0 0.0
        %6892 = vmatpush1.msra.mxu0 0.0
        %6893 = vmatprep.subr.mxu0 0.0
        %6894 = vmatpush1.msra.mxu0 0.0
        %6895 = vmatprep.subr.mxu0 0.0
        %6896 = vmatpush1.msra.mxu0 0.0
        %6897 = vmatprep.subr.mxu0 0.0
        %6898 = vmatpush1.msra.mxu0 0.0
        %6899 = vmatprep.subr.mxu0 0.0
        %6900 = vmatpush1.msra.mxu0 0.0
        %6901 = vmatprep.subr.mxu0 0.0
        %6902 = vmatpush1.msra.mxu0 0.0
        %6903 = vmatprep.subr.mxu0 0.0
        %6904 = vmatpush1.msra.mxu0 0.0
        %6905 = vmatprep.subr.mxu0 0.0
        %6906 = vmatpush1.msra.mxu0 0.0
        %6907 = vmatprep.subr.mxu0 0.0
        %6908 = vmatpush1.msra.mxu0 0.0
        %6909 = vmatprep.subr.mxu0 0.0
        %6910 = vmatpush1.msra.mxu0 0.0
        %6911 = vmatprep.subr.mxu0 0.0
        %6912 = vmatpush1.msra.mxu0 0.0
        %6913 = vmatprep.subr.mxu0 %v6828
        %6914 = vmatpush1.msra.mxu0 %v6827
        %6915 = vmatprep.subr.mxu0 %v6819
        %6916 = vmatpush1.msra.mxu0 %v6818
        %6917 = vmatprep.subr.mxu0 0.0
        %6918 = vmatpush2.msra.mxu0 0.0
        %6919 = vmatprep.subr.mxu0 0.0
        %6920 = vmatpush2.msra.mxu0 0.0
        %6921 = vmatprep.subr.mxu0 0.0
        %6922 = vmatpush2.msra.mxu0 0.0
        %6923 = vmatprep.subr.mxu0 0.0
        %6924 = vmatpush2.msra.mxu0 0.0
        %6925 = vmatprep.subr.mxu0 0.0
        %6926 = vmatpush2.msra.mxu0 0.0
        %6927 = vmatprep.subr.mxu0 0.0
        %6928 = vmatpush2.msra.mxu0 0.0
        %6929 = vmatprep.subr.mxu0 0.0
        %6930 = vmatpush2.msra.mxu0 0.0
        %6931 = vmatprep.subr.mxu0 0.0
        %6932 = vmatpush2.msra.mxu0 0.0
        %6933 = vmatprep.subr.mxu0 0.0
        %6934 = vmatpush2.msra.mxu0 0.0
        %6935 = vmatprep.subr.mxu0 0.0
        %6936 = vmatpush2.msra.mxu0 0.0
        %6937 = vmatprep.subr.mxu0 0.0
        %6938 = vmatpush2.msra.mxu0 0.0
        %6939 = vmatprep.subr.mxu0 0.0
        %6940 = vmatpush2.msra.mxu0 0.0
        %6941 = vmatprep.subr.mxu0 0.0
        %6942 = vmatpush2.msra.mxu0 0.0
        %6943 = vmatprep.subr.mxu0 0.0
        %6944 = vmatpush2.msra.mxu0 0.0
        %6945 = vmatprep.subr.mxu0 0.0
        %6946 = vmatpush2.msra.mxu0 0.0
        %6947 = vmatprep.subr.mxu0 0.0
        %6948 = vmatpush2.msra.mxu0 0.0
        %6949 = vmatprep.mubr.f32.mxu0 0.0
        %6950 = vmatmul.mubr.f32.gmra.mxu0 %v5803
        %v6951 = vpop.f32.mrf.mxu0
        %v6952 = vadd.f32 %v6843, %v6951
        %v6953 = vpop.f32.mrf.mxu0
        %v6954 = vadd.f32 %v6847, %v6953
        %6955 = vmatprep.mubr.f32.mxu0 0.0
        %6956 = vmatmul.mubr.f32.gmra.mxu0 %v5806
        %v6957 = vpop.f32.mrf.mxu0
        %v6958 = vadd.f32 %v6843, %v6957
        %v6959 = vpop.f32.mrf.mxu0
        %v6960 = vadd.f32 %v6847, %v6959
        %6961 = vmatprep.mubr.f32.mxu0 0.0
        %6962 = vmatmul.mubr.f32.gmra.mxu0 %v5809
        %v6963 = vpop.f32.mrf.mxu0
        %v6964 = vadd.f32 %v6843, %v6963
        %v6965 = vpop.f32.mrf.mxu0
        %v6966 = vadd.f32 %v6847, %v6965
        %6967 = vmatprep.mubr.f32.mxu0 0.0
        %6968 = vmatmul.mubr.f32.gmra.mxu0 %v5812
        %v6969 = vpop.f32.mrf.mxu0
        %v6970 = vadd.f32 %v6843, %v6969
        %v6971 = vpop.f32.mrf.mxu0
        %v6972 = vadd.f32 %v6847, %v6971
        %6973 = vmatprep.mubr.f32.mxu0 0.0
        %6974 = vmatmul.mubr.f32.gmra.mxu0 %v5815
        %v6975 = vpop.f32.mrf.mxu0
        %v6976 = vadd.f32 %v6843, %v6975
        %v6977 = vpop.f32.mrf.mxu0
        %v6978 = vadd.f32 %v6847, %v6977
        %6979 = vmatprep.mubr.f32.mxu0 0.0
        %6980 = vmatmul.mubr.f32.gmra.mxu0 %v5818
        %v6981 = vpop.f32.mrf.mxu0
        %v6982 = vadd.f32 %v6843, %v6981
        %v6983 = vpop.f32.mrf.mxu0
        %v6984 = vadd.f32 %v6847, %v6983
        %6985 = vmatprep.mubr.f32.mxu0 0.0
        %6986 = vmatmul.mubr.f32.gmra.mxu0 %v5821
        %v6987 = vpop.f32.mrf.mxu0
        %v6988 = vadd.f32 %v6843, %v6987
        %v6989 = vpop.f32.mrf.mxu0
        %v6990 = vadd.f32 %v6847, %v6989
        %6991 = vmatprep.mubr.f32.mxu0 0.0
        %6992 = vmatmul.mubr.f32.gmra.mxu0 %v5824
        %v6993 = vpop.f32.mrf.mxu0
        %v6994 = vadd.f32 %v6843, %v6993
        %v6995 = vpop.f32.mrf.mxu0
        %v6996 = vadd.f32 %v6847, %v6995
        %6997 = vmatprep.mubr.f32.mxu0 0.0
        %6998 = vmatmul.mubr.f32.gmra.mxu0 %v5827
        %v6999 = vpop.f32.mrf.mxu0
        %v7000 = vadd.f32 %v6843, %v6999
        %v7001 = vpop.f32.mrf.mxu0
        %v7002 = vadd.f32 %v6847, %v7001
        %7003 = vdwg.mxu0
        %7004 = vmatprep.subr.mxu0 0.0
        %7005 = vmatpush1.msra.mxu0 0.0
        %7006 = vmatprep.subr.mxu0 0.0
        %7007 = vmatpush1.msra.mxu0 0.0
        %7008 = vmatprep.subr.mxu0 0.0
        %7009 = vmatpush1.msra.mxu0 0.0
        %7010 = vmatprep.subr.mxu0 0.0
        %7011 = vmatpush1.msra.mxu0 0.0
        %7012 = vmatprep.subr.mxu0 0.0
        %7013 = vmatpush1.msra.mxu0 0.0
        %7014 = vmatprep.subr.mxu0 0.0
        %7015 = vmatpush1.msra.mxu0 0.0
        %7016 = vmatprep.subr.mxu0 0.0
        %7017 = vmatpush1.msra.mxu0 0.0
        %7018 = vmatprep.subr.mxu0 0.0
        %7019 = vmatpush1.msra.mxu0 0.0
        %7020 = vmatprep.subr.mxu0 0.0
        %7021 = vmatpush1.msra.mxu0 0.0
        %7022 = vmatprep.subr.mxu0 0.0
        %7023 = vmatpush1.msra.mxu0 0.0
        %7024 = vmatprep.subr.mxu0 0.0
        %7025 = vmatpush1.msra.mxu0 0.0
        %7026 = vmatprep.subr.mxu0 0.0
        %7027 = vmatpush1.msra.mxu0 0.0
        %7028 = vmatprep.subr.mxu0 0.0
        %7029 = vmatpush1.msra.mxu0 0.0
        %7030 = vmatprep.subr.mxu0 0.0
        %7031 = vmatpush1.msra.mxu0 0.0
        %7032 = vmatprep.subr.mxu0 %v6830
        %7033 = vmatpush1.msra.mxu0 %v6829
        %7034 = vmatprep.subr.mxu0 %v6821
        %7035 = vmatpush1.msra.mxu0 %v6820
        %7036 = vmatprep.subr.mxu0 0.0
        %7037 = vmatpush2.msra.mxu0 0.0
        %7038 = vmatprep.subr.mxu0 0.0
        %7039 = vmatpush2.msra.mxu0 0.0
        %7040 = vmatprep.subr.mxu0 0.0
        %7041 = vmatpush2.msra.mxu0 0.0
        %7042 = vmatprep.subr.mxu0 0.0
        %7043 = vmatpush2.msra.mxu0 0.0
        %7044 = vmatprep.subr.mxu0 0.0
        %7045 = vmatpush2.msra.mxu0 0.0
        %7046 = vmatprep.subr.mxu0 0.0
        %7047 = vmatpush2.msra.mxu0 0.0
        %7048 = vmatprep.subr.mxu0 0.0
        %7049 = vmatpush2.msra.mxu0 0.0
        %7050 = vmatprep.subr.mxu0 0.0
        %7051 = vmatpush2.msra.mxu0 0.0
        %7052 = vmatprep.subr.mxu0 0.0
        %7053 = vmatpush2.msra.mxu0 0.0
        %7054 = vmatprep.subr.mxu0 0.0
        %7055 = vmatpush2.msra.mxu0 0.0
        %7056 = vmatprep.subr.mxu0 0.0
        %7057 = vmatpush2.msra.mxu0 0.0
        %7058 = vmatprep.subr.mxu0 0.0
        %7059 = vmatpush2.msra.mxu0 0.0
        %7060 = vmatprep.subr.mxu0 0.0
        %7061 = vmatpush2.msra.mxu0 0.0
        %7062 = vmatprep.subr.mxu0 0.0
        %7063 = vmatpush2.msra.mxu0 0.0
        %7064 = vmatprep.subr.mxu0 0.0
        %7065 = vmatpush2.msra.mxu0 0.0
        %7066 = vmatprep.subr.mxu0 0.0
        %7067 = vmatpush2.msra.mxu0 0.0
        %7068 = vmatprep.mubr.f32.mxu0 0.0
        %7069 = vmatmul.mubr.f32.gmra.mxu0 %v5803
        %v7070 = vpop.f32.mrf.mxu0
        %v7071 = vadd.f32 %v6851, %v7070
        %v7072 = vpop.f32.mrf.mxu0
        %v7073 = vadd.f32 %v6855, %v7072
        %7074 = vmatprep.mubr.f32.mxu0 0.0
        %7075 = vmatmul.mubr.f32.gmra.mxu0 %v5806
        %v7076 = vpop.f32.mrf.mxu0
        %v7077 = vadd.f32 %v6851, %v7076
        %v7078 = vpop.f32.mrf.mxu0
        %v7079 = vadd.f32 %v6855, %v7078
        %7080 = vmatprep.mubr.f32.mxu0 0.0
        %7081 = vmatmul.mubr.f32.gmra.mxu0 %v5809
        %v7082 = vpop.f32.mrf.mxu0
        %v7083 = vadd.f32 %v6851, %v7082
        %v7084 = vpop.f32.mrf.mxu0
        %v7085 = vadd.f32 %v6855, %v7084
        %7086 = vmatprep.mubr.f32.mxu0 0.0
        %7087 = vmatmul.mubr.f32.gmra.mxu0 %v5812
        %v7088 = vpop.f32.mrf.mxu0
        %v7089 = vadd.f32 %v6851, %v7088
        %v7090 = vpop.f32.mrf.mxu0
        %v7091 = vadd.f32 %v6855, %v7090
        %7092 = vmatprep.mubr.f32.mxu0 0.0
        %7093 = vmatmul.mubr.f32.gmra.mxu0 %v5815
        %v7094 = vpop.f32.mrf.mxu0
        %v7095 = vadd.f32 %v6851, %v7094
        %v7096 = vpop.f32.mrf.mxu0
        %v7097 = vadd.f32 %v6855, %v7096
        %7098 = vmatprep.mubr.f32.mxu0 0.0
        %7099 = vmatmul.mubr.f32.gmra.mxu0 %v5818
        %v7100 = vpop.f32.mrf.mxu0
        %v7101 = vadd.f32 %v6851, %v7100
        %v7102 = vpop.f32.mrf.mxu0
        %v7103 = vadd.f32 %v6855, %v7102
        %7104 = vmatprep.mubr.f32.mxu0 0.0
        %7105 = vmatmul.mubr.f32.gmra.mxu0 %v5821
        %v7106 = vpop.f32.mrf.mxu0
        %v7107 = vadd.f32 %v6851, %v7106
        %v7108 = vpop.f32.mrf.mxu0
        %v7109 = vadd.f32 %v6855, %v7108
        %7110 = vmatprep.mubr.f32.mxu0 0.0
        %7111 = vmatmul.mubr.f32.gmra.mxu0 %v5824
        %v7112 = vpop.f32.mrf.mxu0
        %v7113 = vadd.f32 %v6851, %v7112
        %v7114 = vpop.f32.mrf.mxu0
        %v7115 = vadd.f32 %v6855, %v7114
        %7116 = vmatprep.mubr.f32.mxu0 0.0
        %7117 = vmatmul.mubr.f32.gmra.mxu0 %v5827
        %v7118 = vpop.f32.mrf.mxu0
        %v7119 = vadd.f32 %v6851, %v7118
        %v7120 = vpop.f32.mrf.mxu0
        %v7121 = vadd.f32 %v6855, %v7120
        %7122 = vdwg.mxu0
        %7123 = vmatprep.subr.mxu0 0.0
        %7124 = vmatpush1.msra.mxu0 0.0
        %7125 = vmatprep.subr.mxu0 0.0
        %7126 = vmatpush1.msra.mxu0 0.0
        %7127 = vmatprep.subr.mxu0 0.0
        %7128 = vmatpush1.msra.mxu0 0.0
        %7129 = vmatprep.subr.mxu0 0.0
        %7130 = vmatpush1.msra.mxu0 0.0
        %7131 = vmatprep.subr.mxu0 0.0
        %7132 = vmatpush1.msra.mxu0 0.0
        %7133 = vmatprep.subr.mxu0 0.0
        %7134 = vmatpush1.msra.mxu0 0.0
        %7135 = vmatprep.subr.mxu0 0.0
        %7136 = vmatpush1.msra.mxu0 0.0
        %7137 = vmatprep.subr.mxu0 0.0
        %7138 = vmatpush1.msra.mxu0 0.0
        %7139 = vmatprep.subr.mxu0 0.0
        %7140 = vmatpush1.msra.mxu0 0.0
        %7141 = vmatprep.subr.mxu0 0.0
        %7142 = vmatpush1.msra.mxu0 0.0
        %7143 = vmatprep.subr.mxu0 0.0
        %7144 = vmatpush1.msra.mxu0 0.0
        %7145 = vmatprep.subr.mxu0 0.0
        %7146 = vmatpush1.msra.mxu0 0.0
        %7147 = vmatprep.subr.mxu0 0.0
        %7148 = vmatpush1.msra.mxu0 0.0
        %7149 = vmatprep.subr.mxu0 0.0
        %7150 = vmatpush1.msra.mxu0 0.0
        %7151 = vmatprep.subr.mxu0 %v6832
        %7152 = vmatpush1.msra.mxu0 %v6831
        %7153 = vmatprep.subr.mxu0 %v6823
        %7154 = vmatpush1.msra.mxu0 %v6822
        %7155 = vmatprep.subr.mxu0 0.0
        %7156 = vmatpush2.msra.mxu0 0.0
        %7157 = vmatprep.subr.mxu0 0.0
        %7158 = vmatpush2.msra.mxu0 0.0
        %7159 = vmatprep.subr.mxu0 0.0
        %7160 = vmatpush2.msra.mxu0 0.0
        %7161 = vmatprep.subr.mxu0 0.0
        %7162 = vmatpush2.msra.mxu0 0.0
        %7163 = vmatprep.subr.mxu0 0.0
        %7164 = vmatpush2.msra.mxu0 0.0
        %7165 = vmatprep.subr.mxu0 0.0
        %7166 = vmatpush2.msra.mxu0 0.0
        %7167 = vmatprep.subr.mxu0 0.0
        %7168 = vmatpush2.msra.mxu0 0.0
        %7169 = vmatprep.subr.mxu0 0.0
        %7170 = vmatpush2.msra.mxu0 0.0
        %7171 = vmatprep.subr.mxu0 0.0
        %7172 = vmatpush2.msra.mxu0 0.0
        %7173 = vmatprep.subr.mxu0 0.0
        %7174 = vmatpush2.msra.mxu0 0.0
        %7175 = vmatprep.subr.mxu0 0.0
        %7176 = vmatpush2.msra.mxu0 0.0
        %7177 = vmatprep.subr.mxu0 0.0
        %7178 = vmatpush2.msra.mxu0 0.0
        %7179 = vmatprep.subr.mxu0 0.0
        %7180 = vmatpush2.msra.mxu0 0.0
        %7181 = vmatprep.subr.mxu0 0.0
        %7182 = vmatpush2.msra.mxu0 0.0
        %7183 = vmatprep.subr.mxu0 0.0
        %7184 = vmatpush2.msra.mxu0 0.0
        %7185 = vmatprep.subr.mxu0 0.0
        %7186 = vmatpush2.msra.mxu0 0.0
        %7187 = vmatprep.mubr.f32.mxu0 0.0
        %7188 = vmatmul.mubr.f32.gmra.mxu0 %v5803
        %v7189 = vpop.f32.mrf.mxu0
        %v7190 = vadd.f32 %v6859, %v7189
        %v7191 = vpop.f32.mrf.mxu0
        %v7192 = vadd.f32 %v6863, %v7191
        %7193 = vmatprep.mubr.f32.mxu0 0.0
        %7194 = vmatmul.mubr.f32.gmra.mxu0 %v5806
        %v7195 = vpop.f32.mrf.mxu0
        %v7196 = vadd.f32 %v6859, %v7195
        %v7197 = vpop.f32.mrf.mxu0
        %v7198 = vadd.f32 %v6863, %v7197
        %7199 = vmatprep.mubr.f32.mxu0 0.0
        %7200 = vmatmul.mubr.f32.gmra.mxu0 %v5809
        %v7201 = vpop.f32.mrf.mxu0
        %v7202 = vadd.f32 %v6859, %v7201
        %v7203 = vpop.f32.mrf.mxu0
        %v7204 = vadd.f32 %v6863, %v7203
        %7205 = vmatprep.mubr.f32.mxu0 0.0
        %7206 = vmatmul.mubr.f32.gmra.mxu0 %v5812
        %v7207 = vpop.f32.mrf.mxu0
        %v7208 = vadd.f32 %v6859, %v7207
        %v7209 = vpop.f32.mrf.mxu0
        %v7210 = vadd.f32 %v6863, %v7209
        %7211 = vmatprep.mubr.f32.mxu0 0.0
        %7212 = vmatmul.mubr.f32.gmra.mxu0 %v5815
        %v7213 = vpop.f32.mrf.mxu0
        %v7214 = vadd.f32 %v6859, %v7213
        %v7215 = vpop.f32.mrf.mxu0
        %v7216 = vadd.f32 %v6863, %v7215
        %7217 = vmatprep.mubr.f32.mxu0 0.0
        %7218 = vmatmul.mubr.f32.gmra.mxu0 %v5818
        %v7219 = vpop.f32.mrf.mxu0
        %v7220 = vadd.f32 %v6859, %v7219
        %v7221 = vpop.f32.mrf.mxu0
        %v7222 = vadd.f32 %v6863, %v7221
        %7223 = vmatprep.mubr.f32.mxu0 0.0
        %7224 = vmatmul.mubr.f32.gmra.mxu0 %v5821
        %v7225 = vpop.f32.mrf.mxu0
        %v7226 = vadd.f32 %v6859, %v7225
        %v7227 = vpop.f32.mrf.mxu0
        %v7228 = vadd.f32 %v6863, %v7227
        %7229 = vmatprep.mubr.f32.mxu0 0.0
        %7230 = vmatmul.mubr.f32.gmra.mxu0 %v5824
        %v7231 = vpop.f32.mrf.mxu0
        %v7232 = vadd.f32 %v6859, %v7231
        %v7233 = vpop.f32.mrf.mxu0
        %v7234 = vadd.f32 %v6863, %v7233
        %7235 = vmatprep.mubr.f32.mxu0 0.0
        %7236 = vmatmul.mubr.f32.gmra.mxu0 %v5827
        %v7237 = vpop.f32.mrf.mxu0
        %v7238 = vadd.f32 %v6859, %v7237
        %v7239 = vpop.f32.mrf.mxu0
        %v7240 = vadd.f32 %v6863, %v7239
        %7241 = vdwg.mxu0
        %7242 = vmatprep.subr.mxu0 0.0
        %7243 = vmatpush1.msra.mxu0 0.0
        %7244 = vmatprep.subr.mxu0 0.0
        %7245 = vmatpush1.msra.mxu0 0.0
        %7246 = vmatprep.subr.mxu0 0.0
        %7247 = vmatpush1.msra.mxu0 0.0
        %7248 = vmatprep.subr.mxu0 0.0
        %7249 = vmatpush1.msra.mxu0 0.0
        %7250 = vmatprep.subr.mxu0 0.0
        %7251 = vmatpush1.msra.mxu0 0.0
        %7252 = vmatprep.subr.mxu0 0.0
        %7253 = vmatpush1.msra.mxu0 0.0
        %7254 = vmatprep.subr.mxu0 0.0
        %7255 = vmatpush1.msra.mxu0 0.0
        %7256 = vmatprep.subr.mxu0 0.0
        %7257 = vmatpush1.msra.mxu0 0.0
        %7258 = vmatprep.subr.mxu0 0.0
        %7259 = vmatpush1.msra.mxu0 0.0
        %7260 = vmatprep.subr.mxu0 0.0
        %7261 = vmatpush1.msra.mxu0 0.0
        %7262 = vmatprep.subr.mxu0 0.0
        %7263 = vmatpush1.msra.mxu0 0.0
        %7264 = vmatprep.subr.mxu0 0.0
        %7265 = vmatpush1.msra.mxu0 0.0
        %7266 = vmatprep.subr.mxu0 0.0
        %7267 = vmatpush1.msra.mxu0 0.0
        %7268 = vmatprep.subr.mxu0 0.0
        %7269 = vmatpush1.msra.mxu0 0.0
        %7270 = vmatprep.subr.mxu0 %v6834
        %7271 = vmatpush1.msra.mxu0 %v6833
        %7272 = vmatprep.subr.mxu0 %v6825
        %7273 = vmatpush1.msra.mxu0 %v6824
        %7274 = vmatprep.subr.mxu0 0.0
        %7275 = vmatpush2.msra.mxu0 0.0
        %7276 = vmatprep.subr.mxu0 0.0
        %7277 = vmatpush2.msra.mxu0 0.0
        %7278 = vmatprep.subr.mxu0 0.0
        %7279 = vmatpush2.msra.mxu0 0.0
        %7280 = vmatprep.subr.mxu0 0.0
        %7281 = vmatpush2.msra.mxu0 0.0
        %7282 = vmatprep.subr.mxu0 0.0
        %7283 = vmatpush2.msra.mxu0 0.0
        %7284 = vmatprep.subr.mxu0 0.0
        %7285 = vmatpush2.msra.mxu0 0.0
        %7286 = vmatprep.subr.mxu0 0.0
        %7287 = vmatpush2.msra.mxu0 0.0
        %7288 = vmatprep.subr.mxu0 0.0
        %7289 = vmatpush2.msra.mxu0 0.0
        %7290 = vmatprep.subr.mxu0 0.0
        %7291 = vmatpush2.msra.mxu0 0.0
        %7292 = vmatprep.subr.mxu0 0.0
        %7293 = vmatpush2.msra.mxu0 0.0
        %7294 = vmatprep.subr.mxu0 0.0
        %7295 = vmatpush2.msra.mxu0 0.0
        %7296 = vmatprep.subr.mxu0 0.0
        %7297 = vmatpush2.msra.mxu0 0.0
        %7298 = vmatprep.subr.mxu0 0.0
        %7299 = vmatpush2.msra.mxu0 0.0
        %7300 = vmatprep.subr.mxu0 0.0
        %7301 = vmatpush2.msra.mxu0 0.0
        %7302 = vmatprep.subr.mxu0 0.0
        %7303 = vmatpush2.msra.mxu0 0.0
        %7304 = vmatprep.subr.mxu0 0.0
        %7305 = vmatpush2.msra.mxu0 0.0
        %7306 = vmatprep.mubr.f32.mxu0 0.0
        %7307 = vmatmul.mubr.f32.gmra.mxu0 %v5803
        %v7308 = vpop.f32.mrf.mxu0
        %v7309 = vadd.f32 %v6867, %v7308
        %v7310 = vpop.f32.mrf.mxu0
        %v7311 = vadd.f32 %v6871, %v7310
        %7312 = vmatprep.mubr.f32.mxu0 0.0
        %7313 = vmatmul.mubr.f32.gmra.mxu0 %v5806
        %v7314 = vpop.f32.mrf.mxu0
        %v7315 = vadd.f32 %v6867, %v7314
        %v7316 = vpop.f32.mrf.mxu0
        %v7317 = vadd.f32 %v6871, %v7316
        %7318 = vmatprep.mubr.f32.mxu0 0.0
        %7319 = vmatmul.mubr.f32.gmra.mxu0 %v5809
        %v7320 = vpop.f32.mrf.mxu0
        %v7321 = vadd.f32 %v6867, %v7320
        %v7322 = vpop.f32.mrf.mxu0
        %v7323 = vadd.f32 %v6871, %v7322
        %7324 = vmatprep.mubr.f32.mxu0 0.0
        %7325 = vmatmul.mubr.f32.gmra.mxu0 %v5812
        %v7326 = vpop.f32.mrf.mxu0
        %v7327 = vadd.f32 %v6867, %v7326
        %v7328 = vpop.f32.mrf.mxu0
        %v7329 = vadd.f32 %v6871, %v7328
        %7330 = vmatprep.mubr.f32.mxu0 0.0
        %7331 = vmatmul.mubr.f32.gmra.mxu0 %v5815
        %v7332 = vpop.f32.mrf.mxu0
        %v7333 = vadd.f32 %v6867, %v7332
        %v7334 = vpop.f32.mrf.mxu0
        %v7335 = vadd.f32 %v6871, %v7334
        %7336 = vmatprep.mubr.f32.mxu0 0.0
        %7337 = vmatmul.mubr.f32.gmra.mxu0 %v5818
        %v7338 = vpop.f32.mrf.mxu0
        %v7339 = vadd.f32 %v6867, %v7338
        %v7340 = vpop.f32.mrf.mxu0
        %v7341 = vadd.f32 %v6871, %v7340
        %7342 = vmatprep.mubr.f32.mxu0 0.0
        %7343 = vmatmul.mubr.f32.gmra.mxu0 %v5821
        %v7344 = vpop.f32.mrf.mxu0
        %v7345 = vadd.f32 %v6867, %v7344
        %v7346 = vpop.f32.mrf.mxu0
        %v7347 = vadd.f32 %v6871, %v7346
        %7348 = vmatprep.mubr.f32.mxu0 0.0
        %7349 = vmatmul.mubr.f32.gmra.mxu0 %v5824
        %v7350 = vpop.f32.mrf.mxu0
        %v7351 = vadd.f32 %v6867, %v7350
        %v7352 = vpop.f32.mrf.mxu0
        %v7353 = vadd.f32 %v6871, %v7352
        %7354 = vmatprep.mubr.f32.mxu0 0.0
        %7355 = vmatmul.mubr.f32.gmra.mxu0 %v5827
        %v7356 = vpop.f32.mrf.mxu0
        %v7357 = vadd.f32 %v6867, %v7356
        %v7358 = vpop.f32.mrf.mxu0
        %v7359 = vadd.f32 %v6871, %v7358
        %7360 = vdwg.mxu0
        %7361 = vmatprep.subr.mxu0 0.0
        %7362 = vmatpush1.msra.mxu0 0.0
        %7363 = vmatprep.subr.mxu0 0.0
        %7364 = vmatpush1.msra.mxu0 0.0
        %7365 = vmatprep.subr.mxu0 0.0
        %7366 = vmatpush1.msra.mxu0 0.0
        %7367 = vmatprep.subr.mxu0 0.0
        %7368 = vmatpush1.msra.mxu0 0.0
        %7369 = vmatprep.subr.mxu0 0.0
        %7370 = vmatpush1.msra.mxu0 0.0
        %7371 = vmatprep.subr.mxu0 0.0
        %7372 = vmatpush1.msra.mxu0 0.0
        %7373 = vmatprep.subr.mxu0 0.0
        %7374 = vmatpush1.msra.mxu0 0.0
        %7375 = vmatprep.subr.mxu0 0.0
        %7376 = vmatpush1.msra.mxu0 0.0
        %7377 = vmatprep.subr.mxu0 0.0
        %7378 = vmatpush1.msra.mxu0 0.0
        %7379 = vmatprep.subr.mxu0 0.0
        %7380 = vmatpush1.msra.mxu0 0.0
        %7381 = vmatprep.subr.mxu0 0.0
        %7382 = vmatpush1.msra.mxu0 0.0
        %7383 = vmatprep.subr.mxu0 0.0
        %7384 = vmatpush1.msra.mxu0 0.0
        %7385 = vmatprep.subr.mxu0 0.0
        %7386 = vmatpush1.msra.mxu0 0.0
        %7387 = vmatprep.subr.mxu0 0.0
        %7388 = vmatpush1.msra.mxu0 0.0
        %7389 = vmatprep.subr.mxu0 0.0
        %7390 = vmatpush1.msra.mxu0 %v6835
        %7391 = vmatprep.subr.mxu0 0.0
        %7392 = vmatpush1.msra.mxu0 %v6826
        %7393 = vmatprep.subr.mxu0 0.0
        %7394 = vmatpush2.msra.mxu0 0.0
        %7395 = vmatprep.subr.mxu0 0.0
        %7396 = vmatpush2.msra.mxu0 0.0
        %7397 = vmatprep.subr.mxu0 0.0
        %7398 = vmatpush2.msra.mxu0 0.0
        %7399 = vmatprep.subr.mxu0 0.0
        %7400 = vmatpush2.msra.mxu0 0.0
        %7401 = vmatprep.subr.mxu0 0.0
        %7402 = vmatpush2.msra.mxu0 0.0
        %7403 = vmatprep.subr.mxu0 0.0
        %7404 = vmatpush2.msra.mxu0 0.0
        %7405 = vmatprep.subr.mxu0 0.0
        %7406 = vmatpush2.msra.mxu0 0.0
        %7407 = vmatprep.subr.mxu0 0.0
        %7408 = vmatpush2.msra.mxu0 0.0
        %7409 = vmatprep.subr.mxu0 0.0
        %7410 = vmatpush2.msra.mxu0 0.0
        %7411 = vmatprep.subr.mxu0 0.0
        %7412 = vmatpush2.msra.mxu0 0.0
        %7413 = vmatprep.subr.mxu0 0.0
        %7414 = vmatpush2.msra.mxu0 0.0
        %7415 = vmatprep.subr.mxu0 0.0
        %7416 = vmatpush2.msra.mxu0 0.0
        %7417 = vmatprep.subr.mxu0 0.0
        %7418 = vmatpush2.msra.mxu0 0.0
        %7419 = vmatprep.subr.mxu0 0.0
        %7420 = vmatpush2.msra.mxu0 0.0
        %7421 = vmatprep.subr.mxu0 0.0
        %7422 = vmatpush2.msra.mxu0 0.0
        %7423 = vmatprep.subr.mxu0 0.0
        %7424 = vmatpush2.msra.mxu0 0.0
        %7425 = vmatprep.mubr.f32.mxu0 0.0
        %7426 = vmatmul.mubr.f32.gmra.mxu0 %v5803
        %v7427 = vpop.f32.mrf.mxu0
        %v7428 = vadd.f32 %v6875, %v7427
        %v7429 = vpop.f32.mrf.mxu0
        %7430 = vmatprep.mubr.f32.mxu0 0.0
        %7431 = vmatmul.mubr.f32.gmra.mxu0 %v5806
        %v7432 = vpop.f32.mrf.mxu0
        %v7433 = vadd.f32 %v6875, %v7432
        %v7434 = vpop.f32.mrf.mxu0
        %7435 = vmatprep.mubr.f32.mxu0 0.0
        %7436 = vmatmul.mubr.f32.gmra.mxu0 %v5809
        %v7437 = vpop.f32.mrf.mxu0
        %v7438 = vadd.f32 %v6875, %v7437
        %v7439 = vpop.f32.mrf.mxu0
        %7440 = vmatprep.mubr.f32.mxu0 0.0
        %7441 = vmatmul.mubr.f32.gmra.mxu0 %v5812
        %v7442 = vpop.f32.mrf.mxu0
        %v7443 = vadd.f32 %v6875, %v7442
        %v7444 = vpop.f32.mrf.mxu0
        %7445 = vmatprep.mubr.f32.mxu0 0.0
        %7446 = vmatmul.mubr.f32.gmra.mxu0 %v5815
        %v7447 = vpop.f32.mrf.mxu0
        %v7448 = vadd.f32 %v6875, %v7447
        %v7449 = vpop.f32.mrf.mxu0
        %7450 = vmatprep.mubr.f32.mxu0 0.0
        %7451 = vmatmul.mubr.f32.gmra.mxu0 %v5818
        %v7452 = vpop.f32.mrf.mxu0
        %v7453 = vadd.f32 %v6875, %v7452
        %v7454 = vpop.f32.mrf.mxu0
        %7455 = vmatprep.mubr.f32.mxu0 0.0
        %7456 = vmatmul.mubr.f32.gmra.mxu0 %v5821
        %v7457 = vpop.f32.mrf.mxu0
        %v7458 = vadd.f32 %v6875, %v7457
        %v7459 = vpop.f32.mrf.mxu0
        %7460 = vmatprep.mubr.f32.mxu0 0.0
        %7461 = vmatmul.mubr.f32.gmra.mxu0 %v5824
        %v7462 = vpop.f32.mrf.mxu0
        %v7463 = vadd.f32 %v6875, %v7462
        %v7464 = vpop.f32.mrf.mxu0
        %7465 = vmatprep.mubr.f32.mxu0 0.0
        %7466 = vmatmul.mubr.f32.gmra.mxu0 %v5827
        %v7467 = vpop.f32.mrf.mxu0
        %v7468 = vadd.f32 %v6875, %v7467
        %v7469 = vpop.f32.mrf.mxu0
        %7470 = vdwg.mxu0
        %v7471 = vmul.f32 %v6737, %v6952
        %v7472 = vmul.f32 %v6738, %v6954
        %v7473 = vmul.f32 %v6739, %v7071
        %v7474 = vmul.f32 %v6740, %v7073
        %v7475 = vmul.f32 %v6741, %v7190
        %v7476 = vmul.f32 %v6742, %v7192
        %v7477 = vmul.f32 %v6743, %v7309
        %v7478 = vmul.f32 %v6744, %v7311
        %v7479 = vmul.f32 %v6745, %v7428
        %v7480 = vmul.f32 %v6746, %v6958
        %v7481 = vmul.f32 %v6747, %v6960
        %v7482 = vmul.f32 %v6748, %v7077
        %v7483 = vmul.f32 %v6749, %v7079
        %v7484 = vmul.f32 %v6750, %v7196
        %v7485 = vmul.f32 %v6751, %v7198
        %v7486 = vmul.f32 %v6752, %v7315
        %v7487 = vmul.f32 %v6753, %v7317
        %v7488 = vmul.f32 %v6754, %v7433
        %v7489 = vmul.f32 %v6755, %v6964
        %v7490 = vmul.f32 %v6756, %v6966
        %v7491 = vmul.f32 %v6757, %v7083
        %v7492 = vmul.f32 %v6758, %v7085
        %v7493 = vmul.f32 %v6759, %v7202
        %v7494 = vmul.f32 %v6760, %v7204
        %v7495 = vmul.f32 %v6761, %v7321
        %v7496 = vmul.f32 %v6762, %v7323
        %v7497 = vmul.f32 %v6763, %v7438
        %v7498 = vmul.f32 %v6764, %v6970
        %v7499 = vmul.f32 %v6765, %v6972
        %v7500 = vmul.f32 %v6766, %v7089
        %v7501 = vmul.f32 %v6767, %v7091
        %v7502 = vmul.f32 %v6768, %v7208
        %v7503 = vmul.f32 %v6769, %v7210
        %v7504 = vmul.f32 %v6770, %v7327
        %v7505 = vmul.f32 %v6771, %v7329
        %v7506 = vmul.f32 %v6772, %v7443
        %v7507 = vmul.f32 %v6773, %v6976
        %v7508 = vmul.f32 %v6774, %v6978
        %v7509 = vmul.f32 %v6775, %v7095
        %v7510 = vmul.f32 %v6776, %v7097
        %v7511 = vmul.f32 %v6777, %v7214
        %v7512 = vmul.f32 %v6778, %v7216
        %v7513 = vmul.f32 %v6779, %v7333
        %v7514 = vmul.f32 %v6780, %v7335
        %v7515 = vmul.f32 %v6781, %v7448
        %v7516 = vmul.f32 %v6782, %v6982
        %v7517 = vmul.f32 %v6783, %v6984
        %v7518 = vmul.f32 %v6784, %v7101
        %v7519 = vmul.f32 %v6785, %v7103
        %v7520 = vmul.f32 %v6786, %v7220
        %v7521 = vmul.f32 %v6787, %v7222
        %v7522 = vmul.f32 %v6788, %v7339
        %v7523 = vmul.f32 %v6789, %v7341
        %v7524 = vmul.f32 %v6790, %v7453
        %v7525 = vmul.f32 %v6791, %v6988
        %v7526 = vmul.f32 %v6792, %v6990
        %v7527 = vmul.f32 %v6793, %v7107
        %v7528 = vmul.f32 %v6794, %v7109
        %v7529 = vmul.f32 %v6795, %v7226
        %v7530 = vmul.f32 %v6796, %v7228
        %v7531 = vmul.f32 %v6797, %v7345
        %v7532 = vmul.f32 %v6798, %v7347
        %v7533 = vmul.f32 %v6799, %v7458
        %v7534 = vmul.f32 %v6800, %v6994
        %v7535 = vmul.f32 %v6801, %v6996
        %v7536 = vmul.f32 %v6802, %v7113
        %v7537 = vmul.f32 %v6803, %v7115
        %v7538 = vmul.f32 %v6804, %v7232
        %v7539 = vmul.f32 %v6805, %v7234
        %v7540 = vmul.f32 %v6806, %v7351
        %v7541 = vmul.f32 %v6807, %v7353
        %v7542 = vmul.f32 %v6808, %v7463
        %v7543 = vmul.f32 %v6809, %v7000
        %v7544 = vmul.f32 %v6810, %v7002
        %v7545 = vmul.f32 %v6811, %v7119
        %v7546 = vmul.f32 %v6812, %v7121
        %v7547 = vmul.f32 %v6813, %v7238
        %v7548 = vmul.f32 %v6814, %v7240
        %v7549 = vmul.f32 %v6815, %v7357
        %v7550 = vmul.f32 %v6816, %v7359
        %v7551 = vmul.f32 %v6817, %v7468
        %v7553 = vsel %vm4341, %v7479, 0
        %v7556 = vsel %vm4341, %v7488, 0
        %v7559 = vsel %vm4341, %v7497, 0
        %v7562 = vsel %vm4341, %v7506, 0
        %v7565 = vsel %vm4341, %v7515, 0
        %v7568 = vsel %vm4341, %v7524, 0
        %v7571 = vsel %vm4341, %v7533, 0
        %v7574 = vsel %vm4341, %v7542, 0
        %v7577 = vsel %vm4341, %v7551, 0
        %7579 = vmatprep.subr.mxu0 0.0
        %7580 = vmatpush1.msra.mxu0 %v1334
        %7581 = vmatprep.subr.mxu0 0.0
        %7582 = vmatpush1.msra.mxu0 %v1333
        %7583 = vmatprep.subr.mxu0 0.0
        %7584 = vmatpush1.msra.mxu0 %v1332
        %7585 = vmatprep.subr.mxu0 0.0
        %7586 = vmatpush1.msra.mxu0 %v1331
        %7587 = vmatprep.subr.mxu0 0.0
        %7588 = vmatpush1.msra.mxu0 %v1330
        %7589 = vmatprep.subr.mxu0 0.0
        %7590 = vmatpush1.msra.mxu0 %v1329
        %7591 = vmatprep.subr.mxu0 0.0
        %7592 = vmatpush1.msra.mxu0 %v1328
        %7593 = vmatprep.subr.mxu0 0.0
        %7594 = vmatpush1.msra.mxu0 %v1327
        %7595 = vmatprep.subr.mxu0 0.0
        %7596 = vmatpush1.msra.mxu0 %v1326
        %7597 = vmatprep.subr.mxu0 0.0
        %7598 = vmatpush1.msra.mxu0 %v1325
        %7599 = vmatprep.subr.mxu0 0.0
        %7600 = vmatpush1.msra.mxu0 %v1324
        %7601 = vmatprep.subr.mxu0 0.0
        %7602 = vmatpush1.msra.mxu0 %v1323
        %7603 = vmatprep.subr.mxu0 0.0
        %7604 = vmatpush1.msra.mxu0 %v1322
        %7605 = vmatprep.subr.mxu0 0.0
        %7606 = vmatpush1.msra.mxu0 %v1321
        %7607 = vmatprep.subr.mxu0 0.0
        %7608 = vmatpush1.msra.mxu0 %v1320
        %7609 = vmatprep.subr.mxu0 0.0
        %7610 = vmatpush1.msra.mxu0 %v1319
        %7611 = vmatprep.subr.mxu0 0.0
        %7612 = vmatpush2.msra.mxu0 %v1350
        %7613 = vmatprep.subr.mxu0 0.0
        %7614 = vmatpush2.msra.mxu0 %v1349
        %7615 = vmatprep.subr.mxu0 0.0
        %7616 = vmatpush2.msra.mxu0 %v1348
        %7617 = vmatprep.subr.mxu0 0.0
        %7618 = vmatpush2.msra.mxu0 %v1347
        %7619 = vmatprep.subr.mxu0 0.0
        %7620 = vmatpush2.msra.mxu0 %v1346
        %7621 = vmatprep.subr.mxu0 0.0
        %7622 = vmatpush2.msra.mxu0 %v1345
        %7623 = vmatprep.subr.mxu0 0.0
        %7624 = vmatpush2.msra.mxu0 %v1344
        %7625 = vmatprep.subr.mxu0 0.0
        %7626 = vmatpush2.msra.mxu0 %v1343
        %7627 = vmatprep.subr.mxu0 0.0
        %7628 = vmatpush2.msra.mxu0 %v1342
        %7629 = vmatprep.subr.mxu0 0.0
        %7630 = vmatpush2.msra.mxu0 %v1341
        %7631 = vmatprep.subr.mxu0 0.0
        %7632 = vmatpush2.msra.mxu0 %v1340
        %7633 = vmatprep.subr.mxu0 0.0
        %7634 = vmatpush2.msra.mxu0 %v1339
        %7635 = vmatprep.subr.mxu0 0.0
        %7636 = vmatpush2.msra.mxu0 %v1338
        %7637 = vmatprep.subr.mxu0 0.0
        %7638 = vmatpush2.msra.mxu0 %v1337
        %7639 = vmatprep.subr.mxu0 0.0
        %7640 = vmatpush2.msra.mxu0 %v1336
        %7641 = vmatprep.subr.mxu0 0.0
        %7642 = vmatpush2.msra.mxu0 %v1335
        %7643 = vmatprep.mubr.f32.mxu0 %v7472
        %7644 = vmatmul.mubr.f32.gmra.mxu0 %v7471
        %v7645 = vpop.f32.mrf.mxu0
        %v7646 = vadd.f32 %v5791, %v7645
        %v7647 = vpop.f32.mrf.mxu0
        %7648 = vmatprep.mubr.f32.mxu0 %v7481
        %7649 = vmatmul.mubr.f32.gmra.mxu0 %v7480
        %v7650 = vpop.f32.mrf.mxu0
        %v7651 = vadd.f32 %v5792, %v7650
        %v7652 = vpop.f32.mrf.mxu0
        %7653 = vmatprep.mubr.f32.mxu0 %v7490
        %7654 = vmatmul.mubr.f32.gmra.mxu0 %v7489
        %v7655 = vpop.f32.mrf.mxu0
        %v7656 = vadd.f32 %v5793, %v7655
        %v7657 = vpop.f32.mrf.mxu0
        %7658 = vmatprep.mubr.f32.mxu0 %v7499
        %7659 = vmatmul.mubr.f32.gmra.mxu0 %v7498
        %v7660 = vpop.f32.mrf.mxu0
        %v7661 = vadd.f32 %v5794, %v7660
        %v7662 = vpop.f32.mrf.mxu0
        %7663 = vmatprep.mubr.f32.mxu0 %v7508
        %7664 = vmatmul.mubr.f32.gmra.mxu0 %v7507
        %v7665 = vpop.f32.mrf.mxu0
        %v7666 = vadd.f32 %v5795, %v7665
        %v7667 = vpop.f32.mrf.mxu0
        %7668 = vmatprep.mubr.f32.mxu0 %v7517
        %7669 = vmatmul.mubr.f32.gmra.mxu0 %v7516
        %v7670 = vpop.f32.mrf.mxu0
        %v7671 = vadd.f32 %v5796, %v7670
        %v7672 = vpop.f32.mrf.mxu0
        %7673 = vmatprep.mubr.f32.mxu0 %v7526
        %7674 = vmatmul.mubr.f32.gmra.mxu0 %v7525
        %v7675 = vpop.f32.mrf.mxu0
        %v7676 = vadd.f32 %v5797, %v7675
        %v7677 = vpop.f32.mrf.mxu0
        %7678 = vmatprep.mubr.f32.mxu0 %v7535
        %7679 = vmatmul.mubr.f32.gmra.mxu0 %v7534
        %v7680 = vpop.f32.mrf.mxu0
        %v7681 = vadd.f32 %v5798, %v7680
        %v7682 = vpop.f32.mrf.mxu0
        %7683 = vmatprep.mubr.f32.mxu0 %v7544
        %7684 = vmatmul.mubr.f32.gmra.mxu0 %v7543
        %v7685 = vpop.f32.mrf.mxu0
        %v7686 = vadd.f32 %v5799, %v7685
        %v7687 = vpop.f32.mrf.mxu0
        %7688 = vdwg.mxu0
        %7689 = vmatprep.subr.mxu0 0.0
        %7690 = vmatpush1.msra.mxu0 %v1366
        %7691 = vmatprep.subr.mxu0 0.0
        %7692 = vmatpush1.msra.mxu0 %v1365
        %7693 = vmatprep.subr.mxu0 0.0
        %7694 = vmatpush1.msra.mxu0 %v1364
        %7695 = vmatprep.subr.mxu0 0.0
        %7696 = vmatpush1.msra.mxu0 %v1363
        %7697 = vmatprep.subr.mxu0 0.0
        %7698 = vmatpush1.msra.mxu0 %v1362
        %7699 = vmatprep.subr.mxu0 0.0
        %7700 = vmatpush1.msra.mxu0 %v1361
        %7701 = vmatprep.subr.mxu0 0.0
        %7702 = vmatpush1.msra.mxu0 %v1360
        %7703 = vmatprep.subr.mxu0 0.0
        %7704 = vmatpush1.msra.mxu0 %v1359
        %7705 = vmatprep.subr.mxu0 0.0
        %7706 = vmatpush1.msra.mxu0 %v1358
        %7707 = vmatprep.subr.mxu0 0.0
        %7708 = vmatpush1.msra.mxu0 %v1357
        %7709 = vmatprep.subr.mxu0 0.0
        %7710 = vmatpush1.msra.mxu0 %v1356
        %7711 = vmatprep.subr.mxu0 0.0
        %7712 = vmatpush1.msra.mxu0 %v1355
        %7713 = vmatprep.subr.mxu0 0.0
        %7714 = vmatpush1.msra.mxu0 %v1354
        %7715 = vmatprep.subr.mxu0 0.0
        %7716 = vmatpush1.msra.mxu0 %v1353
        %7717 = vmatprep.subr.mxu0 0.0
        %7718 = vmatpush1.msra.mxu0 %v1352
        %7719 = vmatprep.subr.mxu0 0.0
        %7720 = vmatpush1.msra.mxu0 %v1351
        %7721 = vmatprep.subr.mxu0 0.0
        %7722 = vmatpush2.msra.mxu0 %v1382
        %7723 = vmatprep.subr.mxu0 0.0
        %7724 = vmatpush2.msra.mxu0 %v1381
        %7725 = vmatprep.subr.mxu0 0.0
        %7726 = vmatpush2.msra.mxu0 %v1380
        %7727 = vmatprep.subr.mxu0 0.0
        %7728 = vmatpush2.msra.mxu0 %v1379
        %7729 = vmatprep.subr.mxu0 0.0
        %7730 = vmatpush2.msra.mxu0 %v1378
        %7731 = vmatprep.subr.mxu0 0.0
        %7732 = vmatpush2.msra.mxu0 %v1377
        %7733 = vmatprep.subr.mxu0 0.0
        %7734 = vmatpush2.msra.mxu0 %v1376
        %7735 = vmatprep.subr.mxu0 0.0
        %7736 = vmatpush2.msra.mxu0 %v1375
        %7737 = vmatprep.subr.mxu0 0.0
        %7738 = vmatpush2.msra.mxu0 %v1374
        %7739 = vmatprep.subr.mxu0 0.0
        %7740 = vmatpush2.msra.mxu0 %v1373
        %7741 = vmatprep.subr.mxu0 0.0
        %7742 = vmatpush2.msra.mxu0 %v1372
        %7743 = vmatprep.subr.mxu0 0.0
        %7744 = vmatpush2.msra.mxu0 %v1371
        %7745 = vmatprep.subr.mxu0 0.0
        %7746 = vmatpush2.msra.mxu0 %v1370
        %7747 = vmatprep.subr.mxu0 0.0
        %7748 = vmatpush2.msra.mxu0 %v1369
        %7749 = vmatprep.subr.mxu0 0.0
        %7750 = vmatpush2.msra.mxu0 %v1368
        %7751 = vmatprep.subr.mxu0 0.0
        %7752 = vmatpush2.msra.mxu0 %v1367
        %7753 = vmatprep.mubr.f32.mxu0 %v7474
        %7754 = vmatmul.mubr.f32.gmra.mxu0 %v7473
        %v7755 = vpop.f32.mrf.mxu0
        %v7756 = vadd.f32 %v7646, %v7755
        %v7757 = vpop.f32.mrf.mxu0
        %7758 = vmatprep.mubr.f32.mxu0 %v7483
        %7759 = vmatmul.mubr.f32.gmra.mxu0 %v7482
        %v7760 = vpop.f32.mrf.mxu0
        %v7761 = vadd.f32 %v7651, %v7760
        %v7762 = vpop.f32.mrf.mxu0
        %7763 = vmatprep.mubr.f32.mxu0 %v7492
        %7764 = vmatmul.mubr.f32.gmra.mxu0 %v7491
        %v7765 = vpop.f32.mrf.mxu0
        %v7766 = vadd.f32 %v7656, %v7765
        %v7767 = vpop.f32.mrf.mxu0
        %7768 = vmatprep.mubr.f32.mxu0 %v7501
        %7769 = vmatmul.mubr.f32.gmra.mxu0 %v7500
        %v7770 = vpop.f32.mrf.mxu0
        %v7771 = vadd.f32 %v7661, %v7770
        %v7772 = vpop.f32.mrf.mxu0
        %7773 = vmatprep.mubr.f32.mxu0 %v7510
        %7774 = vmatmul.mubr.f32.gmra.mxu0 %v7509
        %v7775 = vpop.f32.mrf.mxu0
        %v7776 = vadd.f32 %v7666, %v7775
        %v7777 = vpop.f32.mrf.mxu0
        %7778 = vmatprep.mubr.f32.mxu0 %v7519
        %7779 = vmatmul.mubr.f32.gmra.mxu0 %v7518
        %v7780 = vpop.f32.mrf.mxu0
        %v7781 = vadd.f32 %v7671, %v7780
        %v7782 = vpop.f32.mrf.mxu0
        %7783 = vmatprep.mubr.f32.mxu0 %v7528
        %7784 = vmatmul.mubr.f32.gmra.mxu0 %v7527
        %v7785 = vpop.f32.mrf.mxu0
        %v7786 = vadd.f32 %v7676, %v7785
        %v7787 = vpop.f32.mrf.mxu0
        %7788 = vmatprep.mubr.f32.mxu0 %v7537
        %7789 = vmatmul.mubr.f32.gmra.mxu0 %v7536
        %v7790 = vpop.f32.mrf.mxu0
        %v7791 = vadd.f32 %v7681, %v7790
        %v7792 = vpop.f32.mrf.mxu0
        %7793 = vmatprep.mubr.f32.mxu0 %v7546
        %7794 = vmatmul.mubr.f32.gmra.mxu0 %v7545
        %v7795 = vpop.f32.mrf.mxu0
        %v7796 = vadd.f32 %v7686, %v7795
        %v7797 = vpop.f32.mrf.mxu0
        %7798 = vdwg.mxu0
        %7799 = vmatprep.subr.mxu0 0.0
        %7800 = vmatpush1.msra.mxu0 %v1398
        %7801 = vmatprep.subr.mxu0 0.0
        %7802 = vmatpush1.msra.mxu0 %v1397
        %7803 = vmatprep.subr.mxu0 0.0
        %7804 = vmatpush1.msra.mxu0 %v1396
        %7805 = vmatprep.subr.mxu0 0.0
        %7806 = vmatpush1.msra.mxu0 %v1395
        %7807 = vmatprep.subr.mxu0 0.0
        %7808 = vmatpush1.msra.mxu0 %v1394
        %7809 = vmatprep.subr.mxu0 0.0
        %7810 = vmatpush1.msra.mxu0 %v1393
        %7811 = vmatprep.subr.mxu0 0.0
        %7812 = vmatpush1.msra.mxu0 %v1392
        %7813 = vmatprep.subr.mxu0 0.0
        %7814 = vmatpush1.msra.mxu0 %v1391
        %7815 = vmatprep.subr.mxu0 0.0
        %7816 = vmatpush1.msra.mxu0 %v1390
        %7817 = vmatprep.subr.mxu0 0.0
        %7818 = vmatpush1.msra.mxu0 %v1389
        %7819 = vmatprep.subr.mxu0 0.0
        %7820 = vmatpush1.msra.mxu0 %v1388
        %7821 = vmatprep.subr.mxu0 0.0
        %7822 = vmatpush1.msra.mxu0 %v1387
        %7823 = vmatprep.subr.mxu0 0.0
        %7824 = vmatpush1.msra.mxu0 %v1386
        %7825 = vmatprep.subr.mxu0 0.0
        %7826 = vmatpush1.msra.mxu0 %v1385
        %7827 = vmatprep.subr.mxu0 0.0
        %7828 = vmatpush1.msra.mxu0 %v1384
        %7829 = vmatprep.subr.mxu0 0.0
        %7830 = vmatpush1.msra.mxu0 %v1383
        %7831 = vmatprep.subr.mxu0 0.0
        %7832 = vmatpush2.msra.mxu0 %v1414
        %7833 = vmatprep.subr.mxu0 0.0
        %7834 = vmatpush2.msra.mxu0 %v1413
        %7835 = vmatprep.subr.mxu0 0.0
        %7836 = vmatpush2.msra.mxu0 %v1412
        %7837 = vmatprep.subr.mxu0 0.0
        %7838 = vmatpush2.msra.mxu0 %v1411
        %7839 = vmatprep.subr.mxu0 0.0
        %7840 = vmatpush2.msra.mxu0 %v1410
        %7841 = vmatprep.subr.mxu0 0.0
        %7842 = vmatpush2.msra.mxu0 %v1409
        %7843 = vmatprep.subr.mxu0 0.0
        %7844 = vmatpush2.msra.mxu0 %v1408
        %7845 = vmatprep.subr.mxu0 0.0
        %7846 = vmatpush2.msra.mxu0 %v1407
        %7847 = vmatprep.subr.mxu0 0.0
        %7848 = vmatpush2.msra.mxu0 %v1406
        %7849 = vmatprep.subr.mxu0 0.0
        %7850 = vmatpush2.msra.mxu0 %v1405
        %7851 = vmatprep.subr.mxu0 0.0
        %7852 = vmatpush2.msra.mxu0 %v1404
        %7853 = vmatprep.subr.mxu0 0.0
        %7854 = vmatpush2.msra.mxu0 %v1403
        %7855 = vmatprep.subr.mxu0 0.0
        %7856 = vmatpush2.msra.mxu0 %v1402
        %7857 = vmatprep.subr.mxu0 0.0
        %7858 = vmatpush2.msra.mxu0 %v1401
        %7859 = vmatprep.subr.mxu0 0.0
        %7860 = vmatpush2.msra.mxu0 %v1400
        %7861 = vmatprep.subr.mxu0 0.0
        %7862 = vmatpush2.msra.mxu0 %v1399
        %7863 = vmatprep.mubr.f32.mxu0 %v7476
        %7864 = vmatmul.mubr.f32.gmra.mxu0 %v7475
        %v7865 = vpop.f32.mrf.mxu0
        %v7866 = vadd.f32 %v7756, %v7865
        %v7867 = vpop.f32.mrf.mxu0
        %7868 = vmatprep.mubr.f32.mxu0 %v7485
        %7869 = vmatmul.mubr.f32.gmra.mxu0 %v7484
        %v7870 = vpop.f32.mrf.mxu0
        %v7871 = vadd.f32 %v7761, %v7870
        %v7872 = vpop.f32.mrf.mxu0
        %7873 = vmatprep.mubr.f32.mxu0 %v7494
        %7874 = vmatmul.mubr.f32.gmra.mxu0 %v7493
        %v7875 = vpop.f32.mrf.mxu0
        %v7876 = vadd.f32 %v7766, %v7875
        %v7877 = vpop.f32.mrf.mxu0
        %7878 = vmatprep.mubr.f32.mxu0 %v7503
        %7879 = vmatmul.mubr.f32.gmra.mxu0 %v7502
        %v7880 = vpop.f32.mrf.mxu0
        %v7881 = vadd.f32 %v7771, %v7880
        %v7882 = vpop.f32.mrf.mxu0
        %7883 = vmatprep.mubr.f32.mxu0 %v7512
        %7884 = vmatmul.mubr.f32.gmra.mxu0 %v7511
        %v7885 = vpop.f32.mrf.mxu0
        %v7886 = vadd.f32 %v7776, %v7885
        %v7887 = vpop.f32.mrf.mxu0
        %7888 = vmatprep.mubr.f32.mxu0 %v7521
        %7889 = vmatmul.mubr.f32.gmra.mxu0 %v7520
        %v7890 = vpop.f32.mrf.mxu0
        %v7891 = vadd.f32 %v7781, %v7890
        %v7892 = vpop.f32.mrf.mxu0
        %7893 = vmatprep.mubr.f32.mxu0 %v7530
        %7894 = vmatmul.mubr.f32.gmra.mxu0 %v7529
        %v7895 = vpop.f32.mrf.mxu0
        %v7896 = vadd.f32 %v7786, %v7895
        %v7897 = vpop.f32.mrf.mxu0
        %7898 = vmatprep.mubr.f32.mxu0 %v7539
        %7899 = vmatmul.mubr.f32.gmra.mxu0 %v7538
        %v7900 = vpop.f32.mrf.mxu0
        %v7901 = vadd.f32 %v7791, %v7900
        %v7902 = vpop.f32.mrf.mxu0
        %7903 = vmatprep.mubr.f32.mxu0 %v7548
        %7904 = vmatmul.mubr.f32.gmra.mxu0 %v7547
        %v7905 = vpop.f32.mrf.mxu0
        %v7906 = vadd.f32 %v7796, %v7905
        %v7907 = vpop.f32.mrf.mxu0
        %7908 = vdwg.mxu0
        %7909 = vmatprep.subr.mxu0 0.0
        %7910 = vmatpush1.msra.mxu0 %v1430
        %7911 = vmatprep.subr.mxu0 0.0
        %7912 = vmatpush1.msra.mxu0 %v1429
        %7913 = vmatprep.subr.mxu0 0.0
        %7914 = vmatpush1.msra.mxu0 %v1428
        %7915 = vmatprep.subr.mxu0 0.0
        %7916 = vmatpush1.msra.mxu0 %v1427
        %7917 = vmatprep.subr.mxu0 0.0
        %7918 = vmatpush1.msra.mxu0 %v1426
        %7919 = vmatprep.subr.mxu0 0.0
        %7920 = vmatpush1.msra.mxu0 %v1425
        %7921 = vmatprep.subr.mxu0 0.0
        %7922 = vmatpush1.msra.mxu0 %v1424
        %7923 = vmatprep.subr.mxu0 0.0
        %7924 = vmatpush1.msra.mxu0 %v1423
        %7925 = vmatprep.subr.mxu0 0.0
        %7926 = vmatpush1.msra.mxu0 %v1422
        %7927 = vmatprep.subr.mxu0 0.0
        %7928 = vmatpush1.msra.mxu0 %v1421
        %7929 = vmatprep.subr.mxu0 0.0
        %7930 = vmatpush1.msra.mxu0 %v1420
        %7931 = vmatprep.subr.mxu0 0.0
        %7932 = vmatpush1.msra.mxu0 %v1419
        %7933 = vmatprep.subr.mxu0 0.0
        %7934 = vmatpush1.msra.mxu0 %v1418
        %7935 = vmatprep.subr.mxu0 0.0
        %7936 = vmatpush1.msra.mxu0 %v1417
        %7937 = vmatprep.subr.mxu0 0.0
        %7938 = vmatpush1.msra.mxu0 %v1416
        %7939 = vmatprep.subr.mxu0 0.0
        %7940 = vmatpush1.msra.mxu0 %v1415
        %7941 = vmatprep.subr.mxu0 0.0
        %7942 = vmatpush2.msra.mxu0 %v1446
        %7943 = vmatprep.subr.mxu0 0.0
        %7944 = vmatpush2.msra.mxu0 %v1445
        %7945 = vmatprep.subr.mxu0 0.0
        %7946 = vmatpush2.msra.mxu0 %v1444
        %7947 = vmatprep.subr.mxu0 0.0
        %7948 = vmatpush2.msra.mxu0 %v1443
        %7949 = vmatprep.subr.mxu0 0.0
        %7950 = vmatpush2.msra.mxu0 %v1442
        %7951 = vmatprep.subr.mxu0 0.0
        %7952 = vmatpush2.msra.mxu0 %v1441
        %7953 = vmatprep.subr.mxu0 0.0
        %7954 = vmatpush2.msra.mxu0 %v1440
        %7955 = vmatprep.subr.mxu0 0.0
        %7956 = vmatpush2.msra.mxu0 %v1439
        %7957 = vmatprep.subr.mxu0 0.0
        %7958 = vmatpush2.msra.mxu0 %v1438
        %7959 = vmatprep.subr.mxu0 0.0
        %7960 = vmatpush2.msra.mxu0 %v1437
        %7961 = vmatprep.subr.mxu0 0.0
        %7962 = vmatpush2.msra.mxu0 %v1436
        %7963 = vmatprep.subr.mxu0 0.0
        %7964 = vmatpush2.msra.mxu0 %v1435
        %7965 = vmatprep.subr.mxu0 0.0
        %7966 = vmatpush2.msra.mxu0 %v1434
        %7967 = vmatprep.subr.mxu0 0.0
        %7968 = vmatpush2.msra.mxu0 %v1433
        %7969 = vmatprep.subr.mxu0 0.0
        %7970 = vmatpush2.msra.mxu0 %v1432
        %7971 = vmatprep.subr.mxu0 0.0
        %7972 = vmatpush2.msra.mxu0 %v1431
        %7973 = vmatprep.mubr.f32.mxu0 %v7478
        %7974 = vmatmul.mubr.f32.gmra.mxu0 %v7477
        %v7975 = vpop.f32.mrf.mxu0
        %v7976 = vadd.f32 %v7866, %v7975
        %v7977 = vpop.f32.mrf.mxu0
        %7978 = vmatprep.mubr.f32.mxu0 %v7487
        %7979 = vmatmul.mubr.f32.gmra.mxu0 %v7486
        %v7980 = vpop.f32.mrf.mxu0
        %v7981 = vadd.f32 %v7871, %v7980
        %v7982 = vpop.f32.mrf.mxu0
        %7983 = vmatprep.mubr.f32.mxu0 %v7496
        %7984 = vmatmul.mubr.f32.gmra.mxu0 %v7495
        %v7985 = vpop.f32.mrf.mxu0
        %v7986 = vadd.f32 %v7876, %v7985
        %v7987 = vpop.f32.mrf.mxu0
        %7988 = vmatprep.mubr.f32.mxu0 %v7505
        %7989 = vmatmul.mubr.f32.gmra.mxu0 %v7504
        %v7990 = vpop.f32.mrf.mxu0
        %v7991 = vadd.f32 %v7881, %v7990
        %v7992 = vpop.f32.mrf.mxu0
        %7993 = vmatprep.mubr.f32.mxu0 %v7514
        %7994 = vmatmul.mubr.f32.gmra.mxu0 %v7513
        %v7995 = vpop.f32.mrf.mxu0
        %v7996 = vadd.f32 %v7886, %v7995
        %v7997 = vpop.f32.mrf.mxu0
        %7998 = vmatprep.mubr.f32.mxu0 %v7523
        %7999 = vmatmul.mubr.f32.gmra.mxu0 %v7522
        %v8000 = vpop.f32.mrf.mxu0
        %v8001 = vadd.f32 %v7891, %v8000
        %v8002 = vpop.f32.mrf.mxu0
        %8003 = vmatprep.mubr.f32.mxu0 %v7532
        %8004 = vmatmul.mubr.f32.gmra.mxu0 %v7531
        %v8005 = vpop.f32.mrf.mxu0
        %v8006 = vadd.f32 %v7896, %v8005
        %v8007 = vpop.f32.mrf.mxu0
        %8008 = vmatprep.mubr.f32.mxu0 %v7541
        %8009 = vmatmul.mubr.f32.gmra.mxu0 %v7540
        %v8010 = vpop.f32.mrf.mxu0
        %v8011 = vadd.f32 %v7901, %v8010
        %v8012 = vpop.f32.mrf.mxu0
        %8013 = vmatprep.mubr.f32.mxu0 %v7550
        %8014 = vmatmul.mubr.f32.gmra.mxu0 %v7549
        %v8015 = vpop.f32.mrf.mxu0
        %v8016 = vadd.f32 %v7906, %v8015
        %v8017 = vpop.f32.mrf.mxu0
        %8018 = vdwg.mxu0
        %8019 = vmatprep.subr.mxu0 0.0
        %8020 = vmatpush1.msra.mxu0 0.0
        %8021 = vmatprep.subr.mxu0 0.0
        %8022 = vmatpush1.msra.mxu0 0.0
        %8023 = vmatprep.subr.mxu0 0.0
        %8024 = vmatpush1.msra.mxu0 0.0
        %8025 = vmatprep.subr.mxu0 0.0
        %8026 = vmatpush1.msra.mxu0 0.0
        %8027 = vmatprep.subr.mxu0 0.0
        %8028 = vmatpush1.msra.mxu0 %v1458
        %8029 = vmatprep.subr.mxu0 0.0
        %8030 = vmatpush1.msra.mxu0 %v1457
        %8031 = vmatprep.subr.mxu0 0.0
        %8032 = vmatpush1.msra.mxu0 %v1456
        %8033 = vmatprep.subr.mxu0 0.0
        %8034 = vmatpush1.msra.mxu0 %v1455
        %8035 = vmatprep.subr.mxu0 0.0
        %8036 = vmatpush1.msra.mxu0 %v1454
        %8037 = vmatprep.subr.mxu0 0.0
        %8038 = vmatpush1.msra.mxu0 %v1453
        %8039 = vmatprep.subr.mxu0 0.0
        %8040 = vmatpush1.msra.mxu0 %v1452
        %8041 = vmatprep.subr.mxu0 0.0
        %8042 = vmatpush1.msra.mxu0 %v1451
        %8043 = vmatprep.subr.mxu0 0.0
        %8044 = vmatpush1.msra.mxu0 %v1450
        %8045 = vmatprep.subr.mxu0 0.0
        %8046 = vmatpush1.msra.mxu0 %v1449
        %8047 = vmatprep.subr.mxu0 0.0
        %8048 = vmatpush1.msra.mxu0 %v1448
        %8049 = vmatprep.subr.mxu0 0.0
        %8050 = vmatpush1.msra.mxu0 %v1447
        %8051 = vmatprep.subr.mxu0 0.0
        %8052 = vmatpush2.msra.mxu0 0.0
        %8053 = vmatprep.subr.mxu0 0.0
        %8054 = vmatpush2.msra.mxu0 0.0
        %8055 = vmatprep.subr.mxu0 0.0
        %8056 = vmatpush2.msra.mxu0 0.0
        %8057 = vmatprep.subr.mxu0 0.0
        %8058 = vmatpush2.msra.mxu0 0.0
        %8059 = vmatprep.subr.mxu0 0.0
        %8060 = vmatpush2.msra.mxu0 0.0
        %8061 = vmatprep.subr.mxu0 0.0
        %8062 = vmatpush2.msra.mxu0 0.0
        %8063 = vmatprep.subr.mxu0 0.0
        %8064 = vmatpush2.msra.mxu0 0.0
        %8065 = vmatprep.subr.mxu0 0.0
        %8066 = vmatpush2.msra.mxu0 0.0
        %8067 = vmatprep.subr.mxu0 0.0
        %8068 = vmatpush2.msra.mxu0 0.0
        %8069 = vmatprep.subr.mxu0 0.0
        %8070 = vmatpush2.msra.mxu0 0.0
        %8071 = vmatprep.subr.mxu0 0.0
        %8072 = vmatpush2.msra.mxu0 0.0
        %8073 = vmatprep.subr.mxu0 0.0
        %8074 = vmatpush2.msra.mxu0 0.0
        %8075 = vmatprep.subr.mxu0 0.0
        %8076 = vmatpush2.msra.mxu0 0.0
        %8077 = vmatprep.subr.mxu0 0.0
        %8078 = vmatpush2.msra.mxu0 0.0
        %8079 = vmatprep.subr.mxu0 0.0
        %8080 = vmatpush2.msra.mxu0 0.0
        %8081 = vmatprep.subr.mxu0 0.0
        %8082 = vmatpush2.msra.mxu0 0.0
        %8083 = vmatprep.mubr.f32.mxu0 0.0
        %8084 = vmatmul.mubr.f32.gmra.mxu0 %v7553
        %v8085 = vpop.f32.mrf.mxu0
        %v8086 = vadd.f32 %v7976, %v8085
        %v8087 = vpop.f32.mrf.mxu0
        %8088 = vmatprep.mubr.f32.mxu0 0.0
        %8089 = vmatmul.mubr.f32.gmra.mxu0 %v7556
        %v8090 = vpop.f32.mrf.mxu0
        %v8091 = vadd.f32 %v7981, %v8090
        %v8092 = vpop.f32.mrf.mxu0
        %8093 = vmatprep.mubr.f32.mxu0 0.0
        %8094 = vmatmul.mubr.f32.gmra.mxu0 %v7559
        %v8095 = vpop.f32.mrf.mxu0
        %v8096 = vadd.f32 %v7986, %v8095
        %v8097 = vpop.f32.mrf.mxu0
        %8098 = vmatprep.mubr.f32.mxu0 0.0
        %8099 = vmatmul.mubr.f32.gmra.mxu0 %v7562
        %v8100 = vpop.f32.mrf.mxu0
        %v8101 = vadd.f32 %v7991, %v8100
        %v8102 = vpop.f32.mrf.mxu0
        %8103 = vmatprep.mubr.f32.mxu0 0.0
        %8104 = vmatmul.mubr.f32.gmra.mxu0 %v7565
        %v8105 = vpop.f32.mrf.mxu0
        %v8106 = vadd.f32 %v7996, %v8105
        %v8107 = vpop.f32.mrf.mxu0
        %8108 = vmatprep.mubr.f32.mxu0 0.0
        %8109 = vmatmul.mubr.f32.gmra.mxu0 %v7568
        %v8110 = vpop.f32.mrf.mxu0
        %v8111 = vadd.f32 %v8001, %v8110
        %v8112 = vpop.f32.mrf.mxu0
        %8113 = vmatprep.mubr.f32.mxu0 0.0
        %8114 = vmatmul.mubr.f32.gmra.mxu0 %v7571
        %v8115 = vpop.f32.mrf.mxu0
        %v8116 = vadd.f32 %v8006, %v8115
        %v8117 = vpop.f32.mrf.mxu0
        %8118 = vmatprep.mubr.f32.mxu0 0.0
        %8119 = vmatmul.mubr.f32.gmra.mxu0 %v7574
        %v8120 = vpop.f32.mrf.mxu0
        %v8121 = vadd.f32 %v8011, %v8120
        %v8122 = vpop.f32.mrf.mxu0
        %8123 = vmatprep.mubr.f32.mxu0 0.0
        %8124 = vmatmul.mubr.f32.gmra.mxu0 %v7577
        %v8125 = vpop.f32.mrf.mxu0
        %v8126 = vadd.f32 %v8016, %v8125
        %v8127 = vpop.f32.mrf.mxu0
        %8128 = vdwg.mxu0
        %8129 = vst.msk [vmem:[%s1318] sm:$0xff] %vm1515, %v8086
        %8130 = vst.msk [vmem:[%s1318 + $0x8] sm:$0xff] %vm1515, %v8091
        %8131 = vst.msk [vmem:[%s1318 + $0x10] sm:$0xff] %vm1515, %v8096
        %8132 = vst.msk [vmem:[%s1318 + $0x18] sm:$0xff] %vm1515, %v8101
        %8133 = vst.msk [vmem:[%s1318 + $0x20] sm:$0xff] %vm1515, %v8106
        %8134 = vst.msk [vmem:[%s1318 + $0x28] sm:$0xff] %vm1515, %v8111
        %8135 = vst.msk [vmem:[%s1318 + $0x30] sm:$0xff] %vm1515, %v8116
        %8136 = vst.msk [vmem:[%s1318 + $0x38] sm:$0xff] %vm1515, %v8121
        %vm8137 = vcmask 128000
        %8138 = vst.msk [vmem:[%s1318 + $0x40] sm:$0x3f] %vm8137, %v8126
        %p8139 = scmp.lt.s32.totalorder %s88, 1
        %s8140 = scalar_select %p8139, %s88, 1
        %s8141 = smul.addr %s8140, 9
        %s8142 = smul.addr %s8141, 8
        %s8143 = scalar_lea.vmem %s63, %s8142
        // Predicated region
        $region253: #{sharelink_forward.2} parent=143 // pred_check
          %p8144 = pneg %p762
        $region254: #{sharelink_forward.2} parent=143 // pred_check_branch
          %8146 = sbr.rel (%p8144) target = $region256
        $region255: #{sharelink_forward.2} parent=143 // pred_region
          _
        $region256: #{sharelink_forward.2} parent=143 // pred_fallthru
          _
      $region144: #{sharelink_forward.2} parent=5 // pred_fallthru
        _
      %p8147 = scmp.le.s32.totalorder 2, %s83
      // Predicated region
      $region257: #{sharelink_forward.2} parent=5 // pred_check
        %p8148 = pneg %p8147
      $region258: #{sharelink_forward.2} parent=5 // pred_check_branch
        %8150 = sbr.rel (%p8148) target = $region260
      $region259: #{sharelink_forward.2} parent=5 // pred_region
        %s8151 = ssub.s32 %s83, 2
        // Predicated region
        $region261: #{sharelink_forward.2} parent=259 // pred_check
          %p8152 = pneg %p768
        $region262: #{sharelink_forward.2} parent=259 // pred_check_branch
          %8154 = sbr.rel (%p8152) target = $region264
        $region263: #{sharelink_forward.2} parent=259 // pred_region
          %p8155 = scmp.lt.s32.totalorder %s89, 1
          %s8156 = scalar_select %p8155, %s89, 1
          %s8157 = smul.addr %s8156, 9
          %s8158 = smul.addr %s8157, 8
          %s8159 = scalar_lea.vmem %s63, %s8158
        $region264: #{sharelink_forward.2} parent=259 // pred_fallthru
          _
      $region260: #{sharelink_forward.2} parent=5 // pred_fallthru
        _
    $region6: #{sharelink_forward.2} parent=1 // loop_footer
      %s87 = sadd.s32 1, %s83
    $region7: #{sharelink_forward.2} parent=1 // loop_footer_branch
      %82 = sbr.rel target = $region3
    $region8: #{sharelink_forward.2} parent=1 // loop_exit
      _
    %8160 = vsyncpa [#allocation3], 1
    %s8161 = scalar_lea.sflag [#allocation3], 1
    %8162 = vsyncpa %s8161, 1
    %8163 = vsyncpa [#allocation5], 1
    %8164 = vsyncpa [#allocation8], 1
    %8165 = vsyncpa [#allocation11], 1
    %8166 = vsyncpa [#allocation14], 1
    %8167 = vsyncpa [#allocation17], 1
    %8168 = vsyncpa [#allocation20], 1
    %8169 = vsyncpa [#allocation23], 1
    %8170 = vsyncpa [#allocation26], 1
    %8171 = vsyncpa [#allocation29], 1
    %8172 = vsyncpa [#allocation32], 1
    %8173 = vsyncpa [#allocation35], 1
    %8174 = vsyncpa [#allocation38], 1
    %8175 = vsyncpa [#allocation41], 1

</llo_original>
